<compile_context>
chip_gen: v5e
topology: v5e:2x2
jax: 0.10.0
libtpu: 0.0.40
codegen_flags: <defaults>
</compile_context>

<pallas_src>
import jax
import jax.numpy as jnp
from jax import lax
from jax.experimental import pallas as pl
from jax.experimental.pallas import tpu as pltpu

DROPOUT_P = 0.6
LANE = 128
SUBLANE = 8


def _round_up(x, m):
    return ((x + m - 1) // m) * m


# ------------------------------ fused kernel -------------------------------- #

def _make_fused_kernel(BP, DP, HP, CP, n_classes, len_seq):
    f32 = jnp.float32
    bf16 = jnp.bfloat16

    def kernel(pooled_ref, yl0_ref, teach_ref, pscale_ref, emb_ref, enc_wy_ref,
               w_ih1_ref, w_hh1_ref, b_i1_ref, b_hn1_ref,
               w_ih2_ref, w_hh2_ref, b_i2_ref, b_hn2_ref,
               w_fc_ref, b_fc_ref,
               out_ref):
        # ---- loop-invariant vreg work, hoisted out of the recurrence --------
        col_i = lax.broadcasted_iota(jnp.int32, (BP, CP), 1)
        colf = col_i.astype(f32)
        lane_valid = col_i < n_classes
        neg_big = jnp.full((BP, CP), -1e30, f32)
        cp_f = jnp.full((BP, CP), float(CP), f32)

        def gru_cell(x, h, w_ih_ref, w_hh_ref, b_i_ref, b_hn_ref):
            # gates concatenated along lanes as [r | z | n] -> one MXU push per operand
            gi = jnp.dot(x.astype(bf16), w_ih_ref[...],
                         preferred_element_type=f32) + b_i_ref[...]
            gh = jnp.dot(h.astype(bf16), w_hh_ref[...],
                         preferred_element_type=f32)
            rz = jax.nn.sigmoid(gi[:, :2 * HP] + gh[:, :2 * HP])   # b_ih+b_hh pre-summed
            r = rz[:, :HP]
            z = rz[:, HP:]
            n = jnp.tanh(gi[:, 2 * HP:] + r * (gh[:, 2 * HP:] + b_hn_ref[...]))
            return (1.0 - z) * n + z * h

        # ---- t == 0: encoder stand-in (graph term precomputed on host) ------
        yl = yl0_ref[...]                                   # dropout(embedding(y[0]))
        h0 = jnp.tanh(pooled_ref[...] +
                      jnp.dot(yl.astype(bf16), enc_wy_ref[...],
                              preferred_element_type=f32))
        h1 = h0                                             # h = encoder(...).repeat(2,1,1)
        h2 = h0

        # ---- fully-unrolled recurrence; state carried in registers ----------
        for t in range(len_seq):
            h1 = gru_cell(yl, h1, w_ih1_ref, w_hh1_ref, b_i1_ref, b_hn1_ref)
            h2 = gru_cell(h1, h2, w_ih2_ref, w_hh2_ref, b_i2_ref, b_hn2_ref)
            logits = jnp.dot(h2.astype(bf16), w_fc_ref[...],
                             preferred_element_type=f32) + b_fc_ref[...]
            out_ref[t] = logits                             # lane-dense (BP, CP) store

            if t + 1 < len_seq:
                # argmax(logits) over the valid class lanes (ties -> lowest index)
                masked = jnp.where(lane_valid, logits, neg_big)
                m = jnp.max(masked, axis=1, keepdims=True)
                idx = jnp.min(jnp.where(masked == m, colf, cp_f),
                              axis=1, keepdims=True)
                pred_oh = (colf == idx).astype(bf16)
                pred_emb = jnp.dot(pred_oh, emb_ref[...],
                                   preferred_element_type=f32)
                # exact {0,1} blend of dropout(emb(argmax)) vs dropout(emb(y[t]))
                yl = pred_emb * pscale_ref[t] + teach_ref[t]

    return kernel


# ------------------------------- forward pass -------------------------------- #

def seq2seq_forward(g, y, params, rng_key):
    """Mirrors Seq2Seq.forward (teacher forcing prob 0.5, dropout p=0.6) with one
    fused Pallas call over the whole sequence (grid=(1,), in-kernel unrolled loop)."""
    len_seq, B = y.shape
    n_nodes, n_feat = g.shape[1], g.shape[2]
    n_classes, D = params["embedding"].shape
    H = params["w_hh1"].shape[2]

    BP = _round_up(B, SUBLANE)
    DP = _round_up(D, LANE)
    HP = _round_up(H, LANE)
    CP = _round_up(n_classes, LANE)

    # -------- host-side zero-padding to (8,128)-friendly, gate-fused slabs ----
    def pad2(w, rows, cols):
        return jnp.zeros((rows, cols), jnp.float32).at[:w.shape[0], :w.shape[1]].set(w)

    def pad_gate_w(w3, rows):          # (3, Din, H) -> (rows, 3*HP) bf16, gates [r|z|n]
        out = jnp.zeros((rows, 3 * HP), jnp.float32)
        for k in range(3):
            out = out.at[:w3.shape[1], k * HP:k * HP + w3.shape[2]].set(w3[k])
        return out.astype(jnp.bfloat16)

    def fuse_bias_i(b_ih3, b_hh3):     # (3,1,H) x2 -> (1, 3*HP): [bi_r+bh_r | bi_z+bh_z | bi_n]
        out = jnp.zeros((1, 3 * HP), jnp.float32)
        out = out.at[:, 0 * HP:0 * HP + H].set(b_ih3[0] + b_hh3[0])
        out = out.at[:, 1 * HP:1 * HP + H].set(b_ih3[1] + b_hh3[1])
        out = out.at[:, 2 * HP:2 * HP + H].set(b_ih3[2])
        return out

    def pad_b_hn(b_hh3):               # (3,1,H) -> (1, HP): b_hh n-gate (stays inside r*(.))
        return jnp.zeros((1, HP), jnp.float32).at[:, :H].set(b_hh3[2])

    emb_p = pad2(params["embedding"], CP, DP).astype(jnp.bfloat16)
    enc_wy_p = pad2(params["enc_w_y"], DP, HP).astype(jnp.bfloat16)
    w_ih1_p = pad_gate_w(params["w_ih1"], DP)
    w_hh1_p = pad_gate_w(params["w_hh1"], HP)
    w_ih2_p = pad_gate_w(params["w_ih2"], HP)
    w_hh2_p = pad_gate_w(params["w_hh2"], HP)
    b_i1_p = fuse_bias_i(params["b_ih1"], params["b_hh1"])
    b_hn1_p = pad_b_hn(params["b_hh1"])
    b_i2_p = fuse_bias_i(params["b_ih2"], params["b_hh2"])
    b_hn2_p = pad_b_hn(params["b_hh2"])
    w_fc_p = pad2(params["w_fc"], HP, CP).astype(jnp.bfloat16)
    b_fc_p = pad2(params["b_fc"], 1, CP)

    # encoder graph term precomputed on host (used only at t==0)
    pooled = jnp.mean(g, axis=1)                                   # (B, F) graph mean-pool
    proj = pooled @ params["enc_w_g"] + params["enc_b"]            # (B, H)
    pooled_p = jnp.zeros((BP, HP), jnp.float32).at[:B, :H].set(proj)

    # host-side randomness: teacher-forcing coins + inverted-dropout keep masks
    k_coin, k_drop = jax.random.split(rng_key)
    coins = (jax.random.uniform(k_coin, (len_seq,)) < 0.5).astype(jnp.float32)  # 1 -> use argmax
    keep = (jax.random.uniform(k_drop, (len_seq + 1, BP, DP)) >= DROPOUT_P)
    masks = keep.astype(jnp.float32) * (1.0 / (1.0 - DROPOUT_P))

    # teacher-token embeddings (bf16-rounded to match the in-kernel table exactly)
    emb_f32 = params["embedding"].astype(jnp.bfloat16).astype(jnp.float32)
    y_p = jnp.zeros((len_seq, BP), jnp.int32).at[:, :B].set(y)
    emb_y = jnp.zeros((len_seq, BP, DP), jnp.float32).at[:, :, :D].set(emb_f32[y_p])

    yl0_p = emb_y[0] * masks[0]                                    # dropout(embedding(y[0]))
    coin_b = coins[:, None, None]                                  # (len_seq,1,1)
    pred_scale_p = coin_b * masks[1:]                              # (len_seq, BP, DP)
    teach_term_p = (1.0 - coin_b) * masks[1:] * emb_y              # (len_seq, BP, DP)

    kernel = _make_fused_kernel(BP, DP, HP, CP, n_classes, len_seq)

    c2 = lambda i: (0, 0)
    c3 = lambda i: (0, 0, 0)

    out_p = pl.pallas_call(
        kernel,
        out_shape=jax.ShapeDtypeStruct((len_seq, BP, CP), jnp.float32),
        grid_spec=pltpu.PrefetchScalarGridSpec(
            num_scalar_prefetch=0,
            grid=(1,),
            in_specs=[
                pl.BlockSpec((BP, HP), c2),                   # pooled_proj (t==0 only)
                pl.BlockSpec((BP, DP), c2),                   # yl0 = dropout(emb(y[0]))
                pl.BlockSpec((len_seq, BP, DP), c3),          # teach_term per step
                pl.BlockSpec((len_seq, BP, DP), c3),          # pred_scale per step
                pl.BlockSpec((CP, DP), c2),                   # embedding table (bf16)
                pl.BlockSpec((DP, HP), c2),                   # enc_w_y (bf16)
                pl.BlockSpec((DP, 3 * HP), c2),               # w_ih1 [r|z|n] (bf16)
                pl.BlockSpec((HP, 3 * HP), c2),               # w_hh1 (bf16)
                pl.BlockSpec((1, 3 * HP), c2),                # b_i1 (fused)
                pl.BlockSpec((1, HP), c2),                    # b_hn1
                pl.BlockSpec((HP, 3 * HP), c2),               # w_ih2 (bf16)
                pl.BlockSpec((HP, 3 * HP), c2),               # w_hh2 (bf16)
                pl.BlockSpec((1, 3 * HP), c2),                # b_i2 (fused)
                pl.BlockSpec((1, HP), c2),                    # b_hn2
                pl.BlockSpec((HP, CP), c2),                   # w_fc (bf16)
                pl.BlockSpec((1, CP), c2),                    # b_fc
            ],
            out_specs=pl.BlockSpec((len_seq, BP, CP), c3),    # single writeback
        ),
        compiler_params=pltpu.CompilerParams(
            dimension_semantics=("arbitrary",),
        ),
    )(pooled_p, yl0_p, teach_term_p, pred_scale_p, emb_p, enc_wy_p,
      w_ih1_p, w_hh1_p, b_i1_p, b_hn1_p,
      w_ih2_p, w_hh2_p, b_i2_p, b_hn2_p,
      w_fc_p, b_fc_p)

    return out_p[:, :B, :n_classes]                  # (len_seq, B, n_classes)


seq2seq_forward_jit = jax.jit(seq2seq_forward)


# ------------------------------- parameter init ------------------------------ #

def init_params(key, n_classes, dim_hidden, dim_hidden_dec, n_feat):
    keys = jax.random.split(key, 16)
    s = 0.1
    H, D = dim_hidden_dec, dim_hidden
    return {
        "embedding": s * jax.random.normal(keys[0], (n_classes, D), jnp.float32),
        # encoder stand-in (graph mean-pool + mix with embedded start token)
        "enc_w_g": s * jax.random.normal(keys[1], (n_feat, H), jnp.float32),
        "enc_w_y": s * jax.random.normal(keys[2], (D, H), jnp.float32),
        "enc_b":   s * jax.random.normal(keys[3], (1, H), jnp.float32),
        # decoder GRU layer 1 (input dim = D), gates stacked [r, z, n]
        "w_ih1": s * jax.random.normal(keys[4], (3, D, H), jnp.float32),
        "w_hh1": s * jax.random.normal(keys[5], (3, H, H), jnp.float32),
        "b_ih1": s * jax.random.normal(keys[6], (3, 1, H), jnp.float32),
        "b_hh1": s * jax.random.normal(keys[7], (3, 1, H), jnp.float32),
        # decoder GRU layer 2 (input dim = H)
        "w_ih2": s * jax.random.normal(keys[8], (3, H, H), jnp.float32),
        "w_hh2": s * jax.random.normal(keys[9], (3, H, H), jnp.float32),
        "b_ih2": s * jax.random.normal(keys[10], (3, 1, H), jnp.float32),
        "b_hh2": s * jax.random.normal(keys[11], (3, 1, H), jnp.float32),
        # fc head: Linear(H, n_classes), stored transposed
        "w_fc": s * jax.random.normal(keys[12], (H, n_classes), jnp.float32),
        "b_fc": s * jax.random.normal(keys[13], (1, n_classes), jnp.float32),
    }


# ------------------------------------ main ------------------------------------ #

if __name__ == "__main__":
    B = 2            # batch (number of graphs)
    LEN_SEQ = 8      # output sequence length
    DIM_HIDDEN = 32  # embedding dim (decoder layer-1 input)
    DIM_HIDDEN_DEC = 32
    N_CLASSES = 12
    N_NODES = 16     # nodes per graph (dense stand-in for the PyG batch)
    N_FEAT = 8       # node feature dim

    root = jax.random.PRNGKey(0)
    k_par, k_g, k_y, k_fwd = jax.random.split(root, 4)

    params = init_params(k_par, N_CLASSES, DIM_HIDDEN, DIM_HIDDEN_DEC, N_FEAT)
    g = jax.random.normal(k_g, (B, N_NODES, N_FEAT), jnp.float32)
    y = jax.random.randint(k_y, (LEN_SEQ, B), 0, N_CLASSES, jnp.int32)

    out = seq2seq_forward_jit(g, y, params, k_fwd)
    out = jax.block_until_ready(out)

    assert out.shape == (LEN_SEQ, B, N_CLASSES), out.shape
    assert out.dtype == jnp.float32
    assert bool(jnp.all(jnp.isfinite(out)))
    print("KERNEL_OK")
</pallas_src>

<mosaic_0001>
module attributes {stable_mosaic.version = 11 : i64} {
  func.func @kernel(%arg0: i32, %arg1: memref<8x128xf32, #tpu.memory_space<vmem>>, %arg2: memref<8x128xf32, #tpu.memory_space<vmem>>, %arg3: memref<8x8x128xf32, #tpu.memory_space<vmem>>, %arg4: memref<8x8x128xf32, #tpu.memory_space<vmem>>, %arg5: memref<128x128xbf16, #tpu.memory_space<vmem>>, %arg6: memref<128x128xbf16, #tpu.memory_space<vmem>>, %arg7: memref<128x384xbf16, #tpu.memory_space<vmem>>, %arg8: memref<128x384xbf16, #tpu.memory_space<vmem>>, %arg9: memref<1x384xf32, #tpu.memory_space<vmem>>, %arg10: memref<1x128xf32, #tpu.memory_space<vmem>>, %arg11: memref<128x384xbf16, #tpu.memory_space<vmem>>, %arg12: memref<128x384xbf16, #tpu.memory_space<vmem>>, %arg13: memref<1x384xf32, #tpu.memory_space<vmem>>, %arg14: memref<1x128xf32, #tpu.memory_space<vmem>>, %arg15: memref<128x128xbf16, #tpu.memory_space<vmem>>, %arg16: memref<1x128xf32, #tpu.memory_space<vmem>>, %arg17: memref<8x8x128xf32, #tpu.memory_space<vmem>>) attributes {dimension_semantics = [#tpu.dimension_semantics<arbitrary>], iteration_bounds = array<i64: 1>, scalar_prefetch = 0 : i64, scratch_operands = 0 : i64, tpu.core_type = #tpu.core_type<tc>, window_params = [{pipeline_mode = #tpu.pipeline_mode<synchronous>, transform_indices = @transform_0, window_bounds = array<i64: 8, 128>}, {pipeline_mode = #tpu.pipeline_mode<synchronous>, transform_indices = @transform_1, window_bounds = array<i64: 8, 128>}, {pipeline_mode = #tpu.pipeline_mode<synchronous>, transform_indices = @transform_2, window_bounds = array<i64: 8, 8, 128>}, {pipeline_mode = #tpu.pipeline_mode<synchronous>, transform_indices = @transform_3, window_bounds = array<i64: 8, 8, 128>}, {pipeline_mode = #tpu.pipeline_mode<synchronous>, transform_indices = @transform_4, window_bounds = array<i64: 128, 128>}, {pipeline_mode = #tpu.pipeline_mode<synchronous>, transform_indices = @transform_5, window_bounds = array<i64: 128, 128>}, {pipeline_mode = #tpu.pipeline_mode<synchronous>, transform_indices = @transform_6, window_bounds = array<i64: 128, 384>}, {pipeline_mode = #tpu.pipeline_mode<synchronous>, transform_indices = @transform_7, window_bounds = array<i64: 128, 384>}, {pipeline_mode = #tpu.pipeline_mode<synchronous>, transform_indices = @transform_8, window_bounds = array<i64: 1, 384>}, {pipeline_mode = #tpu.pipeline_mode<synchronous>, transform_indices = @transform_9, window_bounds = array<i64: 1, 128>}, {pipeline_mode = #tpu.pipeline_mode<synchronous>, transform_indices = @transform_10, window_bounds = array<i64: 128, 384>}, {pipeline_mode = #tpu.pipeline_mode<synchronous>, transform_indices = @transform_11, window_bounds = array<i64: 128, 384>}, {pipeline_mode = #tpu.pipeline_mode<synchronous>, transform_indices = @transform_12, window_bounds = array<i64: 1, 384>}, {pipeline_mode = #tpu.pipeline_mode<synchronous>, transform_indices = @transform_13, window_bounds = array<i64: 1, 128>}, {pipeline_mode = #tpu.pipeline_mode<synchronous>, transform_indices = @transform_14, window_bounds = array<i64: 128, 128>}, {pipeline_mode = #tpu.pipeline_mode<synchronous>, transform_indices = @transform_15, window_bounds = array<i64: 1, 128>}, {pipeline_mode = #tpu.pipeline_mode<synchronous>, transform_indices = @transform_16, window_bounds = array<i64: 8, 8, 128>}]} {
    %0 = tpu.iota {dimensions = array<i32: 1>} : vector<8x128xi32>
    %1 = arith.sitofp %0 : vector<8x128xi32> to vector<8x128xf32>
    %c12_i32 = arith.constant 12 : i32
    %2 = vector.broadcast %c12_i32 : i32 to vector<8x128xi32>
    %3 = arith.cmpi slt, %0, %2 : vector<8x128xi32>
    %cst = arith.constant -1.000000e+30 : f32
    %4 = vector.broadcast %cst : f32 to vector<8x128xf32>
    %cst_0 = arith.constant 1.280000e+02 : f32
    %5 = vector.broadcast %cst_0 : f32 to vector<8x128xf32>
    %c0 = arith.constant 0 : index
    %c0_1 = arith.constant 0 : index
    %6 = vector.load %arg2[%c0, %c0_1] : memref<8x128xf32, #tpu.memory_space<vmem>>, vector<8x128xf32>
    %c0_2 = arith.constant 0 : index
    %c0_3 = arith.constant 0 : index
    %7 = vector.load %arg1[%c0_2, %c0_3] : memref<8x128xf32, #tpu.memory_space<vmem>>, vector<8x128xf32>
    %8 = arith.truncf %6 : vector<8x128xf32> to vector<8x128xbf16>
    %c0_4 = arith.constant 0 : index
    %c0_5 = arith.constant 0 : index
    %9 = vector.load %arg6[%c0_4, %c0_5] : memref<128x128xbf16, #tpu.memory_space<vmem>>, vector<128x128xbf16>
    %cst_6 = arith.constant dense<0.000000e+00> : vector<8x128xf32>
    %10 = tpu.matmul %8, %9, %cst_6 {dimension_numbers = #tpu.dot_dimension_numbers<[1], [0], [0], [1], [0, 0, 1, 1], [], []>} : vector<8x128xbf16>, vector<128x128xbf16>, vector<8x128xf32> -> vector<8x128xf32>
    %11 = arith.addf %7, %10 : vector<8x128xf32>
    %12 = math.tanh %11 : vector<8x128xf32>
    %13 = arith.truncf %6 : vector<8x128xf32> to vector<8x128xbf16>
    %c0_7 = arith.constant 0 : index
    %c0_8 = arith.constant 0 : index
    %14 = vector.load %arg7[%c0_7, %c0_8] : memref<128x384xbf16, #tpu.memory_space<vmem>>, vector<128x384xbf16>
    %cst_9 = arith.constant dense<0.000000e+00> : vector<8x384xf32>
    %15 = tpu.matmul %13, %14, %cst_9 {dimension_numbers = #tpu.dot_dimension_numbers<[1], [0], [0], [1], [0, 0, 1, 1], [], []>} : vector<8x128xbf16>, vector<128x384xbf16>, vector<8x384xf32> -> vector<8x384xf32>
    %c0_10 = arith.constant 0 : index
    %c0_11 = arith.constant 0 : index
    %16 = vector.load %arg9[%c0_10, %c0_11] : memref<1x384xf32, #tpu.memory_space<vmem>>, vector<1x384xf32>
    %17 = vector.broadcast %16 : vector<1x384xf32> to vector<8x384xf32>
    %18 = arith.addf %15, %17 : vector<8x384xf32>
    %19 = arith.truncf %12 : vector<8x128xf32> to vector<8x128xbf16>
    %c0_12 = arith.constant 0 : index
    %c0_13 = arith.constant 0 : index
    %20 = vector.load %arg8[%c0_12, %c0_13] : memref<128x384xbf16, #tpu.memory_space<vmem>>, vector<128x384xbf16>
    %cst_14 = arith.constant dense<0.000000e+00> : vector<8x384xf32>
    %21 = tpu.matmul %19, %20, %cst_14 {dimension_numbers = #tpu.dot_dimension_numbers<[1], [0], [0], [1], [0, 0, 1, 1], [], []>} : vector<8x128xbf16>, vector<128x384xbf16>, vector<8x384xf32> -> vector<8x384xf32>
    %22 = vector.extract_strided_slice %18 {offsets = [0, 0], sizes = [8, 256], strides = [1, 1]} : vector<8x384xf32> to vector<8x256xf32>
    %23 = vector.extract_strided_slice %21 {offsets = [0, 0], sizes = [8, 256], strides = [1, 1]} : vector<8x384xf32> to vector<8x256xf32>
    %24 = arith.addf %22, %23 : vector<8x256xf32>
    %25 = arith.negf %24 : vector<8x256xf32>
    %26 = math.exp %25 : vector<8x256xf32>
    %cst_15 = arith.constant 1.000000e+00 : f32
    %27 = vector.broadcast %cst_15 : f32 to vector<8x256xf32>
    %28 = arith.addf %27, %26 : vector<8x256xf32>
    %29 = arith.divf %27, %28 : vector<8x256xf32>
    %30 = vector.extract_strided_slice %29 {offsets = [0, 0], sizes = [8, 128], strides = [1, 1]} : vector<8x256xf32> to vector<8x128xf32>
    %31 = vector.extract_strided_slice %29 {offsets = [0, 128], sizes = [8, 128], strides = [1, 1]} : vector<8x256xf32> to vector<8x128xf32>
    %32 = vector.extract_strided_slice %18 {offsets = [0, 256], sizes = [8, 128], strides = [1, 1]} : vector<8x384xf32> to vector<8x128xf32>
    %33 = vector.extract_strided_slice %21 {offsets = [0, 256], sizes = [8, 128], strides = [1, 1]} : vector<8x384xf32> to vector<8x128xf32>
    %c0_16 = arith.constant 0 : index
    %c0_17 = arith.constant 0 : index
    %34 = vector.load %arg10[%c0_16, %c0_17] : memref<1x128xf32, #tpu.memory_space<vmem>>, vector<1x128xf32>
    %35 = vector.broadcast %34 : vector<1x128xf32> to vector<8x128xf32>
    %36 = arith.addf %33, %35 : vector<8x128xf32>
    %37 = arith.mulf %30, %36 : vector<8x128xf32>
    %38 = arith.addf %32, %37 : vector<8x128xf32>
    %39 = math.tanh %38 : vector<8x128xf32>
    %cst_18 = arith.constant 1.000000e+00 : f32
    %40 = vector.broadcast %cst_18 : f32 to vector<8x128xf32>
    %41 = arith.subf %40, %31 : vector<8x128xf32>
    %42 = arith.mulf %41, %39 : vector<8x128xf32>
    %43 = arith.mulf %31, %12 : vector<8x128xf32>
    %44 = arith.addf %42, %43 : vector<8x128xf32>
    %45 = arith.truncf %44 : vector<8x128xf32> to vector<8x128xbf16>
    %c0_19 = arith.constant 0 : index
    %c0_20 = arith.constant 0 : index
    %46 = vector.load %arg11[%c0_19, %c0_20] : memref<128x384xbf16, #tpu.memory_space<vmem>>, vector<128x384xbf16>
    %cst_21 = arith.constant dense<0.000000e+00> : vector<8x384xf32>
    %47 = tpu.matmul %45, %46, %cst_21 {dimension_numbers = #tpu.dot_dimension_numbers<[1], [0], [0], [1], [0, 0, 1, 1], [], []>} : vector<8x128xbf16>, vector<128x384xbf16>, vector<8x384xf32> -> vector<8x384xf32>
    %c0_22 = arith.constant 0 : index
    %c0_23 = arith.constant 0 : index
    %48 = vector.load %arg13[%c0_22, %c0_23] : memref<1x384xf32, #tpu.memory_space<vmem>>, vector<1x384xf32>
    %49 = vector.broadcast %48 : vector<1x384xf32> to vector<8x384xf32>
    %50 = arith.addf %47, %49 : vector<8x384xf32>
    %51 = arith.truncf %12 : vector<8x128xf32> to vector<8x128xbf16>
    %c0_24 = arith.constant 0 : index
    %c0_25 = arith.constant 0 : index
    %52 = vector.load %arg12[%c0_24, %c0_25] : memref<128x384xbf16, #tpu.memory_space<vmem>>, vector<128x384xbf16>
    %cst_26 = arith.constant dense<0.000000e+00> : vector<8x384xf32>
    %53 = tpu.matmul %51, %52, %cst_26 {dimension_numbers = #tpu.dot_dimension_numbers<[1], [0], [0], [1], [0, 0, 1, 1], [], []>} : vector<8x128xbf16>, vector<128x384xbf16>, vector<8x384xf32> -> vector<8x384xf32>
    %54 = vector.extract_strided_slice %50 {offsets = [0, 0], sizes = [8, 256], strides = [1, 1]} : vector<8x384xf32> to vector<8x256xf32>
    %55 = vector.extract_strided_slice %53 {offsets = [0, 0], sizes = [8, 256], strides = [1, 1]} : vector<8x384xf32> to vector<8x256xf32>
    %56 = arith.addf %54, %55 : vector<8x256xf32>
    %57 = arith.negf %56 : vector<8x256xf32>
    %58 = math.exp %57 : vector<8x256xf32>
    %cst_27 = arith.constant 1.000000e+00 : f32
    %59 = vector.broadcast %cst_27 : f32 to vector<8x256xf32>
    %60 = arith.addf %59, %58 : vector<8x256xf32>
    %61 = arith.divf %59, %60 : vector<8x256xf32>
    %62 = vector.extract_strided_slice %61 {offsets = [0, 0], sizes = [8, 128], strides = [1, 1]} : vector<8x256xf32> to vector<8x128xf32>
    %63 = vector.extract_strided_slice %61 {offsets = [0, 128], sizes = [8, 128], strides = [1, 1]} : vector<8x256xf32> to vector<8x128xf32>
    %64 = vector.extract_strided_slice %50 {offsets = [0, 256], sizes = [8, 128], strides = [1, 1]} : vector<8x384xf32> to vector<8x128xf32>
    %65 = vector.extract_strided_slice %53 {offsets = [0, 256], sizes = [8, 128], strides = [1, 1]} : vector<8x384xf32> to vector<8x128xf32>
    %c0_28 = arith.constant 0 : index
    %c0_29 = arith.constant 0 : index
    %66 = vector.load %arg14[%c0_28, %c0_29] : memref<1x128xf32, #tpu.memory_space<vmem>>, vector<1x128xf32>
    %67 = vector.broadcast %66 : vector<1x128xf32> to vector<8x128xf32>
    %68 = arith.addf %65, %67 : vector<8x128xf32>
    %69 = arith.mulf %62, %68 : vector<8x128xf32>
    %70 = arith.addf %64, %69 : vector<8x128xf32>
    %71 = math.tanh %70 : vector<8x128xf32>
    %cst_30 = arith.constant 1.000000e+00 : f32
    %72 = vector.broadcast %cst_30 : f32 to vector<8x128xf32>
    %73 = arith.subf %72, %63 : vector<8x128xf32>
    %74 = arith.mulf %73, %71 : vector<8x128xf32>
    %75 = arith.mulf %63, %12 : vector<8x128xf32>
    %76 = arith.addf %74, %75 : vector<8x128xf32>
    %77 = arith.truncf %76 : vector<8x128xf32> to vector<8x128xbf16>
    %c0_31 = arith.constant 0 : index
    %c0_32 = arith.constant 0 : index
    %78 = vector.load %arg15[%c0_31, %c0_32] : memref<128x128xbf16, #tpu.memory_space<vmem>>, vector<128x128xbf16>
    %cst_33 = arith.constant dense<0.000000e+00> : vector<8x128xf32>
    %79 = tpu.matmul %77, %78, %cst_33 {dimension_numbers = #tpu.dot_dimension_numbers<[1], [0], [0], [1], [0, 0, 1, 1], [], []>} : vector<8x128xbf16>, vector<128x128xbf16>, vector<8x128xf32> -> vector<8x128xf32>
    %c0_34 = arith.constant 0 : index
    %c0_35 = arith.constant 0 : index
    %80 = vector.load %arg16[%c0_34, %c0_35] : memref<1x128xf32, #tpu.memory_space<vmem>>, vector<1x128xf32>
    %81 = vector.broadcast %80 : vector<1x128xf32> to vector<8x128xf32>
    %82 = arith.addf %79, %81 : vector<8x128xf32>
    %c0_36 = arith.constant 0 : index
    %c0_37 = arith.constant 0 : index
    %c0_38 = arith.constant 0 : index
    %83 = vector.load %arg17[%c0_36, %c0_37, %c0_38] : memref<8x8x128xf32, #tpu.memory_space<vmem>>, vector<1x8x128xf32>
    %84 = vector.shape_cast %83 : vector<1x8x128xf32> to vector<8x128xf32>
    %85 = vector.shape_cast %82 : vector<8x128xf32> to vector<1x8x128xf32>
    tpu.vector_store %arg17[%c0_36, %c0_37, %c0_38], %85 {strides = array<i32>} : memref<8x8x128xf32, #tpu.memory_space<vmem>>, vector<1x8x128xf32>,
    %86 = arith.select %3, %82, %4 : vector<8x128xi1>, vector<8x128xf32>
    %cst_39 = arith.constant dense<0xFF800000> : vector<8xf32>
    %87 = vector.multi_reduction <maximumf>, %86, %cst_39 [1] : vector<8x128xf32> to vector<8xf32>
    %88 = vector.shape_cast %87 : vector<8xf32> to vector<8x1xf32>
    %89 = vector.broadcast %88 : vector<8x1xf32> to vector<8x128xf32>
    %90 = arith.cmpf oeq, %86, %89 : vector<8x128xf32>
    %91 = arith.select %90, %1, %5 : vector<8x128xi1>, vector<8x128xf32>
    %cst_40 = arith.constant dense<0x7F800000> : vector<8xf32>
    %92 = vector.multi_reduction <minimumf>, %91, %cst_40 [1] : vector<8x128xf32> to vector<8xf32>
    %93 = vector.shape_cast %92 : vector<8xf32> to vector<8x1xf32>
    %94 = vector.broadcast %93 : vector<8x1xf32> to vector<8x128xf32>
    %95 = arith.cmpf oeq, %1, %94 : vector<8x128xf32>
    %96 = arith.extui %95 : vector<8x128xi1> to vector<8x128xi32>
    %97 = arith.sitofp %96 : vector<8x128xi32> to vector<8x128xf32>
    %98 = arith.truncf %97 : vector<8x128xf32> to vector<8x128xbf16>
    %c0_41 = arith.constant 0 : index
    %c0_42 = arith.constant 0 : index
    %99 = vector.load %arg5[%c0_41, %c0_42] : memref<128x128xbf16, #tpu.memory_space<vmem>>, vector<128x128xbf16>
    %cst_43 = arith.constant dense<0.000000e+00> : vector<8x128xf32>
    %100 = tpu.matmul %98, %99, %cst_43 {dimension_numbers = #tpu.dot_dimension_numbers<[1], [0], [0], [1], [0, 0, 1, 1], [], []>} : vector<8x128xbf16>, vector<128x128xbf16>, vector<8x128xf32> -> vector<8x128xf32>
    %c0_44 = arith.constant 0 : index
    %c0_45 = arith.constant 0 : index
    %c0_46 = arith.constant 0 : index
    %101 = vector.load %arg4[%c0_44, %c0_45, %c0_46] : memref<8x8x128xf32, #tpu.memory_space<vmem>>, vector<1x8x128xf32>
    %102 = vector.shape_cast %101 : vector<1x8x128xf32> to vector<8x128xf32>
    %103 = arith.mulf %100, %102 : vector<8x128xf32>
    %c0_47 = arith.constant 0 : index
    %c0_48 = arith.constant 0 : index
    %c0_49 = arith.constant 0 : index
    %104 = vector.load %arg3[%c0_47, %c0_48, %c0_49] : memref<8x8x128xf32, #tpu.memory_space<vmem>>, vector<1x8x128xf32>
    %105 = vector.shape_cast %104 : vector<1x8x128xf32> to vector<8x128xf32>
    %106 = arith.addf %103, %105 : vector<8x128xf32>
    %107 = arith.truncf %106 : vector<8x128xf32> to vector<8x128xbf16>
    %c0_50 = arith.constant 0 : index
    %c0_51 = arith.constant 0 : index
    %108 = vector.load %arg7[%c0_50, %c0_51] : memref<128x384xbf16, #tpu.memory_space<vmem>>, vector<128x384xbf16>
    %cst_52 = arith.constant dense<0.000000e+00> : vector<8x384xf32>
    %109 = tpu.matmul %107, %108, %cst_52 {dimension_numbers = #tpu.dot_dimension_numbers<[1], [0], [0], [1], [0, 0, 1, 1], [], []>} : vector<8x128xbf16>, vector<128x384xbf16>, vector<8x384xf32> -> vector<8x384xf32>
    %c0_53 = arith.constant 0 : index
    %c0_54 = arith.constant 0 : index
    %110 = vector.load %arg9[%c0_53, %c0_54] : memref<1x384xf32, #tpu.memory_space<vmem>>, vector<1x384xf32>
    %111 = vector.broadcast %110 : vector<1x384xf32> to vector<8x384xf32>
    %112 = arith.addf %109, %111 : vector<8x384xf32>
    %113 = arith.truncf %44 : vector<8x128xf32> to vector<8x128xbf16>
    %c0_55 = arith.constant 0 : index
    %c0_56 = arith.constant 0 : index
    %114 = vector.load %arg8[%c0_55, %c0_56] : memref<128x384xbf16, #tpu.memory_space<vmem>>, vector<128x384xbf16>
    %cst_57 = arith.constant dense<0.000000e+00> : vector<8x384xf32>
    %115 = tpu.matmul %113, %114, %cst_57 {dimension_numbers = #tpu.dot_dimension_numbers<[1], [0], [0], [1], [0, 0, 1, 1], [], []>} : vector<8x128xbf16>, vector<128x384xbf16>, vector<8x384xf32> -> vector<8x384xf32>
    %116 = vector.extract_strided_slice %112 {offsets = [0, 0], sizes = [8, 256], strides = [1, 1]} : vector<8x384xf32> to vector<8x256xf32>
    %117 = vector.extract_strided_slice %115 {offsets = [0, 0], sizes = [8, 256], strides = [1, 1]} : vector<8x384xf32> to vector<8x256xf32>
    %118 = arith.addf %116, %117 : vector<8x256xf32>
    %119 = arith.negf %118 : vector<8x256xf32>
    %120 = math.exp %119 : vector<8x256xf32>
    %cst_58 = arith.constant 1.000000e+00 : f32
    %121 = vector.broadcast %cst_58 : f32 to vector<8x256xf32>
    %122 = arith.addf %121, %120 : vector<8x256xf32>
    %123 = arith.divf %121, %122 : vector<8x256xf32>
    %124 = vector.extract_strided_slice %123 {offsets = [0, 0], sizes = [8, 128], strides = [1, 1]} : vector<8x256xf32> to vector<8x128xf32>
    %125 = vector.extract_strided_slice %123 {offsets = [0, 128], sizes = [8, 128], strides = [1, 1]} : vector<8x256xf32> to vector<8x128xf32>
    %126 = vector.extract_strided_slice %112 {offsets = [0, 256], sizes = [8, 128], strides = [1, 1]} : vector<8x384xf32> to vector<8x128xf32>
    %127 = vector.extract_strided_slice %115 {offsets = [0, 256], sizes = [8, 128], strides = [1, 1]} : vector<8x384xf32> to vector<8x128xf32>
    %c0_59 = arith.constant 0 : index
    %c0_60 = arith.constant 0 : index
    %128 = vector.load %arg10[%c0_59, %c0_60] : memref<1x128xf32, #tpu.memory_space<vmem>>, vector<1x128xf32>
    %129 = vector.broadcast %128 : vector<1x128xf32> to vector<8x128xf32>
    %130 = arith.addf %127, %129 : vector<8x128xf32>
    %131 = arith.mulf %124, %130 : vector<8x128xf32>
    %132 = arith.addf %126, %131 : vector<8x128xf32>
    %133 = math.tanh %132 : vector<8x128xf32>
    %cst_61 = arith.constant 1.000000e+00 : f32
    %134 = vector.broadcast %cst_61 : f32 to vector<8x128xf32>
    %135 = arith.subf %134, %125 : vector<8x128xf32>
    %136 = arith.mulf %135, %133 : vector<8x128xf32>
    %137 = arith.mulf %125, %44 : vector<8x128xf32>
    %138 = arith.addf %136, %137 : vector<8x128xf32>
    %139 = arith.truncf %138 : vector<8x128xf32> to vector<8x128xbf16>
    %c0_62 = arith.constant 0 : index
    %c0_63 = arith.constant 0 : index
    %140 = vector.load %arg11[%c0_62, %c0_63] : memref<128x384xbf16, #tpu.memory_space<vmem>>, vector<128x384xbf16>
    %cst_64 = arith.constant dense<0.000000e+00> : vector<8x384xf32>
    %141 = tpu.matmul %139, %140, %cst_64 {dimension_numbers = #tpu.dot_dimension_numbers<[1], [0], [0], [1], [0, 0, 1, 1], [], []>} : vector<8x128xbf16>, vector<128x384xbf16>, vector<8x384xf32> -> vector<8x384xf32>
    %c0_65 = arith.constant 0 : index
    %c0_66 = arith.constant 0 : index
    %142 = vector.load %arg13[%c0_65, %c0_66] : memref<1x384xf32, #tpu.memory_space<vmem>>, vector<1x384xf32>
    %143 = vector.broadcast %142 : vector<1x384xf32> to vector<8x384xf32>
    %144 = arith.addf %141, %143 : vector<8x384xf32>
    %145 = arith.truncf %76 : vector<8x128xf32> to vector<8x128xbf16>
    %c0_67 = arith.constant 0 : index
    %c0_68 = arith.constant 0 : index
    %146 = vector.load %arg12[%c0_67, %c0_68] : memref<128x384xbf16, #tpu.memory_space<vmem>>, vector<128x384xbf16>
    %cst_69 = arith.constant dense<0.000000e+00> : vector<8x384xf32>
    %147 = tpu.matmul %145, %146, %cst_69 {dimension_numbers = #tpu.dot_dimension_numbers<[1], [0], [0], [1], [0, 0, 1, 1], [], []>} : vector<8x128xbf16>, vector<128x384xbf16>, vector<8x384xf32> -> vector<8x384xf32>
    %148 = vector.extract_strided_slice %144 {offsets = [0, 0], sizes = [8, 256], strides = [1, 1]} : vector<8x384xf32> to vector<8x256xf32>
    %149 = vector.extract_strided_slice %147 {offsets = [0, 0], sizes = [8, 256], strides = [1, 1]} : vector<8x384xf32> to vector<8x256xf32>
    %150 = arith.addf %148, %149 : vector<8x256xf32>
    %151 = arith.negf %150 : vector<8x256xf32>
    %152 = math.exp %151 : vector<8x256xf32>
    %cst_70 = arith.constant 1.000000e+00 : f32
    %153 = vector.broadcast %cst_70 : f32 to vector<8x256xf32>
    %154 = arith.addf %153, %152 : vector<8x256xf32>
    %155 = arith.divf %153, %154 : vector<8x256xf32>
    %156 = vector.extract_strided_slice %155 {offsets = [0, 0], sizes = [8, 128], strides = [1, 1]} : vector<8x256xf32> to vector<8x128xf32>
    %157 = vector.extract_strided_slice %155 {offsets = [0, 128], sizes = [8, 128], strides = [1, 1]} : vector<8x256xf32> to vector<8x128xf32>
    %158 = vector.extract_strided_slice %144 {offsets = [0, 256], sizes = [8, 128], strides = [1, 1]} : vector<8x384xf32> to vector<8x128xf32>
    %159 = vector.extract_strided_slice %147 {offsets = [0, 256], sizes = [8, 128], strides = [1, 1]} : vector<8x384xf32> to vector<8x128xf32>
    %c0_71 = arith.constant 0 : index
    %c0_72 = arith.constant 0 : index
    %160 = vector.load %arg14[%c0_71, %c0_72] : memref<1x128xf32, #tpu.memory_space<vmem>>, vector<1x128xf32>
    %161 = vector.broadcast %160 : vector<1x128xf32> to vector<8x128xf32>
    %162 = arith.addf %159, %161 : vector<8x128xf32>
    %163 = arith.mulf %156, %162 : vector<8x128xf32>
    %164 = arith.addf %158, %163 : vector<8x128xf32>
    %165 = math.tanh %164 : vector<8x128xf32>
    %cst_73 = arith.constant 1.000000e+00 : f32
    %166 = vector.broadcast %cst_73 : f32 to vector<8x128xf32>
    %167 = arith.subf %166, %157 : vector<8x128xf32>
    %168 = arith.mulf %167, %165 : vector<8x128xf32>
    %169 = arith.mulf %157, %76 : vector<8x128xf32>
    %170 = arith.addf %168, %169 : vector<8x128xf32>
    %171 = arith.truncf %170 : vector<8x128xf32> to vector<8x128xbf16>
    %c0_74 = arith.constant 0 : index
    %c0_75 = arith.constant 0 : index
    %172 = vector.load %arg15[%c0_74, %c0_75] : memref<128x128xbf16, #tpu.memory_space<vmem>>, vector<128x128xbf16>
    %cst_76 = arith.constant dense<0.000000e+00> : vector<8x128xf32>
    %173 = tpu.matmul %171, %172, %cst_76 {dimension_numbers = #tpu.dot_dimension_numbers<[1], [0], [0], [1], [0, 0, 1, 1], [], []>} : vector<8x128xbf16>, vector<128x128xbf16>, vector<8x128xf32> -> vector<8x128xf32>
    %c0_77 = arith.constant 0 : index
    %c0_78 = arith.constant 0 : index
    %174 = vector.load %arg16[%c0_77, %c0_78] : memref<1x128xf32, #tpu.memory_space<vmem>>, vector<1x128xf32>
    %175 = vector.broadcast %174 : vector<1x128xf32> to vector<8x128xf32>
    %176 = arith.addf %173, %175 : vector<8x128xf32>
    %c1 = arith.constant 1 : index
    %c0_79 = arith.constant 0 : index
    %c0_80 = arith.constant 0 : index
    %177 = vector.load %arg17[%c1, %c0_79, %c0_80] : memref<8x8x128xf32, #tpu.memory_space<vmem>>, vector<1x8x128xf32>
    %178 = vector.shape_cast %177 : vector<1x8x128xf32> to vector<8x128xf32>
    %179 = vector.shape_cast %176 : vector<8x128xf32> to vector<1x8x128xf32>
    tpu.vector_store %arg17[%c1, %c0_79, %c0_80], %179 {strides = array<i32>} : memref<8x8x128xf32, #tpu.memory_space<vmem>>, vector<1x8x128xf32>,
    %180 = arith.select %3, %176, %4 : vector<8x128xi1>, vector<8x128xf32>
    %cst_81 = arith.constant dense<0xFF800000> : vector<8xf32>
    %181 = vector.multi_reduction <maximumf>, %180, %cst_81 [1] : vector<8x128xf32> to vector<8xf32>
    %182 = vector.shape_cast %181 : vector<8xf32> to vector<8x1xf32>
    %183 = vector.broadcast %182 : vector<8x1xf32> to vector<8x128xf32>
    %184 = arith.cmpf oeq, %180, %183 : vector<8x128xf32>
    %185 = arith.select %184, %1, %5 : vector<8x128xi1>, vector<8x128xf32>
    %cst_82 = arith.constant dense<0x7F800000> : vector<8xf32>
    %186 = vector.multi_reduction <minimumf>, %185, %cst_82 [1] : vector<8x128xf32> to vector<8xf32>
    %187 = vector.shape_cast %186 : vector<8xf32> to vector<8x1xf32>
    %188 = vector.broadcast %187 : vector<8x1xf32> to vector<8x128xf32>
    %189 = arith.cmpf oeq, %1, %188 : vector<8x128xf32>
    %190 = arith.extui %189 : vector<8x128xi1> to vector<8x128xi32>
    %191 = arith.sitofp %190 : vector<8x128xi32> to vector<8x128xf32>
    %192 = arith.truncf %191 : vector<8x128xf32> to vector<8x128xbf16>
    %c0_83 = arith.constant 0 : index
    %c0_84 = arith.constant 0 : index
    %193 = vector.load %arg5[%c0_83, %c0_84] : memref<128x128xbf16, #tpu.memory_space<vmem>>, vector<128x128xbf16>
    %cst_85 = arith.constant dense<0.000000e+00> : vector<8x128xf32>
    %194 = tpu.matmul %192, %193, %cst_85 {dimension_numbers = #tpu.dot_dimension_numbers<[1], [0], [0], [1], [0, 0, 1, 1], [], []>} : vector<8x128xbf16>, vector<128x128xbf16>, vector<8x128xf32> -> vector<8x128xf32>
    %c1_86 = arith.constant 1 : index
    %c0_87 = arith.constant 0 : index
    %c0_88 = arith.constant 0 : index
    %195 = vector.load %arg4[%c1_86, %c0_87, %c0_88] : memref<8x8x128xf32, #tpu.memory_space<vmem>>, vector<1x8x128xf32>
    %196 = vector.shape_cast %195 : vector<1x8x128xf32> to vector<8x128xf32>
    %197 = arith.mulf %194, %196 : vector<8x128xf32>
    %c1_89 = arith.constant 1 : index
    %c0_90 = arith.constant 0 : index
    %c0_91 = arith.constant 0 : index
    %198 = vector.load %arg3[%c1_89, %c0_90, %c0_91] : memref<8x8x128xf32, #tpu.memory_space<vmem>>, vector<1x8x128xf32>
    %199 = vector.shape_cast %198 : vector<1x8x128xf32> to vector<8x128xf32>
    %200 = arith.addf %197, %199 : vector<8x128xf32>
    %201 = arith.truncf %200 : vector<8x128xf32> to vector<8x128xbf16>
    %c0_92 = arith.constant 0 : index
    %c0_93 = arith.constant 0 : index
    %202 = vector.load %arg7[%c0_92, %c0_93] : memref<128x384xbf16, #tpu.memory_space<vmem>>, vector<128x384xbf16>
    %cst_94 = arith.constant dense<0.000000e+00> : vector<8x384xf32>
    %203 = tpu.matmul %201, %202, %cst_94 {dimension_numbers = #tpu.dot_dimension_numbers<[1], [0], [0], [1], [0, 0, 1, 1], [], []>} : vector<8x128xbf16>, vector<128x384xbf16>, vector<8x384xf32> -> vector<8x384xf32>
    %c0_95 = arith.constant 0 : index
    %c0_96 = arith.constant 0 : index
    %204 = vector.load %arg9[%c0_95, %c0_96] : memref<1x384xf32, #tpu.memory_space<vmem>>, vector<1x384xf32>
    %205 = vector.broadcast %204 : vector<1x384xf32> to vector<8x384xf32>
    %206 = arith.addf %203, %205 : vector<8x384xf32>
    %207 = arith.truncf %138 : vector<8x128xf32> to vector<8x128xbf16>
    %c0_97 = arith.constant 0 : index
    %c0_98 = arith.constant 0 : index
    %208 = vector.load %arg8[%c0_97, %c0_98] : memref<128x384xbf16, #tpu.memory_space<vmem>>, vector<128x384xbf16>
    %cst_99 = arith.constant dense<0.000000e+00> : vector<8x384xf32>
    %209 = tpu.matmul %207, %208, %cst_99 {dimension_numbers = #tpu.dot_dimension_numbers<[1], [0], [0], [1], [0, 0, 1, 1], [], []>} : vector<8x128xbf16>, vector<128x384xbf16>, vector<8x384xf32> -> vector<8x384xf32>
    %210 = vector.extract_strided_slice %206 {offsets = [0, 0], sizes = [8, 256], strides = [1, 1]} : vector<8x384xf32> to vector<8x256xf32>
    %211 = vector.extract_strided_slice %209 {offsets = [0, 0], sizes = [8, 256], strides = [1, 1]} : vector<8x384xf32> to vector<8x256xf32>
    %212 = arith.addf %210, %211 : vector<8x256xf32>
    %213 = arith.negf %212 : vector<8x256xf32>
    %214 = math.exp %213 : vector<8x256xf32>
    %cst_100 = arith.constant 1.000000e+00 : f32
    %215 = vector.broadcast %cst_100 : f32 to vector<8x256xf32>
    %216 = arith.addf %215, %214 : vector<8x256xf32>
    %217 = arith.divf %215, %216 : vector<8x256xf32>
    %218 = vector.extract_strided_slice %217 {offsets = [0, 0], sizes = [8, 128], strides = [1, 1]} : vector<8x256xf32> to vector<8x128xf32>
    %219 = vector.extract_strided_slice %217 {offsets = [0, 128], sizes = [8, 128], strides = [1, 1]} : vector<8x256xf32> to vector<8x128xf32>
    %220 = vector.extract_strided_slice %206 {offsets = [0, 256], sizes = [8, 128], strides = [1, 1]} : vector<8x384xf32> to vector<8x128xf32>
    %221 = vector.extract_strided_slice %209 {offsets = [0, 256], sizes = [8, 128], strides = [1, 1]} : vector<8x384xf32> to vector<8x128xf32>
    %c0_101 = arith.constant 0 : index
    %c0_102 = arith.constant 0 : index
    %222 = vector.load %arg10[%c0_101, %c0_102] : memref<1x128xf32, #tpu.memory_space<vmem>>, vector<1x128xf32>
    %223 = vector.broadcast %222 : vector<1x128xf32> to vector<8x128xf32>
    %224 = arith.addf %221, %223 : vector<8x128xf32>
    %225 = arith.mulf %218, %224 : vector<8x128xf32>
    %226 = arith.addf %220, %225 : vector<8x128xf32>
    %227 = math.tanh %226 : vector<8x128xf32>
    %cst_103 = arith.constant 1.000000e+00 : f32
    %228 = vector.broadcast %cst_103 : f32 to vector<8x128xf32>
    %229 = arith.subf %228, %219 : vector<8x128xf32>
    %230 = arith.mulf %229, %227 : vector<8x128xf32>
    %231 = arith.mulf %219, %138 : vector<8x128xf32>
    %232 = arith.addf %230, %231 : vector<8x128xf32>
    %233 = arith.truncf %232 : vector<8x128xf32> to vector<8x128xbf16>
    %c0_104 = arith.constant 0 : index
    %c0_105 = arith.constant 0 : index
    %234 = vector.load %arg11[%c0_104, %c0_105] : memref<128x384xbf16, #tpu.memory_space<vmem>>, vector<128x384xbf16>
    %cst_106 = arith.constant dense<0.000000e+00> : vector<8x384xf32>
    %235 = tpu.matmul %233, %234, %cst_106 {dimension_numbers = #tpu.dot_dimension_numbers<[1], [0], [0], [1], [0, 0, 1, 1], [], []>} : vector<8x128xbf16>, vector<128x384xbf16>, vector<8x384xf32> -> vector<8x384xf32>
    %c0_107 = arith.constant 0 : index
    %c0_108 = arith.constant 0 : index
    %236 = vector.load %arg13[%c0_107, %c0_108] : memref<1x384xf32, #tpu.memory_space<vmem>>, vector<1x384xf32>
    %237 = vector.broadcast %236 : vector<1x384xf32> to vector<8x384xf32>
    %238 = arith.addf %235, %237 : vector<8x384xf32>
    %239 = arith.truncf %170 : vector<8x128xf32> to vector<8x128xbf16>
    %c0_109 = arith.constant 0 : index
    %c0_110 = arith.constant 0 : index
    %240 = vector.load %arg12[%c0_109, %c0_110] : memref<128x384xbf16, #tpu.memory_space<vmem>>, vector<128x384xbf16>
    %cst_111 = arith.constant dense<0.000000e+00> : vector<8x384xf32>
    %241 = tpu.matmul %239, %240, %cst_111 {dimension_numbers = #tpu.dot_dimension_numbers<[1], [0], [0], [1], [0, 0, 1, 1], [], []>} : vector<8x128xbf16>, vector<128x384xbf16>, vector<8x384xf32> -> vector<8x384xf32>
    %242 = vector.extract_strided_slice %238 {offsets = [0, 0], sizes = [8, 256], strides = [1, 1]} : vector<8x384xf32> to vector<8x256xf32>
    %243 = vector.extract_strided_slice %241 {offsets = [0, 0], sizes = [8, 256], strides = [1, 1]} : vector<8x384xf32> to vector<8x256xf32>
    %244 = arith.addf %242, %243 : vector<8x256xf32>
    %245 = arith.negf %244 : vector<8x256xf32>
    %246 = math.exp %245 : vector<8x256xf32>
    %cst_112 = arith.constant 1.000000e+00 : f32
    %247 = vector.broadcast %cst_112 : f32 to vector<8x256xf32>
    %248 = arith.addf %247, %246 : vector<8x256xf32>
    %249 = arith.divf %247, %248 : vector<8x256xf32>
    %250 = vector.extract_strided_slice %249 {offsets = [0, 0], sizes = [8, 128], strides = [1, 1]} : vector<8x256xf32> to vector<8x128xf32>
    %251 = vector.extract_strided_slice %249 {offsets = [0, 128], sizes = [8, 128], strides = [1, 1]} : vector<8x256xf32> to vector<8x128xf32>
    %252 = vector.extract_strided_slice %238 {offsets = [0, 256], sizes = [8, 128], strides = [1, 1]} : vector<8x384xf32> to vector<8x128xf32>
    %253 = vector.extract_strided_slice %241 {offsets = [0, 256], sizes = [8, 128], strides = [1, 1]} : vector<8x384xf32> to vector<8x128xf32>
    %c0_113 = arith.constant 0 : index
    %c0_114 = arith.constant 0 : index
    %254 = vector.load %arg14[%c0_113, %c0_114] : memref<1x128xf32, #tpu.memory_space<vmem>>, vector<1x128xf32>
    %255 = vector.broadcast %254 : vector<1x128xf32> to vector<8x128xf32>
    %256 = arith.addf %253, %255 : vector<8x128xf32>
    %257 = arith.mulf %250, %256 : vector<8x128xf32>
    %258 = arith.addf %252, %257 : vector<8x128xf32>
    %259 = math.tanh %258 : vector<8x128xf32>
    %cst_115 = arith.constant 1.000000e+00 : f32
    %260 = vector.broadcast %cst_115 : f32 to vector<8x128xf32>
    %261 = arith.subf %260, %251 : vector<8x128xf32>
    %262 = arith.mulf %261, %259 : vector<8x128xf32>
    %263 = arith.mulf %251, %170 : vector<8x128xf32>
    %264 = arith.addf %262, %263 : vector<8x128xf32>
    %265 = arith.truncf %264 : vector<8x128xf32> to vector<8x128xbf16>
    %c0_116 = arith.constant 0 : index
    %c0_117 = arith.constant 0 : index
    %266 = vector.load %arg15[%c0_116, %c0_117] : memref<128x128xbf16, #tpu.memory_space<vmem>>, vector<128x128xbf16>
    %cst_118 = arith.constant dense<0.000000e+00> : vector<8x128xf32>
    %267 = tpu.matmul %265, %266, %cst_118 {dimension_numbers = #tpu.dot_dimension_numbers<[1], [0], [0], [1], [0, 0, 1, 1], [], []>} : vector<8x128xbf16>, vector<128x128xbf16>, vector<8x128xf32> -> vector<8x128xf32>
    %c0_119 = arith.constant 0 : index
    %c0_120 = arith.constant 0 : index
    %268 = vector.load %arg16[%c0_119, %c0_120] : memref<1x128xf32, #tpu.memory_space<vmem>>, vector<1x128xf32>
    %269 = vector.broadcast %268 : vector<1x128xf32> to vector<8x128xf32>
    %270 = arith.addf %267, %269 : vector<8x128xf32>
    %c2 = arith.constant 2 : index
    %c0_121 = arith.constant 0 : index
    %c0_122 = arith.constant 0 : index
    %271 = vector.load %arg17[%c2, %c0_121, %c0_122] : memref<8x8x128xf32, #tpu.memory_space<vmem>>, vector<1x8x128xf32>
    %272 = vector.shape_cast %271 : vector<1x8x128xf32> to vector<8x128xf32>
    %273 = vector.shape_cast %270 : vector<8x128xf32> to vector<1x8x128xf32>
    tpu.vector_store %arg17[%c2, %c0_121, %c0_122], %273 {strides = array<i32>} : memref<8x8x128xf32, #tpu.memory_space<vmem>>, vector<1x8x128xf32>,
    %274 = arith.select %3, %270, %4 : vector<8x128xi1>, vector<8x128xf32>
    %cst_123 = arith.constant dense<0xFF800000> : vector<8xf32>
    %275 = vector.multi_reduction <maximumf>, %274, %cst_123 [1] : vector<8x128xf32> to vector<8xf32>
    %276 = vector.shape_cast %275 : vector<8xf32> to vector<8x1xf32>
    %277 = vector.broadcast %276 : vector<8x1xf32> to vector<8x128xf32>
    %278 = arith.cmpf oeq, %274, %277 : vector<8x128xf32>
    %279 = arith.select %278, %1, %5 : vector<8x128xi1>, vector<8x128xf32>
    %cst_124 = arith.constant dense<0x7F800000> : vector<8xf32>
    %280 = vector.multi_reduction <minimumf>, %279, %cst_124 [1] : vector<8x128xf32> to vector<8xf32>
    %281 = vector.shape_cast %280 : vector<8xf32> to vector<8x1xf32>
    %282 = vector.broadcast %281 : vector<8x1xf32> to vector<8x128xf32>
    %283 = arith.cmpf oeq, %1, %282 : vector<8x128xf32>
    %284 = arith.extui %283 : vector<8x128xi1> to vector<8x128xi32>
    %285 = arith.sitofp %284 : vector<8x128xi32> to vector<8x128xf32>
    %286 = arith.truncf %285 : vector<8x128xf32> to vector<8x128xbf16>
    %c0_125 = arith.constant 0 : index
    %c0_126 = arith.constant 0 : index
    %287 = vector.load %arg5[%c0_125, %c0_126] : memref<128x128xbf16, #tpu.memory_space<vmem>>, vector<128x128xbf16>
    %cst_127 = arith.constant dense<0.000000e+00> : vector<8x128xf32>
    %288 = tpu.matmul %286, %287, %cst_127 {dimension_numbers = #tpu.dot_dimension_numbers<[1], [0], [0], [1], [0, 0, 1, 1], [], []>} : vector<8x128xbf16>, vector<128x128xbf16>, vector<8x128xf32> -> vector<8x128xf32>
    %c2_128 = arith.constant 2 : index
    %c0_129 = arith.constant 0 : index
    %c0_130 = arith.constant 0 : index
    %289 = vector.load %arg4[%c2_128, %c0_129, %c0_130] : memref<8x8x128xf32, #tpu.memory_space<vmem>>, vector<1x8x128xf32>
    %290 = vector.shape_cast %289 : vector<1x8x128xf32> to vector<8x128xf32>
    %291 = arith.mulf %288, %290 : vector<8x128xf32>
    %c2_131 = arith.constant 2 : index
    %c0_132 = arith.constant 0 : index
    %c0_133 = arith.constant 0 : index
    %292 = vector.load %arg3[%c2_131, %c0_132, %c0_133] : memref<8x8x128xf32, #tpu.memory_space<vmem>>, vector<1x8x128xf32>
    %293 = vector.shape_cast %292 : vector<1x8x128xf32> to vector<8x128xf32>
    %294 = arith.addf %291, %293 : vector<8x128xf32>
    %295 = arith.truncf %294 : vector<8x128xf32> to vector<8x128xbf16>
    %c0_134 = arith.constant 0 : index
    %c0_135 = arith.constant 0 : index
    %296 = vector.load %arg7[%c0_134, %c0_135] : memref<128x384xbf16, #tpu.memory_space<vmem>>, vector<128x384xbf16>
    %cst_136 = arith.constant dense<0.000000e+00> : vector<8x384xf32>
    %297 = tpu.matmul %295, %296, %cst_136 {dimension_numbers = #tpu.dot_dimension_numbers<[1], [0], [0], [1], [0, 0, 1, 1], [], []>} : vector<8x128xbf16>, vector<128x384xbf16>, vector<8x384xf32> -> vector<8x384xf32>
    %c0_137 = arith.constant 0 : index
    %c0_138 = arith.constant 0 : index
    %298 = vector.load %arg9[%c0_137, %c0_138] : memref<1x384xf32, #tpu.memory_space<vmem>>, vector<1x384xf32>
    %299 = vector.broadcast %298 : vector<1x384xf32> to vector<8x384xf32>
    %300 = arith.addf %297, %299 : vector<8x384xf32>
    %301 = arith.truncf %232 : vector<8x128xf32> to vector<8x128xbf16>
    %c0_139 = arith.constant 0 : index
    %c0_140 = arith.constant 0 : index
    %302 = vector.load %arg8[%c0_139, %c0_140] : memref<128x384xbf16, #tpu.memory_space<vmem>>, vector<128x384xbf16>
    %cst_141 = arith.constant dense<0.000000e+00> : vector<8x384xf32>
    %303 = tpu.matmul %301, %302, %cst_141 {dimension_numbers = #tpu.dot_dimension_numbers<[1], [0], [0], [1], [0, 0, 1, 1], [], []>} : vector<8x128xbf16>, vector<128x384xbf16>, vector<8x384xf32> -> vector<8x384xf32>
    %304 = vector.extract_strided_slice %300 {offsets = [0, 0], sizes = [8, 256], strides = [1, 1]} : vector<8x384xf32> to vector<8x256xf32>
    %305 = vector.extract_strided_slice %303 {offsets = [0, 0], sizes = [8, 256], strides = [1, 1]} : vector<8x384xf32> to vector<8x256xf32>
    %306 = arith.addf %304, %305 : vector<8x256xf32>
    %307 = arith.negf %306 : vector<8x256xf32>
    %308 = math.exp %307 : vector<8x256xf32>
    %cst_142 = arith.constant 1.000000e+00 : f32
    %309 = vector.broadcast %cst_142 : f32 to vector<8x256xf32>
    %310 = arith.addf %309, %308 : vector<8x256xf32>
    %311 = arith.divf %309, %310 : vector<8x256xf32>
    %312 = vector.extract_strided_slice %311 {offsets = [0, 0], sizes = [8, 128], strides = [1, 1]} : vector<8x256xf32> to vector<8x128xf32>
    %313 = vector.extract_strided_slice %311 {offsets = [0, 128], sizes = [8, 128], strides = [1, 1]} : vector<8x256xf32> to vector<8x128xf32>
    %314 = vector.extract_strided_slice %300 {offsets = [0, 256], sizes = [8, 128], strides = [1, 1]} : vector<8x384xf32> to vector<8x128xf32>
    %315 = vector.extract_strided_slice %303 {offsets = [0, 256], sizes = [8, 128], strides = [1, 1]} : vector<8x384xf32> to vector<8x128xf32>
    %c0_143 = arith.constant 0 : index
    %c0_144 = arith.constant 0 : index
    %316 = vector.load %arg10[%c0_143, %c0_144] : memref<1x128xf32, #tpu.memory_space<vmem>>, vector<1x128xf32>
    %317 = vector.broadcast %316 : vector<1x128xf32> to vector<8x128xf32>
    %318 = arith.addf %315, %317 : vector<8x128xf32>
    %319 = arith.mulf %312, %318 : vector<8x128xf32>
    %320 = arith.addf %314, %319 : vector<8x128xf32>
    %321 = math.tanh %320 : vector<8x128xf32>
    %cst_145 = arith.constant 1.000000e+00 : f32
    %322 = vector.broadcast %cst_145 : f32 to vector<8x128xf32>
    %323 = arith.subf %322, %313 : vector<8x128xf32>
    %324 = arith.mulf %323, %321 : vector<8x128xf32>
    %325 = arith.mulf %313, %232 : vector<8x128xf32>
    %326 = arith.addf %324, %325 : vector<8x128xf32>
    %327 = arith.truncf %326 : vector<8x128xf32> to vector<8x128xbf16>
    %c0_146 = arith.constant 0 : index
    %c0_147 = arith.constant 0 : index
    %328 = vector.load %arg11[%c0_146, %c0_147] : memref<128x384xbf16, #tpu.memory_space<vmem>>, vector<128x384xbf16>
    %cst_148 = arith.constant dense<0.000000e+00> : vector<8x384xf32>
    %329 = tpu.matmul %327, %328, %cst_148 {dimension_numbers = #tpu.dot_dimension_numbers<[1], [0], [0], [1], [0, 0, 1, 1], [], []>} : vector<8x128xbf16>, vector<128x384xbf16>, vector<8x384xf32> -> vector<8x384xf32>
    %c0_149 = arith.constant 0 : index
    %c0_150 = arith.constant 0 : index
    %330 = vector.load %arg13[%c0_149, %c0_150] : memref<1x384xf32, #tpu.memory_space<vmem>>, vector<1x384xf32>
    %331 = vector.broadcast %330 : vector<1x384xf32> to vector<8x384xf32>
    %332 = arith.addf %329, %331 : vector<8x384xf32>
    %333 = arith.truncf %264 : vector<8x128xf32> to vector<8x128xbf16>
    %c0_151 = arith.constant 0 : index
    %c0_152 = arith.constant 0 : index
    %334 = vector.load %arg12[%c0_151, %c0_152] : memref<128x384xbf16, #tpu.memory_space<vmem>>, vector<128x384xbf16>
    %cst_153 = arith.constant dense<0.000000e+00> : vector<8x384xf32>
    %335 = tpu.matmul %333, %334, %cst_153 {dimension_numbers = #tpu.dot_dimension_numbers<[1], [0], [0], [1], [0, 0, 1, 1], [], []>} : vector<8x128xbf16>, vector<128x384xbf16>, vector<8x384xf32> -> vector<8x384xf32>
    %336 = vector.extract_strided_slice %332 {offsets = [0, 0], sizes = [8, 256], strides = [1, 1]} : vector<8x384xf32> to vector<8x256xf32>
    %337 = vector.extract_strided_slice %335 {offsets = [0, 0], sizes = [8, 256], strides = [1, 1]} : vector<8x384xf32> to vector<8x256xf32>
    %338 = arith.addf %336, %337 : vector<8x256xf32>
    %339 = arith.negf %338 : vector<8x256xf32>
    %340 = math.exp %339 : vector<8x256xf32>
    %cst_154 = arith.constant 1.000000e+00 : f32
    %341 = vector.broadcast %cst_154 : f32 to vector<8x256xf32>
    %342 = arith.addf %341, %340 : vector<8x256xf32>
    %343 = arith.divf %341, %342 : vector<8x256xf32>
    %344 = vector.extract_strided_slice %343 {offsets = [0, 0], sizes = [8, 128], strides = [1, 1]} : vector<8x256xf32> to vector<8x128xf32>
    %345 = vector.extract_strided_slice %343 {offsets = [0, 128], sizes = [8, 128], strides = [1, 1]} : vector<8x256xf32> to vector<8x128xf32>
    %346 = vector.extract_strided_slice %332 {offsets = [0, 256], sizes = [8, 128], strides = [1, 1]} : vector<8x384xf32> to vector<8x128xf32>
    %347 = vector.extract_strided_slice %335 {offsets = [0, 256], sizes = [8, 128], strides = [1, 1]} : vector<8x384xf32> to vector<8x128xf32>
    %c0_155 = arith.constant 0 : index
    %c0_156 = arith.constant 0 : index
    %348 = vector.load %arg14[%c0_155, %c0_156] : memref<1x128xf32, #tpu.memory_space<vmem>>, vector<1x128xf32>
    %349 = vector.broadcast %348 : vector<1x128xf32> to vector<8x128xf32>
    %350 = arith.addf %347, %349 : vector<8x128xf32>
    %351 = arith.mulf %344, %350 : vector<8x128xf32>
    %352 = arith.addf %346, %351 : vector<8x128xf32>
    %353 = math.tanh %352 : vector<8x128xf32>
    %cst_157 = arith.constant 1.000000e+00 : f32
    %354 = vector.broadcast %cst_157 : f32 to vector<8x128xf32>
    %355 = arith.subf %354, %345 : vector<8x128xf32>
    %356 = arith.mulf %355, %353 : vector<8x128xf32>
    %357 = arith.mulf %345, %264 : vector<8x128xf32>
    %358 = arith.addf %356, %357 : vector<8x128xf32>
    %359 = arith.truncf %358 : vector<8x128xf32> to vector<8x128xbf16>
    %c0_158 = arith.constant 0 : index
    %c0_159 = arith.constant 0 : index
    %360 = vector.load %arg15[%c0_158, %c0_159] : memref<128x128xbf16, #tpu.memory_space<vmem>>, vector<128x128xbf16>
    %cst_160 = arith.constant dense<0.000000e+00> : vector<8x128xf32>
    %361 = tpu.matmul %359, %360, %cst_160 {dimension_numbers = #tpu.dot_dimension_numbers<[1], [0], [0], [1], [0, 0, 1, 1], [], []>} : vector<8x128xbf16>, vector<128x128xbf16>, vector<8x128xf32> -> vector<8x128xf32>
    %c0_161 = arith.constant 0 : index
    %c0_162 = arith.constant 0 : index
    %362 = vector.load %arg16[%c0_161, %c0_162] : memref<1x128xf32, #tpu.memory_space<vmem>>, vector<1x128xf32>
    %363 = vector.broadcast %362 : vector<1x128xf32> to vector<8x128xf32>
    %364 = arith.addf %361, %363 : vector<8x128xf32>
    %c3 = arith.constant 3 : index
    %c0_163 = arith.constant 0 : index
    %c0_164 = arith.constant 0 : index
    %365 = vector.load %arg17[%c3, %c0_163, %c0_164] : memref<8x8x128xf32, #tpu.memory_space<vmem>>, vector<1x8x128xf32>
    %366 = vector.shape_cast %365 : vector<1x8x128xf32> to vector<8x128xf32>
    %367 = vector.shape_cast %364 : vector<8x128xf32> to vector<1x8x128xf32>
    tpu.vector_store %arg17[%c3, %c0_163, %c0_164], %367 {strides = array<i32>} : memref<8x8x128xf32, #tpu.memory_space<vmem>>, vector<1x8x128xf32>,
    %368 = arith.select %3, %364, %4 : vector<8x128xi1>, vector<8x128xf32>
    %cst_165 = arith.constant dense<0xFF800000> : vector<8xf32>
    %369 = vector.multi_reduction <maximumf>, %368, %cst_165 [1] : vector<8x128xf32> to vector<8xf32>
    %370 = vector.shape_cast %369 : vector<8xf32> to vector<8x1xf32>
    %371 = vector.broadcast %370 : vector<8x1xf32> to vector<8x128xf32>
    %372 = arith.cmpf oeq, %368, %371 : vector<8x128xf32>
    %373 = arith.select %372, %1, %5 : vector<8x128xi1>, vector<8x128xf32>
    %cst_166 = arith.constant dense<0x7F800000> : vector<8xf32>
    %374 = vector.multi_reduction <minimumf>, %373, %cst_166 [1] : vector<8x128xf32> to vector<8xf32>
    %375 = vector.shape_cast %374 : vector<8xf32> to vector<8x1xf32>
    %376 = vector.broadcast %375 : vector<8x1xf32> to vector<8x128xf32>
    %377 = arith.cmpf oeq, %1, %376 : vector<8x128xf32>
    %378 = arith.extui %377 : vector<8x128xi1> to vector<8x128xi32>
    %379 = arith.sitofp %378 : vector<8x128xi32> to vector<8x128xf32>
    %380 = arith.truncf %379 : vector<8x128xf32> to vector<8x128xbf16>
    %c0_167 = arith.constant 0 : index
    %c0_168 = arith.constant 0 : index
    %381 = vector.load %arg5[%c0_167, %c0_168] : memref<128x128xbf16, #tpu.memory_space<vmem>>, vector<128x128xbf16>
    %cst_169 = arith.constant dense<0.000000e+00> : vector<8x128xf32>
    %382 = tpu.matmul %380, %381, %cst_169 {dimension_numbers = #tpu.dot_dimension_numbers<[1], [0], [0], [1], [0, 0, 1, 1], [], []>} : vector<8x128xbf16>, vector<128x128xbf16>, vector<8x128xf32> -> vector<8x128xf32>
    %c3_170 = arith.constant 3 : index
    %c0_171 = arith.constant 0 : index
    %c0_172 = arith.constant 0 : index
    %383 = vector.load %arg4[%c3_170, %c0_171, %c0_172] : memref<8x8x128xf32, #tpu.memory_space<vmem>>, vector<1x8x128xf32>
    %384 = vector.shape_cast %383 : vector<1x8x128xf32> to vector<8x128xf32>
    %385 = arith.mulf %382, %384 : vector<8x128xf32>
    %c3_173 = arith.constant 3 : index
    %c0_174 = arith.constant 0 : index
    %c0_175 = arith.constant 0 : index
    %386 = vector.load %arg3[%c3_173, %c0_174, %c0_175] : memref<8x8x128xf32, #tpu.memory_space<vmem>>, vector<1x8x128xf32>
    %387 = vector.shape_cast %386 : vector<1x8x128xf32> to vector<8x128xf32>
    %388 = arith.addf %385, %387 : vector<8x128xf32>
    %389 = arith.truncf %388 : vector<8x128xf32> to vector<8x128xbf16>
    %c0_176 = arith.constant 0 : index
    %c0_177 = arith.constant 0 : index
    %390 = vector.load %arg7[%c0_176, %c0_177] : memref<128x384xbf16, #tpu.memory_space<vmem>>, vector<128x384xbf16>
    %cst_178 = arith.constant dense<0.000000e+00> : vector<8x384xf32>
    %391 = tpu.matmul %389, %390, %cst_178 {dimension_numbers = #tpu.dot_dimension_numbers<[1], [0], [0], [1], [0, 0, 1, 1], [], []>} : vector<8x128xbf16>, vector<128x384xbf16>, vector<8x384xf32> -> vector<8x384xf32>
    %c0_179 = arith.constant 0 : index
    %c0_180 = arith.constant 0 : index
    %392 = vector.load %arg9[%c0_179, %c0_180] : memref<1x384xf32, #tpu.memory_space<vmem>>, vector<1x384xf32>
    %393 = vector.broadcast %392 : vector<1x384xf32> to vector<8x384xf32>
    %394 = arith.addf %391, %393 : vector<8x384xf32>
    %395 = arith.truncf %326 : vector<8x128xf32> to vector<8x128xbf16>
    %c0_181 = arith.constant 0 : index
    %c0_182 = arith.constant 0 : index
    %396 = vector.load %arg8[%c0_181, %c0_182] : memref<128x384xbf16, #tpu.memory_space<vmem>>, vector<128x384xbf16>
    %cst_183 = arith.constant dense<0.000000e+00> : vector<8x384xf32>
    %397 = tpu.matmul %395, %396, %cst_183 {dimension_numbers = #tpu.dot_dimension_numbers<[1], [0], [0], [1], [0, 0, 1, 1], [], []>} : vector<8x128xbf16>, vector<128x384xbf16>, vector<8x384xf32> -> vector<8x384xf32>
    %398 = vector.extract_strided_slice %394 {offsets = [0, 0], sizes = [8, 256], strides = [1, 1]} : vector<8x384xf32> to vector<8x256xf32>
    %399 = vector.extract_strided_slice %397 {offsets = [0, 0], sizes = [8, 256], strides = [1, 1]} : vector<8x384xf32> to vector<8x256xf32>
    %400 = arith.addf %398, %399 : vector<8x256xf32>
    %401 = arith.negf %400 : vector<8x256xf32>
    %402 = math.exp %401 : vector<8x256xf32>
    %cst_184 = arith.constant 1.000000e+00 : f32
    %403 = vector.broadcast %cst_184 : f32 to vector<8x256xf32>
    %404 = arith.addf %403, %402 : vector<8x256xf32>
    %405 = arith.divf %403, %404 : vector<8x256xf32>
    %406 = vector.extract_strided_slice %405 {offsets = [0, 0], sizes = [8, 128], strides = [1, 1]} : vector<8x256xf32> to vector<8x128xf32>
    %407 = vector.extract_strided_slice %405 {offsets = [0, 128], sizes = [8, 128], strides = [1, 1]} : vector<8x256xf32> to vector<8x128xf32>
    %408 = vector.extract_strided_slice %394 {offsets = [0, 256], sizes = [8, 128], strides = [1, 1]} : vector<8x384xf32> to vector<8x128xf32>
    %409 = vector.extract_strided_slice %397 {offsets = [0, 256], sizes = [8, 128], strides = [1, 1]} : vector<8x384xf32> to vector<8x128xf32>
    %c0_185 = arith.constant 0 : index
    %c0_186 = arith.constant 0 : index
    %410 = vector.load %arg10[%c0_185, %c0_186] : memref<1x128xf32, #tpu.memory_space<vmem>>, vector<1x128xf32>
    %411 = vector.broadcast %410 : vector<1x128xf32> to vector<8x128xf32>
    %412 = arith.addf %409, %411 : vector<8x128xf32>
    %413 = arith.mulf %406, %412 : vector<8x128xf32>
    %414 = arith.addf %408, %413 : vector<8x128xf32>
    %415 = math.tanh %414 : vector<8x128xf32>
    %cst_187 = arith.constant 1.000000e+00 : f32
    %416 = vector.broadcast %cst_187 : f32 to vector<8x128xf32>
    %417 = arith.subf %416, %407 : vector<8x128xf32>
    %418 = arith.mulf %417, %415 : vector<8x128xf32>
    %419 = arith.mulf %407, %326 : vector<8x128xf32>
    %420 = arith.addf %418, %419 : vector<8x128xf32>
    %421 = arith.truncf %420 : vector<8x128xf32> to vector<8x128xbf16>
    %c0_188 = arith.constant 0 : index
    %c0_189 = arith.constant 0 : index
    %422 = vector.load %arg11[%c0_188, %c0_189] : memref<128x384xbf16, #tpu.memory_space<vmem>>, vector<128x384xbf16>
    %cst_190 = arith.constant dense<0.000000e+00> : vector<8x384xf32>
    %423 = tpu.matmul %421, %422, %cst_190 {dimension_numbers = #tpu.dot_dimension_numbers<[1], [0], [0], [1], [0, 0, 1, 1], [], []>} : vector<8x128xbf16>, vector<128x384xbf16>, vector<8x384xf32> -> vector<8x384xf32>
    %c0_191 = arith.constant 0 : index
    %c0_192 = arith.constant 0 : index
    %424 = vector.load %arg13[%c0_191, %c0_192] : memref<1x384xf32, #tpu.memory_space<vmem>>, vector<1x384xf32>
    %425 = vector.broadcast %424 : vector<1x384xf32> to vector<8x384xf32>
    %426 = arith.addf %423, %425 : vector<8x384xf32>
    %427 = arith.truncf %358 : vector<8x128xf32> to vector<8x128xbf16>
    %c0_193 = arith.constant 0 : index
    %c0_194 = arith.constant 0 : index
    %428 = vector.load %arg12[%c0_193, %c0_194] : memref<128x384xbf16, #tpu.memory_space<vmem>>, vector<128x384xbf16>
    %cst_195 = arith.constant dense<0.000000e+00> : vector<8x384xf32>
    %429 = tpu.matmul %427, %428, %cst_195 {dimension_numbers = #tpu.dot_dimension_numbers<[1], [0], [0], [1], [0, 0, 1, 1], [], []>} : vector<8x128xbf16>, vector<128x384xbf16>, vector<8x384xf32> -> vector<8x384xf32>
    %430 = vector.extract_strided_slice %426 {offsets = [0, 0], sizes = [8, 256], strides = [1, 1]} : vector<8x384xf32> to vector<8x256xf32>
    %431 = vector.extract_strided_slice %429 {offsets = [0, 0], sizes = [8, 256], strides = [1, 1]} : vector<8x384xf32> to vector<8x256xf32>
    %432 = arith.addf %430, %431 : vector<8x256xf32>
    %433 = arith.negf %432 : vector<8x256xf32>
    %434 = math.exp %433 : vector<8x256xf32>
    %cst_196 = arith.constant 1.000000e+00 : f32
    %435 = vector.broadcast %cst_196 : f32 to vector<8x256xf32>
    %436 = arith.addf %435, %434 : vector<8x256xf32>
    %437 = arith.divf %435, %436 : vector<8x256xf32>
    %438 = vector.extract_strided_slice %437 {offsets = [0, 0], sizes = [8, 128], strides = [1, 1]} : vector<8x256xf32> to vector<8x128xf32>
    %439 = vector.extract_strided_slice %437 {offsets = [0, 128], sizes = [8, 128], strides = [1, 1]} : vector<8x256xf32> to vector<8x128xf32>
    %440 = vector.extract_strided_slice %426 {offsets = [0, 256], sizes = [8, 128], strides = [1, 1]} : vector<8x384xf32> to vector<8x128xf32>
    %441 = vector.extract_strided_slice %429 {offsets = [0, 256], sizes = [8, 128], strides = [1, 1]} : vector<8x384xf32> to vector<8x128xf32>
    %c0_197 = arith.constant 0 : index
    %c0_198 = arith.constant 0 : index
    %442 = vector.load %arg14[%c0_197, %c0_198] : memref<1x128xf32, #tpu.memory_space<vmem>>, vector<1x128xf32>
    %443 = vector.broadcast %442 : vector<1x128xf32> to vector<8x128xf32>
    %444 = arith.addf %441, %443 : vector<8x128xf32>
    %445 = arith.mulf %438, %444 : vector<8x128xf32>
    %446 = arith.addf %440, %445 : vector<8x128xf32>
    %447 = math.tanh %446 : vector<8x128xf32>
    %cst_199 = arith.constant 1.000000e+00 : f32
    %448 = vector.broadcast %cst_199 : f32 to vector<8x128xf32>
    %449 = arith.subf %448, %439 : vector<8x128xf32>
    %450 = arith.mulf %449, %447 : vector<8x128xf32>
    %451 = arith.mulf %439, %358 : vector<8x128xf32>
    %452 = arith.addf %450, %451 : vector<8x128xf32>
    %453 = arith.truncf %452 : vector<8x128xf32> to vector<8x128xbf16>
    %c0_200 = arith.constant 0 : index
    %c0_201 = arith.constant 0 : index
    %454 = vector.load %arg15[%c0_200, %c0_201] : memref<128x128xbf16, #tpu.memory_space<vmem>>, vector<128x128xbf16>
    %cst_202 = arith.constant dense<0.000000e+00> : vector<8x128xf32>
    %455 = tpu.matmul %453, %454, %cst_202 {dimension_numbers = #tpu.dot_dimension_numbers<[1], [0], [0], [1], [0, 0, 1, 1], [], []>} : vector<8x128xbf16>, vector<128x128xbf16>, vector<8x128xf32> -> vector<8x128xf32>
    %c0_203 = arith.constant 0 : index
    %c0_204 = arith.constant 0 : index
    %456 = vector.load %arg16[%c0_203, %c0_204] : memref<1x128xf32, #tpu.memory_space<vmem>>, vector<1x128xf32>
    %457 = vector.broadcast %456 : vector<1x128xf32> to vector<8x128xf32>
    %458 = arith.addf %455, %457 : vector<8x128xf32>
    %c4 = arith.constant 4 : index
    %c0_205 = arith.constant 0 : index
    %c0_206 = arith.constant 0 : index
    %459 = vector.load %arg17[%c4, %c0_205, %c0_206] : memref<8x8x128xf32, #tpu.memory_space<vmem>>, vector<1x8x128xf32>
    %460 = vector.shape_cast %459 : vector<1x8x128xf32> to vector<8x128xf32>
    %461 = vector.shape_cast %458 : vector<8x128xf32> to vector<1x8x128xf32>
    tpu.vector_store %arg17[%c4, %c0_205, %c0_206], %461 {strides = array<i32>} : memref<8x8x128xf32, #tpu.memory_space<vmem>>, vector<1x8x128xf32>,
    %462 = arith.select %3, %458, %4 : vector<8x128xi1>, vector<8x128xf32>
    %cst_207 = arith.constant dense<0xFF800000> : vector<8xf32>
    %463 = vector.multi_reduction <maximumf>, %462, %cst_207 [1] : vector<8x128xf32> to vector<8xf32>
    %464 = vector.shape_cast %463 : vector<8xf32> to vector<8x1xf32>
    %465 = vector.broadcast %464 : vector<8x1xf32> to vector<8x128xf32>
    %466 = arith.cmpf oeq, %462, %465 : vector<8x128xf32>
    %467 = arith.select %466, %1, %5 : vector<8x128xi1>, vector<8x128xf32>
    %cst_208 = arith.constant dense<0x7F800000> : vector<8xf32>
    %468 = vector.multi_reduction <minimumf>, %467, %cst_208 [1] : vector<8x128xf32> to vector<8xf32>
    %469 = vector.shape_cast %468 : vector<8xf32> to vector<8x1xf32>
    %470 = vector.broadcast %469 : vector<8x1xf32> to vector<8x128xf32>
    %471 = arith.cmpf oeq, %1, %470 : vector<8x128xf32>
    %472 = arith.extui %471 : vector<8x128xi1> to vector<8x128xi32>
    %473 = arith.sitofp %472 : vector<8x128xi32> to vector<8x128xf32>
    %474 = arith.truncf %473 : vector<8x128xf32> to vector<8x128xbf16>
    %c0_209 = arith.constant 0 : index
    %c0_210 = arith.constant 0 : index
    %475 = vector.load %arg5[%c0_209, %c0_210] : memref<128x128xbf16, #tpu.memory_space<vmem>>, vector<128x128xbf16>
    %cst_211 = arith.constant dense<0.000000e+00> : vector<8x128xf32>
    %476 = tpu.matmul %474, %475, %cst_211 {dimension_numbers = #tpu.dot_dimension_numbers<[1], [0], [0], [1], [0, 0, 1, 1], [], []>} : vector<8x128xbf16>, vector<128x128xbf16>, vector<8x128xf32> -> vector<8x128xf32>
    %c4_212 = arith.constant 4 : index
    %c0_213 = arith.constant 0 : index
    %c0_214 = arith.constant 0 : index
    %477 = vector.load %arg4[%c4_212, %c0_213, %c0_214] : memref<8x8x128xf32, #tpu.memory_space<vmem>>, vector<1x8x128xf32>
    %478 = vector.shape_cast %477 : vector<1x8x128xf32> to vector<8x128xf32>
    %479 = arith.mulf %476, %478 : vector<8x128xf32>
    %c4_215 = arith.constant 4 : index
    %c0_216 = arith.constant 0 : index
    %c0_217 = arith.constant 0 : index
    %480 = vector.load %arg3[%c4_215, %c0_216, %c0_217] : memref<8x8x128xf32, #tpu.memory_space<vmem>>, vector<1x8x128xf32>
    %481 = vector.shape_cast %480 : vector<1x8x128xf32> to vector<8x128xf32>
    %482 = arith.addf %479, %481 : vector<8x128xf32>
    %483 = arith.truncf %482 : vector<8x128xf32> to vector<8x128xbf16>
    %c0_218 = arith.constant 0 : index
    %c0_219 = arith.constant 0 : index
    %484 = vector.load %arg7[%c0_218, %c0_219] : memref<128x384xbf16, #tpu.memory_space<vmem>>, vector<128x384xbf16>
    %cst_220 = arith.constant dense<0.000000e+00> : vector<8x384xf32>
    %485 = tpu.matmul %483, %484, %cst_220 {dimension_numbers = #tpu.dot_dimension_numbers<[1], [0], [0], [1], [0, 0, 1, 1], [], []>} : vector<8x128xbf16>, vector<128x384xbf16>, vector<8x384xf32> -> vector<8x384xf32>
    %c0_221 = arith.constant 0 : index
    %c0_222 = arith.constant 0 : index
    %486 = vector.load %arg9[%c0_221, %c0_222] : memref<1x384xf32, #tpu.memory_space<vmem>>, vector<1x384xf32>
    %487 = vector.broadcast %486 : vector<1x384xf32> to vector<8x384xf32>
    %488 = arith.addf %485, %487 : vector<8x384xf32>
    %489 = arith.truncf %420 : vector<8x128xf32> to vector<8x128xbf16>
    %c0_223 = arith.constant 0 : index
    %c0_224 = arith.constant 0 : index
    %490 = vector.load %arg8[%c0_223, %c0_224] : memref<128x384xbf16, #tpu.memory_space<vmem>>, vector<128x384xbf16>
    %cst_225 = arith.constant dense<0.000000e+00> : vector<8x384xf32>
    %491 = tpu.matmul %489, %490, %cst_225 {dimension_numbers = #tpu.dot_dimension_numbers<[1], [0], [0], [1], [0, 0, 1, 1], [], []>} : vector<8x128xbf16>, vector<128x384xbf16>, vector<8x384xf32> -> vector<8x384xf32>
    %492 = vector.extract_strided_slice %488 {offsets = [0, 0], sizes = [8, 256], strides = [1, 1]} : vector<8x384xf32> to vector<8x256xf32>
    %493 = vector.extract_strided_slice %491 {offsets = [0, 0], sizes = [8, 256], strides = [1, 1]} : vector<8x384xf32> to vector<8x256xf32>
    %494 = arith.addf %492, %493 : vector<8x256xf32>
    %495 = arith.negf %494 : vector<8x256xf32>
    %496 = math.exp %495 : vector<8x256xf32>
    %cst_226 = arith.constant 1.000000e+00 : f32
    %497 = vector.broadcast %cst_226 : f32 to vector<8x256xf32>
    %498 = arith.addf %497, %496 : vector<8x256xf32>
    %499 = arith.divf %497, %498 : vector<8x256xf32>
    %500 = vector.extract_strided_slice %499 {offsets = [0, 0], sizes = [8, 128], strides = [1, 1]} : vector<8x256xf32> to vector<8x128xf32>
    %501 = vector.extract_strided_slice %499 {offsets = [0, 128], sizes = [8, 128], strides = [1, 1]} : vector<8x256xf32> to vector<8x128xf32>
    %502 = vector.extract_strided_slice %488 {offsets = [0, 256], sizes = [8, 128], strides = [1, 1]} : vector<8x384xf32> to vector<8x128xf32>
    %503 = vector.extract_strided_slice %491 {offsets = [0, 256], sizes = [8, 128], strides = [1, 1]} : vector<8x384xf32> to vector<8x128xf32>
    %c0_227 = arith.constant 0 : index
    %c0_228 = arith.constant 0 : index
    %504 = vector.load %arg10[%c0_227, %c0_228] : memref<1x128xf32, #tpu.memory_space<vmem>>, vector<1x128xf32>
    %505 = vector.broadcast %504 : vector<1x128xf32> to vector<8x128xf32>
    %506 = arith.addf %503, %505 : vector<8x128xf32>
    %507 = arith.mulf %500, %506 : vector<8x128xf32>
    %508 = arith.addf %502, %507 : vector<8x128xf32>
    %509 = math.tanh %508 : vector<8x128xf32>
    %cst_229 = arith.constant 1.000000e+00 : f32
    %510 = vector.broadcast %cst_229 : f32 to vector<8x128xf32>
    %511 = arith.subf %510, %501 : vector<8x128xf32>
    %512 = arith.mulf %511, %509 : vector<8x128xf32>
    %513 = arith.mulf %501, %420 : vector<8x128xf32>
    %514 = arith.addf %512, %513 : vector<8x128xf32>
    %515 = arith.truncf %514 : vector<8x128xf32> to vector<8x128xbf16>
    %c0_230 = arith.constant 0 : index
    %c0_231 = arith.constant 0 : index
    %516 = vector.load %arg11[%c0_230, %c0_231] : memref<128x384xbf16, #tpu.memory_space<vmem>>, vector<128x384xbf16>
    %cst_232 = arith.constant dense<0.000000e+00> : vector<8x384xf32>
    %517 = tpu.matmul %515, %516, %cst_232 {dimension_numbers = #tpu.dot_dimension_numbers<[1], [0], [0], [1], [0, 0, 1, 1], [], []>} : vector<8x128xbf16>, vector<128x384xbf16>, vector<8x384xf32> -> vector<8x384xf32>
    %c0_233 = arith.constant 0 : index
    %c0_234 = arith.constant 0 : index
    %518 = vector.load %arg13[%c0_233, %c0_234] : memref<1x384xf32, #tpu.memory_space<vmem>>, vector<1x384xf32>
    %519 = vector.broadcast %518 : vector<1x384xf32> to vector<8x384xf32>
    %520 = arith.addf %517, %519 : vector<8x384xf32>
    %521 = arith.truncf %452 : vector<8x128xf32> to vector<8x128xbf16>
    %c0_235 = arith.constant 0 : index
    %c0_236 = arith.constant 0 : index
    %522 = vector.load %arg12[%c0_235, %c0_236] : memref<128x384xbf16, #tpu.memory_space<vmem>>, vector<128x384xbf16>
    %cst_237 = arith.constant dense<0.000000e+00> : vector<8x384xf32>
    %523 = tpu.matmul %521, %522, %cst_237 {dimension_numbers = #tpu.dot_dimension_numbers<[1], [0], [0], [1], [0, 0, 1, 1], [], []>} : vector<8x128xbf16>, vector<128x384xbf16>, vector<8x384xf32> -> vector<8x384xf32>
    %524 = vector.extract_strided_slice %520 {offsets = [0, 0], sizes = [8, 256], strides = [1, 1]} : vector<8x384xf32> to vector<8x256xf32>
    %525 = vector.extract_strided_slice %523 {offsets = [0, 0], sizes = [8, 256], strides = [1, 1]} : vector<8x384xf32> to vector<8x256xf32>
    %526 = arith.addf %524, %525 : vector<8x256xf32>
    %527 = arith.negf %526 : vector<8x256xf32>
    %528 = math.exp %527 : vector<8x256xf32>
    %cst_238 = arith.constant 1.000000e+00 : f32
    %529 = vector.broadcast %cst_238 : f32 to vector<8x256xf32>
    %530 = arith.addf %529, %528 : vector<8x256xf32>
    %531 = arith.divf %529, %530 : vector<8x256xf32>
    %532 = vector.extract_strided_slice %531 {offsets = [0, 0], sizes = [8, 128], strides = [1, 1]} : vector<8x256xf32> to vector<8x128xf32>
    %533 = vector.extract_strided_slice %531 {offsets = [0, 128], sizes = [8, 128], strides = [1, 1]} : vector<8x256xf32> to vector<8x128xf32>
    %534 = vector.extract_strided_slice %520 {offsets = [0, 256], sizes = [8, 128], strides = [1, 1]} : vector<8x384xf32> to vector<8x128xf32>
    %535 = vector.extract_strided_slice %523 {offsets = [0, 256], sizes = [8, 128], strides = [1, 1]} : vector<8x384xf32> to vector<8x128xf32>
    %c0_239 = arith.constant 0 : index
    %c0_240 = arith.constant 0 : index
    %536 = vector.load %arg14[%c0_239, %c0_240] : memref<1x128xf32, #tpu.memory_space<vmem>>, vector<1x128xf32>
    %537 = vector.broadcast %536 : vector<1x128xf32> to vector<8x128xf32>
    %538 = arith.addf %535, %537 : vector<8x128xf32>
    %539 = arith.mulf %532, %538 : vector<8x128xf32>
    %540 = arith.addf %534, %539 : vector<8x128xf32>
    %541 = math.tanh %540 : vector<8x128xf32>
    %cst_241 = arith.constant 1.000000e+00 : f32
    %542 = vector.broadcast %cst_241 : f32 to vector<8x128xf32>
    %543 = arith.subf %542, %533 : vector<8x128xf32>
    %544 = arith.mulf %543, %541 : vector<8x128xf32>
    %545 = arith.mulf %533, %452 : vector<8x128xf32>
    %546 = arith.addf %544, %545 : vector<8x128xf32>
    %547 = arith.truncf %546 : vector<8x128xf32> to vector<8x128xbf16>
    %c0_242 = arith.constant 0 : index
    %c0_243 = arith.constant 0 : index
    %548 = vector.load %arg15[%c0_242, %c0_243] : memref<128x128xbf16, #tpu.memory_space<vmem>>, vector<128x128xbf16>
    %cst_244 = arith.constant dense<0.000000e+00> : vector<8x128xf32>
    %549 = tpu.matmul %547, %548, %cst_244 {dimension_numbers = #tpu.dot_dimension_numbers<[1], [0], [0], [1], [0, 0, 1, 1], [], []>} : vector<8x128xbf16>, vector<128x128xbf16>, vector<8x128xf32> -> vector<8x128xf32>
    %c0_245 = arith.constant 0 : index
    %c0_246 = arith.constant 0 : index
    %550 = vector.load %arg16[%c0_245, %c0_246] : memref<1x128xf32, #tpu.memory_space<vmem>>, vector<1x128xf32>
    %551 = vector.broadcast %550 : vector<1x128xf32> to vector<8x128xf32>
    %552 = arith.addf %549, %551 : vector<8x128xf32>
    %c5 = arith.constant 5 : index
    %c0_247 = arith.constant 0 : index
    %c0_248 = arith.constant 0 : index
    %553 = vector.load %arg17[%c5, %c0_247, %c0_248] : memref<8x8x128xf32, #tpu.memory_space<vmem>>, vector<1x8x128xf32>
    %554 = vector.shape_cast %553 : vector<1x8x128xf32> to vector<8x128xf32>
    %555 = vector.shape_cast %552 : vector<8x128xf32> to vector<1x8x128xf32>
    tpu.vector_store %arg17[%c5, %c0_247, %c0_248], %555 {strides = array<i32>} : memref<8x8x128xf32, #tpu.memory_space<vmem>>, vector<1x8x128xf32>,
    %556 = arith.select %3, %552, %4 : vector<8x128xi1>, vector<8x128xf32>
    %cst_249 = arith.constant dense<0xFF800000> : vector<8xf32>
    %557 = vector.multi_reduction <maximumf>, %556, %cst_249 [1] : vector<8x128xf32> to vector<8xf32>
    %558 = vector.shape_cast %557 : vector<8xf32> to vector<8x1xf32>
    %559 = vector.broadcast %558 : vector<8x1xf32> to vector<8x128xf32>
    %560 = arith.cmpf oeq, %556, %559 : vector<8x128xf32>
    %561 = arith.select %560, %1, %5 : vector<8x128xi1>, vector<8x128xf32>
    %cst_250 = arith.constant dense<0x7F800000> : vector<8xf32>
    %562 = vector.multi_reduction <minimumf>, %561, %cst_250 [1] : vector<8x128xf32> to vector<8xf32>
    %563 = vector.shape_cast %562 : vector<8xf32> to vector<8x1xf32>
    %564 = vector.broadcast %563 : vector<8x1xf32> to vector<8x128xf32>
    %565 = arith.cmpf oeq, %1, %564 : vector<8x128xf32>
    %566 = arith.extui %565 : vector<8x128xi1> to vector<8x128xi32>
    %567 = arith.sitofp %566 : vector<8x128xi32> to vector<8x128xf32>
    %568 = arith.truncf %567 : vector<8x128xf32> to vector<8x128xbf16>
    %c0_251 = arith.constant 0 : index
    %c0_252 = arith.constant 0 : index
    %569 = vector.load %arg5[%c0_251, %c0_252] : memref<128x128xbf16, #tpu.memory_space<vmem>>, vector<128x128xbf16>
    %cst_253 = arith.constant dense<0.000000e+00> : vector<8x128xf32>
    %570 = tpu.matmul %568, %569, %cst_253 {dimension_numbers = #tpu.dot_dimension_numbers<[1], [0], [0], [1], [0, 0, 1, 1], [], []>} : vector<8x128xbf16>, vector<128x128xbf16>, vector<8x128xf32> -> vector<8x128xf32>
    %c5_254 = arith.constant 5 : index
    %c0_255 = arith.constant 0 : index
    %c0_256 = arith.constant 0 : index
    %571 = vector.load %arg4[%c5_254, %c0_255, %c0_256] : memref<8x8x128xf32, #tpu.memory_space<vmem>>, vector<1x8x128xf32>
    %572 = vector.shape_cast %571 : vector<1x8x128xf32> to vector<8x128xf32>
    %573 = arith.mulf %570, %572 : vector<8x128xf32>
    %c5_257 = arith.constant 5 : index
    %c0_258 = arith.constant 0 : index
    %c0_259 = arith.constant 0 : index
    %574 = vector.load %arg3[%c5_257, %c0_258, %c0_259] : memref<8x8x128xf32, #tpu.memory_space<vmem>>, vector<1x8x128xf32>
    %575 = vector.shape_cast %574 : vector<1x8x128xf32> to vector<8x128xf32>
    %576 = arith.addf %573, %575 : vector<8x128xf32>
    %577 = arith.truncf %576 : vector<8x128xf32> to vector<8x128xbf16>
    %c0_260 = arith.constant 0 : index
    %c0_261 = arith.constant 0 : index
    %578 = vector.load %arg7[%c0_260, %c0_261] : memref<128x384xbf16, #tpu.memory_space<vmem>>, vector<128x384xbf16>
    %cst_262 = arith.constant dense<0.000000e+00> : vector<8x384xf32>
    %579 = tpu.matmul %577, %578, %cst_262 {dimension_numbers = #tpu.dot_dimension_numbers<[1], [0], [0], [1], [0, 0, 1, 1], [], []>} : vector<8x128xbf16>, vector<128x384xbf16>, vector<8x384xf32> -> vector<8x384xf32>
    %c0_263 = arith.constant 0 : index
    %c0_264 = arith.constant 0 : index
    %580 = vector.load %arg9[%c0_263, %c0_264] : memref<1x384xf32, #tpu.memory_space<vmem>>, vector<1x384xf32>
    %581 = vector.broadcast %580 : vector<1x384xf32> to vector<8x384xf32>
    %582 = arith.addf %579, %581 : vector<8x384xf32>
    %583 = arith.truncf %514 : vector<8x128xf32> to vector<8x128xbf16>
    %c0_265 = arith.constant 0 : index
    %c0_266 = arith.constant 0 : index
    %584 = vector.load %arg8[%c0_265, %c0_266] : memref<128x384xbf16, #tpu.memory_space<vmem>>, vector<128x384xbf16>
    %cst_267 = arith.constant dense<0.000000e+00> : vector<8x384xf32>
    %585 = tpu.matmul %583, %584, %cst_267 {dimension_numbers = #tpu.dot_dimension_numbers<[1], [0], [0], [1], [0, 0, 1, 1], [], []>} : vector<8x128xbf16>, vector<128x384xbf16>, vector<8x384xf32> -> vector<8x384xf32>
    %586 = vector.extract_strided_slice %582 {offsets = [0, 0], sizes = [8, 256], strides = [1, 1]} : vector<8x384xf32> to vector<8x256xf32>
    %587 = vector.extract_strided_slice %585 {offsets = [0, 0], sizes = [8, 256], strides = [1, 1]} : vector<8x384xf32> to vector<8x256xf32>
    %588 = arith.addf %586, %587 : vector<8x256xf32>
    %589 = arith.negf %588 : vector<8x256xf32>
    %590 = math.exp %589 : vector<8x256xf32>
    %cst_268 = arith.constant 1.000000e+00 : f32
    %591 = vector.broadcast %cst_268 : f32 to vector<8x256xf32>
    %592 = arith.addf %591, %590 : vector<8x256xf32>
    %593 = arith.divf %591, %592 : vector<8x256xf32>
    %594 = vector.extract_strided_slice %593 {offsets = [0, 0], sizes = [8, 128], strides = [1, 1]} : vector<8x256xf32> to vector<8x128xf32>
    %595 = vector.extract_strided_slice %593 {offsets = [0, 128], sizes = [8, 128], strides = [1, 1]} : vector<8x256xf32> to vector<8x128xf32>
    %596 = vector.extract_strided_slice %582 {offsets = [0, 256], sizes = [8, 128], strides = [1, 1]} : vector<8x384xf32> to vector<8x128xf32>
    %597 = vector.extract_strided_slice %585 {offsets = [0, 256], sizes = [8, 128], strides = [1, 1]} : vector<8x384xf32> to vector<8x128xf32>
    %c0_269 = arith.constant 0 : index
    %c0_270 = arith.constant 0 : index
    %598 = vector.load %arg10[%c0_269, %c0_270] : memref<1x128xf32, #tpu.memory_space<vmem>>, vector<1x128xf32>
    %599 = vector.broadcast %598 : vector<1x128xf32> to vector<8x128xf32>
    %600 = arith.addf %597, %599 : vector<8x128xf32>
    %601 = arith.mulf %594, %600 : vector<8x128xf32>
    %602 = arith.addf %596, %601 : vector<8x128xf32>
    %603 = math.tanh %602 : vector<8x128xf32>
    %cst_271 = arith.constant 1.000000e+00 : f32
    %604 = vector.broadcast %cst_271 : f32 to vector<8x128xf32>
    %605 = arith.subf %604, %595 : vector<8x128xf32>
    %606 = arith.mulf %605, %603 : vector<8x128xf32>
    %607 = arith.mulf %595, %514 : vector<8x128xf32>
    %608 = arith.addf %606, %607 : vector<8x128xf32>
    %609 = arith.truncf %608 : vector<8x128xf32> to vector<8x128xbf16>
    %c0_272 = arith.constant 0 : index
    %c0_273 = arith.constant 0 : index
    %610 = vector.load %arg11[%c0_272, %c0_273] : memref<128x384xbf16, #tpu.memory_space<vmem>>, vector<128x384xbf16>
    %cst_274 = arith.constant dense<0.000000e+00> : vector<8x384xf32>
    %611 = tpu.matmul %609, %610, %cst_274 {dimension_numbers = #tpu.dot_dimension_numbers<[1], [0], [0], [1], [0, 0, 1, 1], [], []>} : vector<8x128xbf16>, vector<128x384xbf16>, vector<8x384xf32> -> vector<8x384xf32>
    %c0_275 = arith.constant 0 : index
    %c0_276 = arith.constant 0 : index
    %612 = vector.load %arg13[%c0_275, %c0_276] : memref<1x384xf32, #tpu.memory_space<vmem>>, vector<1x384xf32>
    %613 = vector.broadcast %612 : vector<1x384xf32> to vector<8x384xf32>
    %614 = arith.addf %611, %613 : vector<8x384xf32>
    %615 = arith.truncf %546 : vector<8x128xf32> to vector<8x128xbf16>
    %c0_277 = arith.constant 0 : index
    %c0_278 = arith.constant 0 : index
    %616 = vector.load %arg12[%c0_277, %c0_278] : memref<128x384xbf16, #tpu.memory_space<vmem>>, vector<128x384xbf16>
    %cst_279 = arith.constant dense<0.000000e+00> : vector<8x384xf32>
    %617 = tpu.matmul %615, %616, %cst_279 {dimension_numbers = #tpu.dot_dimension_numbers<[1], [0], [0], [1], [0, 0, 1, 1], [], []>} : vector<8x128xbf16>, vector<128x384xbf16>, vector<8x384xf32> -> vector<8x384xf32>
    %618 = vector.extract_strided_slice %614 {offsets = [0, 0], sizes = [8, 256], strides = [1, 1]} : vector<8x384xf32> to vector<8x256xf32>
    %619 = vector.extract_strided_slice %617 {offsets = [0, 0], sizes = [8, 256], strides = [1, 1]} : vector<8x384xf32> to vector<8x256xf32>
    %620 = arith.addf %618, %619 : vector<8x256xf32>
    %621 = arith.negf %620 : vector<8x256xf32>
    %622 = math.exp %621 : vector<8x256xf32>
    %cst_280 = arith.constant 1.000000e+00 : f32
    %623 = vector.broadcast %cst_280 : f32 to vector<8x256xf32>
    %624 = arith.addf %623, %622 : vector<8x256xf32>
    %625 = arith.divf %623, %624 : vector<8x256xf32>
    %626 = vector.extract_strided_slice %625 {offsets = [0, 0], sizes = [8, 128], strides = [1, 1]} : vector<8x256xf32> to vector<8x128xf32>
    %627 = vector.extract_strided_slice %625 {offsets = [0, 128], sizes = [8, 128], strides = [1, 1]} : vector<8x256xf32> to vector<8x128xf32>
    %628 = vector.extract_strided_slice %614 {offsets = [0, 256], sizes = [8, 128], strides = [1, 1]} : vector<8x384xf32> to vector<8x128xf32>
    %629 = vector.extract_strided_slice %617 {offsets = [0, 256], sizes = [8, 128], strides = [1, 1]} : vector<8x384xf32> to vector<8x128xf32>
    %c0_281 = arith.constant 0 : index
    %c0_282 = arith.constant 0 : index
    %630 = vector.load %arg14[%c0_281, %c0_282] : memref<1x128xf32, #tpu.memory_space<vmem>>, vector<1x128xf32>
    %631 = vector.broadcast %630 : vector<1x128xf32> to vector<8x128xf32>
    %632 = arith.addf %629, %631 : vector<8x128xf32>
    %633 = arith.mulf %626, %632 : vector<8x128xf32>
    %634 = arith.addf %628, %633 : vector<8x128xf32>
    %635 = math.tanh %634 : vector<8x128xf32>
    %cst_283 = arith.constant 1.000000e+00 : f32
    %636 = vector.broadcast %cst_283 : f32 to vector<8x128xf32>
    %637 = arith.subf %636, %627 : vector<8x128xf32>
    %638 = arith.mulf %637, %635 : vector<8x128xf32>
    %639 = arith.mulf %627, %546 : vector<8x128xf32>
    %640 = arith.addf %638, %639 : vector<8x128xf32>
    %641 = arith.truncf %640 : vector<8x128xf32> to vector<8x128xbf16>
    %c0_284 = arith.constant 0 : index
    %c0_285 = arith.constant 0 : index
    %642 = vector.load %arg15[%c0_284, %c0_285] : memref<128x128xbf16, #tpu.memory_space<vmem>>, vector<128x128xbf16>
    %cst_286 = arith.constant dense<0.000000e+00> : vector<8x128xf32>
    %643 = tpu.matmul %641, %642, %cst_286 {dimension_numbers = #tpu.dot_dimension_numbers<[1], [0], [0], [1], [0, 0, 1, 1], [], []>} : vector<8x128xbf16>, vector<128x128xbf16>, vector<8x128xf32> -> vector<8x128xf32>
    %c0_287 = arith.constant 0 : index
    %c0_288 = arith.constant 0 : index
    %644 = vector.load %arg16[%c0_287, %c0_288] : memref<1x128xf32, #tpu.memory_space<vmem>>, vector<1x128xf32>
    %645 = vector.broadcast %644 : vector<1x128xf32> to vector<8x128xf32>
    %646 = arith.addf %643, %645 : vector<8x128xf32>
    %c6 = arith.constant 6 : index
    %c0_289 = arith.constant 0 : index
    %c0_290 = arith.constant 0 : index
    %647 = vector.load %arg17[%c6, %c0_289, %c0_290] : memref<8x8x128xf32, #tpu.memory_space<vmem>>, vector<1x8x128xf32>
    %648 = vector.shape_cast %647 : vector<1x8x128xf32> to vector<8x128xf32>
    %649 = vector.shape_cast %646 : vector<8x128xf32> to vector<1x8x128xf32>
    tpu.vector_store %arg17[%c6, %c0_289, %c0_290], %649 {strides = array<i32>} : memref<8x8x128xf32, #tpu.memory_space<vmem>>, vector<1x8x128xf32>,
    %650 = arith.select %3, %646, %4 : vector<8x128xi1>, vector<8x128xf32>
    %cst_291 = arith.constant dense<0xFF800000> : vector<8xf32>
    %651 = vector.multi_reduction <maximumf>, %650, %cst_291 [1] : vector<8x128xf32> to vector<8xf32>
    %652 = vector.shape_cast %651 : vector<8xf32> to vector<8x1xf32>
    %653 = vector.broadcast %652 : vector<8x1xf32> to vector<8x128xf32>
    %654 = arith.cmpf oeq, %650, %653 : vector<8x128xf32>
    %655 = arith.select %654, %1, %5 : vector<8x128xi1>, vector<8x128xf32>
    %cst_292 = arith.constant dense<0x7F800000> : vector<8xf32>
    %656 = vector.multi_reduction <minimumf>, %655, %cst_292 [1] : vector<8x128xf32> to vector<8xf32>
    %657 = vector.shape_cast %656 : vector<8xf32> to vector<8x1xf32>
    %658 = vector.broadcast %657 : vector<8x1xf32> to vector<8x128xf32>
    %659 = arith.cmpf oeq, %1, %658 : vector<8x128xf32>
    %660 = arith.extui %659 : vector<8x128xi1> to vector<8x128xi32>
    %661 = arith.sitofp %660 : vector<8x128xi32> to vector<8x128xf32>
    %662 = arith.truncf %661 : vector<8x128xf32> to vector<8x128xbf16>
    %c0_293 = arith.constant 0 : index
    %c0_294 = arith.constant 0 : index
    %663 = vector.load %arg5[%c0_293, %c0_294] : memref<128x128xbf16, #tpu.memory_space<vmem>>, vector<128x128xbf16>
    %cst_295 = arith.constant dense<0.000000e+00> : vector<8x128xf32>
    %664 = tpu.matmul %662, %663, %cst_295 {dimension_numbers = #tpu.dot_dimension_numbers<[1], [0], [0], [1], [0, 0, 1, 1], [], []>} : vector<8x128xbf16>, vector<128x128xbf16>, vector<8x128xf32> -> vector<8x128xf32>
    %c6_296 = arith.constant 6 : index
    %c0_297 = arith.constant 0 : index
    %c0_298 = arith.constant 0 : index
    %665 = vector.load %arg4[%c6_296, %c0_297, %c0_298] : memref<8x8x128xf32, #tpu.memory_space<vmem>>, vector<1x8x128xf32>
    %666 = vector.shape_cast %665 : vector<1x8x128xf32> to vector<8x128xf32>
    %667 = arith.mulf %664, %666 : vector<8x128xf32>
    %c6_299 = arith.constant 6 : index
    %c0_300 = arith.constant 0 : index
    %c0_301 = arith.constant 0 : index
    %668 = vector.load %arg3[%c6_299, %c0_300, %c0_301] : memref<8x8x128xf32, #tpu.memory_space<vmem>>, vector<1x8x128xf32>
    %669 = vector.shape_cast %668 : vector<1x8x128xf32> to vector<8x128xf32>
    %670 = arith.addf %667, %669 : vector<8x128xf32>
    %671 = arith.truncf %670 : vector<8x128xf32> to vector<8x128xbf16>
    %c0_302 = arith.constant 0 : index
    %c0_303 = arith.constant 0 : index
    %672 = vector.load %arg7[%c0_302, %c0_303] : memref<128x384xbf16, #tpu.memory_space<vmem>>, vector<128x384xbf16>
    %cst_304 = arith.constant dense<0.000000e+00> : vector<8x384xf32>
    %673 = tpu.matmul %671, %672, %cst_304 {dimension_numbers = #tpu.dot_dimension_numbers<[1], [0], [0], [1], [0, 0, 1, 1], [], []>} : vector<8x128xbf16>, vector<128x384xbf16>, vector<8x384xf32> -> vector<8x384xf32>
    %c0_305 = arith.constant 0 : index
    %c0_306 = arith.constant 0 : index
    %674 = vector.load %arg9[%c0_305, %c0_306] : memref<1x384xf32, #tpu.memory_space<vmem>>, vector<1x384xf32>
    %675 = vector.broadcast %674 : vector<1x384xf32> to vector<8x384xf32>
    %676 = arith.addf %673, %675 : vector<8x384xf32>
    %677 = arith.truncf %608 : vector<8x128xf32> to vector<8x128xbf16>
    %c0_307 = arith.constant 0 : index
    %c0_308 = arith.constant 0 : index
    %678 = vector.load %arg8[%c0_307, %c0_308] : memref<128x384xbf16, #tpu.memory_space<vmem>>, vector<128x384xbf16>
    %cst_309 = arith.constant dense<0.000000e+00> : vector<8x384xf32>
    %679 = tpu.matmul %677, %678, %cst_309 {dimension_numbers = #tpu.dot_dimension_numbers<[1], [0], [0], [1], [0, 0, 1, 1], [], []>} : vector<8x128xbf16>, vector<128x384xbf16>, vector<8x384xf32> -> vector<8x384xf32>
    %680 = vector.extract_strided_slice %676 {offsets = [0, 0], sizes = [8, 256], strides = [1, 1]} : vector<8x384xf32> to vector<8x256xf32>
    %681 = vector.extract_strided_slice %679 {offsets = [0, 0], sizes = [8, 256], strides = [1, 1]} : vector<8x384xf32> to vector<8x256xf32>
    %682 = arith.addf %680, %681 : vector<8x256xf32>
    %683 = arith.negf %682 : vector<8x256xf32>
    %684 = math.exp %683 : vector<8x256xf32>
    %cst_310 = arith.constant 1.000000e+00 : f32
    %685 = vector.broadcast %cst_310 : f32 to vector<8x256xf32>
    %686 = arith.addf %685, %684 : vector<8x256xf32>
    %687 = arith.divf %685, %686 : vector<8x256xf32>
    %688 = vector.extract_strided_slice %687 {offsets = [0, 0], sizes = [8, 128], strides = [1, 1]} : vector<8x256xf32> to vector<8x128xf32>
    %689 = vector.extract_strided_slice %687 {offsets = [0, 128], sizes = [8, 128], strides = [1, 1]} : vector<8x256xf32> to vector<8x128xf32>
    %690 = vector.extract_strided_slice %676 {offsets = [0, 256], sizes = [8, 128], strides = [1, 1]} : vector<8x384xf32> to vector<8x128xf32>
    %691 = vector.extract_strided_slice %679 {offsets = [0, 256], sizes = [8, 128], strides = [1, 1]} : vector<8x384xf32> to vector<8x128xf32>
    %c0_311 = arith.constant 0 : index
    %c0_312 = arith.constant 0 : index
    %692 = vector.load %arg10[%c0_311, %c0_312] : memref<1x128xf32, #tpu.memory_space<vmem>>, vector<1x128xf32>
    %693 = vector.broadcast %692 : vector<1x128xf32> to vector<8x128xf32>
    %694 = arith.addf %691, %693 : vector<8x128xf32>
    %695 = arith.mulf %688, %694 : vector<8x128xf32>
    %696 = arith.addf %690, %695 : vector<8x128xf32>
    %697 = math.tanh %696 : vector<8x128xf32>
    %cst_313 = arith.constant 1.000000e+00 : f32
    %698 = vector.broadcast %cst_313 : f32 to vector<8x128xf32>
    %699 = arith.subf %698, %689 : vector<8x128xf32>
    %700 = arith.mulf %699, %697 : vector<8x128xf32>
    %701 = arith.mulf %689, %608 : vector<8x128xf32>
    %702 = arith.addf %700, %701 : vector<8x128xf32>
    %703 = arith.truncf %702 : vector<8x128xf32> to vector<8x128xbf16>
    %c0_314 = arith.constant 0 : index
    %c0_315 = arith.constant 0 : index
    %704 = vector.load %arg11[%c0_314, %c0_315] : memref<128x384xbf16, #tpu.memory_space<vmem>>, vector<128x384xbf16>
    %cst_316 = arith.constant dense<0.000000e+00> : vector<8x384xf32>
    %705 = tpu.matmul %703, %704, %cst_316 {dimension_numbers = #tpu.dot_dimension_numbers<[1], [0], [0], [1], [0, 0, 1, 1], [], []>} : vector<8x128xbf16>, vector<128x384xbf16>, vector<8x384xf32> -> vector<8x384xf32>
    %c0_317 = arith.constant 0 : index
    %c0_318 = arith.constant 0 : index
    %706 = vector.load %arg13[%c0_317, %c0_318] : memref<1x384xf32, #tpu.memory_space<vmem>>, vector<1x384xf32>
    %707 = vector.broadcast %706 : vector<1x384xf32> to vector<8x384xf32>
    %708 = arith.addf %705, %707 : vector<8x384xf32>
    %709 = arith.truncf %640 : vector<8x128xf32> to vector<8x128xbf16>
    %c0_319 = arith.constant 0 : index
    %c0_320 = arith.constant 0 : index
    %710 = vector.load %arg12[%c0_319, %c0_320] : memref<128x384xbf16, #tpu.memory_space<vmem>>, vector<128x384xbf16>
    %cst_321 = arith.constant dense<0.000000e+00> : vector<8x384xf32>
    %711 = tpu.matmul %709, %710, %cst_321 {dimension_numbers = #tpu.dot_dimension_numbers<[1], [0], [0], [1], [0, 0, 1, 1], [], []>} : vector<8x128xbf16>, vector<128x384xbf16>, vector<8x384xf32> -> vector<8x384xf32>
    %712 = vector.extract_strided_slice %708 {offsets = [0, 0], sizes = [8, 256], strides = [1, 1]} : vector<8x384xf32> to vector<8x256xf32>
    %713 = vector.extract_strided_slice %711 {offsets = [0, 0], sizes = [8, 256], strides = [1, 1]} : vector<8x384xf32> to vector<8x256xf32>
    %714 = arith.addf %712, %713 : vector<8x256xf32>
    %715 = arith.negf %714 : vector<8x256xf32>
    %716 = math.exp %715 : vector<8x256xf32>
    %cst_322 = arith.constant 1.000000e+00 : f32
    %717 = vector.broadcast %cst_322 : f32 to vector<8x256xf32>
    %718 = arith.addf %717, %716 : vector<8x256xf32>
    %719 = arith.divf %717, %718 : vector<8x256xf32>
    %720 = vector.extract_strided_slice %719 {offsets = [0, 0], sizes = [8, 128], strides = [1, 1]} : vector<8x256xf32> to vector<8x128xf32>
    %721 = vector.extract_strided_slice %719 {offsets = [0, 128], sizes = [8, 128], strides = [1, 1]} : vector<8x256xf32> to vector<8x128xf32>
    %722 = vector.extract_strided_slice %708 {offsets = [0, 256], sizes = [8, 128], strides = [1, 1]} : vector<8x384xf32> to vector<8x128xf32>
    %723 = vector.extract_strided_slice %711 {offsets = [0, 256], sizes = [8, 128], strides = [1, 1]} : vector<8x384xf32> to vector<8x128xf32>
    %c0_323 = arith.constant 0 : index
    %c0_324 = arith.constant 0 : index
    %724 = vector.load %arg14[%c0_323, %c0_324] : memref<1x128xf32, #tpu.memory_space<vmem>>, vector<1x128xf32>
    %725 = vector.broadcast %724 : vector<1x128xf32> to vector<8x128xf32>
    %726 = arith.addf %723, %725 : vector<8x128xf32>
    %727 = arith.mulf %720, %726 : vector<8x128xf32>
    %728 = arith.addf %722, %727 : vector<8x128xf32>
    %729 = math.tanh %728 : vector<8x128xf32>
    %cst_325 = arith.constant 1.000000e+00 : f32
    %730 = vector.broadcast %cst_325 : f32 to vector<8x128xf32>
    %731 = arith.subf %730, %721 : vector<8x128xf32>
    %732 = arith.mulf %731, %729 : vector<8x128xf32>
    %733 = arith.mulf %721, %640 : vector<8x128xf32>
    %734 = arith.addf %732, %733 : vector<8x128xf32>
    %735 = arith.truncf %734 : vector<8x128xf32> to vector<8x128xbf16>
    %c0_326 = arith.constant 0 : index
    %c0_327 = arith.constant 0 : index
    %736 = vector.load %arg15[%c0_326, %c0_327] : memref<128x128xbf16, #tpu.memory_space<vmem>>, vector<128x128xbf16>
    %cst_328 = arith.constant dense<0.000000e+00> : vector<8x128xf32>
    %737 = tpu.matmul %735, %736, %cst_328 {dimension_numbers = #tpu.dot_dimension_numbers<[1], [0], [0], [1], [0, 0, 1, 1], [], []>} : vector<8x128xbf16>, vector<128x128xbf16>, vector<8x128xf32> -> vector<8x128xf32>
    %c0_329 = arith.constant 0 : index
    %c0_330 = arith.constant 0 : index
    %738 = vector.load %arg16[%c0_329, %c0_330] : memref<1x128xf32, #tpu.memory_space<vmem>>, vector<1x128xf32>
    %739 = vector.broadcast %738 : vector<1x128xf32> to vector<8x128xf32>
    %740 = arith.addf %737, %739 : vector<8x128xf32>
    %c7 = arith.constant 7 : index
    %c0_331 = arith.constant 0 : index
    %c0_332 = arith.constant 0 : index
    %741 = vector.load %arg17[%c7, %c0_331, %c0_332] : memref<8x8x128xf32, #tpu.memory_space<vmem>>, vector<1x8x128xf32>
    %742 = vector.shape_cast %741 : vector<1x8x128xf32> to vector<8x128xf32>
    %743 = vector.shape_cast %740 : vector<8x128xf32> to vector<1x8x128xf32>
    tpu.vector_store %arg17[%c7, %c0_331, %c0_332], %743 {strides = array<i32>} : memref<8x8x128xf32, #tpu.memory_space<vmem>>, vector<1x8x128xf32>,
    return
  }
  func.func @transform_0(%arg0: i32) -> (i32, i32) {
    %c0_i32 = arith.constant 0 : i32
    %c0_i32_0 = arith.constant 0 : i32
    %c0_i32_1 = arith.constant 0 : i32
    return %c0_i32, %c0_i32_0 : i32, i32
  }
  func.func @transform_1(%arg0: i32) -> (i32, i32) {
    %c0_i32 = arith.constant 0 : i32
    %c0_i32_0 = arith.constant 0 : i32
    %c0_i32_1 = arith.constant 0 : i32
    return %c0_i32, %c0_i32_0 : i32, i32
  }
  func.func @transform_2(%arg0: i32) -> (i32, i32, i32) {
    %c0_i32 = arith.constant 0 : i32
    %c0_i32_0 = arith.constant 0 : i32
    %c0_i32_1 = arith.constant 0 : i32
    %c0_i32_2 = arith.constant 0 : i32
    return %c0_i32, %c0_i32_0, %c0_i32_1 : i32, i32, i32
  }
  func.func @transform_3(%arg0: i32) -> (i32, i32, i32) {
    %c0_i32 = arith.constant 0 : i32
    %c0_i32_0 = arith.constant 0 : i32
    %c0_i32_1 = arith.constant 0 : i32
    %c0_i32_2 = arith.constant 0 : i32
    return %c0_i32, %c0_i32_0, %c0_i32_1 : i32, i32, i32
  }
  func.func @transform_4(%arg0: i32) -> (i32, i32) {
    %c0_i32 = arith.constant 0 : i32
    %c0_i32_0 = arith.constant 0 : i32
    %c0_i32_1 = arith.constant 0 : i32
    return %c0_i32, %c0_i32_0 : i32, i32
  }
  func.func @transform_5(%arg0: i32) -> (i32, i32) {
    %c0_i32 = arith.constant 0 : i32
    %c0_i32_0 = arith.constant 0 : i32
    %c0_i32_1 = arith.constant 0 : i32
    return %c0_i32, %c0_i32_0 : i32, i32
  }
  func.func @transform_6(%arg0: i32) -> (i32, i32) {
    %c0_i32 = arith.constant 0 : i32
    %c0_i32_0 = arith.constant 0 : i32
    %c0_i32_1 = arith.constant 0 : i32
    return %c0_i32, %c0_i32_0 : i32, i32
  }
  func.func @transform_7(%arg0: i32) -> (i32, i32) {
    %c0_i32 = arith.constant 0 : i32
    %c0_i32_0 = arith.constant 0 : i32
    %c0_i32_1 = arith.constant 0 : i32
    return %c0_i32, %c0_i32_0 : i32, i32
  }
  func.func @transform_8(%arg0: i32) -> (i32, i32) {
    %c0_i32 = arith.constant 0 : i32
    %c0_i32_0 = arith.constant 0 : i32
    %c0_i32_1 = arith.constant 0 : i32
    return %c0_i32, %c0_i32_0 : i32, i32
  }
  func.func @transform_9(%arg0: i32) -> (i32, i32) {
    %c0_i32 = arith.constant 0 : i32
    %c0_i32_0 = arith.constant 0 : i32
    %c0_i32_1 = arith.constant 0 : i32
    return %c0_i32, %c0_i32_0 : i32, i32
  }
  func.func @transform_10(%arg0: i32) -> (i32, i32) {
    %c0_i32 = arith.constant 0 : i32
    %c0_i32_0 = arith.constant 0 : i32
    %c0_i32_1 = arith.constant 0 : i32
    return %c0_i32, %c0_i32_0 : i32, i32
  }
  func.func @transform_11(%arg0: i32) -> (i32, i32) {
    %c0_i32 = arith.constant 0 : i32
    %c0_i32_0 = arith.constant 0 : i32
    %c0_i32_1 = arith.constant 0 : i32
    return %c0_i32, %c0_i32_0 : i32, i32
  }
  func.func @transform_12(%arg0: i32) -> (i32, i32) {
    %c0_i32 = arith.constant 0 : i32
    %c0_i32_0 = arith.constant 0 : i32
    %c0_i32_1 = arith.constant 0 : i32
    return %c0_i32, %c0_i32_0 : i32, i32
  }
  func.func @transform_13(%arg0: i32) -> (i32, i32) {
    %c0_i32 = arith.constant 0 : i32
    %c0_i32_0 = arith.constant 0 : i32
    %c0_i32_1 = arith.constant 0 : i32
    return %c0_i32, %c0_i32_0 : i32, i32
  }
  func.func @transform_14(%arg0: i32) -> (i32, i32) {
    %c0_i32 = arith.constant 0 : i32
    %c0_i32_0 = arith.constant 0 : i32
    %c0_i32_1 = arith.constant 0 : i32
    return %c0_i32, %c0_i32_0 : i32, i32
  }
  func.func @transform_15(%arg0: i32) -> (i32, i32) {
    %c0_i32 = arith.constant 0 : i32
    %c0_i32_0 = arith.constant 0 : i32
    %c0_i32_1 = arith.constant 0 : i32
    return %c0_i32, %c0_i32_0 : i32, i32
  }
  func.func @transform_16(%arg0: i32) -> (i32, i32, i32) {
    %c0_i32 = arith.constant 0 : i32
    %c0_i32_0 = arith.constant 0 : i32
    %c0_i32_1 = arith.constant 0 : i32
    %c0_i32_2 = arith.constant 0 : i32
    return %c0_i32, %c0_i32_0, %c0_i32_1 : i32, i32, i32
  }
}

</mosaic_0001>

<llo_original>
// kernel: seq2seq_forward.1
$region0: #{seq2seq_forward.1}
  #allocation0 [shape = 'u32[]', space=smem, size = 0x4, offset = 0x4, fixed_abs, tag = 'smem constant byte address 0x4 - core index']
  #allocation1 [shape = 'u32[72,128]{1,0:T(1,128)}', space=vmem, size = 0x9000, scoped, tag = 'internal scratch']
  %s0 = inlined_call_operand.vmem [shape: f32[8,128], index: 0, kind: input, shape index: {}]
  %s1 = inlined_call_operand.vmem [shape: f32[8,128], index: 1, kind: input, shape index: {}]
  %s2 = inlined_call_operand.vmem [shape: f32[8,8,128], index: 2, kind: input, shape index: {}]
  %s3 = inlined_call_operand.vmem [shape: f32[8,8,128], index: 3, kind: input, shape index: {}]
  %s4 = inlined_call_operand.vmem [shape: bf16[128,128], index: 4, kind: input, shape index: {}]
  %s5 = inlined_call_operand.vmem [shape: bf16[128,128], index: 5, kind: input, shape index: {}]
  %s6 = inlined_call_operand.vmem [shape: bf16[128,384], index: 6, kind: input, shape index: {}]
  %s7 = inlined_call_operand.vmem [shape: bf16[128,384], index: 7, kind: input, shape index: {}]
  %s8 = inlined_call_operand.vmem [shape: f32[1,384], index: 8, kind: input, shape index: {}]
  %s9 = inlined_call_operand.vmem [shape: f32[1,128], index: 9, kind: input, shape index: {}]
  %s10 = inlined_call_operand.vmem [shape: bf16[128,384], index: 10, kind: input, shape index: {}]
  %s11 = inlined_call_operand.vmem [shape: bf16[128,384], index: 11, kind: input, shape index: {}]
  %s12 = inlined_call_operand.vmem [shape: f32[1,384], index: 12, kind: input, shape index: {}]
  %s13 = inlined_call_operand.vmem [shape: f32[1,128], index: 13, kind: input, shape index: {}]
  %s14 = inlined_call_operand.vmem [shape: bf16[128,128], index: 14, kind: input, shape index: {}]
  %s15 = inlined_call_operand.vmem [shape: f32[1,128], index: 15, kind: input, shape index: {}]
  %s16 = inlined_call_operand.vmem [shape: f32[8,8,128], index: 16, kind: output, shape index: {}]
  %s17 = sld [smem:[#allocation0]]
  $region74: #{seq2seq_forward.1} parent=0
    _
  %s19 = ssub.s32 1, %s17
  %s20 = scalar_select 0, %s19, %s17
  // Predicated region
  $region2: #{seq2seq_forward.1} parent=0 // pred_check
    _
  $region3: #{seq2seq_forward.1} parent=0 // pred_check_branch
    %22 = sbr.rel (0) target = $region5
  $region4: #{seq2seq_forward.1} parent=0 // pred_region
    _
  $region5: #{seq2seq_forward.1} parent=0 // pred_fallthru
    _
  // Predicated region
  $region6: #{seq2seq_forward.1} parent=0 // pred_check
    _
  $region7: #{seq2seq_forward.1} parent=0 // pred_check_branch
    %24 = sbr.rel (0) target = $region9
  $region8: #{seq2seq_forward.1} parent=0 // pred_region
    _
  $region9: #{seq2seq_forward.1} parent=0 // pred_fallthru
    _
  // Predicated region
  $region10: #{seq2seq_forward.1} parent=0 // pred_check
    _
  $region11: #{seq2seq_forward.1} parent=0 // pred_check_branch
    %26 = sbr.rel (0) target = $region13
  $region12: #{seq2seq_forward.1} parent=0 // pred_region
    _
  $region13: #{seq2seq_forward.1} parent=0 // pred_fallthru
    _
  // Predicated region
  $region14: #{seq2seq_forward.1} parent=0 // pred_check
    _
  $region15: #{seq2seq_forward.1} parent=0 // pred_check_branch
    %28 = sbr.rel (0) target = $region17
  $region16: #{seq2seq_forward.1} parent=0 // pred_region
    _
  $region17: #{seq2seq_forward.1} parent=0 // pred_fallthru
    _
  // Predicated region
  $region18: #{seq2seq_forward.1} parent=0 // pred_check
    _
  $region19: #{seq2seq_forward.1} parent=0 // pred_check_branch
    %30 = sbr.rel (0) target = $region21
  $region20: #{seq2seq_forward.1} parent=0 // pred_region
    _
  $region21: #{seq2seq_forward.1} parent=0 // pred_fallthru
    _
  // Predicated region
  $region22: #{seq2seq_forward.1} parent=0 // pred_check
    _
  $region23: #{seq2seq_forward.1} parent=0 // pred_check_branch
    %32 = sbr.rel (0) target = $region25
  $region24: #{seq2seq_forward.1} parent=0 // pred_region
    _
  $region25: #{seq2seq_forward.1} parent=0 // pred_fallthru
    _
  // Predicated region
  $region26: #{seq2seq_forward.1} parent=0 // pred_check
    _
  $region27: #{seq2seq_forward.1} parent=0 // pred_check_branch
    %34 = sbr.rel (0) target = $region29
  $region28: #{seq2seq_forward.1} parent=0 // pred_region
    _
  $region29: #{seq2seq_forward.1} parent=0 // pred_fallthru
    _
  // Predicated region
  $region30: #{seq2seq_forward.1} parent=0 // pred_check
    _
  $region31: #{seq2seq_forward.1} parent=0 // pred_check_branch
    %36 = sbr.rel (0) target = $region33
  $region32: #{seq2seq_forward.1} parent=0 // pred_region
    _
  $region33: #{seq2seq_forward.1} parent=0 // pred_fallthru
    _
  // Predicated region
  $region34: #{seq2seq_forward.1} parent=0 // pred_check
    _
  $region35: #{seq2seq_forward.1} parent=0 // pred_check_branch
    %38 = sbr.rel (0) target = $region37
  $region36: #{seq2seq_forward.1} parent=0 // pred_region
    _
  $region37: #{seq2seq_forward.1} parent=0 // pred_fallthru
    _
  // Predicated region
  $region38: #{seq2seq_forward.1} parent=0 // pred_check
    _
  $region39: #{seq2seq_forward.1} parent=0 // pred_check_branch
    %40 = sbr.rel (0) target = $region41
  $region40: #{seq2seq_forward.1} parent=0 // pred_region
    _
  $region41: #{seq2seq_forward.1} parent=0 // pred_fallthru
    _
  // Predicated region
  $region42: #{seq2seq_forward.1} parent=0 // pred_check
    _
  $region43: #{seq2seq_forward.1} parent=0 // pred_check_branch
    %42 = sbr.rel (0) target = $region45
  $region44: #{seq2seq_forward.1} parent=0 // pred_region
    _
  $region45: #{seq2seq_forward.1} parent=0 // pred_fallthru
    _
  // Predicated region
  $region46: #{seq2seq_forward.1} parent=0 // pred_check
    _
  $region47: #{seq2seq_forward.1} parent=0 // pred_check_branch
    %44 = sbr.rel (0) target = $region49
  $region48: #{seq2seq_forward.1} parent=0 // pred_region
    _
  $region49: #{seq2seq_forward.1} parent=0 // pred_fallthru
    _
  // Predicated region
  $region50: #{seq2seq_forward.1} parent=0 // pred_check
    _
  $region51: #{seq2seq_forward.1} parent=0 // pred_check_branch
    %46 = sbr.rel (0) target = $region53
  $region52: #{seq2seq_forward.1} parent=0 // pred_region
    _
  $region53: #{seq2seq_forward.1} parent=0 // pred_fallthru
    _
  // Predicated region
  $region54: #{seq2seq_forward.1} parent=0 // pred_check
    _
  $region55: #{seq2seq_forward.1} parent=0 // pred_check_branch
    %48 = sbr.rel (0) target = $region57
  $region56: #{seq2seq_forward.1} parent=0 // pred_region
    _
  $region57: #{seq2seq_forward.1} parent=0 // pred_fallthru
    _
  // Predicated region
  $region58: #{seq2seq_forward.1} parent=0 // pred_check
    _
  $region59: #{seq2seq_forward.1} parent=0 // pred_check_branch
    %50 = sbr.rel (0) target = $region61
  $region60: #{seq2seq_forward.1} parent=0 // pred_region
    _
  $region61: #{seq2seq_forward.1} parent=0 // pred_fallthru
    _
  // Predicated region
  $region62: #{seq2seq_forward.1} parent=0 // pred_check
    _
  $region63: #{seq2seq_forward.1} parent=0 // pred_check_branch
    %52 = sbr.rel (0) target = $region65
  $region64: #{seq2seq_forward.1} parent=0 // pred_region
    _
  $region65: #{seq2seq_forward.1} parent=0 // pred_fallthru
    _
  %v53 = vlaneseq
  %v54 = vand.u32 %v53, 127
  %v55 = vcvt.s32.f32 %v54
  %vm56 = vcmp.lt.s32.totalorder %v54, 12
  %v57 = vld [vmem:[%s1] sm:$0xff]
  %v58 = vld [vmem:[%s0] sm:$0xff]
  %v59 = vpack.c.bf16 %v57, %v57
  %v60 = vld [vmem:[%s5] sm:$0xf]
  %v61 = vld [vmem:[%s5 + $0x4] sm:$0xf]
  %v62 = vld [vmem:[%s5 + $0x8] sm:$0xf]
  %v63 = vld [vmem:[%s5 + $0xc] sm:$0xf]
  %v64 = vld [vmem:[%s5 + $0x10] sm:$0xf]
  %v65 = vld [vmem:[%s5 + $0x14] sm:$0xf]
  %v66 = vld [vmem:[%s5 + $0x18] sm:$0xf]
  %v67 = vld [vmem:[%s5 + $0x1c] sm:$0xf]
  %v68 = vld [vmem:[%s5 + $0x20] sm:$0xf]
  %v69 = vld [vmem:[%s5 + $0x24] sm:$0xf]
  %v70 = vld [vmem:[%s5 + $0x28] sm:$0xf]
  %v71 = vld [vmem:[%s5 + $0x2c] sm:$0xf]
  %v72 = vld [vmem:[%s5 + $0x30] sm:$0xf]
  %v73 = vld [vmem:[%s5 + $0x34] sm:$0xf]
  %v74 = vld [vmem:[%s5 + $0x38] sm:$0xf]
  %v75 = vld [vmem:[%s5 + $0x3c] sm:$0xf]
  %v92 = vunpack.c.l.b16 %v60
  %v93 = vunpack.c.l.b16 %v61
  %v94 = vunpack.c.l.b16 %v62
  %v95 = vunpack.c.l.b16 %v63
  %v96 = vunpack.c.l.b16 %v64
  %v97 = vunpack.c.l.b16 %v65
  %v98 = vunpack.c.l.b16 %v66
  %v99 = vunpack.c.l.b16 %v67
  %v100 = vunpack.c.l.b16 %v68
  %v101 = vunpack.c.l.b16 %v69
  %v102 = vunpack.c.l.b16 %v70
  %v103 = vunpack.c.l.b16 %v71
  %v104 = vunpack.c.l.b16 %v72
  %v105 = vunpack.c.l.b16 %v73
  %v106 = vunpack.c.l.b16 %v74
  %v107 = vunpack.c.l.b16 %v75
  %v108 = vpack.c.b16 %v93, %v92
  %v109 = vpack.c.b16 %v95, %v94
  %v110 = vpack.c.b16 %v97, %v96
  %v111 = vpack.c.b16 %v99, %v98
  %v112 = vpack.c.b16 %v101, %v100
  %v113 = vpack.c.b16 %v103, %v102
  %v114 = vpack.c.b16 %v105, %v104
  %v115 = vpack.c.b16 %v107, %v106
  %124 = vmatpush.bf16.msra.mxu0 %v115
  %125 = vmatpush.bf16.msra.mxu0 %v114
  %126 = vmatpush.bf16.msra.mxu0 %v113
  %127 = vmatpush.bf16.msra.mxu0 %v112
  %128 = vmatpush.bf16.msra.mxu0 %v111
  %129 = vmatpush.bf16.msra.mxu0 %v110
  %130 = vmatpush.bf16.msra.mxu0 %v109
  %131 = vmatpush.bf16.msra.mxu0 %v108
  %132 = vmatmul.bf16.gmra.mxu0 %v59
  %v133 = vpop.f32.mrf.mxu0
  %v134 = vadd.f32 0.0, %v133
  %v135 = vpop.f32.mrf.mxu0
  %136 = vdwg.mxu0
  %v137 = vadd.f32 %v58, %v134
  %v138 = vtanh.pop %v137
  %v139 = vld [vmem:[%s6] sm:$0xff]
  %v140 = vld [vmem:[%s6 + $0x8] sm:$0xf]
  %v141 = vld [vmem:[%s6 + $0xc] sm:$0xff]
  %v142 = vld [vmem:[%s6 + $0x14] sm:$0xf]
  %v143 = vld [vmem:[%s6 + $0x18] sm:$0xff]
  %v144 = vld [vmem:[%s6 + $0x20] sm:$0xf]
  %v145 = vld [vmem:[%s6 + $0x24] sm:$0xff]
  %v146 = vld [vmem:[%s6 + $0x2c] sm:$0xf]
  %v147 = vld [vmem:[%s6 + $0x30] sm:$0xff]
  %v148 = vld [vmem:[%s6 + $0x38] sm:$0xf]
  %v149 = vld [vmem:[%s6 + $0x3c] sm:$0xff]
  %v150 = vld [vmem:[%s6 + $0x44] sm:$0xf]
  %v151 = vld [vmem:[%s6 + $0x48] sm:$0xff]
  %v152 = vld [vmem:[%s6 + $0x50] sm:$0xf]
  %v153 = vld [vmem:[%s6 + $0x54] sm:$0xff]
  %v154 = vld [vmem:[%s6 + $0x5c] sm:$0xf]
  %v155 = vld [vmem:[%s6 + $0x60] sm:$0xff]
  %v156 = vld [vmem:[%s6 + $0x68] sm:$0xf]
  %v157 = vld [vmem:[%s6 + $0x6c] sm:$0xff]
  %v158 = vld [vmem:[%s6 + $0x74] sm:$0xf]
  %v159 = vld [vmem:[%s6 + $0x78] sm:$0xff]
  %v160 = vld [vmem:[%s6 + $0x80] sm:$0xf]
  %v161 = vld [vmem:[%s6 + $0x84] sm:$0xff]
  %v162 = vld [vmem:[%s6 + $0x8c] sm:$0xf]
  %v163 = vld [vmem:[%s6 + $0x90] sm:$0xff]
  %v164 = vld [vmem:[%s6 + $0x98] sm:$0xf]
  %v165 = vld [vmem:[%s6 + $0x9c] sm:$0xff]
  %v166 = vld [vmem:[%s6 + $0xa4] sm:$0xf]
  %v167 = vld [vmem:[%s6 + $0xa8] sm:$0xff]
  %v168 = vld [vmem:[%s6 + $0xb0] sm:$0xf]
  %v169 = vld [vmem:[%s6 + $0xb4] sm:$0xff]
  %v170 = vld [vmem:[%s6 + $0xbc] sm:$0xf]
  %v171 = vld [vmem:[%s8] sm:$0x7]
  %v173 = vperm.slane %v171, 0
  %v174 = vperm.slane %v171, 1
  %v175 = vperm.slane %v171, 2
  %v211 = vunpack.c.l.b16 %v139
  %v212 = vunpack.c.h.b16 %v139
  %v213 = vunpack.c.l.b16 %v140
  %v214 = vunpack.c.l.b16 %v141
  %v215 = vunpack.c.h.b16 %v141
  %v216 = vunpack.c.l.b16 %v142
  %v217 = vunpack.c.l.b16 %v143
  %v218 = vunpack.c.h.b16 %v143
  %v219 = vunpack.c.l.b16 %v144
  %v220 = vunpack.c.l.b16 %v145
  %v221 = vunpack.c.h.b16 %v145
  %v222 = vunpack.c.l.b16 %v146
  %v223 = vunpack.c.l.b16 %v147
  %v224 = vunpack.c.h.b16 %v147
  %v225 = vunpack.c.l.b16 %v148
  %v226 = vunpack.c.l.b16 %v149
  %v227 = vunpack.c.h.b16 %v149
  %v228 = vunpack.c.l.b16 %v150
  %v229 = vunpack.c.l.b16 %v151
  %v230 = vunpack.c.h.b16 %v151
  %v231 = vunpack.c.l.b16 %v152
  %v232 = vunpack.c.l.b16 %v153
  %v233 = vunpack.c.h.b16 %v153
  %v234 = vunpack.c.l.b16 %v154
  %v235 = vunpack.c.l.b16 %v155
  %v236 = vunpack.c.h.b16 %v155
  %v237 = vunpack.c.l.b16 %v156
  %v238 = vunpack.c.l.b16 %v157
  %v239 = vunpack.c.h.b16 %v157
  %v240 = vunpack.c.l.b16 %v158
  %v241 = vunpack.c.l.b16 %v159
  %v242 = vunpack.c.h.b16 %v159
  %v243 = vunpack.c.l.b16 %v160
  %v244 = vunpack.c.l.b16 %v161
  %v245 = vunpack.c.h.b16 %v161
  %v246 = vunpack.c.l.b16 %v162
  %v247 = vunpack.c.l.b16 %v163
  %v248 = vunpack.c.h.b16 %v163
  %v249 = vunpack.c.l.b16 %v164
  %v250 = vunpack.c.l.b16 %v165
  %v251 = vunpack.c.h.b16 %v165
  %v252 = vunpack.c.l.b16 %v166
  %v253 = vunpack.c.l.b16 %v167
  %v254 = vunpack.c.h.b16 %v167
  %v255 = vunpack.c.l.b16 %v168
  %v256 = vunpack.c.l.b16 %v169
  %v257 = vunpack.c.h.b16 %v169
  %v258 = vunpack.c.l.b16 %v170
  %v259 = vpack.c.b16 %v214, %v211
  %v260 = vpack.c.b16 %v215, %v212
  %v261 = vpack.c.b16 %v216, %v213
  %v262 = vpack.c.b16 %v220, %v217
  %v263 = vpack.c.b16 %v221, %v218
  %v264 = vpack.c.b16 %v222, %v219
  %v265 = vpack.c.b16 %v226, %v223
  %v266 = vpack.c.b16 %v227, %v224
  %v267 = vpack.c.b16 %v228, %v225
  %v268 = vpack.c.b16 %v232, %v229
  %v269 = vpack.c.b16 %v233, %v230
  %v270 = vpack.c.b16 %v234, %v231
  %v271 = vpack.c.b16 %v238, %v235
  %v272 = vpack.c.b16 %v239, %v236
  %v273 = vpack.c.b16 %v240, %v237
  %v274 = vpack.c.b16 %v244, %v241
  %v275 = vpack.c.b16 %v245, %v242
  %v276 = vpack.c.b16 %v246, %v243
  %v277 = vpack.c.b16 %v250, %v247
  %v278 = vpack.c.b16 %v251, %v248
  %v279 = vpack.c.b16 %v252, %v249
  %v280 = vpack.c.b16 %v256, %v253
  %v281 = vpack.c.b16 %v257, %v254
  %v282 = vpack.c.b16 %v258, %v255
  %307 = vmatpush.bf16.msra.mxu0 %v280
  %308 = vmatpush.bf16.msra.mxu0 %v277
  %309 = vmatpush.bf16.msra.mxu0 %v274
  %310 = vmatpush.bf16.msra.mxu0 %v271
  %311 = vmatpush.bf16.msra.mxu0 %v268
  %312 = vmatpush.bf16.msra.mxu0 %v265
  %313 = vmatpush.bf16.msra.mxu0 %v262
  %314 = vmatpush.bf16.msra.mxu0 %v259
  %315 = vmatmul.bf16.gmra.mxu0 %v59
  %v316 = vpop.f32.mrf.mxu0
  %v317 = vadd.f32 %v173, %v316
  %v318 = vpop.f32.mrf.mxu0
  %319 = vdwg.mxu0
  %320 = vmatpush.bf16.msra.mxu0 %v281
  %321 = vmatpush.bf16.msra.mxu0 %v278
  %322 = vmatpush.bf16.msra.mxu0 %v275
  %323 = vmatpush.bf16.msra.mxu0 %v272
  %324 = vmatpush.bf16.msra.mxu0 %v269
  %325 = vmatpush.bf16.msra.mxu0 %v266
  %326 = vmatpush.bf16.msra.mxu0 %v263
  %327 = vmatpush.bf16.msra.mxu0 %v260
  %328 = vmatmul.bf16.gmra.mxu0 %v59
  %v329 = vpop.f32.mrf.mxu0
  %v330 = vadd.f32 %v174, %v329
  %v331 = vpop.f32.mrf.mxu0
  %332 = vdwg.mxu0
  %333 = vmatpush.bf16.msra.mxu0 %v282
  %334 = vmatpush.bf16.msra.mxu0 %v279
  %335 = vmatpush.bf16.msra.mxu0 %v276
  %336 = vmatpush.bf16.msra.mxu0 %v273
  %337 = vmatpush.bf16.msra.mxu0 %v270
  %338 = vmatpush.bf16.msra.mxu0 %v267
  %339 = vmatpush.bf16.msra.mxu0 %v264
  %340 = vmatpush.bf16.msra.mxu0 %v261
  %341 = vmatmul.bf16.gmra.mxu0 %v59
  %v342 = vpop.f32.mrf.mxu0
  %v343 = vadd.f32 %v175, %v342
  %v344 = vpop.f32.mrf.mxu0
  %345 = vdwg.mxu0
  %v346 = vpack.c.bf16 %v138, %v138
  %v347 = vld [vmem:[%s7] sm:$0xff]
  %v348 = vld [vmem:[%s7 + $0x8] sm:$0xf]
  %v349 = vld [vmem:[%s7 + $0xc] sm:$0xff]
  %v350 = vld [vmem:[%s7 + $0x14] sm:$0xf]
  %v351 = vld [vmem:[%s7 + $0x18] sm:$0xff]
  %v352 = vld [vmem:[%s7 + $0x20] sm:$0xf]
  %v353 = vld [vmem:[%s7 + $0x24] sm:$0xff]
  %v354 = vld [vmem:[%s7 + $0x2c] sm:$0xf]
  %v355 = vld [vmem:[%s7 + $0x30] sm:$0xff]
  %v356 = vld [vmem:[%s7 + $0x38] sm:$0xf]
  %v357 = vld [vmem:[%s7 + $0x3c] sm:$0xff]
  %v358 = vld [vmem:[%s7 + $0x44] sm:$0xf]
  %v359 = vld [vmem:[%s7 + $0x48] sm:$0xff]
  %v360 = vld [vmem:[%s7 + $0x50] sm:$0xf]
  %v361 = vld [vmem:[%s7 + $0x54] sm:$0xff]
  %v362 = vld [vmem:[%s7 + $0x5c] sm:$0xf]
  %v363 = vld [vmem:[%s7 + $0x60] sm:$0xff]
  %v364 = vld [vmem:[%s7 + $0x68] sm:$0xf]
  %v365 = vld [vmem:[%s7 + $0x6c] sm:$0xff]
  %v366 = vld [vmem:[%s7 + $0x74] sm:$0xf]
  %v367 = vld [vmem:[%s7 + $0x78] sm:$0xff]
  %v368 = vld [vmem:[%s7 + $0x80] sm:$0xf]
  %v369 = vld [vmem:[%s7 + $0x84] sm:$0xff]
  %v370 = vld [vmem:[%s7 + $0x8c] sm:$0xf]
  %v371 = vld [vmem:[%s7 + $0x90] sm:$0xff]
  %v372 = vld [vmem:[%s7 + $0x98] sm:$0xf]
  %v373 = vld [vmem:[%s7 + $0x9c] sm:$0xff]
  %v374 = vld [vmem:[%s7 + $0xa4] sm:$0xf]
  %v375 = vld [vmem:[%s7 + $0xa8] sm:$0xff]
  %v376 = vld [vmem:[%s7 + $0xb0] sm:$0xf]
  %v377 = vld [vmem:[%s7 + $0xb4] sm:$0xff]
  %v378 = vld [vmem:[%s7 + $0xbc] sm:$0xf]
  %v411 = vunpack.c.l.b16 %v347
  %v412 = vunpack.c.h.b16 %v347
  %v413 = vunpack.c.l.b16 %v348
  %v414 = vunpack.c.l.b16 %v349
  %v415 = vunpack.c.h.b16 %v349
  %v416 = vunpack.c.l.b16 %v350
  %v417 = vunpack.c.l.b16 %v351
  %v418 = vunpack.c.h.b16 %v351
  %v419 = vunpack.c.l.b16 %v352
  %v420 = vunpack.c.l.b16 %v353
  %v421 = vunpack.c.h.b16 %v353
  %v422 = vunpack.c.l.b16 %v354
  %v423 = vunpack.c.l.b16 %v355
  %v424 = vunpack.c.h.b16 %v355
  %v425 = vunpack.c.l.b16 %v356
  %v426 = vunpack.c.l.b16 %v357
  %v427 = vunpack.c.h.b16 %v357
  %v428 = vunpack.c.l.b16 %v358
  %v429 = vunpack.c.l.b16 %v359
  %v430 = vunpack.c.h.b16 %v359
  %v431 = vunpack.c.l.b16 %v360
  %v432 = vunpack.c.l.b16 %v361
  %v433 = vunpack.c.h.b16 %v361
  %v434 = vunpack.c.l.b16 %v362
  %v435 = vunpack.c.l.b16 %v363
  %v436 = vunpack.c.h.b16 %v363
  %v437 = vunpack.c.l.b16 %v364
  %v438 = vunpack.c.l.b16 %v365
  %v439 = vunpack.c.h.b16 %v365
  %v440 = vunpack.c.l.b16 %v366
  %v441 = vunpack.c.l.b16 %v367
  %v442 = vunpack.c.h.b16 %v367
  %v443 = vunpack.c.l.b16 %v368
  %v444 = vunpack.c.l.b16 %v369
  %v445 = vunpack.c.h.b16 %v369
  %v446 = vunpack.c.l.b16 %v370
  %v447 = vunpack.c.l.b16 %v371
  %v448 = vunpack.c.h.b16 %v371
  %v449 = vunpack.c.l.b16 %v372
  %v450 = vunpack.c.l.b16 %v373
  %v451 = vunpack.c.h.b16 %v373
  %v452 = vunpack.c.l.b16 %v374
  %v453 = vunpack.c.l.b16 %v375
  %v454 = vunpack.c.h.b16 %v375
  %v455 = vunpack.c.l.b16 %v376
  %v456 = vunpack.c.l.b16 %v377
  %v457 = vunpack.c.h.b16 %v377
  %v458 = vunpack.c.l.b16 %v378
  %v459 = vpack.c.b16 %v414, %v411
  %v460 = vpack.c.b16 %v415, %v412
  %v461 = vpack.c.b16 %v416, %v413
  %v462 = vpack.c.b16 %v420, %v417
  %v463 = vpack.c.b16 %v421, %v418
  %v464 = vpack.c.b16 %v422, %v419
  %v465 = vpack.c.b16 %v426, %v423
  %v466 = vpack.c.b16 %v427, %v424
  %v467 = vpack.c.b16 %v428, %v425
  %v468 = vpack.c.b16 %v432, %v429
  %v469 = vpack.c.b16 %v433, %v430
  %v470 = vpack.c.b16 %v434, %v431
  %v471 = vpack.c.b16 %v438, %v435
  %v472 = vpack.c.b16 %v439, %v436
  %v473 = vpack.c.b16 %v440, %v437
  %v474 = vpack.c.b16 %v444, %v441
  %v475 = vpack.c.b16 %v445, %v442
  %v476 = vpack.c.b16 %v446, %v443
  %v477 = vpack.c.b16 %v450, %v447
  %v478 = vpack.c.b16 %v451, %v448
  %v479 = vpack.c.b16 %v452, %v449
  %v480 = vpack.c.b16 %v456, %v453
  %v481 = vpack.c.b16 %v457, %v454
  %v482 = vpack.c.b16 %v458, %v455
  %507 = vmatpush.bf16.msra.mxu0 %v480
  %508 = vmatpush.bf16.msra.mxu0 %v477
  %509 = vmatpush.bf16.msra.mxu0 %v474
  %510 = vmatpush.bf16.msra.mxu0 %v471
  %511 = vmatpush.bf16.msra.mxu0 %v468
  %512 = vmatpush.bf16.msra.mxu0 %v465
  %513 = vmatpush.bf16.msra.mxu0 %v462
  %514 = vmatpush.bf16.msra.mxu0 %v459
  %515 = vmatmul.bf16.gmra.mxu0 %v346
  %v516 = vpop.f32.mrf.mxu0
  %v517 = vadd.f32 0.0, %v516
  %v518 = vpop.f32.mrf.mxu0
  %519 = vdwg.mxu0
  %520 = vmatpush.bf16.msra.mxu0 %v481
  %521 = vmatpush.bf16.msra.mxu0 %v478
  %522 = vmatpush.bf16.msra.mxu0 %v475
  %523 = vmatpush.bf16.msra.mxu0 %v472
  %524 = vmatpush.bf16.msra.mxu0 %v469
  %525 = vmatpush.bf16.msra.mxu0 %v466
  %526 = vmatpush.bf16.msra.mxu0 %v463
  %527 = vmatpush.bf16.msra.mxu0 %v460
  %528 = vmatmul.bf16.gmra.mxu0 %v346
  %v529 = vpop.f32.mrf.mxu0
  %v530 = vadd.f32 0.0, %v529
  %v531 = vpop.f32.mrf.mxu0
  %532 = vdwg.mxu0
  %533 = vmatpush.bf16.msra.mxu0 %v482
  %534 = vmatpush.bf16.msra.mxu0 %v479
  %535 = vmatpush.bf16.msra.mxu0 %v476
  %536 = vmatpush.bf16.msra.mxu0 %v473
  %537 = vmatpush.bf16.msra.mxu0 %v470
  %538 = vmatpush.bf16.msra.mxu0 %v467
  %539 = vmatpush.bf16.msra.mxu0 %v464
  %540 = vmatpush.bf16.msra.mxu0 %v461
  %541 = vmatmul.bf16.gmra.mxu0 %v346
  %v542 = vpop.f32.mrf.mxu0
  %v543 = vadd.f32 0.0, %v542
  %v544 = vpop.f32.mrf.mxu0
  %545 = vdwg.mxu0
  %v546 = vadd.f32 %v317, %v517
  %v547 = vadd.f32 %v330, %v530
  %v548 = vxor.u32 %v546, 2147483648
  %v549 = vxor.u32 %v547, 2147483648
  %v550 = vmul.f32 %v548, 1.442695
  %v551 = vpow.pop %v550
  %v552 = vmul.f32 %v549, 1.442695
  %v553 = vpow.pop %v552
  %v554 = vadd.f32 %v551, 1.0
  %v555 = vadd.f32 %v553, 1.0
  %v556 = vrcp.pop %v554
  %v557 = vmul.f32 %v554, %v556
  %v558 = vsub.f32 1.0, %v557
  %v559 = vmul.f32 %v556, %v558
  %v560 = vadd.f32 %v556, %v559
  %vm561 = vweird.f32 %v554
  %vm562 = vweird.f32 %v556
  %vm563 = vmor %vm561, %vm562
  %v564 = vsel %vm563, %v556, %v560
  %v565 = vand.u32 2147483647, %v554
  %vm566 = vcmp.eq.f32.partialorder %v565, 8.507059e+37
  %v567 = vand.u32 %v554, 2147483648
  %v568 = vor.u32 1.1754944e-38, %v567
  %v569 = vsel %vm566, %v568, %v564
  %v570 = vmul.f32 1.0, %v569
  %v571 = vrcp.pop %v555
  %v572 = vmul.f32 %v555, %v571
  %v573 = vsub.f32 1.0, %v572
  %v574 = vmul.f32 %v571, %v573
  %v575 = vadd.f32 %v571, %v574
  %vm576 = vweird.f32 %v555
  %vm577 = vweird.f32 %v571
  %vm578 = vmor %vm576, %vm577
  %v579 = vsel %vm578, %v571, %v575
  %v580 = vand.u32 2147483647, %v555
  %vm581 = vcmp.eq.f32.partialorder %v580, 8.507059e+37
  %v582 = vand.u32 %v555, 2147483648
  %v583 = vor.u32 1.1754944e-38, %v582
  %v584 = vsel %vm581, %v583, %v579
  %v585 = vmul.f32 1.0, %v584
  %v586 = vld [vmem:[%s9] sm:$0x1]
  %v588 = vperm.slane %v586, 0
  %v590 = vadd.f32 %v543, %v588
  %v591 = vmul.f32 %v570, %v590
  %v592 = vadd.f32 %v343, %v591
  %v593 = vtanh.pop %v592
  %v594 = vsub.f32 1.0, %v585
  %v595 = vmul.f32 %v594, %v593
  %v596 = vmul.f32 %v585, %v138
  %v597 = vadd.f32 %v595, %v596
  %v598 = vpack.c.bf16 %v597, %v597
  %v599 = vld [vmem:[%s10] sm:$0xff]
  %v600 = vld [vmem:[%s10 + $0x8] sm:$0xf]
  %v601 = vld [vmem:[%s10 + $0xc] sm:$0xff]
  %v602 = vld [vmem:[%s10 + $0x14] sm:$0xf]
  %v603 = vld [vmem:[%s10 + $0x18] sm:$0xff]
  %v604 = vld [vmem:[%s10 + $0x20] sm:$0xf]
  %v605 = vld [vmem:[%s10 + $0x24] sm:$0xff]
  %v606 = vld [vmem:[%s10 + $0x2c] sm:$0xf]
  %v607 = vld [vmem:[%s10 + $0x30] sm:$0xff]
  %v608 = vld [vmem:[%s10 + $0x38] sm:$0xf]
  %v609 = vld [vmem:[%s10 + $0x3c] sm:$0xff]
  %v610 = vld [vmem:[%s10 + $0x44] sm:$0xf]
  %v611 = vld [vmem:[%s10 + $0x48] sm:$0xff]
  %v612 = vld [vmem:[%s10 + $0x50] sm:$0xf]
  %v613 = vld [vmem:[%s10 + $0x54] sm:$0xff]
  %v614 = vld [vmem:[%s10 + $0x5c] sm:$0xf]
  %v615 = vld [vmem:[%s10 + $0x60] sm:$0xff]
  %v616 = vld [vmem:[%s10 + $0x68] sm:$0xf]
  %v617 = vld [vmem:[%s10 + $0x6c] sm:$0xff]
  %v618 = vld [vmem:[%s10 + $0x74] sm:$0xf]
  %v619 = vld [vmem:[%s10 + $0x78] sm:$0xff]
  %v620 = vld [vmem:[%s10 + $0x80] sm:$0xf]
  %v621 = vld [vmem:[%s10 + $0x84] sm:$0xff]
  %v622 = vld [vmem:[%s10 + $0x8c] sm:$0xf]
  %v623 = vld [vmem:[%s10 + $0x90] sm:$0xff]
  %v624 = vld [vmem:[%s10 + $0x98] sm:$0xf]
  %v625 = vld [vmem:[%s10 + $0x9c] sm:$0xff]
  %v626 = vld [vmem:[%s10 + $0xa4] sm:$0xf]
  %v627 = vld [vmem:[%s10 + $0xa8] sm:$0xff]
  %v628 = vld [vmem:[%s10 + $0xb0] sm:$0xf]
  %v629 = vld [vmem:[%s10 + $0xb4] sm:$0xff]
  %v630 = vld [vmem:[%s10 + $0xbc] sm:$0xf]
  %v631 = vld [vmem:[%s12] sm:$0x7]
  %v633 = vperm.slane %v631, 0
  %v634 = vperm.slane %v631, 1
  %v635 = vperm.slane %v631, 2
  %v671 = vunpack.c.l.b16 %v599
  %v672 = vunpack.c.h.b16 %v599
  %v673 = vunpack.c.l.b16 %v600
  %v674 = vunpack.c.l.b16 %v601
  %v675 = vunpack.c.h.b16 %v601
  %v676 = vunpack.c.l.b16 %v602
  %v677 = vunpack.c.l.b16 %v603
  %v678 = vunpack.c.h.b16 %v603
  %v679 = vunpack.c.l.b16 %v604
  %v680 = vunpack.c.l.b16 %v605
  %v681 = vunpack.c.h.b16 %v605
  %v682 = vunpack.c.l.b16 %v606
  %v683 = vunpack.c.l.b16 %v607
  %v684 = vunpack.c.h.b16 %v607
  %v685 = vunpack.c.l.b16 %v608
  %v686 = vunpack.c.l.b16 %v609
  %v687 = vunpack.c.h.b16 %v609
  %v688 = vunpack.c.l.b16 %v610
  %v689 = vunpack.c.l.b16 %v611
  %v690 = vunpack.c.h.b16 %v611
  %v691 = vunpack.c.l.b16 %v612
  %v692 = vunpack.c.l.b16 %v613
  %v693 = vunpack.c.h.b16 %v613
  %v694 = vunpack.c.l.b16 %v614
  %v695 = vunpack.c.l.b16 %v615
  %v696 = vunpack.c.h.b16 %v615
  %v697 = vunpack.c.l.b16 %v616
  %v698 = vunpack.c.l.b16 %v617
  %v699 = vunpack.c.h.b16 %v617
  %v700 = vunpack.c.l.b16 %v618
  %v701 = vunpack.c.l.b16 %v619
  %v702 = vunpack.c.h.b16 %v619
  %v703 = vunpack.c.l.b16 %v620
  %v704 = vunpack.c.l.b16 %v621
  %v705 = vunpack.c.h.b16 %v621
  %v706 = vunpack.c.l.b16 %v622
  %v707 = vunpack.c.l.b16 %v623
  %v708 = vunpack.c.h.b16 %v623
  %v709 = vunpack.c.l.b16 %v624
  %v710 = vunpack.c.l.b16 %v625
  %v711 = vunpack.c.h.b16 %v625
  %v712 = vunpack.c.l.b16 %v626
  %v713 = vunpack.c.l.b16 %v627
  %v714 = vunpack.c.h.b16 %v627
  %v715 = vunpack.c.l.b16 %v628
  %v716 = vunpack.c.l.b16 %v629
  %v717 = vunpack.c.h.b16 %v629
  %v718 = vunpack.c.l.b16 %v630
  %v719 = vpack.c.b16 %v674, %v671
  %v720 = vpack.c.b16 %v675, %v672
  %v721 = vpack.c.b16 %v676, %v673
  %v722 = vpack.c.b16 %v680, %v677
  %v723 = vpack.c.b16 %v681, %v678
  %v724 = vpack.c.b16 %v682, %v679
  %v725 = vpack.c.b16 %v686, %v683
  %v726 = vpack.c.b16 %v687, %v684
  %v727 = vpack.c.b16 %v688, %v685
  %v728 = vpack.c.b16 %v692, %v689
  %v729 = vpack.c.b16 %v693, %v690
  %v730 = vpack.c.b16 %v694, %v691
  %v731 = vpack.c.b16 %v698, %v695
  %v732 = vpack.c.b16 %v699, %v696
  %v733 = vpack.c.b16 %v700, %v697
  %v734 = vpack.c.b16 %v704, %v701
  %v735 = vpack.c.b16 %v705, %v702
  %v736 = vpack.c.b16 %v706, %v703
  %v737 = vpack.c.b16 %v710, %v707
  %v738 = vpack.c.b16 %v711, %v708
  %v739 = vpack.c.b16 %v712, %v709
  %v740 = vpack.c.b16 %v716, %v713
  %v741 = vpack.c.b16 %v717, %v714
  %v742 = vpack.c.b16 %v718, %v715
  %767 = vmatpush.bf16.msra.mxu0 %v740
  %768 = vmatpush.bf16.msra.mxu0 %v737
  %769 = vmatpush.bf16.msra.mxu0 %v734
  %770 = vmatpush.bf16.msra.mxu0 %v731
  %771 = vmatpush.bf16.msra.mxu0 %v728
  %772 = vmatpush.bf16.msra.mxu0 %v725
  %773 = vmatpush.bf16.msra.mxu0 %v722
  %774 = vmatpush.bf16.msra.mxu0 %v719
  %775 = vmatmul.bf16.gmra.mxu0 %v598
  %v776 = vpop.f32.mrf.mxu0
  %v777 = vadd.f32 %v633, %v776
  %v778 = vpop.f32.mrf.mxu0
  %779 = vdwg.mxu0
  %780 = vmatpush.bf16.msra.mxu0 %v741
  %781 = vmatpush.bf16.msra.mxu0 %v738
  %782 = vmatpush.bf16.msra.mxu0 %v735
  %783 = vmatpush.bf16.msra.mxu0 %v732
  %784 = vmatpush.bf16.msra.mxu0 %v729
  %785 = vmatpush.bf16.msra.mxu0 %v726
  %786 = vmatpush.bf16.msra.mxu0 %v723
  %787 = vmatpush.bf16.msra.mxu0 %v720
  %788 = vmatmul.bf16.gmra.mxu0 %v598
  %v789 = vpop.f32.mrf.mxu0
  %v790 = vadd.f32 %v634, %v789
  %v791 = vpop.f32.mrf.mxu0
  %792 = vdwg.mxu0
  %793 = vmatpush.bf16.msra.mxu0 %v742
  %794 = vmatpush.bf16.msra.mxu0 %v739
  %795 = vmatpush.bf16.msra.mxu0 %v736
  %796 = vmatpush.bf16.msra.mxu0 %v733
  %797 = vmatpush.bf16.msra.mxu0 %v730
  %798 = vmatpush.bf16.msra.mxu0 %v727
  %799 = vmatpush.bf16.msra.mxu0 %v724
  %800 = vmatpush.bf16.msra.mxu0 %v721
  %801 = vmatmul.bf16.gmra.mxu0 %v598
  %v802 = vpop.f32.mrf.mxu0
  %v803 = vadd.f32 %v635, %v802
  %v804 = vpop.f32.mrf.mxu0
  %805 = vdwg.mxu0
  %v806 = vld [vmem:[%s11] sm:$0xff]
  %v807 = vld [vmem:[%s11 + $0x8] sm:$0xf]
  %v808 = vld [vmem:[%s11 + $0xc] sm:$0xff]
  %v809 = vld [vmem:[%s11 + $0x14] sm:$0xf]
  %v810 = vld [vmem:[%s11 + $0x18] sm:$0xff]
  %v811 = vld [vmem:[%s11 + $0x20] sm:$0xf]
  %v812 = vld [vmem:[%s11 + $0x24] sm:$0xff]
  %v813 = vld [vmem:[%s11 + $0x2c] sm:$0xf]
  %v814 = vld [vmem:[%s11 + $0x30] sm:$0xff]
  %v815 = vld [vmem:[%s11 + $0x38] sm:$0xf]
  %v816 = vld [vmem:[%s11 + $0x3c] sm:$0xff]
  %v817 = vld [vmem:[%s11 + $0x44] sm:$0xf]
  %v818 = vld [vmem:[%s11 + $0x48] sm:$0xff]
  %v819 = vld [vmem:[%s11 + $0x50] sm:$0xf]
  %v820 = vld [vmem:[%s11 + $0x54] sm:$0xff]
  %v821 = vld [vmem:[%s11 + $0x5c] sm:$0xf]
  %v822 = vld [vmem:[%s11 + $0x60] sm:$0xff]
  %v823 = vld [vmem:[%s11 + $0x68] sm:$0xf]
  %v824 = vld [vmem:[%s11 + $0x6c] sm:$0xff]
  %v825 = vld [vmem:[%s11 + $0x74] sm:$0xf]
  %v826 = vld [vmem:[%s11 + $0x78] sm:$0xff]
  %v827 = vld [vmem:[%s11 + $0x80] sm:$0xf]
  %v828 = vld [vmem:[%s11 + $0x84] sm:$0xff]
  %v829 = vld [vmem:[%s11 + $0x8c] sm:$0xf]
  %v830 = vld [vmem:[%s11 + $0x90] sm:$0xff]
  %v831 = vld [vmem:[%s11 + $0x98] sm:$0xf]
  %v832 = vld [vmem:[%s11 + $0x9c] sm:$0xff]
  %v833 = vld [vmem:[%s11 + $0xa4] sm:$0xf]
  %v834 = vld [vmem:[%s11 + $0xa8] sm:$0xff]
  %v835 = vld [vmem:[%s11 + $0xb0] sm:$0xf]
  %v836 = vld [vmem:[%s11 + $0xb4] sm:$0xff]
  %v837 = vld [vmem:[%s11 + $0xbc] sm:$0xf]
  %v870 = vunpack.c.l.b16 %v806
  %v871 = vunpack.c.h.b16 %v806
  %v872 = vunpack.c.l.b16 %v807
  %v873 = vunpack.c.l.b16 %v808
  %v874 = vunpack.c.h.b16 %v808
  %v875 = vunpack.c.l.b16 %v809
  %v876 = vunpack.c.l.b16 %v810
  %v877 = vunpack.c.h.b16 %v810
  %v878 = vunpack.c.l.b16 %v811
  %v879 = vunpack.c.l.b16 %v812
  %v880 = vunpack.c.h.b16 %v812
  %v881 = vunpack.c.l.b16 %v813
  %v882 = vunpack.c.l.b16 %v814
  %v883 = vunpack.c.h.b16 %v814
  %v884 = vunpack.c.l.b16 %v815
  %v885 = vunpack.c.l.b16 %v816
  %v886 = vunpack.c.h.b16 %v816
  %v887 = vunpack.c.l.b16 %v817
  %v888 = vunpack.c.l.b16 %v818
  %v889 = vunpack.c.h.b16 %v818
  %v890 = vunpack.c.l.b16 %v819
  %v891 = vunpack.c.l.b16 %v820
  %v892 = vunpack.c.h.b16 %v820
  %v893 = vunpack.c.l.b16 %v821
  %v894 = vunpack.c.l.b16 %v822
  %v895 = vunpack.c.h.b16 %v822
  %v896 = vunpack.c.l.b16 %v823
  %v897 = vunpack.c.l.b16 %v824
  %v898 = vunpack.c.h.b16 %v824
  %v899 = vunpack.c.l.b16 %v825
  %v900 = vunpack.c.l.b16 %v826
  %v901 = vunpack.c.h.b16 %v826
  %v902 = vunpack.c.l.b16 %v827
  %v903 = vunpack.c.l.b16 %v828
  %v904 = vunpack.c.h.b16 %v828
  %v905 = vunpack.c.l.b16 %v829
  %v906 = vunpack.c.l.b16 %v830
  %v907 = vunpack.c.h.b16 %v830
  %v908 = vunpack.c.l.b16 %v831
  %v909 = vunpack.c.l.b16 %v832
  %v910 = vunpack.c.h.b16 %v832
  %v911 = vunpack.c.l.b16 %v833
  %v912 = vunpack.c.l.b16 %v834
  %v913 = vunpack.c.h.b16 %v834
  %v914 = vunpack.c.l.b16 %v835
  %v915 = vunpack.c.l.b16 %v836
  %v916 = vunpack.c.h.b16 %v836
  %v917 = vunpack.c.l.b16 %v837
  %v918 = vpack.c.b16 %v873, %v870
  %v919 = vpack.c.b16 %v874, %v871
  %v920 = vpack.c.b16 %v875, %v872
  %v921 = vpack.c.b16 %v879, %v876
  %v922 = vpack.c.b16 %v880, %v877
  %v923 = vpack.c.b16 %v881, %v878
  %v924 = vpack.c.b16 %v885, %v882
  %v925 = vpack.c.b16 %v886, %v883
  %v926 = vpack.c.b16 %v887, %v884
  %v927 = vpack.c.b16 %v891, %v888
  %v928 = vpack.c.b16 %v892, %v889
  %v929 = vpack.c.b16 %v893, %v890
  %v930 = vpack.c.b16 %v897, %v894
  %v931 = vpack.c.b16 %v898, %v895
  %v932 = vpack.c.b16 %v899, %v896
  %v933 = vpack.c.b16 %v903, %v900
  %v934 = vpack.c.b16 %v904, %v901
  %v935 = vpack.c.b16 %v905, %v902
  %v936 = vpack.c.b16 %v909, %v906
  %v937 = vpack.c.b16 %v910, %v907
  %v938 = vpack.c.b16 %v911, %v908
  %v939 = vpack.c.b16 %v915, %v912
  %v940 = vpack.c.b16 %v916, %v913
  %v941 = vpack.c.b16 %v917, %v914
  %966 = vmatpush.bf16.msra.mxu0 %v939
  %967 = vmatpush.bf16.msra.mxu0 %v936
  %968 = vmatpush.bf16.msra.mxu0 %v933
  %969 = vmatpush.bf16.msra.mxu0 %v930
  %970 = vmatpush.bf16.msra.mxu0 %v927
  %971 = vmatpush.bf16.msra.mxu0 %v924
  %972 = vmatpush.bf16.msra.mxu0 %v921
  %973 = vmatpush.bf16.msra.mxu0 %v918
  %974 = vmatmul.bf16.gmra.mxu0 %v346
  %v975 = vpop.f32.mrf.mxu0
  %v976 = vadd.f32 0.0, %v975
  %v977 = vpop.f32.mrf.mxu0
  %978 = vdwg.mxu0
  %979 = vmatpush.bf16.msra.mxu0 %v940
  %980 = vmatpush.bf16.msra.mxu0 %v937
  %981 = vmatpush.bf16.msra.mxu0 %v934
  %982 = vmatpush.bf16.msra.mxu0 %v931
  %983 = vmatpush.bf16.msra.mxu0 %v928
  %984 = vmatpush.bf16.msra.mxu0 %v925
  %985 = vmatpush.bf16.msra.mxu0 %v922
  %986 = vmatpush.bf16.msra.mxu0 %v919
  %987 = vmatmul.bf16.gmra.mxu0 %v346
  %v988 = vpop.f32.mrf.mxu0
  %v989 = vadd.f32 0.0, %v988
  %v990 = vpop.f32.mrf.mxu0
  %991 = vdwg.mxu0
  %992 = vmatpush.bf16.msra.mxu0 %v941
  %993 = vmatpush.bf16.msra.mxu0 %v938
  %994 = vmatpush.bf16.msra.mxu0 %v935
  %995 = vmatpush.bf16.msra.mxu0 %v932
  %996 = vmatpush.bf16.msra.mxu0 %v929
  %997 = vmatpush.bf16.msra.mxu0 %v926
  %998 = vmatpush.bf16.msra.mxu0 %v923
  %999 = vmatpush.bf16.msra.mxu0 %v920
  %1000 = vmatmul.bf16.gmra.mxu0 %v346
  %v1001 = vpop.f32.mrf.mxu0
  %v1002 = vadd.f32 0.0, %v1001
  %v1003 = vpop.f32.mrf.mxu0
  %1004 = vdwg.mxu0
  %v1005 = vadd.f32 %v777, %v976
  %v1006 = vadd.f32 %v790, %v989
  %v1007 = vxor.u32 %v1005, 2147483648
  %v1008 = vxor.u32 %v1006, 2147483648
  %v1009 = vmul.f32 %v1007, 1.442695
  %v1010 = vpow.pop %v1009
  %v1011 = vmul.f32 %v1008, 1.442695
  %v1012 = vpow.pop %v1011
  %v1013 = vadd.f32 %v1010, 1.0
  %v1014 = vadd.f32 %v1012, 1.0
  %v1015 = vrcp.pop %v1013
  %v1016 = vmul.f32 %v1013, %v1015
  %v1017 = vsub.f32 1.0, %v1016
  %v1018 = vmul.f32 %v1015, %v1017
  %v1019 = vadd.f32 %v1015, %v1018
  %vm1020 = vweird.f32 %v1013
  %vm1021 = vweird.f32 %v1015
  %vm1022 = vmor %vm1020, %vm1021
  %v1023 = vsel %vm1022, %v1015, %v1019
  %v1024 = vand.u32 2147483647, %v1013
  %vm1025 = vcmp.eq.f32.partialorder %v1024, 8.507059e+37
  %v1026 = vand.u32 %v1013, 2147483648
  %v1027 = vor.u32 1.1754944e-38, %v1026
  %v1028 = vsel %vm1025, %v1027, %v1023
  %v1029 = vmul.f32 1.0, %v1028
  %v1030 = vrcp.pop %v1014
  %v1031 = vmul.f32 %v1014, %v1030
  %v1032 = vsub.f32 1.0, %v1031
  %v1033 = vmul.f32 %v1030, %v1032
  %v1034 = vadd.f32 %v1030, %v1033
  %vm1035 = vweird.f32 %v1014
  %vm1036 = vweird.f32 %v1030
  %vm1037 = vmor %vm1035, %vm1036
  %v1038 = vsel %vm1037, %v1030, %v1034
  %v1039 = vand.u32 2147483647, %v1014
  %vm1040 = vcmp.eq.f32.partialorder %v1039, 8.507059e+37
  %v1041 = vand.u32 %v1014, 2147483648
  %v1042 = vor.u32 1.1754944e-38, %v1041
  %v1043 = vsel %vm1040, %v1042, %v1038
  %v1044 = vmul.f32 1.0, %v1043
  %v1045 = vld [vmem:[%s13] sm:$0x1]
  %v1047 = vperm.slane %v1045, 0
  %v1049 = vadd.f32 %v1002, %v1047
  %v1050 = vmul.f32 %v1029, %v1049
  %v1051 = vadd.f32 %v803, %v1050
  %v1052 = vtanh.pop %v1051
  %v1053 = vsub.f32 1.0, %v1044
  %v1054 = vmul.f32 %v1053, %v1052
  %v1055 = vmul.f32 %v1044, %v138
  %v1056 = vadd.f32 %v1054, %v1055
  %v1057 = vpack.c.bf16 %v1056, %v1056
  %v1058 = vld [vmem:[%s14] sm:$0xf]
  %v1059 = vld [vmem:[%s14 + $0x4] sm:$0xf]
  %v1060 = vld [vmem:[%s14 + $0x8] sm:$0xf]
  %v1061 = vld [vmem:[%s14 + $0xc] sm:$0xf]
  %v1062 = vld [vmem:[%s14 + $0x10] sm:$0xf]
  %v1063 = vld [vmem:[%s14 + $0x14] sm:$0xf]
  %v1064 = vld [vmem:[%s14 + $0x18] sm:$0xf]
  %v1065 = vld [vmem:[%s14 + $0x1c] sm:$0xf]
  %v1066 = vld [vmem:[%s14 + $0x20] sm:$0xf]
  %v1067 = vld [vmem:[%s14 + $0x24] sm:$0xf]
  %v1068 = vld [vmem:[%s14 + $0x28] sm:$0xf]
  %v1069 = vld [vmem:[%s14 + $0x2c] sm:$0xf]
  %v1070 = vld [vmem:[%s14 + $0x30] sm:$0xf]
  %v1071 = vld [vmem:[%s14 + $0x34] sm:$0xf]
  %v1072 = vld [vmem:[%s14 + $0x38] sm:$0xf]
  %v1073 = vld [vmem:[%s14 + $0x3c] sm:$0xf]
  %v1074 = vld [vmem:[%s15] sm:$0x1]
  %v1076 = vperm.slane %v1074, 0
  %v1094 = vunpack.c.l.b16 %v1058
  %v1095 = vunpack.c.l.b16 %v1059
  %v1096 = vunpack.c.l.b16 %v1060
  %v1097 = vunpack.c.l.b16 %v1061
  %v1098 = vunpack.c.l.b16 %v1062
  %v1099 = vunpack.c.l.b16 %v1063
  %v1100 = vunpack.c.l.b16 %v1064
  %v1101 = vunpack.c.l.b16 %v1065
  %v1102 = vunpack.c.l.b16 %v1066
  %v1103 = vunpack.c.l.b16 %v1067
  %v1104 = vunpack.c.l.b16 %v1068
  %v1105 = vunpack.c.l.b16 %v1069
  %v1106 = vunpack.c.l.b16 %v1070
  %v1107 = vunpack.c.l.b16 %v1071
  %v1108 = vunpack.c.l.b16 %v1072
  %v1109 = vunpack.c.l.b16 %v1073
  %v1110 = vpack.c.b16 %v1095, %v1094
  %v1111 = vpack.c.b16 %v1097, %v1096
  %v1112 = vpack.c.b16 %v1099, %v1098
  %v1113 = vpack.c.b16 %v1101, %v1100
  %v1114 = vpack.c.b16 %v1103, %v1102
  %v1115 = vpack.c.b16 %v1105, %v1104
  %v1116 = vpack.c.b16 %v1107, %v1106
  %v1117 = vpack.c.b16 %v1109, %v1108
  %1126 = vmatpush.bf16.msra.mxu0 %v1117
  %1127 = vmatpush.bf16.msra.mxu0 %v1116
  %1128 = vmatpush.bf16.msra.mxu0 %v1115
  %1129 = vmatpush.bf16.msra.mxu0 %v1114
  %1130 = vmatpush.bf16.msra.mxu0 %v1113
  %1131 = vmatpush.bf16.msra.mxu0 %v1112
  %1132 = vmatpush.bf16.msra.mxu0 %v1111
  %1133 = vmatpush.bf16.msra.mxu0 %v1110
  %1134 = vmatmul.bf16.gmra.mxu0 %v1057
  %v1135 = vpop.f32.mrf.mxu0
  %v1136 = vadd.f32 %v1076, %v1135
  %v1137 = vpop.f32.mrf.mxu0
  %1138 = vdwg.mxu0
  %1139 = vst [vmem:[%s16] sm:$0xff] %v1136
  %v1140 = vsel %vm56, %v1136, -1e+30
  %1141 = vmax.xlane.f32.xlu0 %v1140
  %v1142 = vpop.xlane.xlu0 %1141
  %vm1143 = vcmp.eq.f32.partialorder %v1140, %v1142
  %v1144 = vsel %vm1143, %v55, 128.0
  %1145 = vmin.xlane.f32.xlu0 %v1144
  %v1146 = vpop.xlane.xlu0 %1145
  %vm1147 = vcmp.eq.f32.partialorder %v55, %v1146
  %v1148 = vsel %vm1147, 1, 0
  %v1149 = vcvt.s32.f32 %v1148
  %v1150 = vpack.c.bf16 %v1149, %v1149
  %v1151 = vld [vmem:[%s4] sm:$0xf]
  %v1152 = vld [vmem:[%s4 + $0x4] sm:$0xf]
  %v1153 = vld [vmem:[%s4 + $0x8] sm:$0xf]
  %v1154 = vld [vmem:[%s4 + $0xc] sm:$0xf]
  %v1155 = vld [vmem:[%s4 + $0x10] sm:$0xf]
  %v1156 = vld [vmem:[%s4 + $0x14] sm:$0xf]
  %v1157 = vld [vmem:[%s4 + $0x18] sm:$0xf]
  %v1158 = vld [vmem:[%s4 + $0x1c] sm:$0xf]
  %v1159 = vld [vmem:[%s4 + $0x20] sm:$0xf]
  %v1160 = vld [vmem:[%s4 + $0x24] sm:$0xf]
  %v1161 = vld [vmem:[%s4 + $0x28] sm:$0xf]
  %v1162 = vld [vmem:[%s4 + $0x2c] sm:$0xf]
  %v1163 = vld [vmem:[%s4 + $0x30] sm:$0xf]
  %v1164 = vld [vmem:[%s4 + $0x34] sm:$0xf]
  %v1165 = vld [vmem:[%s4 + $0x38] sm:$0xf]
  %v1166 = vld [vmem:[%s4 + $0x3c] sm:$0xf]
  %v1183 = vunpack.c.l.b16 %v1151
  %v1184 = vunpack.c.l.b16 %v1152
  %v1185 = vunpack.c.l.b16 %v1153
  %v1186 = vunpack.c.l.b16 %v1154
  %v1187 = vunpack.c.l.b16 %v1155
  %v1188 = vunpack.c.l.b16 %v1156
  %v1189 = vunpack.c.l.b16 %v1157
  %v1190 = vunpack.c.l.b16 %v1158
  %v1191 = vunpack.c.l.b16 %v1159
  %v1192 = vunpack.c.l.b16 %v1160
  %v1193 = vunpack.c.l.b16 %v1161
  %v1194 = vunpack.c.l.b16 %v1162
  %v1195 = vunpack.c.l.b16 %v1163
  %v1196 = vunpack.c.l.b16 %v1164
  %v1197 = vunpack.c.l.b16 %v1165
  %v1198 = vunpack.c.l.b16 %v1166
  %v1199 = vpack.c.b16 %v1184, %v1183
  %v1200 = vpack.c.b16 %v1186, %v1185
  %v1201 = vpack.c.b16 %v1188, %v1187
  %v1202 = vpack.c.b16 %v1190, %v1189
  %v1203 = vpack.c.b16 %v1192, %v1191
  %v1204 = vpack.c.b16 %v1194, %v1193
  %v1205 = vpack.c.b16 %v1196, %v1195
  %v1206 = vpack.c.b16 %v1198, %v1197
  %1215 = vmatpush.bf16.msra.mxu0 %v1206
  %1216 = vmatpush.bf16.msra.mxu0 %v1205
  %1217 = vmatpush.bf16.msra.mxu0 %v1204
  %1218 = vmatpush.bf16.msra.mxu0 %v1203
  %1219 = vmatpush.bf16.msra.mxu0 %v1202
  %1220 = vmatpush.bf16.msra.mxu0 %v1201
  %1221 = vmatpush.bf16.msra.mxu0 %v1200
  %1222 = vmatpush.bf16.msra.mxu0 %v1199
  %1223 = vmatmul.bf16.gmra.mxu0 %v1150
  %v1224 = vpop.f32.mrf.mxu0
  %v1225 = vadd.f32 0.0, %v1224
  %v1226 = vpop.f32.mrf.mxu0
  %1227 = vdwg.mxu0
  %v1228 = vld [vmem:[%s3] sm:$0xff]
  %v1229 = vmul.f32 %v1225, %v1228
  %v1230 = vld [vmem:[%s2] sm:$0xff]
  %v1231 = vadd.f32 %v1229, %v1230
  %v1232 = vpack.c.bf16 %v1231, %v1231
  %v1233 = vld [vmem:[%s6] sm:$0xff]
  %v1234 = vld [vmem:[%s6 + $0x8] sm:$0xf]
  %v1235 = vld [vmem:[%s6 + $0xc] sm:$0xff]
  %v1236 = vld [vmem:[%s6 + $0x14] sm:$0xf]
  %v1237 = vld [vmem:[%s6 + $0x18] sm:$0xff]
  %v1238 = vld [vmem:[%s6 + $0x20] sm:$0xf]
  %v1239 = vld [vmem:[%s6 + $0x24] sm:$0xff]
  %v1240 = vld [vmem:[%s6 + $0x2c] sm:$0xf]
  %v1241 = vld [vmem:[%s6 + $0x30] sm:$0xff]
  %v1242 = vld [vmem:[%s6 + $0x38] sm:$0xf]
  %v1243 = vld [vmem:[%s6 + $0x3c] sm:$0xff]
  %v1244 = vld [vmem:[%s6 + $0x44] sm:$0xf]
  %v1245 = vld [vmem:[%s6 + $0x48] sm:$0xff]
  %v1246 = vld [vmem:[%s6 + $0x50] sm:$0xf]
  %v1247 = vld [vmem:[%s6 + $0x54] sm:$0xff]
  %v1248 = vld [vmem:[%s6 + $0x5c] sm:$0xf]
  %v1249 = vld [vmem:[%s6 + $0x60] sm:$0xff]
  %v1250 = vld [vmem:[%s6 + $0x68] sm:$0xf]
  %v1251 = vld [vmem:[%s6 + $0x6c] sm:$0xff]
  %v1252 = vld [vmem:[%s6 + $0x74] sm:$0xf]
  %v1253 = vld [vmem:[%s6 + $0x78] sm:$0xff]
  %v1254 = vld [vmem:[%s6 + $0x80] sm:$0xf]
  %v1255 = vld [vmem:[%s6 + $0x84] sm:$0xff]
  %v1256 = vld [vmem:[%s6 + $0x8c] sm:$0xf]
  %v1257 = vld [vmem:[%s6 + $0x90] sm:$0xff]
  %v1258 = vld [vmem:[%s6 + $0x98] sm:$0xf]
  %v1259 = vld [vmem:[%s6 + $0x9c] sm:$0xff]
  %v1260 = vld [vmem:[%s6 + $0xa4] sm:$0xf]
  %v1261 = vld [vmem:[%s6 + $0xa8] sm:$0xff]
  %v1262 = vld [vmem:[%s6 + $0xb0] sm:$0xf]
  %v1263 = vld [vmem:[%s6 + $0xb4] sm:$0xff]
  %v1264 = vld [vmem:[%s6 + $0xbc] sm:$0xf]
  %v1265 = vld [vmem:[%s8] sm:$0x7]
  %v1267 = vperm.slane %v1265, 0
  %v1268 = vperm.slane %v1265, 1
  %v1269 = vperm.slane %v1265, 2
  %v1305 = vunpack.c.l.b16 %v1233
  %v1306 = vunpack.c.h.b16 %v1233
  %v1307 = vunpack.c.l.b16 %v1234
  %v1308 = vunpack.c.l.b16 %v1235
  %v1309 = vunpack.c.h.b16 %v1235
  %v1310 = vunpack.c.l.b16 %v1236
  %v1311 = vunpack.c.l.b16 %v1237
  %v1312 = vunpack.c.h.b16 %v1237
  %v1313 = vunpack.c.l.b16 %v1238
  %v1314 = vunpack.c.l.b16 %v1239
  %v1315 = vunpack.c.h.b16 %v1239
  %v1316 = vunpack.c.l.b16 %v1240
  %v1317 = vunpack.c.l.b16 %v1241
  %v1318 = vunpack.c.h.b16 %v1241
  %v1319 = vunpack.c.l.b16 %v1242
  %v1320 = vunpack.c.l.b16 %v1243
  %v1321 = vunpack.c.h.b16 %v1243
  %v1322 = vunpack.c.l.b16 %v1244
  %v1323 = vunpack.c.l.b16 %v1245
  %v1324 = vunpack.c.h.b16 %v1245
  %v1325 = vunpack.c.l.b16 %v1246
  %v1326 = vunpack.c.l.b16 %v1247
  %v1327 = vunpack.c.h.b16 %v1247
  %v1328 = vunpack.c.l.b16 %v1248
  %v1329 = vunpack.c.l.b16 %v1249
  %v1330 = vunpack.c.h.b16 %v1249
  %v1331 = vunpack.c.l.b16 %v1250
  %v1332 = vunpack.c.l.b16 %v1251
  %v1333 = vunpack.c.h.b16 %v1251
  %v1334 = vunpack.c.l.b16 %v1252
  %v1335 = vunpack.c.l.b16 %v1253
  %v1336 = vunpack.c.h.b16 %v1253
  %v1337 = vunpack.c.l.b16 %v1254
  %v1338 = vunpack.c.l.b16 %v1255
  %v1339 = vunpack.c.h.b16 %v1255
  %v1340 = vunpack.c.l.b16 %v1256
  %v1341 = vunpack.c.l.b16 %v1257
  %v1342 = vunpack.c.h.b16 %v1257
  %v1343 = vunpack.c.l.b16 %v1258
  %v1344 = vunpack.c.l.b16 %v1259
  %v1345 = vunpack.c.h.b16 %v1259
  %v1346 = vunpack.c.l.b16 %v1260
  %v1347 = vunpack.c.l.b16 %v1261
  %v1348 = vunpack.c.h.b16 %v1261
  %v1349 = vunpack.c.l.b16 %v1262
  %v1350 = vunpack.c.l.b16 %v1263
  %v1351 = vunpack.c.h.b16 %v1263
  %v1352 = vunpack.c.l.b16 %v1264
  %v1353 = vpack.c.b16 %v1308, %v1305
  %v1354 = vpack.c.b16 %v1309, %v1306
  %v1355 = vpack.c.b16 %v1310, %v1307
  %v1356 = vpack.c.b16 %v1314, %v1311
  %v1357 = vpack.c.b16 %v1315, %v1312
  %v1358 = vpack.c.b16 %v1316, %v1313
  %v1359 = vpack.c.b16 %v1320, %v1317
  %v1360 = vpack.c.b16 %v1321, %v1318
  %v1361 = vpack.c.b16 %v1322, %v1319
  %v1362 = vpack.c.b16 %v1326, %v1323
  %v1363 = vpack.c.b16 %v1327, %v1324
  %v1364 = vpack.c.b16 %v1328, %v1325
  %v1365 = vpack.c.b16 %v1332, %v1329
  %v1366 = vpack.c.b16 %v1333, %v1330
  %v1367 = vpack.c.b16 %v1334, %v1331
  %v1368 = vpack.c.b16 %v1338, %v1335
  %v1369 = vpack.c.b16 %v1339, %v1336
  %v1370 = vpack.c.b16 %v1340, %v1337
  %v1371 = vpack.c.b16 %v1344, %v1341
  %v1372 = vpack.c.b16 %v1345, %v1342
  %v1373 = vpack.c.b16 %v1346, %v1343
  %v1374 = vpack.c.b16 %v1350, %v1347
  %v1375 = vpack.c.b16 %v1351, %v1348
  %v1376 = vpack.c.b16 %v1352, %v1349
  %1401 = vmatpush.bf16.msra.mxu0 %v1374
  %1402 = vmatpush.bf16.msra.mxu0 %v1371
  %1403 = vmatpush.bf16.msra.mxu0 %v1368
  %1404 = vmatpush.bf16.msra.mxu0 %v1365
  %1405 = vmatpush.bf16.msra.mxu0 %v1362
  %1406 = vmatpush.bf16.msra.mxu0 %v1359
  %1407 = vmatpush.bf16.msra.mxu0 %v1356
  %1408 = vmatpush.bf16.msra.mxu0 %v1353
  %1409 = vmatmul.bf16.gmra.mxu0 %v1232
  %v1410 = vpop.f32.mrf.mxu0
  %v1411 = vadd.f32 %v1267, %v1410
  %v1412 = vpop.f32.mrf.mxu0
  %1413 = vdwg.mxu0
  %1414 = vmatpush.bf16.msra.mxu0 %v1375
  %1415 = vmatpush.bf16.msra.mxu0 %v1372
  %1416 = vmatpush.bf16.msra.mxu0 %v1369
  %1417 = vmatpush.bf16.msra.mxu0 %v1366
  %1418 = vmatpush.bf16.msra.mxu0 %v1363
  %1419 = vmatpush.bf16.msra.mxu0 %v1360
  %1420 = vmatpush.bf16.msra.mxu0 %v1357
  %1421 = vmatpush.bf16.msra.mxu0 %v1354
  %1422 = vmatmul.bf16.gmra.mxu0 %v1232
  %v1423 = vpop.f32.mrf.mxu0
  %v1424 = vadd.f32 %v1268, %v1423
  %v1425 = vpop.f32.mrf.mxu0
  %1426 = vdwg.mxu0
  %1427 = vmatpush.bf16.msra.mxu0 %v1376
  %1428 = vmatpush.bf16.msra.mxu0 %v1373
  %1429 = vmatpush.bf16.msra.mxu0 %v1370
  %1430 = vmatpush.bf16.msra.mxu0 %v1367
  %1431 = vmatpush.bf16.msra.mxu0 %v1364
  %1432 = vmatpush.bf16.msra.mxu0 %v1361
  %1433 = vmatpush.bf16.msra.mxu0 %v1358
  %1434 = vmatpush.bf16.msra.mxu0 %v1355
  %1435 = vmatmul.bf16.gmra.mxu0 %v1232
  %v1436 = vpop.f32.mrf.mxu0
  %v1437 = vadd.f32 %v1269, %v1436
  %v1438 = vpop.f32.mrf.mxu0
  %1439 = vdwg.mxu0
  %v1440 = vld [vmem:[%s7] sm:$0xff]
  %v1441 = vld [vmem:[%s7 + $0x8] sm:$0xf]
  %v1442 = vld [vmem:[%s7 + $0xc] sm:$0xff]
  %v1443 = vld [vmem:[%s7 + $0x14] sm:$0xf]
  %v1444 = vld [vmem:[%s7 + $0x18] sm:$0xff]
  %v1445 = vld [vmem:[%s7 + $0x20] sm:$0xf]
  %v1446 = vld [vmem:[%s7 + $0x24] sm:$0xff]
  %v1447 = vld [vmem:[%s7 + $0x2c] sm:$0xf]
  %v1448 = vld [vmem:[%s7 + $0x30] sm:$0xff]
  %v1449 = vld [vmem:[%s7 + $0x38] sm:$0xf]
  %v1450 = vld [vmem:[%s7 + $0x3c] sm:$0xff]
  %v1451 = vld [vmem:[%s7 + $0x44] sm:$0xf]
  %v1452 = vld [vmem:[%s7 + $0x48] sm:$0xff]
  %v1453 = vld [vmem:[%s7 + $0x50] sm:$0xf]
  %v1454 = vld [vmem:[%s7 + $0x54] sm:$0xff]
  %v1455 = vld [vmem:[%s7 + $0x5c] sm:$0xf]
  %v1456 = vld [vmem:[%s7 + $0x60] sm:$0xff]
  %v1457 = vld [vmem:[%s7 + $0x68] sm:$0xf]
  %v1458 = vld [vmem:[%s7 + $0x6c] sm:$0xff]
  %v1459 = vld [vmem:[%s7 + $0x74] sm:$0xf]
  %v1460 = vld [vmem:[%s7 + $0x78] sm:$0xff]
  %v1461 = vld [vmem:[%s7 + $0x80] sm:$0xf]
  %v1462 = vld [vmem:[%s7 + $0x84] sm:$0xff]
  %v1463 = vld [vmem:[%s7 + $0x8c] sm:$0xf]
  %v1464 = vld [vmem:[%s7 + $0x90] sm:$0xff]
  %v1465 = vld [vmem:[%s7 + $0x98] sm:$0xf]
  %v1466 = vld [vmem:[%s7 + $0x9c] sm:$0xff]
  %v1467 = vld [vmem:[%s7 + $0xa4] sm:$0xf]
  %v1468 = vld [vmem:[%s7 + $0xa8] sm:$0xff]
  %v1469 = vld [vmem:[%s7 + $0xb0] sm:$0xf]
  %v1470 = vld [vmem:[%s7 + $0xb4] sm:$0xff]
  %v1471 = vld [vmem:[%s7 + $0xbc] sm:$0xf]
  %v1504 = vunpack.c.l.b16 %v1440
  %v1505 = vunpack.c.h.b16 %v1440
  %v1506 = vunpack.c.l.b16 %v1441
  %v1507 = vunpack.c.l.b16 %v1442
  %v1508 = vunpack.c.h.b16 %v1442
  %v1509 = vunpack.c.l.b16 %v1443
  %v1510 = vunpack.c.l.b16 %v1444
  %v1511 = vunpack.c.h.b16 %v1444
  %v1512 = vunpack.c.l.b16 %v1445
  %v1513 = vunpack.c.l.b16 %v1446
  %v1514 = vunpack.c.h.b16 %v1446
  %v1515 = vunpack.c.l.b16 %v1447
  %v1516 = vunpack.c.l.b16 %v1448
  %v1517 = vunpack.c.h.b16 %v1448
  %v1518 = vunpack.c.l.b16 %v1449
  %v1519 = vunpack.c.l.b16 %v1450
  %v1520 = vunpack.c.h.b16 %v1450
  %v1521 = vunpack.c.l.b16 %v1451
  %v1522 = vunpack.c.l.b16 %v1452
  %v1523 = vunpack.c.h.b16 %v1452
  %v1524 = vunpack.c.l.b16 %v1453
  %v1525 = vunpack.c.l.b16 %v1454
  %v1526 = vunpack.c.h.b16 %v1454
  %v1527 = vunpack.c.l.b16 %v1455
  %v1528 = vunpack.c.l.b16 %v1456
  %v1529 = vunpack.c.h.b16 %v1456
  %v1530 = vunpack.c.l.b16 %v1457
  %v1531 = vunpack.c.l.b16 %v1458
  %v1532 = vunpack.c.h.b16 %v1458
  %v1533 = vunpack.c.l.b16 %v1459
  %v1534 = vunpack.c.l.b16 %v1460
  %v1535 = vunpack.c.h.b16 %v1460
  %v1536 = vunpack.c.l.b16 %v1461
  %v1537 = vunpack.c.l.b16 %v1462
  %v1538 = vunpack.c.h.b16 %v1462
  %v1539 = vunpack.c.l.b16 %v1463
  %v1540 = vunpack.c.l.b16 %v1464
  %v1541 = vunpack.c.h.b16 %v1464
  %v1542 = vunpack.c.l.b16 %v1465
  %v1543 = vunpack.c.l.b16 %v1466
  %v1544 = vunpack.c.h.b16 %v1466
  %v1545 = vunpack.c.l.b16 %v1467
  %v1546 = vunpack.c.l.b16 %v1468
  %v1547 = vunpack.c.h.b16 %v1468
  %v1548 = vunpack.c.l.b16 %v1469
  %v1549 = vunpack.c.l.b16 %v1470
  %v1550 = vunpack.c.h.b16 %v1470
  %v1551 = vunpack.c.l.b16 %v1471
  %v1552 = vpack.c.b16 %v1507, %v1504
  %v1553 = vpack.c.b16 %v1508, %v1505
  %v1554 = vpack.c.b16 %v1509, %v1506
  %v1555 = vpack.c.b16 %v1513, %v1510
  %v1556 = vpack.c.b16 %v1514, %v1511
  %v1557 = vpack.c.b16 %v1515, %v1512
  %v1558 = vpack.c.b16 %v1519, %v1516
  %v1559 = vpack.c.b16 %v1520, %v1517
  %v1560 = vpack.c.b16 %v1521, %v1518
  %v1561 = vpack.c.b16 %v1525, %v1522
  %v1562 = vpack.c.b16 %v1526, %v1523
  %v1563 = vpack.c.b16 %v1527, %v1524
  %v1564 = vpack.c.b16 %v1531, %v1528
  %v1565 = vpack.c.b16 %v1532, %v1529
  %v1566 = vpack.c.b16 %v1533, %v1530
  %v1567 = vpack.c.b16 %v1537, %v1534
  %v1568 = vpack.c.b16 %v1538, %v1535
  %v1569 = vpack.c.b16 %v1539, %v1536
  %v1570 = vpack.c.b16 %v1543, %v1540
  %v1571 = vpack.c.b16 %v1544, %v1541
  %v1572 = vpack.c.b16 %v1545, %v1542
  %v1573 = vpack.c.b16 %v1549, %v1546
  %v1574 = vpack.c.b16 %v1550, %v1547
  %v1575 = vpack.c.b16 %v1551, %v1548
  %1600 = vmatpush.bf16.msra.mxu0 %v1573
  %1601 = vmatpush.bf16.msra.mxu0 %v1570
  %1602 = vmatpush.bf16.msra.mxu0 %v1567
  %1603 = vmatpush.bf16.msra.mxu0 %v1564
  %1604 = vmatpush.bf16.msra.mxu0 %v1561
  %1605 = vmatpush.bf16.msra.mxu0 %v1558
  %1606 = vmatpush.bf16.msra.mxu0 %v1555
  %1607 = vmatpush.bf16.msra.mxu0 %v1552
  %1608 = vmatmul.bf16.gmra.mxu0 %v598
  %v1609 = vpop.f32.mrf.mxu0
  %v1610 = vadd.f32 0.0, %v1609
  %v1611 = vpop.f32.mrf.mxu0
  %1612 = vdwg.mxu0
  %1613 = vmatpush.bf16.msra.mxu0 %v1574
  %1614 = vmatpush.bf16.msra.mxu0 %v1571
  %1615 = vmatpush.bf16.msra.mxu0 %v1568
  %1616 = vmatpush.bf16.msra.mxu0 %v1565
  %1617 = vmatpush.bf16.msra.mxu0 %v1562
  %1618 = vmatpush.bf16.msra.mxu0 %v1559
  %1619 = vmatpush.bf16.msra.mxu0 %v1556
  %1620 = vmatpush.bf16.msra.mxu0 %v1553
  %1621 = vmatmul.bf16.gmra.mxu0 %v598
  %v1622 = vpop.f32.mrf.mxu0
  %v1623 = vadd.f32 0.0, %v1622
  %v1624 = vpop.f32.mrf.mxu0
  %1625 = vdwg.mxu0
  %1626 = vmatpush.bf16.msra.mxu0 %v1575
  %1627 = vmatpush.bf16.msra.mxu0 %v1572
  %1628 = vmatpush.bf16.msra.mxu0 %v1569
  %1629 = vmatpush.bf16.msra.mxu0 %v1566
  %1630 = vmatpush.bf16.msra.mxu0 %v1563
  %1631 = vmatpush.bf16.msra.mxu0 %v1560
  %1632 = vmatpush.bf16.msra.mxu0 %v1557
  %1633 = vmatpush.bf16.msra.mxu0 %v1554
  %1634 = vmatmul.bf16.gmra.mxu0 %v598
  %v1635 = vpop.f32.mrf.mxu0
  %v1636 = vadd.f32 0.0, %v1635
  %v1637 = vpop.f32.mrf.mxu0
  %1638 = vdwg.mxu0
  %v1639 = vadd.f32 %v1411, %v1610
  %v1640 = vadd.f32 %v1424, %v1623
  %v1641 = vxor.u32 %v1639, 2147483648
  %v1642 = vxor.u32 %v1640, 2147483648
  %v1643 = vmul.f32 %v1641, 1.442695
  %v1644 = vpow.pop %v1643
  %v1645 = vmul.f32 %v1642, 1.442695
  %v1646 = vpow.pop %v1645
  %v1647 = vadd.f32 %v1644, 1.0
  %v1648 = vadd.f32 %v1646, 1.0
  %v1649 = vrcp.pop %v1647
  %v1650 = vmul.f32 %v1647, %v1649
  %v1651 = vsub.f32 1.0, %v1650
  %v1652 = vmul.f32 %v1649, %v1651
  %v1653 = vadd.f32 %v1649, %v1652
  %vm1654 = vweird.f32 %v1647
  %vm1655 = vweird.f32 %v1649
  %vm1656 = vmor %vm1654, %vm1655
  %v1657 = vsel %vm1656, %v1649, %v1653
  %v1658 = vand.u32 2147483647, %v1647
  %vm1659 = vcmp.eq.f32.partialorder %v1658, 8.507059e+37
  %v1660 = vand.u32 %v1647, 2147483648
  %v1661 = vor.u32 1.1754944e-38, %v1660
  %v1662 = vsel %vm1659, %v1661, %v1657
  %v1663 = vmul.f32 1.0, %v1662
  %v1664 = vrcp.pop %v1648
  %v1665 = vmul.f32 %v1648, %v1664
  %v1666 = vsub.f32 1.0, %v1665
  %v1667 = vmul.f32 %v1664, %v1666
  %v1668 = vadd.f32 %v1664, %v1667
  %vm1669 = vweird.f32 %v1648
  %vm1670 = vweird.f32 %v1664
  %vm1671 = vmor %vm1669, %vm1670
  %v1672 = vsel %vm1671, %v1664, %v1668
  %v1673 = vand.u32 2147483647, %v1648
  %vm1674 = vcmp.eq.f32.partialorder %v1673, 8.507059e+37
  %v1675 = vand.u32 %v1648, 2147483648
  %v1676 = vor.u32 1.1754944e-38, %v1675
  %v1677 = vsel %vm1674, %v1676, %v1672
  %v1678 = vmul.f32 1.0, %v1677
  %v1679 = vld [vmem:[%s9] sm:$0x1]
  %v1681 = vperm.slane %v1679, 0
  %v1683 = vadd.f32 %v1636, %v1681
  %v1684 = vmul.f32 %v1663, %v1683
  %v1685 = vadd.f32 %v1437, %v1684
  %v1686 = vtanh.pop %v1685
  %v1687 = vsub.f32 1.0, %v1678
  %v1688 = vmul.f32 %v1687, %v1686
  %v1689 = vmul.f32 %v1678, %v597
  %v1690 = vadd.f32 %v1688, %v1689
  %v1691 = vpack.c.bf16 %v1690, %v1690
  %v1692 = vld [vmem:[%s10] sm:$0xff]
  %v1693 = vld [vmem:[%s10 + $0x8] sm:$0xf]
  %v1694 = vld [vmem:[%s10 + $0xc] sm:$0xff]
  %v1695 = vld [vmem:[%s10 + $0x14] sm:$0xf]
  %v1696 = vld [vmem:[%s10 + $0x18] sm:$0xff]
  %v1697 = vld [vmem:[%s10 + $0x20] sm:$0xf]
  %v1698 = vld [vmem:[%s10 + $0x24] sm:$0xff]
  %v1699 = vld [vmem:[%s10 + $0x2c] sm:$0xf]
  %v1700 = vld [vmem:[%s10 + $0x30] sm:$0xff]
  %v1701 = vld [vmem:[%s10 + $0x38] sm:$0xf]
  %v1702 = vld [vmem:[%s10 + $0x3c] sm:$0xff]
  %v1703 = vld [vmem:[%s10 + $0x44] sm:$0xf]
  %v1704 = vld [vmem:[%s10 + $0x48] sm:$0xff]
  %v1705 = vld [vmem:[%s10 + $0x50] sm:$0xf]
  %v1706 = vld [vmem:[%s10 + $0x54] sm:$0xff]
  %v1707 = vld [vmem:[%s10 + $0x5c] sm:$0xf]
  %v1708 = vld [vmem:[%s10 + $0x60] sm:$0xff]
  %v1709 = vld [vmem:[%s10 + $0x68] sm:$0xf]
  %v1710 = vld [vmem:[%s10 + $0x6c] sm:$0xff]
  %v1711 = vld [vmem:[%s10 + $0x74] sm:$0xf]
  %v1712 = vld [vmem:[%s10 + $0x78] sm:$0xff]
  %v1713 = vld [vmem:[%s10 + $0x80] sm:$0xf]
  %v1714 = vld [vmem:[%s10 + $0x84] sm:$0xff]
  %v1715 = vld [vmem:[%s10 + $0x8c] sm:$0xf]
  %v1716 = vld [vmem:[%s10 + $0x90] sm:$0xff]
  %v1717 = vld [vmem:[%s10 + $0x98] sm:$0xf]
  %v1718 = vld [vmem:[%s10 + $0x9c] sm:$0xff]
  %v1719 = vld [vmem:[%s10 + $0xa4] sm:$0xf]
  %v1720 = vld [vmem:[%s10 + $0xa8] sm:$0xff]
  %v1721 = vld [vmem:[%s10 + $0xb0] sm:$0xf]
  %v1722 = vld [vmem:[%s10 + $0xb4] sm:$0xff]
  %v1723 = vld [vmem:[%s10 + $0xbc] sm:$0xf]
  %v1724 = vld [vmem:[%s12] sm:$0x7]
  %v1726 = vperm.slane %v1724, 0
  %v1727 = vperm.slane %v1724, 1
  %v1728 = vperm.slane %v1724, 2
  %v1764 = vunpack.c.l.b16 %v1692
  %v1765 = vunpack.c.h.b16 %v1692
  %v1766 = vunpack.c.l.b16 %v1693
  %v1767 = vunpack.c.l.b16 %v1694
  %v1768 = vunpack.c.h.b16 %v1694
  %v1769 = vunpack.c.l.b16 %v1695
  %v1770 = vunpack.c.l.b16 %v1696
  %v1771 = vunpack.c.h.b16 %v1696
  %v1772 = vunpack.c.l.b16 %v1697
  %v1773 = vunpack.c.l.b16 %v1698
  %v1774 = vunpack.c.h.b16 %v1698
  %v1775 = vunpack.c.l.b16 %v1699
  %v1776 = vunpack.c.l.b16 %v1700
  %v1777 = vunpack.c.h.b16 %v1700
  %v1778 = vunpack.c.l.b16 %v1701
  %v1779 = vunpack.c.l.b16 %v1702
  %v1780 = vunpack.c.h.b16 %v1702
  %v1781 = vunpack.c.l.b16 %v1703
  %v1782 = vunpack.c.l.b16 %v1704
  %v1783 = vunpack.c.h.b16 %v1704
  %v1784 = vunpack.c.l.b16 %v1705
  %v1785 = vunpack.c.l.b16 %v1706
  %v1786 = vunpack.c.h.b16 %v1706
  %v1787 = vunpack.c.l.b16 %v1707
  %v1788 = vunpack.c.l.b16 %v1708
  %v1789 = vunpack.c.h.b16 %v1708
  %v1790 = vunpack.c.l.b16 %v1709
  %v1791 = vunpack.c.l.b16 %v1710
  %v1792 = vunpack.c.h.b16 %v1710
  %v1793 = vunpack.c.l.b16 %v1711
  %v1794 = vunpack.c.l.b16 %v1712
  %v1795 = vunpack.c.h.b16 %v1712
  %v1796 = vunpack.c.l.b16 %v1713
  %v1797 = vunpack.c.l.b16 %v1714
  %v1798 = vunpack.c.h.b16 %v1714
  %v1799 = vunpack.c.l.b16 %v1715
  %v1800 = vunpack.c.l.b16 %v1716
  %v1801 = vunpack.c.h.b16 %v1716
  %v1802 = vunpack.c.l.b16 %v1717
  %v1803 = vunpack.c.l.b16 %v1718
  %v1804 = vunpack.c.h.b16 %v1718
  %v1805 = vunpack.c.l.b16 %v1719
  %v1806 = vunpack.c.l.b16 %v1720
  %v1807 = vunpack.c.h.b16 %v1720
  %v1808 = vunpack.c.l.b16 %v1721
  %v1809 = vunpack.c.l.b16 %v1722
  %v1810 = vunpack.c.h.b16 %v1722
  %v1811 = vunpack.c.l.b16 %v1723
  %v1812 = vpack.c.b16 %v1767, %v1764
  %v1813 = vpack.c.b16 %v1768, %v1765
  %v1814 = vpack.c.b16 %v1769, %v1766
  %v1815 = vpack.c.b16 %v1773, %v1770
  %v1816 = vpack.c.b16 %v1774, %v1771
  %v1817 = vpack.c.b16 %v1775, %v1772
  %v1818 = vpack.c.b16 %v1779, %v1776
  %v1819 = vpack.c.b16 %v1780, %v1777
  %v1820 = vpack.c.b16 %v1781, %v1778
  %v1821 = vpack.c.b16 %v1785, %v1782
  %v1822 = vpack.c.b16 %v1786, %v1783
  %v1823 = vpack.c.b16 %v1787, %v1784
  %v1824 = vpack.c.b16 %v1791, %v1788
  %v1825 = vpack.c.b16 %v1792, %v1789
  %v1826 = vpack.c.b16 %v1793, %v1790
  %v1827 = vpack.c.b16 %v1797, %v1794
  %v1828 = vpack.c.b16 %v1798, %v1795
  %v1829 = vpack.c.b16 %v1799, %v1796
  %v1830 = vpack.c.b16 %v1803, %v1800
  %v1831 = vpack.c.b16 %v1804, %v1801
  %v1832 = vpack.c.b16 %v1805, %v1802
  %v1833 = vpack.c.b16 %v1809, %v1806
  %v1834 = vpack.c.b16 %v1810, %v1807
  %v1835 = vpack.c.b16 %v1811, %v1808
  %1860 = vmatpush.bf16.msra.mxu0 %v1833
  %1861 = vmatpush.bf16.msra.mxu0 %v1830
  %1862 = vmatpush.bf16.msra.mxu0 %v1827
  %1863 = vmatpush.bf16.msra.mxu0 %v1824
  %1864 = vmatpush.bf16.msra.mxu0 %v1821
  %1865 = vmatpush.bf16.msra.mxu0 %v1818
  %1866 = vmatpush.bf16.msra.mxu0 %v1815
  %1867 = vmatpush.bf16.msra.mxu0 %v1812
  %1868 = vmatmul.bf16.gmra.mxu0 %v1691
  %v1869 = vpop.f32.mrf.mxu0
  %v1870 = vadd.f32 %v1726, %v1869
  %v1871 = vpop.f32.mrf.mxu0
  %1872 = vdwg.mxu0
  %1873 = vmatpush.bf16.msra.mxu0 %v1834
  %1874 = vmatpush.bf16.msra.mxu0 %v1831
  %1875 = vmatpush.bf16.msra.mxu0 %v1828
  %1876 = vmatpush.bf16.msra.mxu0 %v1825
  %1877 = vmatpush.bf16.msra.mxu0 %v1822
  %1878 = vmatpush.bf16.msra.mxu0 %v1819
  %1879 = vmatpush.bf16.msra.mxu0 %v1816
  %1880 = vmatpush.bf16.msra.mxu0 %v1813
  %1881 = vmatmul.bf16.gmra.mxu0 %v1691
  %v1882 = vpop.f32.mrf.mxu0
  %v1883 = vadd.f32 %v1727, %v1882
  %v1884 = vpop.f32.mrf.mxu0
  %1885 = vdwg.mxu0
  %1886 = vmatpush.bf16.msra.mxu0 %v1835
  %1887 = vmatpush.bf16.msra.mxu0 %v1832
  %1888 = vmatpush.bf16.msra.mxu0 %v1829
  %1889 = vmatpush.bf16.msra.mxu0 %v1826
  %1890 = vmatpush.bf16.msra.mxu0 %v1823
  %1891 = vmatpush.bf16.msra.mxu0 %v1820
  %1892 = vmatpush.bf16.msra.mxu0 %v1817
  %1893 = vmatpush.bf16.msra.mxu0 %v1814
  %1894 = vmatmul.bf16.gmra.mxu0 %v1691
  %v1895 = vpop.f32.mrf.mxu0
  %v1896 = vadd.f32 %v1728, %v1895
  %v1897 = vpop.f32.mrf.mxu0
  %1898 = vdwg.mxu0
  %v1899 = vld [vmem:[%s11] sm:$0xff]
  %v1900 = vld [vmem:[%s11 + $0x8] sm:$0xf]
  %v1901 = vld [vmem:[%s11 + $0xc] sm:$0xff]
  %v1902 = vld [vmem:[%s11 + $0x14] sm:$0xf]
  %v1903 = vld [vmem:[%s11 + $0x18] sm:$0xff]
  %v1904 = vld [vmem:[%s11 + $0x20] sm:$0xf]
  %v1905 = vld [vmem:[%s11 + $0x24] sm:$0xff]
  %v1906 = vld [vmem:[%s11 + $0x2c] sm:$0xf]
  %v1907 = vld [vmem:[%s11 + $0x30] sm:$0xff]
  %v1908 = vld [vmem:[%s11 + $0x38] sm:$0xf]
  %v1909 = vld [vmem:[%s11 + $0x3c] sm:$0xff]
  %v1910 = vld [vmem:[%s11 + $0x44] sm:$0xf]
  %v1911 = vld [vmem:[%s11 + $0x48] sm:$0xff]
  %v1912 = vld [vmem:[%s11 + $0x50] sm:$0xf]
  %v1913 = vld [vmem:[%s11 + $0x54] sm:$0xff]
  %v1914 = vld [vmem:[%s11 + $0x5c] sm:$0xf]
  %v1915 = vld [vmem:[%s11 + $0x60] sm:$0xff]
  %v1916 = vld [vmem:[%s11 + $0x68] sm:$0xf]
  %v1917 = vld [vmem:[%s11 + $0x6c] sm:$0xff]
  %v1918 = vld [vmem:[%s11 + $0x74] sm:$0xf]
  %v1919 = vld [vmem:[%s11 + $0x78] sm:$0xff]
  %v1920 = vld [vmem:[%s11 + $0x80] sm:$0xf]
  %v1921 = vld [vmem:[%s11 + $0x84] sm:$0xff]
  %v1922 = vld [vmem:[%s11 + $0x8c] sm:$0xf]
  %v1923 = vld [vmem:[%s11 + $0x90] sm:$0xff]
  %v1924 = vld [vmem:[%s11 + $0x98] sm:$0xf]
  %v1925 = vld [vmem:[%s11 + $0x9c] sm:$0xff]
  %v1926 = vld [vmem:[%s11 + $0xa4] sm:$0xf]
  %v1927 = vld [vmem:[%s11 + $0xa8] sm:$0xff]
  %v1928 = vld [vmem:[%s11 + $0xb0] sm:$0xf]
  %v1929 = vld [vmem:[%s11 + $0xb4] sm:$0xff]
  %v1930 = vld [vmem:[%s11 + $0xbc] sm:$0xf]
  %v1963 = vunpack.c.l.b16 %v1899
  %v1964 = vunpack.c.h.b16 %v1899
  %v1965 = vunpack.c.l.b16 %v1900
  %v1966 = vunpack.c.l.b16 %v1901
  %v1967 = vunpack.c.h.b16 %v1901
  %v1968 = vunpack.c.l.b16 %v1902
  %v1969 = vunpack.c.l.b16 %v1903
  %v1970 = vunpack.c.h.b16 %v1903
  %v1971 = vunpack.c.l.b16 %v1904
  %v1972 = vunpack.c.l.b16 %v1905
  %v1973 = vunpack.c.h.b16 %v1905
  %v1974 = vunpack.c.l.b16 %v1906
  %v1975 = vunpack.c.l.b16 %v1907
  %v1976 = vunpack.c.h.b16 %v1907
  %v1977 = vunpack.c.l.b16 %v1908
  %v1978 = vunpack.c.l.b16 %v1909
  %v1979 = vunpack.c.h.b16 %v1909
  %v1980 = vunpack.c.l.b16 %v1910
  %v1981 = vunpack.c.l.b16 %v1911
  %v1982 = vunpack.c.h.b16 %v1911
  %v1983 = vunpack.c.l.b16 %v1912
  %v1984 = vunpack.c.l.b16 %v1913
  %v1985 = vunpack.c.h.b16 %v1913
  %v1986 = vunpack.c.l.b16 %v1914
  %v1987 = vunpack.c.l.b16 %v1915
  %v1988 = vunpack.c.h.b16 %v1915
  %v1989 = vunpack.c.l.b16 %v1916
  %v1990 = vunpack.c.l.b16 %v1917
  %v1991 = vunpack.c.h.b16 %v1917
  %v1992 = vunpack.c.l.b16 %v1918
  %v1993 = vunpack.c.l.b16 %v1919
  %v1994 = vunpack.c.h.b16 %v1919
  %v1995 = vunpack.c.l.b16 %v1920
  %v1996 = vunpack.c.l.b16 %v1921
  %v1997 = vunpack.c.h.b16 %v1921
  %v1998 = vunpack.c.l.b16 %v1922
  %v1999 = vunpack.c.l.b16 %v1923
  %v2000 = vunpack.c.h.b16 %v1923
  %v2001 = vunpack.c.l.b16 %v1924
  %v2002 = vunpack.c.l.b16 %v1925
  %v2003 = vunpack.c.h.b16 %v1925
  %v2004 = vunpack.c.l.b16 %v1926
  %v2005 = vunpack.c.l.b16 %v1927
  %v2006 = vunpack.c.h.b16 %v1927
  %v2007 = vunpack.c.l.b16 %v1928
  %v2008 = vunpack.c.l.b16 %v1929
  %v2009 = vunpack.c.h.b16 %v1929
  %v2010 = vunpack.c.l.b16 %v1930
  %v2011 = vpack.c.b16 %v1966, %v1963
  %v2012 = vpack.c.b16 %v1967, %v1964
  %v2013 = vpack.c.b16 %v1968, %v1965
  %v2014 = vpack.c.b16 %v1972, %v1969
  %v2015 = vpack.c.b16 %v1973, %v1970
  %v2016 = vpack.c.b16 %v1974, %v1971
  %v2017 = vpack.c.b16 %v1978, %v1975
  %v2018 = vpack.c.b16 %v1979, %v1976
  %v2019 = vpack.c.b16 %v1980, %v1977
  %v2020 = vpack.c.b16 %v1984, %v1981
  %v2021 = vpack.c.b16 %v1985, %v1982
  %v2022 = vpack.c.b16 %v1986, %v1983
  %v2023 = vpack.c.b16 %v1990, %v1987
  %v2024 = vpack.c.b16 %v1991, %v1988
  %v2025 = vpack.c.b16 %v1992, %v1989
  %v2026 = vpack.c.b16 %v1996, %v1993
  %v2027 = vpack.c.b16 %v1997, %v1994
  %v2028 = vpack.c.b16 %v1998, %v1995
  %v2029 = vpack.c.b16 %v2002, %v1999
  %v2030 = vpack.c.b16 %v2003, %v2000
  %v2031 = vpack.c.b16 %v2004, %v2001
  %v2032 = vpack.c.b16 %v2008, %v2005
  %v2033 = vpack.c.b16 %v2009, %v2006
  %v2034 = vpack.c.b16 %v2010, %v2007
  %2059 = vmatpush.bf16.msra.mxu0 %v2032
  %2060 = vmatpush.bf16.msra.mxu0 %v2029
  %2061 = vmatpush.bf16.msra.mxu0 %v2026
  %2062 = vmatpush.bf16.msra.mxu0 %v2023
  %2063 = vmatpush.bf16.msra.mxu0 %v2020
  %2064 = vmatpush.bf16.msra.mxu0 %v2017
  %2065 = vmatpush.bf16.msra.mxu0 %v2014
  %2066 = vmatpush.bf16.msra.mxu0 %v2011
  %2067 = vmatmul.bf16.gmra.mxu0 %v1057
  %v2068 = vpop.f32.mrf.mxu0
  %v2069 = vadd.f32 0.0, %v2068
  %v2070 = vpop.f32.mrf.mxu0
  %2071 = vdwg.mxu0
  %2072 = vmatpush.bf16.msra.mxu0 %v2033
  %2073 = vmatpush.bf16.msra.mxu0 %v2030
  %2074 = vmatpush.bf16.msra.mxu0 %v2027
  %2075 = vmatpush.bf16.msra.mxu0 %v2024
  %2076 = vmatpush.bf16.msra.mxu0 %v2021
  %2077 = vmatpush.bf16.msra.mxu0 %v2018
  %2078 = vmatpush.bf16.msra.mxu0 %v2015
  %2079 = vmatpush.bf16.msra.mxu0 %v2012
  %2080 = vmatmul.bf16.gmra.mxu0 %v1057
  %v2081 = vpop.f32.mrf.mxu0
  %v2082 = vadd.f32 0.0, %v2081
  %v2083 = vpop.f32.mrf.mxu0
  %2084 = vdwg.mxu0
  %2085 = vmatpush.bf16.msra.mxu0 %v2034
  %2086 = vmatpush.bf16.msra.mxu0 %v2031
  %2087 = vmatpush.bf16.msra.mxu0 %v2028
  %2088 = vmatpush.bf16.msra.mxu0 %v2025
  %2089 = vmatpush.bf16.msra.mxu0 %v2022
  %2090 = vmatpush.bf16.msra.mxu0 %v2019
  %2091 = vmatpush.bf16.msra.mxu0 %v2016
  %2092 = vmatpush.bf16.msra.mxu0 %v2013
  %2093 = vmatmul.bf16.gmra.mxu0 %v1057
  %v2094 = vpop.f32.mrf.mxu0
  %v2095 = vadd.f32 0.0, %v2094
  %v2096 = vpop.f32.mrf.mxu0
  %2097 = vdwg.mxu0
  %v2098 = vadd.f32 %v1870, %v2069
  %v2099 = vadd.f32 %v1883, %v2082
  %v2100 = vxor.u32 %v2098, 2147483648
  %v2101 = vxor.u32 %v2099, 2147483648
  %v2102 = vmul.f32 %v2100, 1.442695
  %v2103 = vpow.pop %v2102
  %v2104 = vmul.f32 %v2101, 1.442695
  %v2105 = vpow.pop %v2104
  %v2106 = vadd.f32 %v2103, 1.0
  %v2107 = vadd.f32 %v2105, 1.0
  %v2108 = vrcp.pop %v2106
  %v2109 = vmul.f32 %v2106, %v2108
  %v2110 = vsub.f32 1.0, %v2109
  %v2111 = vmul.f32 %v2108, %v2110
  %v2112 = vadd.f32 %v2108, %v2111
  %vm2113 = vweird.f32 %v2106
  %vm2114 = vweird.f32 %v2108
  %vm2115 = vmor %vm2113, %vm2114
  %v2116 = vsel %vm2115, %v2108, %v2112
  %v2117 = vand.u32 2147483647, %v2106
  %vm2118 = vcmp.eq.f32.partialorder %v2117, 8.507059e+37
  %v2119 = vand.u32 %v2106, 2147483648
  %v2120 = vor.u32 1.1754944e-38, %v2119
  %v2121 = vsel %vm2118, %v2120, %v2116
  %v2122 = vmul.f32 1.0, %v2121
  %v2123 = vrcp.pop %v2107
  %v2124 = vmul.f32 %v2107, %v2123
  %v2125 = vsub.f32 1.0, %v2124
  %v2126 = vmul.f32 %v2123, %v2125
  %v2127 = vadd.f32 %v2123, %v2126
  %vm2128 = vweird.f32 %v2107
  %vm2129 = vweird.f32 %v2123
  %vm2130 = vmor %vm2128, %vm2129
  %v2131 = vsel %vm2130, %v2123, %v2127
  %v2132 = vand.u32 2147483647, %v2107
  %vm2133 = vcmp.eq.f32.partialorder %v2132, 8.507059e+37
  %v2134 = vand.u32 %v2107, 2147483648
  %v2135 = vor.u32 1.1754944e-38, %v2134
  %v2136 = vsel %vm2133, %v2135, %v2131
  %v2137 = vmul.f32 1.0, %v2136
  %v2138 = vld [vmem:[%s13] sm:$0x1]
  %v2140 = vperm.slane %v2138, 0
  %v2142 = vadd.f32 %v2095, %v2140
  %v2143 = vmul.f32 %v2122, %v2142
  %v2144 = vadd.f32 %v1896, %v2143
  %v2145 = vtanh.pop %v2144
  %v2146 = vsub.f32 1.0, %v2137
  %v2147 = vmul.f32 %v2146, %v2145
  %v2148 = vmul.f32 %v2137, %v1056
  %v2149 = vadd.f32 %v2147, %v2148
  %v2150 = vpack.c.bf16 %v2149, %v2149
  %v2151 = vld [vmem:[%s14] sm:$0xf]
  %v2152 = vld [vmem:[%s14 + $0x4] sm:$0xf]
  %v2153 = vld [vmem:[%s14 + $0x8] sm:$0xf]
  %v2154 = vld [vmem:[%s14 + $0xc] sm:$0xf]
  %v2155 = vld [vmem:[%s14 + $0x10] sm:$0xf]
  %v2156 = vld [vmem:[%s14 + $0x14] sm:$0xf]
  %v2157 = vld [vmem:[%s14 + $0x18] sm:$0xf]
  %v2158 = vld [vmem:[%s14 + $0x1c] sm:$0xf]
  %v2159 = vld [vmem:[%s14 + $0x20] sm:$0xf]
  %v2160 = vld [vmem:[%s14 + $0x24] sm:$0xf]
  %v2161 = vld [vmem:[%s14 + $0x28] sm:$0xf]
  %v2162 = vld [vmem:[%s14 + $0x2c] sm:$0xf]
  %v2163 = vld [vmem:[%s14 + $0x30] sm:$0xf]
  %v2164 = vld [vmem:[%s14 + $0x34] sm:$0xf]
  %v2165 = vld [vmem:[%s14 + $0x38] sm:$0xf]
  %v2166 = vld [vmem:[%s14 + $0x3c] sm:$0xf]
  %v2167 = vld [vmem:[%s15] sm:$0x1]
  %v2169 = vperm.slane %v2167, 0
  %v2187 = vunpack.c.l.b16 %v2151
  %v2188 = vunpack.c.l.b16 %v2152
  %v2189 = vunpack.c.l.b16 %v2153
  %v2190 = vunpack.c.l.b16 %v2154
  %v2191 = vunpack.c.l.b16 %v2155
  %v2192 = vunpack.c.l.b16 %v2156
  %v2193 = vunpack.c.l.b16 %v2157
  %v2194 = vunpack.c.l.b16 %v2158
  %v2195 = vunpack.c.l.b16 %v2159
  %v2196 = vunpack.c.l.b16 %v2160
  %v2197 = vunpack.c.l.b16 %v2161
  %v2198 = vunpack.c.l.b16 %v2162
  %v2199 = vunpack.c.l.b16 %v2163
  %v2200 = vunpack.c.l.b16 %v2164
  %v2201 = vunpack.c.l.b16 %v2165
  %v2202 = vunpack.c.l.b16 %v2166
  %v2203 = vpack.c.b16 %v2188, %v2187
  %v2204 = vpack.c.b16 %v2190, %v2189
  %v2205 = vpack.c.b16 %v2192, %v2191
  %v2206 = vpack.c.b16 %v2194, %v2193
  %v2207 = vpack.c.b16 %v2196, %v2195
  %v2208 = vpack.c.b16 %v2198, %v2197
  %v2209 = vpack.c.b16 %v2200, %v2199
  %v2210 = vpack.c.b16 %v2202, %v2201
  %2219 = vmatpush.bf16.msra.mxu0 %v2210
  %2220 = vmatpush.bf16.msra.mxu0 %v2209
  %2221 = vmatpush.bf16.msra.mxu0 %v2208
  %2222 = vmatpush.bf16.msra.mxu0 %v2207
  %2223 = vmatpush.bf16.msra.mxu0 %v2206
  %2224 = vmatpush.bf16.msra.mxu0 %v2205
  %2225 = vmatpush.bf16.msra.mxu0 %v2204
  %2226 = vmatpush.bf16.msra.mxu0 %v2203
  %2227 = vmatmul.bf16.gmra.mxu0 %v2150
  %v2228 = vpop.f32.mrf.mxu0
  %v2229 = vadd.f32 %v2169, %v2228
  %v2230 = vpop.f32.mrf.mxu0
  %2231 = vdwg.mxu0
  %s2232 = scalar_lea.vmem %s16, 8
  %2233 = vst [vmem:[%s2232] sm:$0xff] %v2229
  %v2234 = vsel %vm56, %v2229, -1e+30
  %2235 = vmax.xlane.f32.xlu0 %v2234
  %v2236 = vpop.xlane.xlu0 %2235
  %vm2237 = vcmp.eq.f32.partialorder %v2234, %v2236
  %v2238 = vsel %vm2237, %v55, 128.0
  %2239 = vmin.xlane.f32.xlu0 %v2238
  %v2240 = vpop.xlane.xlu0 %2239
  %vm2241 = vcmp.eq.f32.partialorder %v55, %v2240
  %v2242 = vsel %vm2241, 1, 0
  %v2243 = vcvt.s32.f32 %v2242
  %v2244 = vpack.c.bf16 %v2243, %v2243
  %v2245 = vld [vmem:[%s4] sm:$0xf]
  %v2246 = vld [vmem:[%s4 + $0x4] sm:$0xf]
  %v2247 = vld [vmem:[%s4 + $0x8] sm:$0xf]
  %v2248 = vld [vmem:[%s4 + $0xc] sm:$0xf]
  %v2249 = vld [vmem:[%s4 + $0x10] sm:$0xf]
  %v2250 = vld [vmem:[%s4 + $0x14] sm:$0xf]
  %v2251 = vld [vmem:[%s4 + $0x18] sm:$0xf]
  %v2252 = vld [vmem:[%s4 + $0x1c] sm:$0xf]
  %v2253 = vld [vmem:[%s4 + $0x20] sm:$0xf]
  %v2254 = vld [vmem:[%s4 + $0x24] sm:$0xf]
  %v2255 = vld [vmem:[%s4 + $0x28] sm:$0xf]
  %v2256 = vld [vmem:[%s4 + $0x2c] sm:$0xf]
  %v2257 = vld [vmem:[%s4 + $0x30] sm:$0xf]
  %v2258 = vld [vmem:[%s4 + $0x34] sm:$0xf]
  %v2259 = vld [vmem:[%s4 + $0x38] sm:$0xf]
  %v2260 = vld [vmem:[%s4 + $0x3c] sm:$0xf]
  %v2277 = vunpack.c.l.b16 %v2245
  %v2278 = vunpack.c.l.b16 %v2246
  %v2279 = vunpack.c.l.b16 %v2247
  %v2280 = vunpack.c.l.b16 %v2248
  %v2281 = vunpack.c.l.b16 %v2249
  %v2282 = vunpack.c.l.b16 %v2250
  %v2283 = vunpack.c.l.b16 %v2251
  %v2284 = vunpack.c.l.b16 %v2252
  %v2285 = vunpack.c.l.b16 %v2253
  %v2286 = vunpack.c.l.b16 %v2254
  %v2287 = vunpack.c.l.b16 %v2255
  %v2288 = vunpack.c.l.b16 %v2256
  %v2289 = vunpack.c.l.b16 %v2257
  %v2290 = vunpack.c.l.b16 %v2258
  %v2291 = vunpack.c.l.b16 %v2259
  %v2292 = vunpack.c.l.b16 %v2260
  %v2293 = vpack.c.b16 %v2278, %v2277
  %v2294 = vpack.c.b16 %v2280, %v2279
  %v2295 = vpack.c.b16 %v2282, %v2281
  %v2296 = vpack.c.b16 %v2284, %v2283
  %v2297 = vpack.c.b16 %v2286, %v2285
  %v2298 = vpack.c.b16 %v2288, %v2287
  %v2299 = vpack.c.b16 %v2290, %v2289
  %v2300 = vpack.c.b16 %v2292, %v2291
  %2309 = vmatpush.bf16.msra.mxu0 %v2300
  %2310 = vmatpush.bf16.msra.mxu0 %v2299
  %2311 = vmatpush.bf16.msra.mxu0 %v2298
  %2312 = vmatpush.bf16.msra.mxu0 %v2297
  %2313 = vmatpush.bf16.msra.mxu0 %v2296
  %2314 = vmatpush.bf16.msra.mxu0 %v2295
  %2315 = vmatpush.bf16.msra.mxu0 %v2294
  %2316 = vmatpush.bf16.msra.mxu0 %v2293
  %2317 = vmatmul.bf16.gmra.mxu0 %v2244
  %v2318 = vpop.f32.mrf.mxu0
  %v2319 = vadd.f32 0.0, %v2318
  %v2320 = vpop.f32.mrf.mxu0
  %2321 = vdwg.mxu0
  %s2322 = scalar_lea.vmem %s3, 8
  %v2323 = vld [vmem:[%s2322] sm:$0xff]
  %v2324 = vmul.f32 %v2319, %v2323
  %s2325 = scalar_lea.vmem %s2, 8
  %v2326 = vld [vmem:[%s2325] sm:$0xff]
  %v2327 = vadd.f32 %v2324, %v2326
  %v2328 = vpack.c.bf16 %v2327, %v2327
  %v2329 = vld [vmem:[%s6] sm:$0xff]
  %v2330 = vld [vmem:[%s6 + $0x8] sm:$0xf]
  %v2331 = vld [vmem:[%s6 + $0xc] sm:$0xff]
  %v2332 = vld [vmem:[%s6 + $0x14] sm:$0xf]
  %v2333 = vld [vmem:[%s6 + $0x18] sm:$0xff]
  %v2334 = vld [vmem:[%s6 + $0x20] sm:$0xf]
  %v2335 = vld [vmem:[%s6 + $0x24] sm:$0xff]
  %v2336 = vld [vmem:[%s6 + $0x2c] sm:$0xf]
  %v2337 = vld [vmem:[%s6 + $0x30] sm:$0xff]
  %v2338 = vld [vmem:[%s6 + $0x38] sm:$0xf]
  %v2339 = vld [vmem:[%s6 + $0x3c] sm:$0xff]
  %v2340 = vld [vmem:[%s6 + $0x44] sm:$0xf]
  %v2341 = vld [vmem:[%s6 + $0x48] sm:$0xff]
  %v2342 = vld [vmem:[%s6 + $0x50] sm:$0xf]
  %v2343 = vld [vmem:[%s6 + $0x54] sm:$0xff]
  %v2344 = vld [vmem:[%s6 + $0x5c] sm:$0xf]
  %v2345 = vld [vmem:[%s6 + $0x60] sm:$0xff]
  %v2346 = vld [vmem:[%s6 + $0x68] sm:$0xf]
  %v2347 = vld [vmem:[%s6 + $0x6c] sm:$0xff]
  %v2348 = vld [vmem:[%s6 + $0x74] sm:$0xf]
  %v2349 = vld [vmem:[%s6 + $0x78] sm:$0xff]
  %v2350 = vld [vmem:[%s6 + $0x80] sm:$0xf]
  %v2351 = vld [vmem:[%s6 + $0x84] sm:$0xff]
  %v2352 = vld [vmem:[%s6 + $0x8c] sm:$0xf]
  %v2353 = vld [vmem:[%s6 + $0x90] sm:$0xff]
  %v2354 = vld [vmem:[%s6 + $0x98] sm:$0xf]
  %v2355 = vld [vmem:[%s6 + $0x9c] sm:$0xff]
  %v2356 = vld [vmem:[%s6 + $0xa4] sm:$0xf]
  %v2357 = vld [vmem:[%s6 + $0xa8] sm:$0xff]
  %v2358 = vld [vmem:[%s6 + $0xb0] sm:$0xf]
  %v2359 = vld [vmem:[%s6 + $0xb4] sm:$0xff]
  %v2360 = vld [vmem:[%s6 + $0xbc] sm:$0xf]
  %v2361 = vld [vmem:[%s8] sm:$0x7]
  %v2363 = vperm.slane %v2361, 0
  %v2364 = vperm.slane %v2361, 1
  %v2365 = vperm.slane %v2361, 2
  %v2401 = vunpack.c.l.b16 %v2329
  %v2402 = vunpack.c.h.b16 %v2329
  %v2403 = vunpack.c.l.b16 %v2330
  %v2404 = vunpack.c.l.b16 %v2331
  %v2405 = vunpack.c.h.b16 %v2331
  %v2406 = vunpack.c.l.b16 %v2332
  %v2407 = vunpack.c.l.b16 %v2333
  %v2408 = vunpack.c.h.b16 %v2333
  %v2409 = vunpack.c.l.b16 %v2334
  %v2410 = vunpack.c.l.b16 %v2335
  %v2411 = vunpack.c.h.b16 %v2335
  %v2412 = vunpack.c.l.b16 %v2336
  %v2413 = vunpack.c.l.b16 %v2337
  %v2414 = vunpack.c.h.b16 %v2337
  %v2415 = vunpack.c.l.b16 %v2338
  %v2416 = vunpack.c.l.b16 %v2339
  %v2417 = vunpack.c.h.b16 %v2339
  %v2418 = vunpack.c.l.b16 %v2340
  %v2419 = vunpack.c.l.b16 %v2341
  %v2420 = vunpack.c.h.b16 %v2341
  %v2421 = vunpack.c.l.b16 %v2342
  %v2422 = vunpack.c.l.b16 %v2343
  %v2423 = vunpack.c.h.b16 %v2343
  %v2424 = vunpack.c.l.b16 %v2344
  %v2425 = vunpack.c.l.b16 %v2345
  %v2426 = vunpack.c.h.b16 %v2345
  %v2427 = vunpack.c.l.b16 %v2346
  %v2428 = vunpack.c.l.b16 %v2347
  %v2429 = vunpack.c.h.b16 %v2347
  %v2430 = vunpack.c.l.b16 %v2348
  %v2431 = vunpack.c.l.b16 %v2349
  %v2432 = vunpack.c.h.b16 %v2349
  %v2433 = vunpack.c.l.b16 %v2350
  %v2434 = vunpack.c.l.b16 %v2351
  %v2435 = vunpack.c.h.b16 %v2351
  %v2436 = vunpack.c.l.b16 %v2352
  %v2437 = vunpack.c.l.b16 %v2353
  %v2438 = vunpack.c.h.b16 %v2353
  %v2439 = vunpack.c.l.b16 %v2354
  %v2440 = vunpack.c.l.b16 %v2355
  %v2441 = vunpack.c.h.b16 %v2355
  %v2442 = vunpack.c.l.b16 %v2356
  %v2443 = vunpack.c.l.b16 %v2357
  %v2444 = vunpack.c.h.b16 %v2357
  %v2445 = vunpack.c.l.b16 %v2358
  %v2446 = vunpack.c.l.b16 %v2359
  %v2447 = vunpack.c.h.b16 %v2359
  %v2448 = vunpack.c.l.b16 %v2360
  %v2449 = vpack.c.b16 %v2404, %v2401
  %v2450 = vpack.c.b16 %v2405, %v2402
  %v2451 = vpack.c.b16 %v2406, %v2403
  %v2452 = vpack.c.b16 %v2410, %v2407
  %v2453 = vpack.c.b16 %v2411, %v2408
  %v2454 = vpack.c.b16 %v2412, %v2409
  %v2455 = vpack.c.b16 %v2416, %v2413
  %v2456 = vpack.c.b16 %v2417, %v2414
  %v2457 = vpack.c.b16 %v2418, %v2415
  %v2458 = vpack.c.b16 %v2422, %v2419
  %v2459 = vpack.c.b16 %v2423, %v2420
  %v2460 = vpack.c.b16 %v2424, %v2421
  %v2461 = vpack.c.b16 %v2428, %v2425
  %v2462 = vpack.c.b16 %v2429, %v2426
  %v2463 = vpack.c.b16 %v2430, %v2427
  %v2464 = vpack.c.b16 %v2434, %v2431
  %v2465 = vpack.c.b16 %v2435, %v2432
  %v2466 = vpack.c.b16 %v2436, %v2433
  %v2467 = vpack.c.b16 %v2440, %v2437
  %v2468 = vpack.c.b16 %v2441, %v2438
  %v2469 = vpack.c.b16 %v2442, %v2439
  %v2470 = vpack.c.b16 %v2446, %v2443
  %v2471 = vpack.c.b16 %v2447, %v2444
  %v2472 = vpack.c.b16 %v2448, %v2445
  %2497 = vmatpush.bf16.msra.mxu0 %v2470
  %2498 = vmatpush.bf16.msra.mxu0 %v2467
  %2499 = vmatpush.bf16.msra.mxu0 %v2464
  %2500 = vmatpush.bf16.msra.mxu0 %v2461
  %2501 = vmatpush.bf16.msra.mxu0 %v2458
  %2502 = vmatpush.bf16.msra.mxu0 %v2455
  %2503 = vmatpush.bf16.msra.mxu0 %v2452
  %2504 = vmatpush.bf16.msra.mxu0 %v2449
  %2505 = vmatmul.bf16.gmra.mxu0 %v2328
  %v2506 = vpop.f32.mrf.mxu0
  %v2507 = vadd.f32 %v2363, %v2506
  %v2508 = vpop.f32.mrf.mxu0
  %2509 = vdwg.mxu0
  %2510 = vmatpush.bf16.msra.mxu0 %v2471
  %2511 = vmatpush.bf16.msra.mxu0 %v2468
  %2512 = vmatpush.bf16.msra.mxu0 %v2465
  %2513 = vmatpush.bf16.msra.mxu0 %v2462
  %2514 = vmatpush.bf16.msra.mxu0 %v2459
  %2515 = vmatpush.bf16.msra.mxu0 %v2456
  %2516 = vmatpush.bf16.msra.mxu0 %v2453
  %2517 = vmatpush.bf16.msra.mxu0 %v2450
  %2518 = vmatmul.bf16.gmra.mxu0 %v2328
  %v2519 = vpop.f32.mrf.mxu0
  %v2520 = vadd.f32 %v2364, %v2519
  %v2521 = vpop.f32.mrf.mxu0
  %2522 = vdwg.mxu0
  %2523 = vmatpush.bf16.msra.mxu0 %v2472
  %2524 = vmatpush.bf16.msra.mxu0 %v2469
  %2525 = vmatpush.bf16.msra.mxu0 %v2466
  %2526 = vmatpush.bf16.msra.mxu0 %v2463
  %2527 = vmatpush.bf16.msra.mxu0 %v2460
  %2528 = vmatpush.bf16.msra.mxu0 %v2457
  %2529 = vmatpush.bf16.msra.mxu0 %v2454
  %2530 = vmatpush.bf16.msra.mxu0 %v2451
  %2531 = vmatmul.bf16.gmra.mxu0 %v2328
  %v2532 = vpop.f32.mrf.mxu0
  %v2533 = vadd.f32 %v2365, %v2532
  %v2534 = vpop.f32.mrf.mxu0
  %2535 = vdwg.mxu0
  %v2536 = vld [vmem:[%s7] sm:$0xff]
  %v2537 = vld [vmem:[%s7 + $0x8] sm:$0xf]
  %v2538 = vld [vmem:[%s7 + $0xc] sm:$0xff]
  %v2539 = vld [vmem:[%s7 + $0x14] sm:$0xf]
  %v2540 = vld [vmem:[%s7 + $0x18] sm:$0xff]
  %v2541 = vld [vmem:[%s7 + $0x20] sm:$0xf]
  %v2542 = vld [vmem:[%s7 + $0x24] sm:$0xff]
  %v2543 = vld [vmem:[%s7 + $0x2c] sm:$0xf]
  %v2544 = vld [vmem:[%s7 + $0x30] sm:$0xff]
  %v2545 = vld [vmem:[%s7 + $0x38] sm:$0xf]
  %v2546 = vld [vmem:[%s7 + $0x3c] sm:$0xff]
  %v2547 = vld [vmem:[%s7 + $0x44] sm:$0xf]
  %v2548 = vld [vmem:[%s7 + $0x48] sm:$0xff]
  %v2549 = vld [vmem:[%s7 + $0x50] sm:$0xf]
  %v2550 = vld [vmem:[%s7 + $0x54] sm:$0xff]
  %v2551 = vld [vmem:[%s7 + $0x5c] sm:$0xf]
  %v2552 = vld [vmem:[%s7 + $0x60] sm:$0xff]
  %v2553 = vld [vmem:[%s7 + $0x68] sm:$0xf]
  %v2554 = vld [vmem:[%s7 + $0x6c] sm:$0xff]
  %v2555 = vld [vmem:[%s7 + $0x74] sm:$0xf]
  %v2556 = vld [vmem:[%s7 + $0x78] sm:$0xff]
  %v2557 = vld [vmem:[%s7 + $0x80] sm:$0xf]
  %v2558 = vld [vmem:[%s7 + $0x84] sm:$0xff]
  %v2559 = vld [vmem:[%s7 + $0x8c] sm:$0xf]
  %v2560 = vld [vmem:[%s7 + $0x90] sm:$0xff]
  %v2561 = vld [vmem:[%s7 + $0x98] sm:$0xf]
  %v2562 = vld [vmem:[%s7 + $0x9c] sm:$0xff]
  %v2563 = vld [vmem:[%s7 + $0xa4] sm:$0xf]
  %v2564 = vld [vmem:[%s7 + $0xa8] sm:$0xff]
  %v2565 = vld [vmem:[%s7 + $0xb0] sm:$0xf]
  %v2566 = vld [vmem:[%s7 + $0xb4] sm:$0xff]
  %v2567 = vld [vmem:[%s7 + $0xbc] sm:$0xf]
  %v2600 = vunpack.c.l.b16 %v2536
  %v2601 = vunpack.c.h.b16 %v2536
  %v2602 = vunpack.c.l.b16 %v2537
  %v2603 = vunpack.c.l.b16 %v2538
  %v2604 = vunpack.c.h.b16 %v2538
  %v2605 = vunpack.c.l.b16 %v2539
  %v2606 = vunpack.c.l.b16 %v2540
  %v2607 = vunpack.c.h.b16 %v2540
  %v2608 = vunpack.c.l.b16 %v2541
  %v2609 = vunpack.c.l.b16 %v2542
  %v2610 = vunpack.c.h.b16 %v2542
  %v2611 = vunpack.c.l.b16 %v2543
  %v2612 = vunpack.c.l.b16 %v2544
  %v2613 = vunpack.c.h.b16 %v2544
  %v2614 = vunpack.c.l.b16 %v2545
  %v2615 = vunpack.c.l.b16 %v2546
  %v2616 = vunpack.c.h.b16 %v2546
  %v2617 = vunpack.c.l.b16 %v2547
  %v2618 = vunpack.c.l.b16 %v2548
  %v2619 = vunpack.c.h.b16 %v2548
  %v2620 = vunpack.c.l.b16 %v2549
  %v2621 = vunpack.c.l.b16 %v2550
  %v2622 = vunpack.c.h.b16 %v2550
  %v2623 = vunpack.c.l.b16 %v2551
  %v2624 = vunpack.c.l.b16 %v2552
  %v2625 = vunpack.c.h.b16 %v2552
  %v2626 = vunpack.c.l.b16 %v2553
  %v2627 = vunpack.c.l.b16 %v2554
  %v2628 = vunpack.c.h.b16 %v2554
  %v2629 = vunpack.c.l.b16 %v2555
  %v2630 = vunpack.c.l.b16 %v2556
  %v2631 = vunpack.c.h.b16 %v2556
  %v2632 = vunpack.c.l.b16 %v2557
  %v2633 = vunpack.c.l.b16 %v2558
  %v2634 = vunpack.c.h.b16 %v2558
  %v2635 = vunpack.c.l.b16 %v2559
  %v2636 = vunpack.c.l.b16 %v2560
  %v2637 = vunpack.c.h.b16 %v2560
  %v2638 = vunpack.c.l.b16 %v2561
  %v2639 = vunpack.c.l.b16 %v2562
  %v2640 = vunpack.c.h.b16 %v2562
  %v2641 = vunpack.c.l.b16 %v2563
  %v2642 = vunpack.c.l.b16 %v2564
  %v2643 = vunpack.c.h.b16 %v2564
  %v2644 = vunpack.c.l.b16 %v2565
  %v2645 = vunpack.c.l.b16 %v2566
  %v2646 = vunpack.c.h.b16 %v2566
  %v2647 = vunpack.c.l.b16 %v2567
  %v2648 = vpack.c.b16 %v2603, %v2600
  %v2649 = vpack.c.b16 %v2604, %v2601
  %v2650 = vpack.c.b16 %v2605, %v2602
  %v2651 = vpack.c.b16 %v2609, %v2606
  %v2652 = vpack.c.b16 %v2610, %v2607
  %v2653 = vpack.c.b16 %v2611, %v2608
  %v2654 = vpack.c.b16 %v2615, %v2612
  %v2655 = vpack.c.b16 %v2616, %v2613
  %v2656 = vpack.c.b16 %v2617, %v2614
  %v2657 = vpack.c.b16 %v2621, %v2618
  %v2658 = vpack.c.b16 %v2622, %v2619
  %v2659 = vpack.c.b16 %v2623, %v2620
  %v2660 = vpack.c.b16 %v2627, %v2624
  %v2661 = vpack.c.b16 %v2628, %v2625
  %v2662 = vpack.c.b16 %v2629, %v2626
  %v2663 = vpack.c.b16 %v2633, %v2630
  %v2664 = vpack.c.b16 %v2634, %v2631
  %v2665 = vpack.c.b16 %v2635, %v2632
  %v2666 = vpack.c.b16 %v2639, %v2636
  %v2667 = vpack.c.b16 %v2640, %v2637
  %v2668 = vpack.c.b16 %v2641, %v2638
  %v2669 = vpack.c.b16 %v2645, %v2642
  %v2670 = vpack.c.b16 %v2646, %v2643
  %v2671 = vpack.c.b16 %v2647, %v2644
  %2696 = vmatpush.bf16.msra.mxu0 %v2669
  %2697 = vmatpush.bf16.msra.mxu0 %v2666
  %2698 = vmatpush.bf16.msra.mxu0 %v2663
  %2699 = vmatpush.bf16.msra.mxu0 %v2660
  %2700 = vmatpush.bf16.msra.mxu0 %v2657
  %2701 = vmatpush.bf16.msra.mxu0 %v2654
  %2702 = vmatpush.bf16.msra.mxu0 %v2651
  %2703 = vmatpush.bf16.msra.mxu0 %v2648
  %2704 = vmatmul.bf16.gmra.mxu0 %v1691
  %v2705 = vpop.f32.mrf.mxu0
  %v2706 = vadd.f32 0.0, %v2705
  %v2707 = vpop.f32.mrf.mxu0
  %2708 = vdwg.mxu0
  %2709 = vmatpush.bf16.msra.mxu0 %v2670
  %2710 = vmatpush.bf16.msra.mxu0 %v2667
  %2711 = vmatpush.bf16.msra.mxu0 %v2664
  %2712 = vmatpush.bf16.msra.mxu0 %v2661
  %2713 = vmatpush.bf16.msra.mxu0 %v2658
  %2714 = vmatpush.bf16.msra.mxu0 %v2655
  %2715 = vmatpush.bf16.msra.mxu0 %v2652
  %2716 = vmatpush.bf16.msra.mxu0 %v2649
  %2717 = vmatmul.bf16.gmra.mxu0 %v1691
  %v2718 = vpop.f32.mrf.mxu0
  %v2719 = vadd.f32 0.0, %v2718
  %v2720 = vpop.f32.mrf.mxu0
  %2721 = vdwg.mxu0
  %2722 = vmatpush.bf16.msra.mxu0 %v2671
  %2723 = vmatpush.bf16.msra.mxu0 %v2668
  %2724 = vmatpush.bf16.msra.mxu0 %v2665
  %2725 = vmatpush.bf16.msra.mxu0 %v2662
  %2726 = vmatpush.bf16.msra.mxu0 %v2659
  %2727 = vmatpush.bf16.msra.mxu0 %v2656
  %2728 = vmatpush.bf16.msra.mxu0 %v2653
  %2729 = vmatpush.bf16.msra.mxu0 %v2650
  %2730 = vmatmul.bf16.gmra.mxu0 %v1691
  %v2731 = vpop.f32.mrf.mxu0
  %v2732 = vadd.f32 0.0, %v2731
  %v2733 = vpop.f32.mrf.mxu0
  %2734 = vdwg.mxu0
  %v2735 = vadd.f32 %v2507, %v2706
  %v2736 = vadd.f32 %v2520, %v2719
  %v2737 = vxor.u32 %v2735, 2147483648
  %v2738 = vxor.u32 %v2736, 2147483648
  %v2739 = vmul.f32 %v2737, 1.442695
  %v2740 = vpow.pop %v2739
  %v2741 = vmul.f32 %v2738, 1.442695
  %v2742 = vpow.pop %v2741
  %v2743 = vadd.f32 %v2740, 1.0
  %v2744 = vadd.f32 %v2742, 1.0
  %v2745 = vrcp.pop %v2743
  %v2746 = vmul.f32 %v2743, %v2745
  %v2747 = vsub.f32 1.0, %v2746
  %v2748 = vmul.f32 %v2745, %v2747
  %v2749 = vadd.f32 %v2745, %v2748
  %vm2750 = vweird.f32 %v2743
  %vm2751 = vweird.f32 %v2745
  %vm2752 = vmor %vm2750, %vm2751
  %v2753 = vsel %vm2752, %v2745, %v2749
  %v2754 = vand.u32 2147483647, %v2743
  %vm2755 = vcmp.eq.f32.partialorder %v2754, 8.507059e+37
  %v2756 = vand.u32 %v2743, 2147483648
  %v2757 = vor.u32 1.1754944e-38, %v2756
  %v2758 = vsel %vm2755, %v2757, %v2753
  %v2759 = vmul.f32 1.0, %v2758
  %v2760 = vrcp.pop %v2744
  %v2761 = vmul.f32 %v2744, %v2760
  %v2762 = vsub.f32 1.0, %v2761
  %v2763 = vmul.f32 %v2760, %v2762
  %v2764 = vadd.f32 %v2760, %v2763
  %vm2765 = vweird.f32 %v2744
  %vm2766 = vweird.f32 %v2760
  %vm2767 = vmor %vm2765, %vm2766
  %v2768 = vsel %vm2767, %v2760, %v2764
  %v2769 = vand.u32 2147483647, %v2744
  %vm2770 = vcmp.eq.f32.partialorder %v2769, 8.507059e+37
  %v2771 = vand.u32 %v2744, 2147483648
  %v2772 = vor.u32 1.1754944e-38, %v2771
  %v2773 = vsel %vm2770, %v2772, %v2768
  %v2774 = vmul.f32 1.0, %v2773
  %v2775 = vld [vmem:[%s9] sm:$0x1]
  %v2777 = vperm.slane %v2775, 0
  %v2779 = vadd.f32 %v2732, %v2777
  %v2780 = vmul.f32 %v2759, %v2779
  %v2781 = vadd.f32 %v2533, %v2780
  %v2782 = vtanh.pop %v2781
  %v2783 = vsub.f32 1.0, %v2774
  %v2784 = vmul.f32 %v2783, %v2782
  %v2785 = vmul.f32 %v2774, %v1690
  %v2786 = vadd.f32 %v2784, %v2785
  %v2787 = vpack.c.bf16 %v2786, %v2786
  %v2788 = vld [vmem:[%s10] sm:$0xff]
  %v2789 = vld [vmem:[%s10 + $0x8] sm:$0xf]
  %v2790 = vld [vmem:[%s10 + $0xc] sm:$0xff]
  %v2791 = vld [vmem:[%s10 + $0x14] sm:$0xf]
  %v2792 = vld [vmem:[%s10 + $0x18] sm:$0xff]
  %v2793 = vld [vmem:[%s10 + $0x20] sm:$0xf]
  %v2794 = vld [vmem:[%s10 + $0x24] sm:$0xff]
  %v2795 = vld [vmem:[%s10 + $0x2c] sm:$0xf]
  %v2796 = vld [vmem:[%s10 + $0x30] sm:$0xff]
  %v2797 = vld [vmem:[%s10 + $0x38] sm:$0xf]
  %v2798 = vld [vmem:[%s10 + $0x3c] sm:$0xff]
  %v2799 = vld [vmem:[%s10 + $0x44] sm:$0xf]
  %v2800 = vld [vmem:[%s10 + $0x48] sm:$0xff]
  %v2801 = vld [vmem:[%s10 + $0x50] sm:$0xf]
  %v2802 = vld [vmem:[%s10 + $0x54] sm:$0xff]
  %v2803 = vld [vmem:[%s10 + $0x5c] sm:$0xf]
  %v2804 = vld [vmem:[%s10 + $0x60] sm:$0xff]
  %v2805 = vld [vmem:[%s10 + $0x68] sm:$0xf]
  %v2806 = vld [vmem:[%s10 + $0x6c] sm:$0xff]
  %v2807 = vld [vmem:[%s10 + $0x74] sm:$0xf]
  %v2808 = vld [vmem:[%s10 + $0x78] sm:$0xff]
  %v2809 = vld [vmem:[%s10 + $0x80] sm:$0xf]
  %v2810 = vld [vmem:[%s10 + $0x84] sm:$0xff]
  %v2811 = vld [vmem:[%s10 + $0x8c] sm:$0xf]
  %v2812 = vld [vmem:[%s10 + $0x90] sm:$0xff]
  %v2813 = vld [vmem:[%s10 + $0x98] sm:$0xf]
  %v2814 = vld [vmem:[%s10 + $0x9c] sm:$0xff]
  %v2815 = vld [vmem:[%s10 + $0xa4] sm:$0xf]
  %v2816 = vld [vmem:[%s10 + $0xa8] sm:$0xff]
  %v2817 = vld [vmem:[%s10 + $0xb0] sm:$0xf]
  %v2818 = vld [vmem:[%s10 + $0xb4] sm:$0xff]
  %v2819 = vld [vmem:[%s10 + $0xbc] sm:$0xf]
  %v2820 = vld [vmem:[%s12] sm:$0x7]
  %v2822 = vperm.slane %v2820, 0
  %v2823 = vperm.slane %v2820, 1
  %v2824 = vperm.slane %v2820, 2
  %v2860 = vunpack.c.l.b16 %v2788
  %v2861 = vunpack.c.h.b16 %v2788
  %v2862 = vunpack.c.l.b16 %v2789
  %v2863 = vunpack.c.l.b16 %v2790
  %v2864 = vunpack.c.h.b16 %v2790
  %v2865 = vunpack.c.l.b16 %v2791
  %v2866 = vunpack.c.l.b16 %v2792
  %v2867 = vunpack.c.h.b16 %v2792
  %v2868 = vunpack.c.l.b16 %v2793
  %v2869 = vunpack.c.l.b16 %v2794
  %v2870 = vunpack.c.h.b16 %v2794
  %v2871 = vunpack.c.l.b16 %v2795
  %v2872 = vunpack.c.l.b16 %v2796
  %v2873 = vunpack.c.h.b16 %v2796
  %v2874 = vunpack.c.l.b16 %v2797
  %v2875 = vunpack.c.l.b16 %v2798
  %v2876 = vunpack.c.h.b16 %v2798
  %v2877 = vunpack.c.l.b16 %v2799
  %v2878 = vunpack.c.l.b16 %v2800
  %v2879 = vunpack.c.h.b16 %v2800
  %v2880 = vunpack.c.l.b16 %v2801
  %v2881 = vunpack.c.l.b16 %v2802
  %v2882 = vunpack.c.h.b16 %v2802
  %v2883 = vunpack.c.l.b16 %v2803
  %v2884 = vunpack.c.l.b16 %v2804
  %v2885 = vunpack.c.h.b16 %v2804
  %v2886 = vunpack.c.l.b16 %v2805
  %v2887 = vunpack.c.l.b16 %v2806
  %v2888 = vunpack.c.h.b16 %v2806
  %v2889 = vunpack.c.l.b16 %v2807
  %v2890 = vunpack.c.l.b16 %v2808
  %v2891 = vunpack.c.h.b16 %v2808
  %v2892 = vunpack.c.l.b16 %v2809
  %v2893 = vunpack.c.l.b16 %v2810
  %v2894 = vunpack.c.h.b16 %v2810
  %v2895 = vunpack.c.l.b16 %v2811
  %v2896 = vunpack.c.l.b16 %v2812
  %v2897 = vunpack.c.h.b16 %v2812
  %v2898 = vunpack.c.l.b16 %v2813
  %v2899 = vunpack.c.l.b16 %v2814
  %v2900 = vunpack.c.h.b16 %v2814
  %v2901 = vunpack.c.l.b16 %v2815
  %v2902 = vunpack.c.l.b16 %v2816
  %v2903 = vunpack.c.h.b16 %v2816
  %v2904 = vunpack.c.l.b16 %v2817
  %v2905 = vunpack.c.l.b16 %v2818
  %v2906 = vunpack.c.h.b16 %v2818
  %v2907 = vunpack.c.l.b16 %v2819
  %v2908 = vpack.c.b16 %v2863, %v2860
  %v2909 = vpack.c.b16 %v2864, %v2861
  %v2910 = vpack.c.b16 %v2865, %v2862
  %v2911 = vpack.c.b16 %v2869, %v2866
  %v2912 = vpack.c.b16 %v2870, %v2867
  %v2913 = vpack.c.b16 %v2871, %v2868
  %v2914 = vpack.c.b16 %v2875, %v2872
  %v2915 = vpack.c.b16 %v2876, %v2873
  %v2916 = vpack.c.b16 %v2877, %v2874
  %v2917 = vpack.c.b16 %v2881, %v2878
  %v2918 = vpack.c.b16 %v2882, %v2879
  %v2919 = vpack.c.b16 %v2883, %v2880
  %v2920 = vpack.c.b16 %v2887, %v2884
  %v2921 = vpack.c.b16 %v2888, %v2885
  %v2922 = vpack.c.b16 %v2889, %v2886
  %v2923 = vpack.c.b16 %v2893, %v2890
  %v2924 = vpack.c.b16 %v2894, %v2891
  %v2925 = vpack.c.b16 %v2895, %v2892
  %v2926 = vpack.c.b16 %v2899, %v2896
  %v2927 = vpack.c.b16 %v2900, %v2897
  %v2928 = vpack.c.b16 %v2901, %v2898
  %v2929 = vpack.c.b16 %v2905, %v2902
  %v2930 = vpack.c.b16 %v2906, %v2903
  %v2931 = vpack.c.b16 %v2907, %v2904
  %2956 = vmatpush.bf16.msra.mxu0 %v2929
  %2957 = vmatpush.bf16.msra.mxu0 %v2926
  %2958 = vmatpush.bf16.msra.mxu0 %v2923
  %2959 = vmatpush.bf16.msra.mxu0 %v2920
  %2960 = vmatpush.bf16.msra.mxu0 %v2917
  %2961 = vmatpush.bf16.msra.mxu0 %v2914
  %2962 = vmatpush.bf16.msra.mxu0 %v2911
  %2963 = vmatpush.bf16.msra.mxu0 %v2908
  %2964 = vmatmul.bf16.gmra.mxu0 %v2787
  %v2965 = vpop.f32.mrf.mxu0
  %v2966 = vadd.f32 %v2822, %v2965
  %v2967 = vpop.f32.mrf.mxu0
  %2968 = vdwg.mxu0
  %2969 = vmatpush.bf16.msra.mxu0 %v2930
  %2970 = vmatpush.bf16.msra.mxu0 %v2927
  %2971 = vmatpush.bf16.msra.mxu0 %v2924
  %2972 = vmatpush.bf16.msra.mxu0 %v2921
  %2973 = vmatpush.bf16.msra.mxu0 %v2918
  %2974 = vmatpush.bf16.msra.mxu0 %v2915
  %2975 = vmatpush.bf16.msra.mxu0 %v2912
  %2976 = vmatpush.bf16.msra.mxu0 %v2909
  %2977 = vmatmul.bf16.gmra.mxu0 %v2787
  %v2978 = vpop.f32.mrf.mxu0
  %v2979 = vadd.f32 %v2823, %v2978
  %v2980 = vpop.f32.mrf.mxu0
  %2981 = vdwg.mxu0
  %2982 = vmatpush.bf16.msra.mxu0 %v2931
  %2983 = vmatpush.bf16.msra.mxu0 %v2928
  %2984 = vmatpush.bf16.msra.mxu0 %v2925
  %2985 = vmatpush.bf16.msra.mxu0 %v2922
  %2986 = vmatpush.bf16.msra.mxu0 %v2919
  %2987 = vmatpush.bf16.msra.mxu0 %v2916
  %2988 = vmatpush.bf16.msra.mxu0 %v2913
  %2989 = vmatpush.bf16.msra.mxu0 %v2910
  %2990 = vmatmul.bf16.gmra.mxu0 %v2787
  %v2991 = vpop.f32.mrf.mxu0
  %v2992 = vadd.f32 %v2824, %v2991
  %v2993 = vpop.f32.mrf.mxu0
  %2994 = vdwg.mxu0
  %v2995 = vld [vmem:[%s11] sm:$0xff]
  %v2996 = vld [vmem:[%s11 + $0x8] sm:$0xf]
  %v2997 = vld [vmem:[%s11 + $0xc] sm:$0xff]
  %v2998 = vld [vmem:[%s11 + $0x14] sm:$0xf]
  %v2999 = vld [vmem:[%s11 + $0x18] sm:$0xff]
  %v3000 = vld [vmem:[%s11 + $0x20] sm:$0xf]
  %v3001 = vld [vmem:[%s11 + $0x24] sm:$0xff]
  %v3002 = vld [vmem:[%s11 + $0x2c] sm:$0xf]
  %v3003 = vld [vmem:[%s11 + $0x30] sm:$0xff]
  %v3004 = vld [vmem:[%s11 + $0x38] sm:$0xf]
  %v3005 = vld [vmem:[%s11 + $0x3c] sm:$0xff]
  %v3006 = vld [vmem:[%s11 + $0x44] sm:$0xf]
  %v3007 = vld [vmem:[%s11 + $0x48] sm:$0xff]
  %v3008 = vld [vmem:[%s11 + $0x50] sm:$0xf]
  %v3009 = vld [vmem:[%s11 + $0x54] sm:$0xff]
  %v3010 = vld [vmem:[%s11 + $0x5c] sm:$0xf]
  %v3011 = vld [vmem:[%s11 + $0x60] sm:$0xff]
  %v3012 = vld [vmem:[%s11 + $0x68] sm:$0xf]
  %v3013 = vld [vmem:[%s11 + $0x6c] sm:$0xff]
  %v3014 = vld [vmem:[%s11 + $0x74] sm:$0xf]
  %v3015 = vld [vmem:[%s11 + $0x78] sm:$0xff]
  %v3016 = vld [vmem:[%s11 + $0x80] sm:$0xf]
  %v3017 = vld [vmem:[%s11 + $0x84] sm:$0xff]
  %v3018 = vld [vmem:[%s11 + $0x8c] sm:$0xf]
  %v3019 = vld [vmem:[%s11 + $0x90] sm:$0xff]
  %v3020 = vld [vmem:[%s11 + $0x98] sm:$0xf]
  %v3021 = vld [vmem:[%s11 + $0x9c] sm:$0xff]
  %v3022 = vld [vmem:[%s11 + $0xa4] sm:$0xf]
  %v3023 = vld [vmem:[%s11 + $0xa8] sm:$0xff]
  %v3024 = vld [vmem:[%s11 + $0xb0] sm:$0xf]
  %v3025 = vld [vmem:[%s11 + $0xb4] sm:$0xff]
  %v3026 = vld [vmem:[%s11 + $0xbc] sm:$0xf]
  %v3059 = vunpack.c.l.b16 %v2995
  %v3060 = vunpack.c.h.b16 %v2995
  %v3061 = vunpack.c.l.b16 %v2996
  %v3062 = vunpack.c.l.b16 %v2997
  %v3063 = vunpack.c.h.b16 %v2997
  %v3064 = vunpack.c.l.b16 %v2998
  %v3065 = vunpack.c.l.b16 %v2999
  %v3066 = vunpack.c.h.b16 %v2999
  %v3067 = vunpack.c.l.b16 %v3000
  %v3068 = vunpack.c.l.b16 %v3001
  %v3069 = vunpack.c.h.b16 %v3001
  %v3070 = vunpack.c.l.b16 %v3002
  %v3071 = vunpack.c.l.b16 %v3003
  %v3072 = vunpack.c.h.b16 %v3003
  %v3073 = vunpack.c.l.b16 %v3004
  %v3074 = vunpack.c.l.b16 %v3005
  %v3075 = vunpack.c.h.b16 %v3005
  %v3076 = vunpack.c.l.b16 %v3006
  %v3077 = vunpack.c.l.b16 %v3007
  %v3078 = vunpack.c.h.b16 %v3007
  %v3079 = vunpack.c.l.b16 %v3008
  %v3080 = vunpack.c.l.b16 %v3009
  %v3081 = vunpack.c.h.b16 %v3009
  %v3082 = vunpack.c.l.b16 %v3010
  %v3083 = vunpack.c.l.b16 %v3011
  %v3084 = vunpack.c.h.b16 %v3011
  %v3085 = vunpack.c.l.b16 %v3012
  %v3086 = vunpack.c.l.b16 %v3013
  %v3087 = vunpack.c.h.b16 %v3013
  %v3088 = vunpack.c.l.b16 %v3014
  %v3089 = vunpack.c.l.b16 %v3015
  %v3090 = vunpack.c.h.b16 %v3015
  %v3091 = vunpack.c.l.b16 %v3016
  %v3092 = vunpack.c.l.b16 %v3017
  %v3093 = vunpack.c.h.b16 %v3017
  %v3094 = vunpack.c.l.b16 %v3018
  %v3095 = vunpack.c.l.b16 %v3019
  %v3096 = vunpack.c.h.b16 %v3019
  %v3097 = vunpack.c.l.b16 %v3020
  %v3098 = vunpack.c.l.b16 %v3021
  %v3099 = vunpack.c.h.b16 %v3021
  %v3100 = vunpack.c.l.b16 %v3022
  %v3101 = vunpack.c.l.b16 %v3023
  %v3102 = vunpack.c.h.b16 %v3023
  %v3103 = vunpack.c.l.b16 %v3024
  %v3104 = vunpack.c.l.b16 %v3025
  %v3105 = vunpack.c.h.b16 %v3025
  %v3106 = vunpack.c.l.b16 %v3026
  %v3107 = vpack.c.b16 %v3062, %v3059
  %v3108 = vpack.c.b16 %v3063, %v3060
  %v3109 = vpack.c.b16 %v3064, %v3061
  %v3110 = vpack.c.b16 %v3068, %v3065
  %v3111 = vpack.c.b16 %v3069, %v3066
  %v3112 = vpack.c.b16 %v3070, %v3067
  %v3113 = vpack.c.b16 %v3074, %v3071
  %v3114 = vpack.c.b16 %v3075, %v3072
  %v3115 = vpack.c.b16 %v3076, %v3073
  %v3116 = vpack.c.b16 %v3080, %v3077
  %v3117 = vpack.c.b16 %v3081, %v3078
  %v3118 = vpack.c.b16 %v3082, %v3079
  %v3119 = vpack.c.b16 %v3086, %v3083
  %v3120 = vpack.c.b16 %v3087, %v3084
  %v3121 = vpack.c.b16 %v3088, %v3085
  %v3122 = vpack.c.b16 %v3092, %v3089
  %v3123 = vpack.c.b16 %v3093, %v3090
  %v3124 = vpack.c.b16 %v3094, %v3091
  %v3125 = vpack.c.b16 %v3098, %v3095
  %v3126 = vpack.c.b16 %v3099, %v3096
  %v3127 = vpack.c.b16 %v3100, %v3097
  %v3128 = vpack.c.b16 %v3104, %v3101
  %v3129 = vpack.c.b16 %v3105, %v3102
  %v3130 = vpack.c.b16 %v3106, %v3103
  %3155 = vmatpush.bf16.msra.mxu0 %v3128
  %3156 = vmatpush.bf16.msra.mxu0 %v3125
  %3157 = vmatpush.bf16.msra.mxu0 %v3122
  %3158 = vmatpush.bf16.msra.mxu0 %v3119
  %3159 = vmatpush.bf16.msra.mxu0 %v3116
  %3160 = vmatpush.bf16.msra.mxu0 %v3113
  %3161 = vmatpush.bf16.msra.mxu0 %v3110
  %3162 = vmatpush.bf16.msra.mxu0 %v3107
  %3163 = vmatmul.bf16.gmra.mxu0 %v2150
  %v3164 = vpop.f32.mrf.mxu0
  %v3165 = vadd.f32 0.0, %v3164
  %v3166 = vpop.f32.mrf.mxu0
  %3167 = vdwg.mxu0
  %3168 = vmatpush.bf16.msra.mxu0 %v3129
  %3169 = vmatpush.bf16.msra.mxu0 %v3126
  %3170 = vmatpush.bf16.msra.mxu0 %v3123
  %3171 = vmatpush.bf16.msra.mxu0 %v3120
  %3172 = vmatpush.bf16.msra.mxu0 %v3117
  %3173 = vmatpush.bf16.msra.mxu0 %v3114
  %3174 = vmatpush.bf16.msra.mxu0 %v3111
  %3175 = vmatpush.bf16.msra.mxu0 %v3108
  %3176 = vmatmul.bf16.gmra.mxu0 %v2150
  %v3177 = vpop.f32.mrf.mxu0
  %v3178 = vadd.f32 0.0, %v3177
  %v3179 = vpop.f32.mrf.mxu0
  %3180 = vdwg.mxu0
  %3181 = vmatpush.bf16.msra.mxu0 %v3130
  %3182 = vmatpush.bf16.msra.mxu0 %v3127
  %3183 = vmatpush.bf16.msra.mxu0 %v3124
  %3184 = vmatpush.bf16.msra.mxu0 %v3121
  %3185 = vmatpush.bf16.msra.mxu0 %v3118
  %3186 = vmatpush.bf16.msra.mxu0 %v3115
  %3187 = vmatpush.bf16.msra.mxu0 %v3112
  %3188 = vmatpush.bf16.msra.mxu0 %v3109
  %3189 = vmatmul.bf16.gmra.mxu0 %v2150
  %v3190 = vpop.f32.mrf.mxu0
  %v3191 = vadd.f32 0.0, %v3190
  %v3192 = vpop.f32.mrf.mxu0
  %3193 = vdwg.mxu0
  %v3194 = vadd.f32 %v2966, %v3165
  %v3195 = vadd.f32 %v2979, %v3178
  %v3196 = vxor.u32 %v3194, 2147483648
  %v3197 = vxor.u32 %v3195, 2147483648
  %v3198 = vmul.f32 %v3196, 1.442695
  %v3199 = vpow.pop %v3198
  %v3200 = vmul.f32 %v3197, 1.442695
  %v3201 = vpow.pop %v3200
  %v3202 = vadd.f32 %v3199, 1.0
  %v3203 = vadd.f32 %v3201, 1.0
  %v3204 = vrcp.pop %v3202
  %v3205 = vmul.f32 %v3202, %v3204
  %v3206 = vsub.f32 1.0, %v3205
  %v3207 = vmul.f32 %v3204, %v3206
  %v3208 = vadd.f32 %v3204, %v3207
  %vm3209 = vweird.f32 %v3202
  %vm3210 = vweird.f32 %v3204
  %vm3211 = vmor %vm3209, %vm3210
  %v3212 = vsel %vm3211, %v3204, %v3208
  %v3213 = vand.u32 2147483647, %v3202
  %vm3214 = vcmp.eq.f32.partialorder %v3213, 8.507059e+37
  %v3215 = vand.u32 %v3202, 2147483648
  %v3216 = vor.u32 1.1754944e-38, %v3215
  %v3217 = vsel %vm3214, %v3216, %v3212
  %v3218 = vmul.f32 1.0, %v3217
  %v3219 = vrcp.pop %v3203
  %v3220 = vmul.f32 %v3203, %v3219
  %v3221 = vsub.f32 1.0, %v3220
  %v3222 = vmul.f32 %v3219, %v3221
  %v3223 = vadd.f32 %v3219, %v3222
  %vm3224 = vweird.f32 %v3203
  %vm3225 = vweird.f32 %v3219
  %vm3226 = vmor %vm3224, %vm3225
  %v3227 = vsel %vm3226, %v3219, %v3223
  %v3228 = vand.u32 2147483647, %v3203
  %vm3229 = vcmp.eq.f32.partialorder %v3228, 8.507059e+37
  %v3230 = vand.u32 %v3203, 2147483648
  %v3231 = vor.u32 1.1754944e-38, %v3230
  %v3232 = vsel %vm3229, %v3231, %v3227
  %v3233 = vmul.f32 1.0, %v3232
  %v3234 = vld [vmem:[%s13] sm:$0x1]
  %v3236 = vperm.slane %v3234, 0
  %v3238 = vadd.f32 %v3191, %v3236
  %v3239 = vmul.f32 %v3218, %v3238
  %v3240 = vadd.f32 %v2992, %v3239
  %v3241 = vtanh.pop %v3240
  %v3242 = vsub.f32 1.0, %v3233
  %v3243 = vmul.f32 %v3242, %v3241
  %v3244 = vmul.f32 %v3233, %v2149
  %v3245 = vadd.f32 %v3243, %v3244
  %v3246 = vpack.c.bf16 %v3245, %v3245
  %v3247 = vld [vmem:[%s14] sm:$0xf]
  %v3248 = vld [vmem:[%s14 + $0x4] sm:$0xf]
  %v3249 = vld [vmem:[%s14 + $0x8] sm:$0xf]
  %v3250 = vld [vmem:[%s14 + $0xc] sm:$0xf]
  %v3251 = vld [vmem:[%s14 + $0x10] sm:$0xf]
  %v3252 = vld [vmem:[%s14 + $0x14] sm:$0xf]
  %v3253 = vld [vmem:[%s14 + $0x18] sm:$0xf]
  %v3254 = vld [vmem:[%s14 + $0x1c] sm:$0xf]
  %v3255 = vld [vmem:[%s14 + $0x20] sm:$0xf]
  %v3256 = vld [vmem:[%s14 + $0x24] sm:$0xf]
  %v3257 = vld [vmem:[%s14 + $0x28] sm:$0xf]
  %v3258 = vld [vmem:[%s14 + $0x2c] sm:$0xf]
  %v3259 = vld [vmem:[%s14 + $0x30] sm:$0xf]
  %v3260 = vld [vmem:[%s14 + $0x34] sm:$0xf]
  %v3261 = vld [vmem:[%s14 + $0x38] sm:$0xf]
  %v3262 = vld [vmem:[%s14 + $0x3c] sm:$0xf]
  %v3263 = vld [vmem:[%s15] sm:$0x1]
  %v3265 = vperm.slane %v3263, 0
  %v3283 = vunpack.c.l.b16 %v3247
  %v3284 = vunpack.c.l.b16 %v3248
  %v3285 = vunpack.c.l.b16 %v3249
  %v3286 = vunpack.c.l.b16 %v3250
  %v3287 = vunpack.c.l.b16 %v3251
  %v3288 = vunpack.c.l.b16 %v3252
  %v3289 = vunpack.c.l.b16 %v3253
  %v3290 = vunpack.c.l.b16 %v3254
  %v3291 = vunpack.c.l.b16 %v3255
  %v3292 = vunpack.c.l.b16 %v3256
  %v3293 = vunpack.c.l.b16 %v3257
  %v3294 = vunpack.c.l.b16 %v3258
  %v3295 = vunpack.c.l.b16 %v3259
  %v3296 = vunpack.c.l.b16 %v3260
  %v3297 = vunpack.c.l.b16 %v3261
  %v3298 = vunpack.c.l.b16 %v3262
  %v3299 = vpack.c.b16 %v3284, %v3283
  %v3300 = vpack.c.b16 %v3286, %v3285
  %v3301 = vpack.c.b16 %v3288, %v3287
  %v3302 = vpack.c.b16 %v3290, %v3289
  %v3303 = vpack.c.b16 %v3292, %v3291
  %v3304 = vpack.c.b16 %v3294, %v3293
  %v3305 = vpack.c.b16 %v3296, %v3295
  %v3306 = vpack.c.b16 %v3298, %v3297
  %3315 = vmatpush.bf16.msra.mxu0 %v3306
  %3316 = vmatpush.bf16.msra.mxu0 %v3305
  %3317 = vmatpush.bf16.msra.mxu0 %v3304
  %3318 = vmatpush.bf16.msra.mxu0 %v3303
  %3319 = vmatpush.bf16.msra.mxu0 %v3302
  %3320 = vmatpush.bf16.msra.mxu0 %v3301
  %3321 = vmatpush.bf16.msra.mxu0 %v3300
  %3322 = vmatpush.bf16.msra.mxu0 %v3299
  %3323 = vmatmul.bf16.gmra.mxu0 %v3246
  %v3324 = vpop.f32.mrf.mxu0
  %v3325 = vadd.f32 %v3265, %v3324
  %v3326 = vpop.f32.mrf.mxu0
  %3327 = vdwg.mxu0
  %s3328 = scalar_lea.vmem %s16, 16
  %3329 = vst [vmem:[%s3328] sm:$0xff] %v3325
  %v3330 = vsel %vm56, %v3325, -1e+30
  %3331 = vmax.xlane.f32.xlu0 %v3330
  %v3332 = vpop.xlane.xlu0 %3331
  %vm3333 = vcmp.eq.f32.partialorder %v3330, %v3332
  %v3334 = vsel %vm3333, %v55, 128.0
  %3335 = vmin.xlane.f32.xlu0 %v3334
  %v3336 = vpop.xlane.xlu0 %3335
  %vm3337 = vcmp.eq.f32.partialorder %v55, %v3336
  %v3338 = vsel %vm3337, 1, 0
  %v3339 = vcvt.s32.f32 %v3338
  %v3340 = vpack.c.bf16 %v3339, %v3339
  %v3341 = vld [vmem:[%s4] sm:$0xf]
  %v3342 = vld [vmem:[%s4 + $0x4] sm:$0xf]
  %v3343 = vld [vmem:[%s4 + $0x8] sm:$0xf]
  %v3344 = vld [vmem:[%s4 + $0xc] sm:$0xf]
  %v3345 = vld [vmem:[%s4 + $0x10] sm:$0xf]
  %v3346 = vld [vmem:[%s4 + $0x14] sm:$0xf]
  %v3347 = vld [vmem:[%s4 + $0x18] sm:$0xf]
  %v3348 = vld [vmem:[%s4 + $0x1c] sm:$0xf]
  %v3349 = vld [vmem:[%s4 + $0x20] sm:$0xf]
  %v3350 = vld [vmem:[%s4 + $0x24] sm:$0xf]
  %v3351 = vld [vmem:[%s4 + $0x28] sm:$0xf]
  %v3352 = vld [vmem:[%s4 + $0x2c] sm:$0xf]
  %v3353 = vld [vmem:[%s4 + $0x30] sm:$0xf]
  %v3354 = vld [vmem:[%s4 + $0x34] sm:$0xf]
  %v3355 = vld [vmem:[%s4 + $0x38] sm:$0xf]
  %v3356 = vld [vmem:[%s4 + $0x3c] sm:$0xf]
  %v3373 = vunpack.c.l.b16 %v3341
  %v3374 = vunpack.c.l.b16 %v3342
  %v3375 = vunpack.c.l.b16 %v3343
  %v3376 = vunpack.c.l.b16 %v3344
  %v3377 = vunpack.c.l.b16 %v3345
  %v3378 = vunpack.c.l.b16 %v3346
  %v3379 = vunpack.c.l.b16 %v3347
  %v3380 = vunpack.c.l.b16 %v3348
  %v3381 = vunpack.c.l.b16 %v3349
  %v3382 = vunpack.c.l.b16 %v3350
  %v3383 = vunpack.c.l.b16 %v3351
  %v3384 = vunpack.c.l.b16 %v3352
  %v3385 = vunpack.c.l.b16 %v3353
  %v3386 = vunpack.c.l.b16 %v3354
  %v3387 = vunpack.c.l.b16 %v3355
  %v3388 = vunpack.c.l.b16 %v3356
  %v3389 = vpack.c.b16 %v3374, %v3373
  %v3390 = vpack.c.b16 %v3376, %v3375
  %v3391 = vpack.c.b16 %v3378, %v3377
  %v3392 = vpack.c.b16 %v3380, %v3379
  %v3393 = vpack.c.b16 %v3382, %v3381
  %v3394 = vpack.c.b16 %v3384, %v3383
  %v3395 = vpack.c.b16 %v3386, %v3385
  %v3396 = vpack.c.b16 %v3388, %v3387
  %3405 = vmatpush.bf16.msra.mxu0 %v3396
  %3406 = vmatpush.bf16.msra.mxu0 %v3395
  %3407 = vmatpush.bf16.msra.mxu0 %v3394
  %3408 = vmatpush.bf16.msra.mxu0 %v3393
  %3409 = vmatpush.bf16.msra.mxu0 %v3392
  %3410 = vmatpush.bf16.msra.mxu0 %v3391
  %3411 = vmatpush.bf16.msra.mxu0 %v3390
  %3412 = vmatpush.bf16.msra.mxu0 %v3389
  %3413 = vmatmul.bf16.gmra.mxu0 %v3340
  %v3414 = vpop.f32.mrf.mxu0
  %v3415 = vadd.f32 0.0, %v3414
  %v3416 = vpop.f32.mrf.mxu0
  %3417 = vdwg.mxu0
  %s3418 = scalar_lea.vmem %s3, 16
  %v3419 = vld [vmem:[%s3418] sm:$0xff]
  %v3420 = vmul.f32 %v3415, %v3419
  %s3421 = scalar_lea.vmem %s2, 16
  %v3422 = vld [vmem:[%s3421] sm:$0xff]
  %v3423 = vadd.f32 %v3420, %v3422
  %v3424 = vpack.c.bf16 %v3423, %v3423
  %v3425 = vld [vmem:[%s6] sm:$0xff]
  %v3426 = vld [vmem:[%s6 + $0x8] sm:$0xf]
  %v3427 = vld [vmem:[%s6 + $0xc] sm:$0xff]
  %v3428 = vld [vmem:[%s6 + $0x14] sm:$0xf]
  %v3429 = vld [vmem:[%s6 + $0x18] sm:$0xff]
  %v3430 = vld [vmem:[%s6 + $0x20] sm:$0xf]
  %v3431 = vld [vmem:[%s6 + $0x24] sm:$0xff]
  %v3432 = vld [vmem:[%s6 + $0x2c] sm:$0xf]
  %v3433 = vld [vmem:[%s6 + $0x30] sm:$0xff]
  %v3434 = vld [vmem:[%s6 + $0x38] sm:$0xf]
  %v3435 = vld [vmem:[%s6 + $0x3c] sm:$0xff]
  %v3436 = vld [vmem:[%s6 + $0x44] sm:$0xf]
  %v3437 = vld [vmem:[%s6 + $0x48] sm:$0xff]
  %v3438 = vld [vmem:[%s6 + $0x50] sm:$0xf]
  %v3439 = vld [vmem:[%s6 + $0x54] sm:$0xff]
  %v3440 = vld [vmem:[%s6 + $0x5c] sm:$0xf]
  %v3441 = vld [vmem:[%s6 + $0x60] sm:$0xff]
  %v3442 = vld [vmem:[%s6 + $0x68] sm:$0xf]
  %v3443 = vld [vmem:[%s6 + $0x6c] sm:$0xff]
  %v3444 = vld [vmem:[%s6 + $0x74] sm:$0xf]
  %v3445 = vld [vmem:[%s6 + $0x78] sm:$0xff]
  %v3446 = vld [vmem:[%s6 + $0x80] sm:$0xf]
  %v3447 = vld [vmem:[%s6 + $0x84] sm:$0xff]
  %v3448 = vld [vmem:[%s6 + $0x8c] sm:$0xf]
  %v3449 = vld [vmem:[%s6 + $0x90] sm:$0xff]
  %v3450 = vld [vmem:[%s6 + $0x98] sm:$0xf]
  %v3451 = vld [vmem:[%s6 + $0x9c] sm:$0xff]
  %v3452 = vld [vmem:[%s6 + $0xa4] sm:$0xf]
  %v3453 = vld [vmem:[%s6 + $0xa8] sm:$0xff]
  %v3454 = vld [vmem:[%s6 + $0xb0] sm:$0xf]
  %v3455 = vld [vmem:[%s6 + $0xb4] sm:$0xff]
  %v3456 = vld [vmem:[%s6 + $0xbc] sm:$0xf]
  %v3457 = vld [vmem:[%s8] sm:$0x7]
  %v3459 = vperm.slane %v3457, 0
  %v3460 = vperm.slane %v3457, 1
  %v3461 = vperm.slane %v3457, 2
  %v3497 = vunpack.c.l.b16 %v3425
  %v3498 = vunpack.c.h.b16 %v3425
  %v3499 = vunpack.c.l.b16 %v3426
  %v3500 = vunpack.c.l.b16 %v3427
  %v3501 = vunpack.c.h.b16 %v3427
  %v3502 = vunpack.c.l.b16 %v3428
  %v3503 = vunpack.c.l.b16 %v3429
  %v3504 = vunpack.c.h.b16 %v3429
  %v3505 = vunpack.c.l.b16 %v3430
  %v3506 = vunpack.c.l.b16 %v3431
  %v3507 = vunpack.c.h.b16 %v3431
  %v3508 = vunpack.c.l.b16 %v3432
  %v3509 = vunpack.c.l.b16 %v3433
  %v3510 = vunpack.c.h.b16 %v3433
  %v3511 = vunpack.c.l.b16 %v3434
  %v3512 = vunpack.c.l.b16 %v3435
  %v3513 = vunpack.c.h.b16 %v3435
  %v3514 = vunpack.c.l.b16 %v3436
  %v3515 = vunpack.c.l.b16 %v3437
  %v3516 = vunpack.c.h.b16 %v3437
  %v3517 = vunpack.c.l.b16 %v3438
  %v3518 = vunpack.c.l.b16 %v3439
  %v3519 = vunpack.c.h.b16 %v3439
  %v3520 = vunpack.c.l.b16 %v3440
  %v3521 = vunpack.c.l.b16 %v3441
  %v3522 = vunpack.c.h.b16 %v3441
  %v3523 = vunpack.c.l.b16 %v3442
  %v3524 = vunpack.c.l.b16 %v3443
  %v3525 = vunpack.c.h.b16 %v3443
  %v3526 = vunpack.c.l.b16 %v3444
  %v3527 = vunpack.c.l.b16 %v3445
  %v3528 = vunpack.c.h.b16 %v3445
  %v3529 = vunpack.c.l.b16 %v3446
  %v3530 = vunpack.c.l.b16 %v3447
  %v3531 = vunpack.c.h.b16 %v3447
  %v3532 = vunpack.c.l.b16 %v3448
  %v3533 = vunpack.c.l.b16 %v3449
  %v3534 = vunpack.c.h.b16 %v3449
  %v3535 = vunpack.c.l.b16 %v3450
  %v3536 = vunpack.c.l.b16 %v3451
  %v3537 = vunpack.c.h.b16 %v3451
  %v3538 = vunpack.c.l.b16 %v3452
  %v3539 = vunpack.c.l.b16 %v3453
  %v3540 = vunpack.c.h.b16 %v3453
  %v3541 = vunpack.c.l.b16 %v3454
  %v3542 = vunpack.c.l.b16 %v3455
  %v3543 = vunpack.c.h.b16 %v3455
  %v3544 = vunpack.c.l.b16 %v3456
  %v3545 = vpack.c.b16 %v3500, %v3497
  %v3546 = vpack.c.b16 %v3501, %v3498
  %v3547 = vpack.c.b16 %v3502, %v3499
  %v3548 = vpack.c.b16 %v3506, %v3503
  %v3549 = vpack.c.b16 %v3507, %v3504
  %v3550 = vpack.c.b16 %v3508, %v3505
  %v3551 = vpack.c.b16 %v3512, %v3509
  %v3552 = vpack.c.b16 %v3513, %v3510
  %v3553 = vpack.c.b16 %v3514, %v3511
  %v3554 = vpack.c.b16 %v3518, %v3515
  %v3555 = vpack.c.b16 %v3519, %v3516
  %v3556 = vpack.c.b16 %v3520, %v3517
  %v3557 = vpack.c.b16 %v3524, %v3521
  %v3558 = vpack.c.b16 %v3525, %v3522
  %v3559 = vpack.c.b16 %v3526, %v3523
  %v3560 = vpack.c.b16 %v3530, %v3527
  %v3561 = vpack.c.b16 %v3531, %v3528
  %v3562 = vpack.c.b16 %v3532, %v3529
  %v3563 = vpack.c.b16 %v3536, %v3533
  %v3564 = vpack.c.b16 %v3537, %v3534
  %v3565 = vpack.c.b16 %v3538, %v3535
  %v3566 = vpack.c.b16 %v3542, %v3539
  %v3567 = vpack.c.b16 %v3543, %v3540
  %v3568 = vpack.c.b16 %v3544, %v3541
  %3593 = vmatpush.bf16.msra.mxu0 %v3566
  %3594 = vmatpush.bf16.msra.mxu0 %v3563
  %3595 = vmatpush.bf16.msra.mxu0 %v3560
  %3596 = vmatpush.bf16.msra.mxu0 %v3557
  %3597 = vmatpush.bf16.msra.mxu0 %v3554
  %3598 = vmatpush.bf16.msra.mxu0 %v3551
  %3599 = vmatpush.bf16.msra.mxu0 %v3548
  %3600 = vmatpush.bf16.msra.mxu0 %v3545
  %3601 = vmatmul.bf16.gmra.mxu0 %v3424
  %v3602 = vpop.f32.mrf.mxu0
  %v3603 = vadd.f32 %v3459, %v3602
  %v3604 = vpop.f32.mrf.mxu0
  %3605 = vdwg.mxu0
  %3606 = vmatpush.bf16.msra.mxu0 %v3567
  %3607 = vmatpush.bf16.msra.mxu0 %v3564
  %3608 = vmatpush.bf16.msra.mxu0 %v3561
  %3609 = vmatpush.bf16.msra.mxu0 %v3558
  %3610 = vmatpush.bf16.msra.mxu0 %v3555
  %3611 = vmatpush.bf16.msra.mxu0 %v3552
  %3612 = vmatpush.bf16.msra.mxu0 %v3549
  %3613 = vmatpush.bf16.msra.mxu0 %v3546
  %3614 = vmatmul.bf16.gmra.mxu0 %v3424
  %v3615 = vpop.f32.mrf.mxu0
  %v3616 = vadd.f32 %v3460, %v3615
  %v3617 = vpop.f32.mrf.mxu0
  %3618 = vdwg.mxu0
  %3619 = vmatpush.bf16.msra.mxu0 %v3568
  %3620 = vmatpush.bf16.msra.mxu0 %v3565
  %3621 = vmatpush.bf16.msra.mxu0 %v3562
  %3622 = vmatpush.bf16.msra.mxu0 %v3559
  %3623 = vmatpush.bf16.msra.mxu0 %v3556
  %3624 = vmatpush.bf16.msra.mxu0 %v3553
  %3625 = vmatpush.bf16.msra.mxu0 %v3550
  %3626 = vmatpush.bf16.msra.mxu0 %v3547
  %3627 = vmatmul.bf16.gmra.mxu0 %v3424
  %v3628 = vpop.f32.mrf.mxu0
  %v3629 = vadd.f32 %v3461, %v3628
  %v3630 = vpop.f32.mrf.mxu0
  %3631 = vdwg.mxu0
  %v3632 = vld [vmem:[%s7] sm:$0xff]
  %v3633 = vld [vmem:[%s7 + $0x8] sm:$0xf]
  %v3634 = vld [vmem:[%s7 + $0xc] sm:$0xff]
  %v3635 = vld [vmem:[%s7 + $0x14] sm:$0xf]
  %v3636 = vld [vmem:[%s7 + $0x18] sm:$0xff]
  %v3637 = vld [vmem:[%s7 + $0x20] sm:$0xf]
  %v3638 = vld [vmem:[%s7 + $0x24] sm:$0xff]
  %v3639 = vld [vmem:[%s7 + $0x2c] sm:$0xf]
  %v3640 = vld [vmem:[%s7 + $0x30] sm:$0xff]
  %v3641 = vld [vmem:[%s7 + $0x38] sm:$0xf]
  %v3642 = vld [vmem:[%s7 + $0x3c] sm:$0xff]
  %v3643 = vld [vmem:[%s7 + $0x44] sm:$0xf]
  %v3644 = vld [vmem:[%s7 + $0x48] sm:$0xff]
  %v3645 = vld [vmem:[%s7 + $0x50] sm:$0xf]
  %v3646 = vld [vmem:[%s7 + $0x54] sm:$0xff]
  %v3647 = vld [vmem:[%s7 + $0x5c] sm:$0xf]
  %v3648 = vld [vmem:[%s7 + $0x60] sm:$0xff]
  %v3649 = vld [vmem:[%s7 + $0x68] sm:$0xf]
  %v3650 = vld [vmem:[%s7 + $0x6c] sm:$0xff]
  %v3651 = vld [vmem:[%s7 + $0x74] sm:$0xf]
  %v3652 = vld [vmem:[%s7 + $0x78] sm:$0xff]
  %v3653 = vld [vmem:[%s7 + $0x80] sm:$0xf]
  %v3654 = vld [vmem:[%s7 + $0x84] sm:$0xff]
  %v3655 = vld [vmem:[%s7 + $0x8c] sm:$0xf]
  %v3656 = vld [vmem:[%s7 + $0x90] sm:$0xff]
  %v3657 = vld [vmem:[%s7 + $0x98] sm:$0xf]
  %v3658 = vld [vmem:[%s7 + $0x9c] sm:$0xff]
  %v3659 = vld [vmem:[%s7 + $0xa4] sm:$0xf]
  %v3660 = vld [vmem:[%s7 + $0xa8] sm:$0xff]
  %v3661 = vld [vmem:[%s7 + $0xb0] sm:$0xf]
  %v3662 = vld [vmem:[%s7 + $0xb4] sm:$0xff]
  %v3663 = vld [vmem:[%s7 + $0xbc] sm:$0xf]
  %v3696 = vunpack.c.l.b16 %v3632
  %v3697 = vunpack.c.h.b16 %v3632
  %v3698 = vunpack.c.l.b16 %v3633
  %v3699 = vunpack.c.l.b16 %v3634
  %v3700 = vunpack.c.h.b16 %v3634
  %v3701 = vunpack.c.l.b16 %v3635
  %v3702 = vunpack.c.l.b16 %v3636
  %v3703 = vunpack.c.h.b16 %v3636
  %v3704 = vunpack.c.l.b16 %v3637
  %v3705 = vunpack.c.l.b16 %v3638
  %v3706 = vunpack.c.h.b16 %v3638
  %v3707 = vunpack.c.l.b16 %v3639
  %v3708 = vunpack.c.l.b16 %v3640
  %v3709 = vunpack.c.h.b16 %v3640
  %v3710 = vunpack.c.l.b16 %v3641
  %v3711 = vunpack.c.l.b16 %v3642
  %v3712 = vunpack.c.h.b16 %v3642
  %v3713 = vunpack.c.l.b16 %v3643
  %v3714 = vunpack.c.l.b16 %v3644
  %v3715 = vunpack.c.h.b16 %v3644
  %v3716 = vunpack.c.l.b16 %v3645
  %v3717 = vunpack.c.l.b16 %v3646
  %v3718 = vunpack.c.h.b16 %v3646
  %v3719 = vunpack.c.l.b16 %v3647
  %v3720 = vunpack.c.l.b16 %v3648
  %v3721 = vunpack.c.h.b16 %v3648
  %v3722 = vunpack.c.l.b16 %v3649
  %v3723 = vunpack.c.l.b16 %v3650
  %v3724 = vunpack.c.h.b16 %v3650
  %v3725 = vunpack.c.l.b16 %v3651
  %v3726 = vunpack.c.l.b16 %v3652
  %v3727 = vunpack.c.h.b16 %v3652
  %v3728 = vunpack.c.l.b16 %v3653
  %v3729 = vunpack.c.l.b16 %v3654
  %v3730 = vunpack.c.h.b16 %v3654
  %v3731 = vunpack.c.l.b16 %v3655
  %v3732 = vunpack.c.l.b16 %v3656
  %v3733 = vunpack.c.h.b16 %v3656
  %v3734 = vunpack.c.l.b16 %v3657
  %v3735 = vunpack.c.l.b16 %v3658
  %v3736 = vunpack.c.h.b16 %v3658
  %v3737 = vunpack.c.l.b16 %v3659
  %v3738 = vunpack.c.l.b16 %v3660
  %v3739 = vunpack.c.h.b16 %v3660
  %v3740 = vunpack.c.l.b16 %v3661
  %v3741 = vunpack.c.l.b16 %v3662
  %v3742 = vunpack.c.h.b16 %v3662
  %v3743 = vunpack.c.l.b16 %v3663
  %v3744 = vpack.c.b16 %v3699, %v3696
  %v3745 = vpack.c.b16 %v3700, %v3697
  %v3746 = vpack.c.b16 %v3701, %v3698
  %v3747 = vpack.c.b16 %v3705, %v3702
  %v3748 = vpack.c.b16 %v3706, %v3703
  %v3749 = vpack.c.b16 %v3707, %v3704
  %v3750 = vpack.c.b16 %v3711, %v3708
  %v3751 = vpack.c.b16 %v3712, %v3709
  %v3752 = vpack.c.b16 %v3713, %v3710
  %v3753 = vpack.c.b16 %v3717, %v3714
  %v3754 = vpack.c.b16 %v3718, %v3715
  %v3755 = vpack.c.b16 %v3719, %v3716
  %v3756 = vpack.c.b16 %v3723, %v3720
  %v3757 = vpack.c.b16 %v3724, %v3721
  %v3758 = vpack.c.b16 %v3725, %v3722
  %v3759 = vpack.c.b16 %v3729, %v3726
  %v3760 = vpack.c.b16 %v3730, %v3727
  %v3761 = vpack.c.b16 %v3731, %v3728
  %v3762 = vpack.c.b16 %v3735, %v3732
  %v3763 = vpack.c.b16 %v3736, %v3733
  %v3764 = vpack.c.b16 %v3737, %v3734
  %v3765 = vpack.c.b16 %v3741, %v3738
  %v3766 = vpack.c.b16 %v3742, %v3739
  %v3767 = vpack.c.b16 %v3743, %v3740
  %3792 = vmatpush.bf16.msra.mxu0 %v3765
  %3793 = vmatpush.bf16.msra.mxu0 %v3762
  %3794 = vmatpush.bf16.msra.mxu0 %v3759
  %3795 = vmatpush.bf16.msra.mxu0 %v3756
  %3796 = vmatpush.bf16.msra.mxu0 %v3753
  %3797 = vmatpush.bf16.msra.mxu0 %v3750
  %3798 = vmatpush.bf16.msra.mxu0 %v3747
  %3799 = vmatpush.bf16.msra.mxu0 %v3744
  %3800 = vmatmul.bf16.gmra.mxu0 %v2787
  %v3801 = vpop.f32.mrf.mxu0
  %v3802 = vadd.f32 0.0, %v3801
  %v3803 = vpop.f32.mrf.mxu0
  %3804 = vdwg.mxu0
  %3805 = vmatpush.bf16.msra.mxu0 %v3766
  %3806 = vmatpush.bf16.msra.mxu0 %v3763
  %3807 = vmatpush.bf16.msra.mxu0 %v3760
  %3808 = vmatpush.bf16.msra.mxu0 %v3757
  %3809 = vmatpush.bf16.msra.mxu0 %v3754
  %3810 = vmatpush.bf16.msra.mxu0 %v3751
  %3811 = vmatpush.bf16.msra.mxu0 %v3748
  %3812 = vmatpush.bf16.msra.mxu0 %v3745
  %3813 = vmatmul.bf16.gmra.mxu0 %v2787
  %v3814 = vpop.f32.mrf.mxu0
  %v3815 = vadd.f32 0.0, %v3814
  %v3816 = vpop.f32.mrf.mxu0
  %3817 = vdwg.mxu0
  %3818 = vmatpush.bf16.msra.mxu0 %v3767
  %3819 = vmatpush.bf16.msra.mxu0 %v3764
  %3820 = vmatpush.bf16.msra.mxu0 %v3761
  %3821 = vmatpush.bf16.msra.mxu0 %v3758
  %3822 = vmatpush.bf16.msra.mxu0 %v3755
  %3823 = vmatpush.bf16.msra.mxu0 %v3752
  %3824 = vmatpush.bf16.msra.mxu0 %v3749
  %3825 = vmatpush.bf16.msra.mxu0 %v3746
  %3826 = vmatmul.bf16.gmra.mxu0 %v2787
  %v3827 = vpop.f32.mrf.mxu0
  %v3828 = vadd.f32 0.0, %v3827
  %v3829 = vpop.f32.mrf.mxu0
  %3830 = vdwg.mxu0
  %v3831 = vadd.f32 %v3603, %v3802
  %v3832 = vadd.f32 %v3616, %v3815
  %v3833 = vxor.u32 %v3831, 2147483648
  %v3834 = vxor.u32 %v3832, 2147483648
  %v3835 = vmul.f32 %v3833, 1.442695
  %v3836 = vpow.pop %v3835
  %v3837 = vmul.f32 %v3834, 1.442695
  %v3838 = vpow.pop %v3837
  %v3839 = vadd.f32 %v3836, 1.0
  %v3840 = vadd.f32 %v3838, 1.0
  %v3841 = vrcp.pop %v3839
  %v3842 = vmul.f32 %v3839, %v3841
  %v3843 = vsub.f32 1.0, %v3842
  %v3844 = vmul.f32 %v3841, %v3843
  %v3845 = vadd.f32 %v3841, %v3844
  %vm3846 = vweird.f32 %v3839
  %vm3847 = vweird.f32 %v3841
  %vm3848 = vmor %vm3846, %vm3847
  %v3849 = vsel %vm3848, %v3841, %v3845
  %v3850 = vand.u32 2147483647, %v3839
  %vm3851 = vcmp.eq.f32.partialorder %v3850, 8.507059e+37
  %v3852 = vand.u32 %v3839, 2147483648
  %v3853 = vor.u32 1.1754944e-38, %v3852
  %v3854 = vsel %vm3851, %v3853, %v3849
  %v3855 = vmul.f32 1.0, %v3854
  %v3856 = vrcp.pop %v3840
  %v3857 = vmul.f32 %v3840, %v3856
  %v3858 = vsub.f32 1.0, %v3857
  %v3859 = vmul.f32 %v3856, %v3858
  %v3860 = vadd.f32 %v3856, %v3859
  %vm3861 = vweird.f32 %v3840
  %vm3862 = vweird.f32 %v3856
  %vm3863 = vmor %vm3861, %vm3862
  %v3864 = vsel %vm3863, %v3856, %v3860
  %v3865 = vand.u32 2147483647, %v3840
  %vm3866 = vcmp.eq.f32.partialorder %v3865, 8.507059e+37
  %v3867 = vand.u32 %v3840, 2147483648
  %v3868 = vor.u32 1.1754944e-38, %v3867
  %v3869 = vsel %vm3866, %v3868, %v3864
  %v3870 = vmul.f32 1.0, %v3869
  %v3871 = vld [vmem:[%s9] sm:$0x1]
  %v3873 = vperm.slane %v3871, 0
  %v3875 = vadd.f32 %v3828, %v3873
  %v3876 = vmul.f32 %v3855, %v3875
  %v3877 = vadd.f32 %v3629, %v3876
  %v3878 = vtanh.pop %v3877
  %v3879 = vsub.f32 1.0, %v3870
  %v3880 = vmul.f32 %v3879, %v3878
  %v3881 = vmul.f32 %v3870, %v2786
  %v3882 = vadd.f32 %v3880, %v3881
  %v3883 = vpack.c.bf16 %v3882, %v3882
  %v3884 = vld [vmem:[%s10] sm:$0xff]
  %v3885 = vld [vmem:[%s10 + $0x8] sm:$0xf]
  %v3886 = vld [vmem:[%s10 + $0xc] sm:$0xff]
  %v3887 = vld [vmem:[%s10 + $0x14] sm:$0xf]
  %v3888 = vld [vmem:[%s10 + $0x18] sm:$0xff]
  %v3889 = vld [vmem:[%s10 + $0x20] sm:$0xf]
  %v3890 = vld [vmem:[%s10 + $0x24] sm:$0xff]
  %v3891 = vld [vmem:[%s10 + $0x2c] sm:$0xf]
  %v3892 = vld [vmem:[%s10 + $0x30] sm:$0xff]
  %v3893 = vld [vmem:[%s10 + $0x38] sm:$0xf]
  %v3894 = vld [vmem:[%s10 + $0x3c] sm:$0xff]
  %v3895 = vld [vmem:[%s10 + $0x44] sm:$0xf]
  %v3896 = vld [vmem:[%s10 + $0x48] sm:$0xff]
  %v3897 = vld [vmem:[%s10 + $0x50] sm:$0xf]
  %v3898 = vld [vmem:[%s10 + $0x54] sm:$0xff]
  %v3899 = vld [vmem:[%s10 + $0x5c] sm:$0xf]
  %v3900 = vld [vmem:[%s10 + $0x60] sm:$0xff]
  %v3901 = vld [vmem:[%s10 + $0x68] sm:$0xf]
  %v3902 = vld [vmem:[%s10 + $0x6c] sm:$0xff]
  %v3903 = vld [vmem:[%s10 + $0x74] sm:$0xf]
  %v3904 = vld [vmem:[%s10 + $0x78] sm:$0xff]
  %v3905 = vld [vmem:[%s10 + $0x80] sm:$0xf]
  %v3906 = vld [vmem:[%s10 + $0x84] sm:$0xff]
  %v3907 = vld [vmem:[%s10 + $0x8c] sm:$0xf]
  %v3908 = vld [vmem:[%s10 + $0x90] sm:$0xff]
  %v3909 = vld [vmem:[%s10 + $0x98] sm:$0xf]
  %v3910 = vld [vmem:[%s10 + $0x9c] sm:$0xff]
  %v3911 = vld [vmem:[%s10 + $0xa4] sm:$0xf]
  %v3912 = vld [vmem:[%s10 + $0xa8] sm:$0xff]
  %v3913 = vld [vmem:[%s10 + $0xb0] sm:$0xf]
  %v3914 = vld [vmem:[%s10 + $0xb4] sm:$0xff]
  %v3915 = vld [vmem:[%s10 + $0xbc] sm:$0xf]
  %v3916 = vld [vmem:[%s12] sm:$0x7]
  %v3918 = vperm.slane %v3916, 0
  %v3919 = vperm.slane %v3916, 1
  %v3920 = vperm.slane %v3916, 2
  %v3956 = vunpack.c.l.b16 %v3884
  %v3957 = vunpack.c.h.b16 %v3884
  %v3958 = vunpack.c.l.b16 %v3885
  %v3959 = vunpack.c.l.b16 %v3886
  %v3960 = vunpack.c.h.b16 %v3886
  %v3961 = vunpack.c.l.b16 %v3887
  %v3962 = vunpack.c.l.b16 %v3888
  %v3963 = vunpack.c.h.b16 %v3888
  %v3964 = vunpack.c.l.b16 %v3889
  %v3965 = vunpack.c.l.b16 %v3890
  %v3966 = vunpack.c.h.b16 %v3890
  %v3967 = vunpack.c.l.b16 %v3891
  %v3968 = vunpack.c.l.b16 %v3892
  %v3969 = vunpack.c.h.b16 %v3892
  %v3970 = vunpack.c.l.b16 %v3893
  %v3971 = vunpack.c.l.b16 %v3894
  %v3972 = vunpack.c.h.b16 %v3894
  %v3973 = vunpack.c.l.b16 %v3895
  %v3974 = vunpack.c.l.b16 %v3896
  %v3975 = vunpack.c.h.b16 %v3896
  %v3976 = vunpack.c.l.b16 %v3897
  %v3977 = vunpack.c.l.b16 %v3898
  %v3978 = vunpack.c.h.b16 %v3898
  %v3979 = vunpack.c.l.b16 %v3899
  %v3980 = vunpack.c.l.b16 %v3900
  %v3981 = vunpack.c.h.b16 %v3900
  %v3982 = vunpack.c.l.b16 %v3901
  %v3983 = vunpack.c.l.b16 %v3902
  %v3984 = vunpack.c.h.b16 %v3902
  %v3985 = vunpack.c.l.b16 %v3903
  %v3986 = vunpack.c.l.b16 %v3904
  %v3987 = vunpack.c.h.b16 %v3904
  %v3988 = vunpack.c.l.b16 %v3905
  %v3989 = vunpack.c.l.b16 %v3906
  %v3990 = vunpack.c.h.b16 %v3906
  %v3991 = vunpack.c.l.b16 %v3907
  %v3992 = vunpack.c.l.b16 %v3908
  %v3993 = vunpack.c.h.b16 %v3908
  %v3994 = vunpack.c.l.b16 %v3909
  %v3995 = vunpack.c.l.b16 %v3910
  %v3996 = vunpack.c.h.b16 %v3910
  %v3997 = vunpack.c.l.b16 %v3911
  %v3998 = vunpack.c.l.b16 %v3912
  %v3999 = vunpack.c.h.b16 %v3912
  %v4000 = vunpack.c.l.b16 %v3913
  %v4001 = vunpack.c.l.b16 %v3914
  %v4002 = vunpack.c.h.b16 %v3914
  %v4003 = vunpack.c.l.b16 %v3915
  %v4004 = vpack.c.b16 %v3959, %v3956
  %v4005 = vpack.c.b16 %v3960, %v3957
  %v4006 = vpack.c.b16 %v3961, %v3958
  %v4007 = vpack.c.b16 %v3965, %v3962
  %v4008 = vpack.c.b16 %v3966, %v3963
  %v4009 = vpack.c.b16 %v3967, %v3964
  %v4010 = vpack.c.b16 %v3971, %v3968
  %v4011 = vpack.c.b16 %v3972, %v3969
  %v4012 = vpack.c.b16 %v3973, %v3970
  %v4013 = vpack.c.b16 %v3977, %v3974
  %v4014 = vpack.c.b16 %v3978, %v3975
  %v4015 = vpack.c.b16 %v3979, %v3976
  %v4016 = vpack.c.b16 %v3983, %v3980
  %v4017 = vpack.c.b16 %v3984, %v3981
  %v4018 = vpack.c.b16 %v3985, %v3982
  %v4019 = vpack.c.b16 %v3989, %v3986
  %v4020 = vpack.c.b16 %v3990, %v3987
  %v4021 = vpack.c.b16 %v3991, %v3988
  %v4022 = vpack.c.b16 %v3995, %v3992
  %v4023 = vpack.c.b16 %v3996, %v3993
  %v4024 = vpack.c.b16 %v3997, %v3994
  %v4025 = vpack.c.b16 %v4001, %v3998
  %v4026 = vpack.c.b16 %v4002, %v3999
  %v4027 = vpack.c.b16 %v4003, %v4000
  %4052 = vmatpush.bf16.msra.mxu0 %v4025
  %4053 = vmatpush.bf16.msra.mxu0 %v4022
  %4054 = vmatpush.bf16.msra.mxu0 %v4019
  %4055 = vmatpush.bf16.msra.mxu0 %v4016
  %4056 = vmatpush.bf16.msra.mxu0 %v4013
  %4057 = vmatpush.bf16.msra.mxu0 %v4010
  %4058 = vmatpush.bf16.msra.mxu0 %v4007
  %4059 = vmatpush.bf16.msra.mxu0 %v4004
  %4060 = vmatmul.bf16.gmra.mxu0 %v3883
  %v4061 = vpop.f32.mrf.mxu0
  %v4062 = vadd.f32 %v3918, %v4061
  %v4063 = vpop.f32.mrf.mxu0
  %4064 = vdwg.mxu0
  %4065 = vmatpush.bf16.msra.mxu0 %v4026
  %4066 = vmatpush.bf16.msra.mxu0 %v4023
  %4067 = vmatpush.bf16.msra.mxu0 %v4020
  %4068 = vmatpush.bf16.msra.mxu0 %v4017
  %4069 = vmatpush.bf16.msra.mxu0 %v4014
  %4070 = vmatpush.bf16.msra.mxu0 %v4011
  %4071 = vmatpush.bf16.msra.mxu0 %v4008
  %4072 = vmatpush.bf16.msra.mxu0 %v4005
  %4073 = vmatmul.bf16.gmra.mxu0 %v3883
  %v4074 = vpop.f32.mrf.mxu0
  %v4075 = vadd.f32 %v3919, %v4074
  %v4076 = vpop.f32.mrf.mxu0
  %4077 = vdwg.mxu0
  %4078 = vmatpush.bf16.msra.mxu0 %v4027
  %4079 = vmatpush.bf16.msra.mxu0 %v4024
  %4080 = vmatpush.bf16.msra.mxu0 %v4021
  %4081 = vmatpush.bf16.msra.mxu0 %v4018
  %4082 = vmatpush.bf16.msra.mxu0 %v4015
  %4083 = vmatpush.bf16.msra.mxu0 %v4012
  %4084 = vmatpush.bf16.msra.mxu0 %v4009
  %4085 = vmatpush.bf16.msra.mxu0 %v4006
  %4086 = vmatmul.bf16.gmra.mxu0 %v3883
  %v4087 = vpop.f32.mrf.mxu0
  %v4088 = vadd.f32 %v3920, %v4087
  %v4089 = vpop.f32.mrf.mxu0
  %4090 = vdwg.mxu0
  %v4091 = vld [vmem:[%s11] sm:$0xff]
  %v4092 = vld [vmem:[%s11 + $0x8] sm:$0xf]
  %v4093 = vld [vmem:[%s11 + $0xc] sm:$0xff]
  %v4094 = vld [vmem:[%s11 + $0x14] sm:$0xf]
  %v4095 = vld [vmem:[%s11 + $0x18] sm:$0xff]
  %v4096 = vld [vmem:[%s11 + $0x20] sm:$0xf]
  %v4097 = vld [vmem:[%s11 + $0x24] sm:$0xff]
  %v4098 = vld [vmem:[%s11 + $0x2c] sm:$0xf]
  %v4099 = vld [vmem:[%s11 + $0x30] sm:$0xff]
  %v4100 = vld [vmem:[%s11 + $0x38] sm:$0xf]
  %v4101 = vld [vmem:[%s11 + $0x3c] sm:$0xff]
  %v4102 = vld [vmem:[%s11 + $0x44] sm:$0xf]
  %v4103 = vld [vmem:[%s11 + $0x48] sm:$0xff]
  %v4104 = vld [vmem:[%s11 + $0x50] sm:$0xf]
  %v4105 = vld [vmem:[%s11 + $0x54] sm:$0xff]
  %v4106 = vld [vmem:[%s11 + $0x5c] sm:$0xf]
  %v4107 = vld [vmem:[%s11 + $0x60] sm:$0xff]
  %v4108 = vld [vmem:[%s11 + $0x68] sm:$0xf]
  %v4109 = vld [vmem:[%s11 + $0x6c] sm:$0xff]
  %v4110 = vld [vmem:[%s11 + $0x74] sm:$0xf]
  %v4111 = vld [vmem:[%s11 + $0x78] sm:$0xff]
  %v4112 = vld [vmem:[%s11 + $0x80] sm:$0xf]
  %v4113 = vld [vmem:[%s11 + $0x84] sm:$0xff]
  %v4114 = vld [vmem:[%s11 + $0x8c] sm:$0xf]
  %v4115 = vld [vmem:[%s11 + $0x90] sm:$0xff]
  %v4116 = vld [vmem:[%s11 + $0x98] sm:$0xf]
  %v4117 = vld [vmem:[%s11 + $0x9c] sm:$0xff]
  %v4118 = vld [vmem:[%s11 + $0xa4] sm:$0xf]
  %v4119 = vld [vmem:[%s11 + $0xa8] sm:$0xff]
  %v4120 = vld [vmem:[%s11 + $0xb0] sm:$0xf]
  %v4121 = vld [vmem:[%s11 + $0xb4] sm:$0xff]
  %v4122 = vld [vmem:[%s11 + $0xbc] sm:$0xf]
  %v4155 = vunpack.c.l.b16 %v4091
  %v4156 = vunpack.c.h.b16 %v4091
  %v4157 = vunpack.c.l.b16 %v4092
  %v4158 = vunpack.c.l.b16 %v4093
  %v4159 = vunpack.c.h.b16 %v4093
  %v4160 = vunpack.c.l.b16 %v4094
  %v4161 = vunpack.c.l.b16 %v4095
  %v4162 = vunpack.c.h.b16 %v4095
  %v4163 = vunpack.c.l.b16 %v4096
  %v4164 = vunpack.c.l.b16 %v4097
  %v4165 = vunpack.c.h.b16 %v4097
  %v4166 = vunpack.c.l.b16 %v4098
  %v4167 = vunpack.c.l.b16 %v4099
  %v4168 = vunpack.c.h.b16 %v4099
  %v4169 = vunpack.c.l.b16 %v4100
  %v4170 = vunpack.c.l.b16 %v4101
  %v4171 = vunpack.c.h.b16 %v4101
  %v4172 = vunpack.c.l.b16 %v4102
  %v4173 = vunpack.c.l.b16 %v4103
  %v4174 = vunpack.c.h.b16 %v4103
  %v4175 = vunpack.c.l.b16 %v4104
  %v4176 = vunpack.c.l.b16 %v4105
  %v4177 = vunpack.c.h.b16 %v4105
  %v4178 = vunpack.c.l.b16 %v4106
  %v4179 = vunpack.c.l.b16 %v4107
  %v4180 = vunpack.c.h.b16 %v4107
  %v4181 = vunpack.c.l.b16 %v4108
  %v4182 = vunpack.c.l.b16 %v4109
  %v4183 = vunpack.c.h.b16 %v4109
  %v4184 = vunpack.c.l.b16 %v4110
  %v4185 = vunpack.c.l.b16 %v4111
  %v4186 = vunpack.c.h.b16 %v4111
  %v4187 = vunpack.c.l.b16 %v4112
  %v4188 = vunpack.c.l.b16 %v4113
  %v4189 = vunpack.c.h.b16 %v4113
  %v4190 = vunpack.c.l.b16 %v4114
  %v4191 = vunpack.c.l.b16 %v4115
  %v4192 = vunpack.c.h.b16 %v4115
  %v4193 = vunpack.c.l.b16 %v4116
  %v4194 = vunpack.c.l.b16 %v4117
  %v4195 = vunpack.c.h.b16 %v4117
  %v4196 = vunpack.c.l.b16 %v4118
  %v4197 = vunpack.c.l.b16 %v4119
  %v4198 = vunpack.c.h.b16 %v4119
  %v4199 = vunpack.c.l.b16 %v4120
  %v4200 = vunpack.c.l.b16 %v4121
  %v4201 = vunpack.c.h.b16 %v4121
  %v4202 = vunpack.c.l.b16 %v4122
  %v4203 = vpack.c.b16 %v4158, %v4155
  %v4204 = vpack.c.b16 %v4159, %v4156
  %v4205 = vpack.c.b16 %v4160, %v4157
  %v4206 = vpack.c.b16 %v4164, %v4161
  %v4207 = vpack.c.b16 %v4165, %v4162
  %v4208 = vpack.c.b16 %v4166, %v4163
  %v4209 = vpack.c.b16 %v4170, %v4167
  %v4210 = vpack.c.b16 %v4171, %v4168
  %v4211 = vpack.c.b16 %v4172, %v4169
  %v4212 = vpack.c.b16 %v4176, %v4173
  %v4213 = vpack.c.b16 %v4177, %v4174
  %v4214 = vpack.c.b16 %v4178, %v4175
  %v4215 = vpack.c.b16 %v4182, %v4179
  %v4216 = vpack.c.b16 %v4183, %v4180
  %v4217 = vpack.c.b16 %v4184, %v4181
  %v4218 = vpack.c.b16 %v4188, %v4185
  %v4219 = vpack.c.b16 %v4189, %v4186
  %v4220 = vpack.c.b16 %v4190, %v4187
  %v4221 = vpack.c.b16 %v4194, %v4191
  %v4222 = vpack.c.b16 %v4195, %v4192
  %v4223 = vpack.c.b16 %v4196, %v4193
  %v4224 = vpack.c.b16 %v4200, %v4197
  %v4225 = vpack.c.b16 %v4201, %v4198
  %v4226 = vpack.c.b16 %v4202, %v4199
  %4251 = vmatpush.bf16.msra.mxu0 %v4224
  %4252 = vmatpush.bf16.msra.mxu0 %v4221
  %4253 = vmatpush.bf16.msra.mxu0 %v4218
  %4254 = vmatpush.bf16.msra.mxu0 %v4215
  %4255 = vmatpush.bf16.msra.mxu0 %v4212
  %4256 = vmatpush.bf16.msra.mxu0 %v4209
  %4257 = vmatpush.bf16.msra.mxu0 %v4206
  %4258 = vmatpush.bf16.msra.mxu0 %v4203
  %4259 = vmatmul.bf16.gmra.mxu0 %v3246
  %v4260 = vpop.f32.mrf.mxu0
  %v4261 = vadd.f32 0.0, %v4260
  %v4262 = vpop.f32.mrf.mxu0
  %4263 = vdwg.mxu0
  %4264 = vmatpush.bf16.msra.mxu0 %v4225
  %4265 = vmatpush.bf16.msra.mxu0 %v4222
  %4266 = vmatpush.bf16.msra.mxu0 %v4219
  %4267 = vmatpush.bf16.msra.mxu0 %v4216
  %4268 = vmatpush.bf16.msra.mxu0 %v4213
  %4269 = vmatpush.bf16.msra.mxu0 %v4210
  %4270 = vmatpush.bf16.msra.mxu0 %v4207
  %4271 = vmatpush.bf16.msra.mxu0 %v4204
  %4272 = vmatmul.bf16.gmra.mxu0 %v3246
  %v4273 = vpop.f32.mrf.mxu0
  %v4274 = vadd.f32 0.0, %v4273
  %v4275 = vpop.f32.mrf.mxu0
  %4276 = vdwg.mxu0
  %4277 = vmatpush.bf16.msra.mxu0 %v4226
  %4278 = vmatpush.bf16.msra.mxu0 %v4223
  %4279 = vmatpush.bf16.msra.mxu0 %v4220
  %4280 = vmatpush.bf16.msra.mxu0 %v4217
  %4281 = vmatpush.bf16.msra.mxu0 %v4214
  %4282 = vmatpush.bf16.msra.mxu0 %v4211
  %4283 = vmatpush.bf16.msra.mxu0 %v4208
  %4284 = vmatpush.bf16.msra.mxu0 %v4205
  %4285 = vmatmul.bf16.gmra.mxu0 %v3246
  %v4286 = vpop.f32.mrf.mxu0
  %v4287 = vadd.f32 0.0, %v4286
  %v4288 = vpop.f32.mrf.mxu0
  %4289 = vdwg.mxu0
  %v4290 = vadd.f32 %v4062, %v4261
  %v4291 = vadd.f32 %v4075, %v4274
  %v4292 = vxor.u32 %v4290, 2147483648
  %v4293 = vxor.u32 %v4291, 2147483648
  %v4294 = vmul.f32 %v4292, 1.442695
  %v4295 = vpow.pop %v4294
  %v4296 = vmul.f32 %v4293, 1.442695
  %v4297 = vpow.pop %v4296
  %v4298 = vadd.f32 %v4295, 1.0
  %v4299 = vadd.f32 %v4297, 1.0
  %v4300 = vrcp.pop %v4298
  %v4301 = vmul.f32 %v4298, %v4300
  %v4302 = vsub.f32 1.0, %v4301
  %v4303 = vmul.f32 %v4300, %v4302
  %v4304 = vadd.f32 %v4300, %v4303
  %vm4305 = vweird.f32 %v4298
  %vm4306 = vweird.f32 %v4300
  %vm4307 = vmor %vm4305, %vm4306
  %v4308 = vsel %vm4307, %v4300, %v4304
  %v4309 = vand.u32 2147483647, %v4298
  %vm4310 = vcmp.eq.f32.partialorder %v4309, 8.507059e+37
  %v4311 = vand.u32 %v4298, 2147483648
  %v4312 = vor.u32 1.1754944e-38, %v4311
  %v4313 = vsel %vm4310, %v4312, %v4308
  %v4314 = vmul.f32 1.0, %v4313
  %v4315 = vrcp.pop %v4299
  %v4316 = vmul.f32 %v4299, %v4315
  %v4317 = vsub.f32 1.0, %v4316
  %v4318 = vmul.f32 %v4315, %v4317
  %v4319 = vadd.f32 %v4315, %v4318
  %vm4320 = vweird.f32 %v4299
  %vm4321 = vweird.f32 %v4315
  %vm4322 = vmor %vm4320, %vm4321
  %v4323 = vsel %vm4322, %v4315, %v4319
  %v4324 = vand.u32 2147483647, %v4299
  %vm4325 = vcmp.eq.f32.partialorder %v4324, 8.507059e+37
  %v4326 = vand.u32 %v4299, 2147483648
  %v4327 = vor.u32 1.1754944e-38, %v4326
  %v4328 = vsel %vm4325, %v4327, %v4323
  %v4329 = vmul.f32 1.0, %v4328
  %v4330 = vld [vmem:[%s13] sm:$0x1]
  %v4332 = vperm.slane %v4330, 0
  %v4334 = vadd.f32 %v4287, %v4332
  %v4335 = vmul.f32 %v4314, %v4334
  %v4336 = vadd.f32 %v4088, %v4335
  %v4337 = vtanh.pop %v4336
  %v4338 = vsub.f32 1.0, %v4329
  %v4339 = vmul.f32 %v4338, %v4337
  %v4340 = vmul.f32 %v4329, %v3245
  %v4341 = vadd.f32 %v4339, %v4340
  %v4342 = vpack.c.bf16 %v4341, %v4341
  %v4343 = vld [vmem:[%s14] sm:$0xf]
  %v4344 = vld [vmem:[%s14 + $0x4] sm:$0xf]
  %v4345 = vld [vmem:[%s14 + $0x8] sm:$0xf]
  %v4346 = vld [vmem:[%s14 + $0xc] sm:$0xf]
  %v4347 = vld [vmem:[%s14 + $0x10] sm:$0xf]
  %v4348 = vld [vmem:[%s14 + $0x14] sm:$0xf]
  %v4349 = vld [vmem:[%s14 + $0x18] sm:$0xf]
  %v4350 = vld [vmem:[%s14 + $0x1c] sm:$0xf]
  %v4351 = vld [vmem:[%s14 + $0x20] sm:$0xf]
  %v4352 = vld [vmem:[%s14 + $0x24] sm:$0xf]
  %v4353 = vld [vmem:[%s14 + $0x28] sm:$0xf]
  %v4354 = vld [vmem:[%s14 + $0x2c] sm:$0xf]
  %v4355 = vld [vmem:[%s14 + $0x30] sm:$0xf]
  %v4356 = vld [vmem:[%s14 + $0x34] sm:$0xf]
  %v4357 = vld [vmem:[%s14 + $0x38] sm:$0xf]
  %v4358 = vld [vmem:[%s14 + $0x3c] sm:$0xf]
  %v4359 = vld [vmem:[%s15] sm:$0x1]
  %v4361 = vperm.slane %v4359, 0
  %v4379 = vunpack.c.l.b16 %v4343
  %v4380 = vunpack.c.l.b16 %v4344
  %v4381 = vunpack.c.l.b16 %v4345
  %v4382 = vunpack.c.l.b16 %v4346
  %v4383 = vunpack.c.l.b16 %v4347
  %v4384 = vunpack.c.l.b16 %v4348
  %v4385 = vunpack.c.l.b16 %v4349
  %v4386 = vunpack.c.l.b16 %v4350
  %v4387 = vunpack.c.l.b16 %v4351
  %v4388 = vunpack.c.l.b16 %v4352
  %v4389 = vunpack.c.l.b16 %v4353
  %v4390 = vunpack.c.l.b16 %v4354
  %v4391 = vunpack.c.l.b16 %v4355
  %v4392 = vunpack.c.l.b16 %v4356
  %v4393 = vunpack.c.l.b16 %v4357
  %v4394 = vunpack.c.l.b16 %v4358
  %v4395 = vpack.c.b16 %v4380, %v4379
  %v4396 = vpack.c.b16 %v4382, %v4381
  %v4397 = vpack.c.b16 %v4384, %v4383
  %v4398 = vpack.c.b16 %v4386, %v4385
  %v4399 = vpack.c.b16 %v4388, %v4387
  %v4400 = vpack.c.b16 %v4390, %v4389
  %v4401 = vpack.c.b16 %v4392, %v4391
  %v4402 = vpack.c.b16 %v4394, %v4393
  %4411 = vmatpush.bf16.msra.mxu0 %v4402
  %4412 = vmatpush.bf16.msra.mxu0 %v4401
  %4413 = vmatpush.bf16.msra.mxu0 %v4400
  %4414 = vmatpush.bf16.msra.mxu0 %v4399
  %4415 = vmatpush.bf16.msra.mxu0 %v4398
  %4416 = vmatpush.bf16.msra.mxu0 %v4397
  %4417 = vmatpush.bf16.msra.mxu0 %v4396
  %4418 = vmatpush.bf16.msra.mxu0 %v4395
  %4419 = vmatmul.bf16.gmra.mxu0 %v4342
  %v4420 = vpop.f32.mrf.mxu0
  %v4421 = vadd.f32 %v4361, %v4420
  %v4422 = vpop.f32.mrf.mxu0
  %4423 = vdwg.mxu0
  %s4424 = scalar_lea.vmem %s16, 24
  %4425 = vst [vmem:[%s4424] sm:$0xff] %v4421
  %v4426 = vsel %vm56, %v4421, -1e+30
  %4427 = vmax.xlane.f32.xlu0 %v4426
  %v4428 = vpop.xlane.xlu0 %4427
  %vm4429 = vcmp.eq.f32.partialorder %v4426, %v4428
  %v4430 = vsel %vm4429, %v55, 128.0
  %4431 = vmin.xlane.f32.xlu0 %v4430
  %v4432 = vpop.xlane.xlu0 %4431
  %vm4433 = vcmp.eq.f32.partialorder %v55, %v4432
  %v4434 = vsel %vm4433, 1, 0
  %v4435 = vcvt.s32.f32 %v4434
  %v4436 = vpack.c.bf16 %v4435, %v4435
  %v4437 = vld [vmem:[%s4] sm:$0xf]
  %v4438 = vld [vmem:[%s4 + $0x4] sm:$0xf]
  %v4439 = vld [vmem:[%s4 + $0x8] sm:$0xf]
  %v4440 = vld [vmem:[%s4 + $0xc] sm:$0xf]
  %v4441 = vld [vmem:[%s4 + $0x10] sm:$0xf]
  %v4442 = vld [vmem:[%s4 + $0x14] sm:$0xf]
  %v4443 = vld [vmem:[%s4 + $0x18] sm:$0xf]
  %v4444 = vld [vmem:[%s4 + $0x1c] sm:$0xf]
  %v4445 = vld [vmem:[%s4 + $0x20] sm:$0xf]
  %v4446 = vld [vmem:[%s4 + $0x24] sm:$0xf]
  %v4447 = vld [vmem:[%s4 + $0x28] sm:$0xf]
  %v4448 = vld [vmem:[%s4 + $0x2c] sm:$0xf]
  %v4449 = vld [vmem:[%s4 + $0x30] sm:$0xf]
  %v4450 = vld [vmem:[%s4 + $0x34] sm:$0xf]
  %v4451 = vld [vmem:[%s4 + $0x38] sm:$0xf]
  %v4452 = vld [vmem:[%s4 + $0x3c] sm:$0xf]
  %v4469 = vunpack.c.l.b16 %v4437
  %v4470 = vunpack.c.l.b16 %v4438
  %v4471 = vunpack.c.l.b16 %v4439
  %v4472 = vunpack.c.l.b16 %v4440
  %v4473 = vunpack.c.l.b16 %v4441
  %v4474 = vunpack.c.l.b16 %v4442
  %v4475 = vunpack.c.l.b16 %v4443
  %v4476 = vunpack.c.l.b16 %v4444
  %v4477 = vunpack.c.l.b16 %v4445
  %v4478 = vunpack.c.l.b16 %v4446
  %v4479 = vunpack.c.l.b16 %v4447
  %v4480 = vunpack.c.l.b16 %v4448
  %v4481 = vunpack.c.l.b16 %v4449
  %v4482 = vunpack.c.l.b16 %v4450
  %v4483 = vunpack.c.l.b16 %v4451
  %v4484 = vunpack.c.l.b16 %v4452
  %v4485 = vpack.c.b16 %v4470, %v4469
  %v4486 = vpack.c.b16 %v4472, %v4471
  %v4487 = vpack.c.b16 %v4474, %v4473
  %v4488 = vpack.c.b16 %v4476, %v4475
  %v4489 = vpack.c.b16 %v4478, %v4477
  %v4490 = vpack.c.b16 %v4480, %v4479
  %v4491 = vpack.c.b16 %v4482, %v4481
  %v4492 = vpack.c.b16 %v4484, %v4483
  %4501 = vmatpush.bf16.msra.mxu0 %v4492
  %4502 = vmatpush.bf16.msra.mxu0 %v4491
  %4503 = vmatpush.bf16.msra.mxu0 %v4490
  %4504 = vmatpush.bf16.msra.mxu0 %v4489
  %4505 = vmatpush.bf16.msra.mxu0 %v4488
  %4506 = vmatpush.bf16.msra.mxu0 %v4487
  %4507 = vmatpush.bf16.msra.mxu0 %v4486
  %4508 = vmatpush.bf16.msra.mxu0 %v4485
  %4509 = vmatmul.bf16.gmra.mxu0 %v4436
  %v4510 = vpop.f32.mrf.mxu0
  %v4511 = vadd.f32 0.0, %v4510
  %v4512 = vpop.f32.mrf.mxu0
  %4513 = vdwg.mxu0
  %s4514 = scalar_lea.vmem %s3, 24
  %v4515 = vld [vmem:[%s4514] sm:$0xff]
  %v4516 = vmul.f32 %v4511, %v4515
  %s4517 = scalar_lea.vmem %s2, 24
  %v4518 = vld [vmem:[%s4517] sm:$0xff]
  %v4519 = vadd.f32 %v4516, %v4518
  %v4520 = vpack.c.bf16 %v4519, %v4519
  %v4521 = vld [vmem:[%s6] sm:$0xff]
  %v4522 = vld [vmem:[%s6 + $0x8] sm:$0xf]
  %v4523 = vld [vmem:[%s6 + $0xc] sm:$0xff]
  %v4524 = vld [vmem:[%s6 + $0x14] sm:$0xf]
  %v4525 = vld [vmem:[%s6 + $0x18] sm:$0xff]
  %v4526 = vld [vmem:[%s6 + $0x20] sm:$0xf]
  %v4527 = vld [vmem:[%s6 + $0x24] sm:$0xff]
  %v4528 = vld [vmem:[%s6 + $0x2c] sm:$0xf]
  %v4529 = vld [vmem:[%s6 + $0x30] sm:$0xff]
  %v4530 = vld [vmem:[%s6 + $0x38] sm:$0xf]
  %v4531 = vld [vmem:[%s6 + $0x3c] sm:$0xff]
  %v4532 = vld [vmem:[%s6 + $0x44] sm:$0xf]
  %v4533 = vld [vmem:[%s6 + $0x48] sm:$0xff]
  %v4534 = vld [vmem:[%s6 + $0x50] sm:$0xf]
  %v4535 = vld [vmem:[%s6 + $0x54] sm:$0xff]
  %v4536 = vld [vmem:[%s6 + $0x5c] sm:$0xf]
  %v4537 = vld [vmem:[%s6 + $0x60] sm:$0xff]
  %v4538 = vld [vmem:[%s6 + $0x68] sm:$0xf]
  %v4539 = vld [vmem:[%s6 + $0x6c] sm:$0xff]
  %v4540 = vld [vmem:[%s6 + $0x74] sm:$0xf]
  %v4541 = vld [vmem:[%s6 + $0x78] sm:$0xff]
  %v4542 = vld [vmem:[%s6 + $0x80] sm:$0xf]
  %v4543 = vld [vmem:[%s6 + $0x84] sm:$0xff]
  %v4544 = vld [vmem:[%s6 + $0x8c] sm:$0xf]
  %v4545 = vld [vmem:[%s6 + $0x90] sm:$0xff]
  %v4546 = vld [vmem:[%s6 + $0x98] sm:$0xf]
  %v4547 = vld [vmem:[%s6 + $0x9c] sm:$0xff]
  %v4548 = vld [vmem:[%s6 + $0xa4] sm:$0xf]
  %v4549 = vld [vmem:[%s6 + $0xa8] sm:$0xff]
  %v4550 = vld [vmem:[%s6 + $0xb0] sm:$0xf]
  %v4551 = vld [vmem:[%s6 + $0xb4] sm:$0xff]
  %v4552 = vld [vmem:[%s6 + $0xbc] sm:$0xf]
  %v4553 = vld [vmem:[%s8] sm:$0x7]
  %v4555 = vperm.slane %v4553, 0
  %v4556 = vperm.slane %v4553, 1
  %v4557 = vperm.slane %v4553, 2
  %v4593 = vunpack.c.l.b16 %v4521
  %v4594 = vunpack.c.h.b16 %v4521
  %v4595 = vunpack.c.l.b16 %v4522
  %v4596 = vunpack.c.l.b16 %v4523
  %v4597 = vunpack.c.h.b16 %v4523
  %v4598 = vunpack.c.l.b16 %v4524
  %v4599 = vunpack.c.l.b16 %v4525
  %v4600 = vunpack.c.h.b16 %v4525
  %v4601 = vunpack.c.l.b16 %v4526
  %v4602 = vunpack.c.l.b16 %v4527
  %v4603 = vunpack.c.h.b16 %v4527
  %v4604 = vunpack.c.l.b16 %v4528
  %v4605 = vunpack.c.l.b16 %v4529
  %v4606 = vunpack.c.h.b16 %v4529
  %v4607 = vunpack.c.l.b16 %v4530
  %v4608 = vunpack.c.l.b16 %v4531
  %v4609 = vunpack.c.h.b16 %v4531
  %v4610 = vunpack.c.l.b16 %v4532
  %v4611 = vunpack.c.l.b16 %v4533
  %v4612 = vunpack.c.h.b16 %v4533
  %v4613 = vunpack.c.l.b16 %v4534
  %v4614 = vunpack.c.l.b16 %v4535
  %v4615 = vunpack.c.h.b16 %v4535
  %v4616 = vunpack.c.l.b16 %v4536
  %v4617 = vunpack.c.l.b16 %v4537
  %v4618 = vunpack.c.h.b16 %v4537
  %v4619 = vunpack.c.l.b16 %v4538
  %v4620 = vunpack.c.l.b16 %v4539
  %v4621 = vunpack.c.h.b16 %v4539
  %v4622 = vunpack.c.l.b16 %v4540
  %v4623 = vunpack.c.l.b16 %v4541
  %v4624 = vunpack.c.h.b16 %v4541
  %v4625 = vunpack.c.l.b16 %v4542
  %v4626 = vunpack.c.l.b16 %v4543
  %v4627 = vunpack.c.h.b16 %v4543
  %v4628 = vunpack.c.l.b16 %v4544
  %v4629 = vunpack.c.l.b16 %v4545
  %v4630 = vunpack.c.h.b16 %v4545
  %v4631 = vunpack.c.l.b16 %v4546
  %v4632 = vunpack.c.l.b16 %v4547
  %v4633 = vunpack.c.h.b16 %v4547
  %v4634 = vunpack.c.l.b16 %v4548
  %v4635 = vunpack.c.l.b16 %v4549
  %v4636 = vunpack.c.h.b16 %v4549
  %v4637 = vunpack.c.l.b16 %v4550
  %v4638 = vunpack.c.l.b16 %v4551
  %v4639 = vunpack.c.h.b16 %v4551
  %v4640 = vunpack.c.l.b16 %v4552
  %v4641 = vpack.c.b16 %v4596, %v4593
  %v4642 = vpack.c.b16 %v4597, %v4594
  %v4643 = vpack.c.b16 %v4598, %v4595
  %v4644 = vpack.c.b16 %v4602, %v4599
  %v4645 = vpack.c.b16 %v4603, %v4600
  %v4646 = vpack.c.b16 %v4604, %v4601
  %v4647 = vpack.c.b16 %v4608, %v4605
  %v4648 = vpack.c.b16 %v4609, %v4606
  %v4649 = vpack.c.b16 %v4610, %v4607
  %v4650 = vpack.c.b16 %v4614, %v4611
  %v4651 = vpack.c.b16 %v4615, %v4612
  %v4652 = vpack.c.b16 %v4616, %v4613
  %v4653 = vpack.c.b16 %v4620, %v4617
  %v4654 = vpack.c.b16 %v4621, %v4618
  %v4655 = vpack.c.b16 %v4622, %v4619
  %v4656 = vpack.c.b16 %v4626, %v4623
  %v4657 = vpack.c.b16 %v4627, %v4624
  %v4658 = vpack.c.b16 %v4628, %v4625
  %v4659 = vpack.c.b16 %v4632, %v4629
  %v4660 = vpack.c.b16 %v4633, %v4630
  %v4661 = vpack.c.b16 %v4634, %v4631
  %v4662 = vpack.c.b16 %v4638, %v4635
  %v4663 = vpack.c.b16 %v4639, %v4636
  %v4664 = vpack.c.b16 %v4640, %v4637
  %4689 = vmatpush.bf16.msra.mxu0 %v4662
  %4690 = vmatpush.bf16.msra.mxu0 %v4659
  %4691 = vmatpush.bf16.msra.mxu0 %v4656
  %4692 = vmatpush.bf16.msra.mxu0 %v4653
  %4693 = vmatpush.bf16.msra.mxu0 %v4650
  %4694 = vmatpush.bf16.msra.mxu0 %v4647
  %4695 = vmatpush.bf16.msra.mxu0 %v4644
  %4696 = vmatpush.bf16.msra.mxu0 %v4641
  %4697 = vmatmul.bf16.gmra.mxu0 %v4520
  %v4698 = vpop.f32.mrf.mxu0
  %v4699 = vadd.f32 %v4555, %v4698
  %v4700 = vpop.f32.mrf.mxu0
  %4701 = vdwg.mxu0
  %4702 = vmatpush.bf16.msra.mxu0 %v4663
  %4703 = vmatpush.bf16.msra.mxu0 %v4660
  %4704 = vmatpush.bf16.msra.mxu0 %v4657
  %4705 = vmatpush.bf16.msra.mxu0 %v4654
  %4706 = vmatpush.bf16.msra.mxu0 %v4651
  %4707 = vmatpush.bf16.msra.mxu0 %v4648
  %4708 = vmatpush.bf16.msra.mxu0 %v4645
  %4709 = vmatpush.bf16.msra.mxu0 %v4642
  %4710 = vmatmul.bf16.gmra.mxu0 %v4520
  %v4711 = vpop.f32.mrf.mxu0
  %v4712 = vadd.f32 %v4556, %v4711
  %v4713 = vpop.f32.mrf.mxu0
  %4714 = vdwg.mxu0
  %4715 = vmatpush.bf16.msra.mxu0 %v4664
  %4716 = vmatpush.bf16.msra.mxu0 %v4661
  %4717 = vmatpush.bf16.msra.mxu0 %v4658
  %4718 = vmatpush.bf16.msra.mxu0 %v4655
  %4719 = vmatpush.bf16.msra.mxu0 %v4652
  %4720 = vmatpush.bf16.msra.mxu0 %v4649
  %4721 = vmatpush.bf16.msra.mxu0 %v4646
  %4722 = vmatpush.bf16.msra.mxu0 %v4643
  %4723 = vmatmul.bf16.gmra.mxu0 %v4520
  %v4724 = vpop.f32.mrf.mxu0
  %v4725 = vadd.f32 %v4557, %v4724
  %v4726 = vpop.f32.mrf.mxu0
  %4727 = vdwg.mxu0
  %v4728 = vld [vmem:[%s7] sm:$0xff]
  %v4729 = vld [vmem:[%s7 + $0x8] sm:$0xf]
  %v4730 = vld [vmem:[%s7 + $0xc] sm:$0xff]
  %v4731 = vld [vmem:[%s7 + $0x14] sm:$0xf]
  %v4732 = vld [vmem:[%s7 + $0x18] sm:$0xff]
  %v4733 = vld [vmem:[%s7 + $0x20] sm:$0xf]
  %v4734 = vld [vmem:[%s7 + $0x24] sm:$0xff]
  %v4735 = vld [vmem:[%s7 + $0x2c] sm:$0xf]
  %v4736 = vld [vmem:[%s7 + $0x30] sm:$0xff]
  %v4737 = vld [vmem:[%s7 + $0x38] sm:$0xf]
  %v4738 = vld [vmem:[%s7 + $0x3c] sm:$0xff]
  %v4739 = vld [vmem:[%s7 + $0x44] sm:$0xf]
  %v4740 = vld [vmem:[%s7 + $0x48] sm:$0xff]
  %v4741 = vld [vmem:[%s7 + $0x50] sm:$0xf]
  %v4742 = vld [vmem:[%s7 + $0x54] sm:$0xff]
  %v4743 = vld [vmem:[%s7 + $0x5c] sm:$0xf]
  %v4744 = vld [vmem:[%s7 + $0x60] sm:$0xff]
  %v4745 = vld [vmem:[%s7 + $0x68] sm:$0xf]
  %v4746 = vld [vmem:[%s7 + $0x6c] sm:$0xff]
  %v4747 = vld [vmem:[%s7 + $0x74] sm:$0xf]
  %v4748 = vld [vmem:[%s7 + $0x78] sm:$0xff]
  %v4749 = vld [vmem:[%s7 + $0x80] sm:$0xf]
  %v4750 = vld [vmem:[%s7 + $0x84] sm:$0xff]
  %v4751 = vld [vmem:[%s7 + $0x8c] sm:$0xf]
  %v4752 = vld [vmem:[%s7 + $0x90] sm:$0xff]
  %v4753 = vld [vmem:[%s7 + $0x98] sm:$0xf]
  %v4754 = vld [vmem:[%s7 + $0x9c] sm:$0xff]
  %v4755 = vld [vmem:[%s7 + $0xa4] sm:$0xf]
  %v4756 = vld [vmem:[%s7 + $0xa8] sm:$0xff]
  %v4757 = vld [vmem:[%s7 + $0xb0] sm:$0xf]
  %v4758 = vld [vmem:[%s7 + $0xb4] sm:$0xff]
  %v4759 = vld [vmem:[%s7 + $0xbc] sm:$0xf]
  %v4792 = vunpack.c.l.b16 %v4728
  %v4793 = vunpack.c.h.b16 %v4728
  %v4794 = vunpack.c.l.b16 %v4729
  %v4795 = vunpack.c.l.b16 %v4730
  %v4796 = vunpack.c.h.b16 %v4730
  %v4797 = vunpack.c.l.b16 %v4731
  %v4798 = vunpack.c.l.b16 %v4732
  %v4799 = vunpack.c.h.b16 %v4732
  %v4800 = vunpack.c.l.b16 %v4733
  %v4801 = vunpack.c.l.b16 %v4734
  %v4802 = vunpack.c.h.b16 %v4734
  %v4803 = vunpack.c.l.b16 %v4735
  %v4804 = vunpack.c.l.b16 %v4736
  %v4805 = vunpack.c.h.b16 %v4736
  %v4806 = vunpack.c.l.b16 %v4737
  %v4807 = vunpack.c.l.b16 %v4738
  %v4808 = vunpack.c.h.b16 %v4738
  %v4809 = vunpack.c.l.b16 %v4739
  %v4810 = vunpack.c.l.b16 %v4740
  %v4811 = vunpack.c.h.b16 %v4740
  %v4812 = vunpack.c.l.b16 %v4741
  %v4813 = vunpack.c.l.b16 %v4742
  %v4814 = vunpack.c.h.b16 %v4742
  %v4815 = vunpack.c.l.b16 %v4743
  %v4816 = vunpack.c.l.b16 %v4744
  %v4817 = vunpack.c.h.b16 %v4744
  %v4818 = vunpack.c.l.b16 %v4745
  %v4819 = vunpack.c.l.b16 %v4746
  %v4820 = vunpack.c.h.b16 %v4746
  %v4821 = vunpack.c.l.b16 %v4747
  %v4822 = vunpack.c.l.b16 %v4748
  %v4823 = vunpack.c.h.b16 %v4748
  %v4824 = vunpack.c.l.b16 %v4749
  %v4825 = vunpack.c.l.b16 %v4750
  %v4826 = vunpack.c.h.b16 %v4750
  %v4827 = vunpack.c.l.b16 %v4751
  %v4828 = vunpack.c.l.b16 %v4752
  %v4829 = vunpack.c.h.b16 %v4752
  %v4830 = vunpack.c.l.b16 %v4753
  %v4831 = vunpack.c.l.b16 %v4754
  %v4832 = vunpack.c.h.b16 %v4754
  %v4833 = vunpack.c.l.b16 %v4755
  %v4834 = vunpack.c.l.b16 %v4756
  %v4835 = vunpack.c.h.b16 %v4756
  %v4836 = vunpack.c.l.b16 %v4757
  %v4837 = vunpack.c.l.b16 %v4758
  %v4838 = vunpack.c.h.b16 %v4758
  %v4839 = vunpack.c.l.b16 %v4759
  %v4840 = vpack.c.b16 %v4795, %v4792
  %v4841 = vpack.c.b16 %v4796, %v4793
  %v4842 = vpack.c.b16 %v4797, %v4794
  %v4843 = vpack.c.b16 %v4801, %v4798
  %v4844 = vpack.c.b16 %v4802, %v4799
  %v4845 = vpack.c.b16 %v4803, %v4800
  %v4846 = vpack.c.b16 %v4807, %v4804
  %v4847 = vpack.c.b16 %v4808, %v4805
  %v4848 = vpack.c.b16 %v4809, %v4806
  %v4849 = vpack.c.b16 %v4813, %v4810
  %v4850 = vpack.c.b16 %v4814, %v4811
  %v4851 = vpack.c.b16 %v4815, %v4812
  %v4852 = vpack.c.b16 %v4819, %v4816
  %v4853 = vpack.c.b16 %v4820, %v4817
  %v4854 = vpack.c.b16 %v4821, %v4818
  %v4855 = vpack.c.b16 %v4825, %v4822
  %v4856 = vpack.c.b16 %v4826, %v4823
  %v4857 = vpack.c.b16 %v4827, %v4824
  %v4858 = vpack.c.b16 %v4831, %v4828
  %v4859 = vpack.c.b16 %v4832, %v4829
  %v4860 = vpack.c.b16 %v4833, %v4830
  %v4861 = vpack.c.b16 %v4837, %v4834
  %v4862 = vpack.c.b16 %v4838, %v4835
  %v4863 = vpack.c.b16 %v4839, %v4836
  %4888 = vmatpush.bf16.msra.mxu0 %v4861
  %4889 = vmatpush.bf16.msra.mxu0 %v4858
  %4890 = vmatpush.bf16.msra.mxu0 %v4855
  %4891 = vmatpush.bf16.msra.mxu0 %v4852
  %4892 = vmatpush.bf16.msra.mxu0 %v4849
  %4893 = vmatpush.bf16.msra.mxu0 %v4846
  %4894 = vmatpush.bf16.msra.mxu0 %v4843
  %4895 = vmatpush.bf16.msra.mxu0 %v4840
  %4896 = vmatmul.bf16.gmra.mxu0 %v3883
  %v4897 = vpop.f32.mrf.mxu0
  %v4898 = vadd.f32 0.0, %v4897
  %v4899 = vpop.f32.mrf.mxu0
  %4900 = vdwg.mxu0
  %4901 = vmatpush.bf16.msra.mxu0 %v4862
  %4902 = vmatpush.bf16.msra.mxu0 %v4859
  %4903 = vmatpush.bf16.msra.mxu0 %v4856
  %4904 = vmatpush.bf16.msra.mxu0 %v4853
  %4905 = vmatpush.bf16.msra.mxu0 %v4850
  %4906 = vmatpush.bf16.msra.mxu0 %v4847
  %4907 = vmatpush.bf16.msra.mxu0 %v4844
  %4908 = vmatpush.bf16.msra.mxu0 %v4841
  %4909 = vmatmul.bf16.gmra.mxu0 %v3883
  %v4910 = vpop.f32.mrf.mxu0
  %v4911 = vadd.f32 0.0, %v4910
  %v4912 = vpop.f32.mrf.mxu0
  %4913 = vdwg.mxu0
  %4914 = vmatpush.bf16.msra.mxu0 %v4863
  %4915 = vmatpush.bf16.msra.mxu0 %v4860
  %4916 = vmatpush.bf16.msra.mxu0 %v4857
  %4917 = vmatpush.bf16.msra.mxu0 %v4854
  %4918 = vmatpush.bf16.msra.mxu0 %v4851
  %4919 = vmatpush.bf16.msra.mxu0 %v4848
  %4920 = vmatpush.bf16.msra.mxu0 %v4845
  %4921 = vmatpush.bf16.msra.mxu0 %v4842
  %4922 = vmatmul.bf16.gmra.mxu0 %v3883
  %v4923 = vpop.f32.mrf.mxu0
  %v4924 = vadd.f32 0.0, %v4923
  %v4925 = vpop.f32.mrf.mxu0
  %4926 = vdwg.mxu0
  %v4927 = vadd.f32 %v4699, %v4898
  %v4928 = vadd.f32 %v4712, %v4911
  %v4929 = vxor.u32 %v4927, 2147483648
  %v4930 = vxor.u32 %v4928, 2147483648
  %v4931 = vmul.f32 %v4929, 1.442695
  %v4932 = vpow.pop %v4931
  %v4933 = vmul.f32 %v4930, 1.442695
  %v4934 = vpow.pop %v4933
  %v4935 = vadd.f32 %v4932, 1.0
  %v4936 = vadd.f32 %v4934, 1.0
  %v4937 = vrcp.pop %v4935
  %v4938 = vmul.f32 %v4935, %v4937
  %v4939 = vsub.f32 1.0, %v4938
  %v4940 = vmul.f32 %v4937, %v4939
  %v4941 = vadd.f32 %v4937, %v4940
  %vm4942 = vweird.f32 %v4935
  %vm4943 = vweird.f32 %v4937
  %vm4944 = vmor %vm4942, %vm4943
  %v4945 = vsel %vm4944, %v4937, %v4941
  %v4946 = vand.u32 2147483647, %v4935
  %vm4947 = vcmp.eq.f32.partialorder %v4946, 8.507059e+37
  %v4948 = vand.u32 %v4935, 2147483648
  %v4949 = vor.u32 1.1754944e-38, %v4948
  %v4950 = vsel %vm4947, %v4949, %v4945
  %v4951 = vmul.f32 1.0, %v4950
  %v4952 = vrcp.pop %v4936
  %v4953 = vmul.f32 %v4936, %v4952
  %v4954 = vsub.f32 1.0, %v4953
  %v4955 = vmul.f32 %v4952, %v4954
  %v4956 = vadd.f32 %v4952, %v4955
  %vm4957 = vweird.f32 %v4936
  %vm4958 = vweird.f32 %v4952
  %vm4959 = vmor %vm4957, %vm4958
  %v4960 = vsel %vm4959, %v4952, %v4956
  %v4961 = vand.u32 2147483647, %v4936
  %vm4962 = vcmp.eq.f32.partialorder %v4961, 8.507059e+37
  %v4963 = vand.u32 %v4936, 2147483648
  %v4964 = vor.u32 1.1754944e-38, %v4963
  %v4965 = vsel %vm4962, %v4964, %v4960
  %v4966 = vmul.f32 1.0, %v4965
  %v4967 = vld [vmem:[%s9] sm:$0x1]
  %v4969 = vperm.slane %v4967, 0
  %v4971 = vadd.f32 %v4924, %v4969
  %v4972 = vmul.f32 %v4951, %v4971
  %v4973 = vadd.f32 %v4725, %v4972
  %v4974 = vtanh.pop %v4973
  %v4975 = vsub.f32 1.0, %v4966
  %v4976 = vmul.f32 %v4975, %v4974
  %v4977 = vmul.f32 %v4966, %v3882
  %v4978 = vadd.f32 %v4976, %v4977
  %v4979 = vpack.c.bf16 %v4978, %v4978
  %v4980 = vld [vmem:[%s10] sm:$0xff]
  %v4981 = vld [vmem:[%s10 + $0x8] sm:$0xf]
  %v4982 = vld [vmem:[%s10 + $0xc] sm:$0xff]
  %v4983 = vld [vmem:[%s10 + $0x14] sm:$0xf]
  %v4984 = vld [vmem:[%s10 + $0x18] sm:$0xff]
  %v4985 = vld [vmem:[%s10 + $0x20] sm:$0xf]
  %v4986 = vld [vmem:[%s10 + $0x24] sm:$0xff]
  %v4987 = vld [vmem:[%s10 + $0x2c] sm:$0xf]
  %v4988 = vld [vmem:[%s10 + $0x30] sm:$0xff]
  %v4989 = vld [vmem:[%s10 + $0x38] sm:$0xf]
  %v4990 = vld [vmem:[%s10 + $0x3c] sm:$0xff]
  %v4991 = vld [vmem:[%s10 + $0x44] sm:$0xf]
  %v4992 = vld [vmem:[%s10 + $0x48] sm:$0xff]
  %v4993 = vld [vmem:[%s10 + $0x50] sm:$0xf]
  %v4994 = vld [vmem:[%s10 + $0x54] sm:$0xff]
  %v4995 = vld [vmem:[%s10 + $0x5c] sm:$0xf]
  %v4996 = vld [vmem:[%s10 + $0x60] sm:$0xff]
  %v4997 = vld [vmem:[%s10 + $0x68] sm:$0xf]
  %v4998 = vld [vmem:[%s10 + $0x6c] sm:$0xff]
  %v4999 = vld [vmem:[%s10 + $0x74] sm:$0xf]
  %v5000 = vld [vmem:[%s10 + $0x78] sm:$0xff]
  %v5001 = vld [vmem:[%s10 + $0x80] sm:$0xf]
  %v5002 = vld [vmem:[%s10 + $0x84] sm:$0xff]
  %v5003 = vld [vmem:[%s10 + $0x8c] sm:$0xf]
  %v5004 = vld [vmem:[%s10 + $0x90] sm:$0xff]
  %v5005 = vld [vmem:[%s10 + $0x98] sm:$0xf]
  %v5006 = vld [vmem:[%s10 + $0x9c] sm:$0xff]
  %v5007 = vld [vmem:[%s10 + $0xa4] sm:$0xf]
  %v5008 = vld [vmem:[%s10 + $0xa8] sm:$0xff]
  %v5009 = vld [vmem:[%s10 + $0xb0] sm:$0xf]
  %v5010 = vld [vmem:[%s10 + $0xb4] sm:$0xff]
  %v5011 = vld [vmem:[%s10 + $0xbc] sm:$0xf]
  %v5012 = vld [vmem:[%s12] sm:$0x7]
  %v5014 = vperm.slane %v5012, 0
  %v5015 = vperm.slane %v5012, 1
  %v5016 = vperm.slane %v5012, 2
  %v5052 = vunpack.c.l.b16 %v4980
  %v5053 = vunpack.c.h.b16 %v4980
  %v5054 = vunpack.c.l.b16 %v4981
  %v5055 = vunpack.c.l.b16 %v4982
  %v5056 = vunpack.c.h.b16 %v4982
  %v5057 = vunpack.c.l.b16 %v4983
  %v5058 = vunpack.c.l.b16 %v4984
  %v5059 = vunpack.c.h.b16 %v4984
  %v5060 = vunpack.c.l.b16 %v4985
  %v5061 = vunpack.c.l.b16 %v4986
  %v5062 = vunpack.c.h.b16 %v4986
  %v5063 = vunpack.c.l.b16 %v4987
  %v5064 = vunpack.c.l.b16 %v4988
  %v5065 = vunpack.c.h.b16 %v4988
  %v5066 = vunpack.c.l.b16 %v4989
  %v5067 = vunpack.c.l.b16 %v4990
  %v5068 = vunpack.c.h.b16 %v4990
  %v5069 = vunpack.c.l.b16 %v4991
  %v5070 = vunpack.c.l.b16 %v4992
  %v5071 = vunpack.c.h.b16 %v4992
  %v5072 = vunpack.c.l.b16 %v4993
  %v5073 = vunpack.c.l.b16 %v4994
  %v5074 = vunpack.c.h.b16 %v4994
  %v5075 = vunpack.c.l.b16 %v4995
  %v5076 = vunpack.c.l.b16 %v4996
  %v5077 = vunpack.c.h.b16 %v4996
  %v5078 = vunpack.c.l.b16 %v4997
  %v5079 = vunpack.c.l.b16 %v4998
  %v5080 = vunpack.c.h.b16 %v4998
  %v5081 = vunpack.c.l.b16 %v4999
  %v5082 = vunpack.c.l.b16 %v5000
  %v5083 = vunpack.c.h.b16 %v5000
  %v5084 = vunpack.c.l.b16 %v5001
  %v5085 = vunpack.c.l.b16 %v5002
  %v5086 = vunpack.c.h.b16 %v5002
  %v5087 = vunpack.c.l.b16 %v5003
  %v5088 = vunpack.c.l.b16 %v5004
  %v5089 = vunpack.c.h.b16 %v5004
  %v5090 = vunpack.c.l.b16 %v5005
  %v5091 = vunpack.c.l.b16 %v5006
  %v5092 = vunpack.c.h.b16 %v5006
  %v5093 = vunpack.c.l.b16 %v5007
  %v5094 = vunpack.c.l.b16 %v5008
  %v5095 = vunpack.c.h.b16 %v5008
  %v5096 = vunpack.c.l.b16 %v5009
  %v5097 = vunpack.c.l.b16 %v5010
  %v5098 = vunpack.c.h.b16 %v5010
  %v5099 = vunpack.c.l.b16 %v5011
  %v5100 = vpack.c.b16 %v5055, %v5052
  %v5101 = vpack.c.b16 %v5056, %v5053
  %v5102 = vpack.c.b16 %v5057, %v5054
  %v5103 = vpack.c.b16 %v5061, %v5058
  %v5104 = vpack.c.b16 %v5062, %v5059
  %v5105 = vpack.c.b16 %v5063, %v5060
  %v5106 = vpack.c.b16 %v5067, %v5064
  %v5107 = vpack.c.b16 %v5068, %v5065
  %v5108 = vpack.c.b16 %v5069, %v5066
  %v5109 = vpack.c.b16 %v5073, %v5070
  %v5110 = vpack.c.b16 %v5074, %v5071
  %v5111 = vpack.c.b16 %v5075, %v5072
  %v5112 = vpack.c.b16 %v5079, %v5076
  %v5113 = vpack.c.b16 %v5080, %v5077
  %v5114 = vpack.c.b16 %v5081, %v5078
  %v5115 = vpack.c.b16 %v5085, %v5082
  %v5116 = vpack.c.b16 %v5086, %v5083
  %v5117 = vpack.c.b16 %v5087, %v5084
  %v5118 = vpack.c.b16 %v5091, %v5088
  %v5119 = vpack.c.b16 %v5092, %v5089
  %v5120 = vpack.c.b16 %v5093, %v5090
  %v5121 = vpack.c.b16 %v5097, %v5094
  %v5122 = vpack.c.b16 %v5098, %v5095
  %v5123 = vpack.c.b16 %v5099, %v5096
  %5148 = vmatpush.bf16.msra.mxu0 %v5121
  %5149 = vmatpush.bf16.msra.mxu0 %v5118
  %5150 = vmatpush.bf16.msra.mxu0 %v5115
  %5151 = vmatpush.bf16.msra.mxu0 %v5112
  %5152 = vmatpush.bf16.msra.mxu0 %v5109
  %5153 = vmatpush.bf16.msra.mxu0 %v5106
  %5154 = vmatpush.bf16.msra.mxu0 %v5103
  %5155 = vmatpush.bf16.msra.mxu0 %v5100
  %5156 = vmatmul.bf16.gmra.mxu0 %v4979
  %v5157 = vpop.f32.mrf.mxu0
  %v5158 = vadd.f32 %v5014, %v5157
  %v5159 = vpop.f32.mrf.mxu0
  %5160 = vdwg.mxu0
  %5161 = vmatpush.bf16.msra.mxu0 %v5122
  %5162 = vmatpush.bf16.msra.mxu0 %v5119
  %5163 = vmatpush.bf16.msra.mxu0 %v5116
  %5164 = vmatpush.bf16.msra.mxu0 %v5113
  %5165 = vmatpush.bf16.msra.mxu0 %v5110
  %5166 = vmatpush.bf16.msra.mxu0 %v5107
  %5167 = vmatpush.bf16.msra.mxu0 %v5104
  %5168 = vmatpush.bf16.msra.mxu0 %v5101
  %5169 = vmatmul.bf16.gmra.mxu0 %v4979
  %v5170 = vpop.f32.mrf.mxu0
  %v5171 = vadd.f32 %v5015, %v5170
  %v5172 = vpop.f32.mrf.mxu0
  %5173 = vdwg.mxu0
  %5174 = vmatpush.bf16.msra.mxu0 %v5123
  %5175 = vmatpush.bf16.msra.mxu0 %v5120
  %5176 = vmatpush.bf16.msra.mxu0 %v5117
  %5177 = vmatpush.bf16.msra.mxu0 %v5114
  %5178 = vmatpush.bf16.msra.mxu0 %v5111
  %5179 = vmatpush.bf16.msra.mxu0 %v5108
  %5180 = vmatpush.bf16.msra.mxu0 %v5105
  %5181 = vmatpush.bf16.msra.mxu0 %v5102
  %5182 = vmatmul.bf16.gmra.mxu0 %v4979
  %v5183 = vpop.f32.mrf.mxu0
  %v5184 = vadd.f32 %v5016, %v5183
  %v5185 = vpop.f32.mrf.mxu0
  %5186 = vdwg.mxu0
  %v5187 = vld [vmem:[%s11] sm:$0xff]
  %v5188 = vld [vmem:[%s11 + $0x8] sm:$0xf]
  %v5189 = vld [vmem:[%s11 + $0xc] sm:$0xff]
  %v5190 = vld [vmem:[%s11 + $0x14] sm:$0xf]
  %v5191 = vld [vmem:[%s11 + $0x18] sm:$0xff]
  %v5192 = vld [vmem:[%s11 + $0x20] sm:$0xf]
  %v5193 = vld [vmem:[%s11 + $0x24] sm:$0xff]
  %v5194 = vld [vmem:[%s11 + $0x2c] sm:$0xf]
  %v5195 = vld [vmem:[%s11 + $0x30] sm:$0xff]
  %v5196 = vld [vmem:[%s11 + $0x38] sm:$0xf]
  %v5197 = vld [vmem:[%s11 + $0x3c] sm:$0xff]
  %v5198 = vld [vmem:[%s11 + $0x44] sm:$0xf]
  %v5199 = vld [vmem:[%s11 + $0x48] sm:$0xff]
  %v5200 = vld [vmem:[%s11 + $0x50] sm:$0xf]
  %v5201 = vld [vmem:[%s11 + $0x54] sm:$0xff]
  %v5202 = vld [vmem:[%s11 + $0x5c] sm:$0xf]
  %v5203 = vld [vmem:[%s11 + $0x60] sm:$0xff]
  %v5204 = vld [vmem:[%s11 + $0x68] sm:$0xf]
  %v5205 = vld [vmem:[%s11 + $0x6c] sm:$0xff]
  %v5206 = vld [vmem:[%s11 + $0x74] sm:$0xf]
  %v5207 = vld [vmem:[%s11 + $0x78] sm:$0xff]
  %v5208 = vld [vmem:[%s11 + $0x80] sm:$0xf]
  %v5209 = vld [vmem:[%s11 + $0x84] sm:$0xff]
  %v5210 = vld [vmem:[%s11 + $0x8c] sm:$0xf]
  %v5211 = vld [vmem:[%s11 + $0x90] sm:$0xff]
  %v5212 = vld [vmem:[%s11 + $0x98] sm:$0xf]
  %v5213 = vld [vmem:[%s11 + $0x9c] sm:$0xff]
  %v5214 = vld [vmem:[%s11 + $0xa4] sm:$0xf]
  %v5215 = vld [vmem:[%s11 + $0xa8] sm:$0xff]
  %v5216 = vld [vmem:[%s11 + $0xb0] sm:$0xf]
  %v5217 = vld [vmem:[%s11 + $0xb4] sm:$0xff]
  %v5218 = vld [vmem:[%s11 + $0xbc] sm:$0xf]
  %v5251 = vunpack.c.l.b16 %v5187
  %v5252 = vunpack.c.h.b16 %v5187
  %v5253 = vunpack.c.l.b16 %v5188
  %v5254 = vunpack.c.l.b16 %v5189
  %v5255 = vunpack.c.h.b16 %v5189
  %v5256 = vunpack.c.l.b16 %v5190
  %v5257 = vunpack.c.l.b16 %v5191
  %v5258 = vunpack.c.h.b16 %v5191
  %v5259 = vunpack.c.l.b16 %v5192
  %v5260 = vunpack.c.l.b16 %v5193
  %v5261 = vunpack.c.h.b16 %v5193
  %v5262 = vunpack.c.l.b16 %v5194
  %v5263 = vunpack.c.l.b16 %v5195
  %v5264 = vunpack.c.h.b16 %v5195
  %v5265 = vunpack.c.l.b16 %v5196
  %v5266 = vunpack.c.l.b16 %v5197
  %v5267 = vunpack.c.h.b16 %v5197
  %v5268 = vunpack.c.l.b16 %v5198
  %v5269 = vunpack.c.l.b16 %v5199
  %v5270 = vunpack.c.h.b16 %v5199
  %v5271 = vunpack.c.l.b16 %v5200
  %v5272 = vunpack.c.l.b16 %v5201
  %v5273 = vunpack.c.h.b16 %v5201
  %v5274 = vunpack.c.l.b16 %v5202
  %v5275 = vunpack.c.l.b16 %v5203
  %v5276 = vunpack.c.h.b16 %v5203
  %v5277 = vunpack.c.l.b16 %v5204
  %v5278 = vunpack.c.l.b16 %v5205
  %v5279 = vunpack.c.h.b16 %v5205
  %v5280 = vunpack.c.l.b16 %v5206
  %v5281 = vunpack.c.l.b16 %v5207
  %v5282 = vunpack.c.h.b16 %v5207
  %v5283 = vunpack.c.l.b16 %v5208
  %v5284 = vunpack.c.l.b16 %v5209
  %v5285 = vunpack.c.h.b16 %v5209
  %v5286 = vunpack.c.l.b16 %v5210
  %v5287 = vunpack.c.l.b16 %v5211
  %v5288 = vunpack.c.h.b16 %v5211
  %v5289 = vunpack.c.l.b16 %v5212
  %v5290 = vunpack.c.l.b16 %v5213
  %v5291 = vunpack.c.h.b16 %v5213
  %v5292 = vunpack.c.l.b16 %v5214
  %v5293 = vunpack.c.l.b16 %v5215
  %v5294 = vunpack.c.h.b16 %v5215
  %v5295 = vunpack.c.l.b16 %v5216
  %v5296 = vunpack.c.l.b16 %v5217
  %v5297 = vunpack.c.h.b16 %v5217
  %v5298 = vunpack.c.l.b16 %v5218
  %v5299 = vpack.c.b16 %v5254, %v5251
  %v5300 = vpack.c.b16 %v5255, %v5252
  %v5301 = vpack.c.b16 %v5256, %v5253
  %v5302 = vpack.c.b16 %v5260, %v5257
  %v5303 = vpack.c.b16 %v5261, %v5258
  %v5304 = vpack.c.b16 %v5262, %v5259
  %v5305 = vpack.c.b16 %v5266, %v5263
  %v5306 = vpack.c.b16 %v5267, %v5264
  %v5307 = vpack.c.b16 %v5268, %v5265
  %v5308 = vpack.c.b16 %v5272, %v5269
  %v5309 = vpack.c.b16 %v5273, %v5270
  %v5310 = vpack.c.b16 %v5274, %v5271
  %v5311 = vpack.c.b16 %v5278, %v5275
  %v5312 = vpack.c.b16 %v5279, %v5276
  %v5313 = vpack.c.b16 %v5280, %v5277
  %v5314 = vpack.c.b16 %v5284, %v5281
  %v5315 = vpack.c.b16 %v5285, %v5282
  %v5316 = vpack.c.b16 %v5286, %v5283
  %v5317 = vpack.c.b16 %v5290, %v5287
  %v5318 = vpack.c.b16 %v5291, %v5288
  %v5319 = vpack.c.b16 %v5292, %v5289
  %v5320 = vpack.c.b16 %v5296, %v5293
  %v5321 = vpack.c.b16 %v5297, %v5294
  %v5322 = vpack.c.b16 %v5298, %v5295
  %5347 = vmatpush.bf16.msra.mxu0 %v5320
  %5348 = vmatpush.bf16.msra.mxu0 %v5317
  %5349 = vmatpush.bf16.msra.mxu0 %v5314
  %5350 = vmatpush.bf16.msra.mxu0 %v5311
  %5351 = vmatpush.bf16.msra.mxu0 %v5308
  %5352 = vmatpush.bf16.msra.mxu0 %v5305
  %5353 = vmatpush.bf16.msra.mxu0 %v5302
  %5354 = vmatpush.bf16.msra.mxu0 %v5299
  %5355 = vmatmul.bf16.gmra.mxu0 %v4342
  %v5356 = vpop.f32.mrf.mxu0
  %v5357 = vadd.f32 0.0, %v5356
  %v5358 = vpop.f32.mrf.mxu0
  %5359 = vdwg.mxu0
  %5360 = vmatpush.bf16.msra.mxu0 %v5321
  %5361 = vmatpush.bf16.msra.mxu0 %v5318
  %5362 = vmatpush.bf16.msra.mxu0 %v5315
  %5363 = vmatpush.bf16.msra.mxu0 %v5312
  %5364 = vmatpush.bf16.msra.mxu0 %v5309
  %5365 = vmatpush.bf16.msra.mxu0 %v5306
  %5366 = vmatpush.bf16.msra.mxu0 %v5303
  %5367 = vmatpush.bf16.msra.mxu0 %v5300
  %5368 = vmatmul.bf16.gmra.mxu0 %v4342
  %v5369 = vpop.f32.mrf.mxu0
  %v5370 = vadd.f32 0.0, %v5369
  %v5371 = vpop.f32.mrf.mxu0
  %5372 = vdwg.mxu0
  %5373 = vmatpush.bf16.msra.mxu0 %v5322
  %5374 = vmatpush.bf16.msra.mxu0 %v5319
  %5375 = vmatpush.bf16.msra.mxu0 %v5316
  %5376 = vmatpush.bf16.msra.mxu0 %v5313
  %5377 = vmatpush.bf16.msra.mxu0 %v5310
  %5378 = vmatpush.bf16.msra.mxu0 %v5307
  %5379 = vmatpush.bf16.msra.mxu0 %v5304
  %5380 = vmatpush.bf16.msra.mxu0 %v5301
  %5381 = vmatmul.bf16.gmra.mxu0 %v4342
  %v5382 = vpop.f32.mrf.mxu0
  %v5383 = vadd.f32 0.0, %v5382
  %v5384 = vpop.f32.mrf.mxu0
  %5385 = vdwg.mxu0
  %v5386 = vadd.f32 %v5158, %v5357
  %v5387 = vadd.f32 %v5171, %v5370
  %v5388 = vxor.u32 %v5386, 2147483648
  %v5389 = vxor.u32 %v5387, 2147483648
  %v5390 = vmul.f32 %v5388, 1.442695
  %v5391 = vpow.pop %v5390
  %v5392 = vmul.f32 %v5389, 1.442695
  %v5393 = vpow.pop %v5392
  %v5394 = vadd.f32 %v5391, 1.0
  %v5395 = vadd.f32 %v5393, 1.0
  %v5396 = vrcp.pop %v5394
  %v5397 = vmul.f32 %v5394, %v5396
  %v5398 = vsub.f32 1.0, %v5397
  %v5399 = vmul.f32 %v5396, %v5398
  %v5400 = vadd.f32 %v5396, %v5399
  %vm5401 = vweird.f32 %v5394
  %vm5402 = vweird.f32 %v5396
  %vm5403 = vmor %vm5401, %vm5402
  %v5404 = vsel %vm5403, %v5396, %v5400
  %v5405 = vand.u32 2147483647, %v5394
  %vm5406 = vcmp.eq.f32.partialorder %v5405, 8.507059e+37
  %v5407 = vand.u32 %v5394, 2147483648
  %v5408 = vor.u32 1.1754944e-38, %v5407
  %v5409 = vsel %vm5406, %v5408, %v5404
  %v5410 = vmul.f32 1.0, %v5409
  %v5411 = vrcp.pop %v5395
  %v5412 = vmul.f32 %v5395, %v5411
  %v5413 = vsub.f32 1.0, %v5412
  %v5414 = vmul.f32 %v5411, %v5413
  %v5415 = vadd.f32 %v5411, %v5414
  %vm5416 = vweird.f32 %v5395
  %vm5417 = vweird.f32 %v5411
  %vm5418 = vmor %vm5416, %vm5417
  %v5419 = vsel %vm5418, %v5411, %v5415
  %v5420 = vand.u32 2147483647, %v5395
  %vm5421 = vcmp.eq.f32.partialorder %v5420, 8.507059e+37
  %v5422 = vand.u32 %v5395, 2147483648
  %v5423 = vor.u32 1.1754944e-38, %v5422
  %v5424 = vsel %vm5421, %v5423, %v5419
  %v5425 = vmul.f32 1.0, %v5424
  %v5426 = vld [vmem:[%s13] sm:$0x1]
  %v5428 = vperm.slane %v5426, 0
  %v5430 = vadd.f32 %v5383, %v5428
  %v5431 = vmul.f32 %v5410, %v5430
  %v5432 = vadd.f32 %v5184, %v5431
  %v5433 = vtanh.pop %v5432
  %v5434 = vsub.f32 1.0, %v5425
  %v5435 = vmul.f32 %v5434, %v5433
  %v5436 = vmul.f32 %v5425, %v4341
  %v5437 = vadd.f32 %v5435, %v5436
  %v5438 = vpack.c.bf16 %v5437, %v5437
  %v5439 = vld [vmem:[%s14] sm:$0xf]
  %v5440 = vld [vmem:[%s14 + $0x4] sm:$0xf]
  %v5441 = vld [vmem:[%s14 + $0x8] sm:$0xf]
  %v5442 = vld [vmem:[%s14 + $0xc] sm:$0xf]
  %v5443 = vld [vmem:[%s14 + $0x10] sm:$0xf]
  %v5444 = vld [vmem:[%s14 + $0x14] sm:$0xf]
  %v5445 = vld [vmem:[%s14 + $0x18] sm:$0xf]
  %v5446 = vld [vmem:[%s14 + $0x1c] sm:$0xf]
  %v5447 = vld [vmem:[%s14 + $0x20] sm:$0xf]
  %v5448 = vld [vmem:[%s14 + $0x24] sm:$0xf]
  %v5449 = vld [vmem:[%s14 + $0x28] sm:$0xf]
  %v5450 = vld [vmem:[%s14 + $0x2c] sm:$0xf]
  %v5451 = vld [vmem:[%s14 + $0x30] sm:$0xf]
  %v5452 = vld [vmem:[%s14 + $0x34] sm:$0xf]
  %v5453 = vld [vmem:[%s14 + $0x38] sm:$0xf]
  %v5454 = vld [vmem:[%s14 + $0x3c] sm:$0xf]
  %v5455 = vld [vmem:[%s15] sm:$0x1]
  %v5457 = vperm.slane %v5455, 0
  %v5475 = vunpack.c.l.b16 %v5439
  %v5476 = vunpack.c.l.b16 %v5440
  %v5477 = vunpack.c.l.b16 %v5441
  %v5478 = vunpack.c.l.b16 %v5442
  %v5479 = vunpack.c.l.b16 %v5443
  %v5480 = vunpack.c.l.b16 %v5444
  %v5481 = vunpack.c.l.b16 %v5445
  %v5482 = vunpack.c.l.b16 %v5446
  %v5483 = vunpack.c.l.b16 %v5447
  %v5484 = vunpack.c.l.b16 %v5448
  %v5485 = vunpack.c.l.b16 %v5449
  %v5486 = vunpack.c.l.b16 %v5450
  %v5487 = vunpack.c.l.b16 %v5451
  %v5488 = vunpack.c.l.b16 %v5452
  %v5489 = vunpack.c.l.b16 %v5453
  %v5490 = vunpack.c.l.b16 %v5454
  %v5491 = vpack.c.b16 %v5476, %v5475
  %v5492 = vpack.c.b16 %v5478, %v5477
  %v5493 = vpack.c.b16 %v5480, %v5479
  %v5494 = vpack.c.b16 %v5482, %v5481
  %v5495 = vpack.c.b16 %v5484, %v5483
  %v5496 = vpack.c.b16 %v5486, %v5485
  %v5497 = vpack.c.b16 %v5488, %v5487
  %v5498 = vpack.c.b16 %v5490, %v5489
  %5507 = vmatpush.bf16.msra.mxu0 %v5498
  %5508 = vmatpush.bf16.msra.mxu0 %v5497
  %5509 = vmatpush.bf16.msra.mxu0 %v5496
  %5510 = vmatpush.bf16.msra.mxu0 %v5495
  %5511 = vmatpush.bf16.msra.mxu0 %v5494
  %5512 = vmatpush.bf16.msra.mxu0 %v5493
  %5513 = vmatpush.bf16.msra.mxu0 %v5492
  %5514 = vmatpush.bf16.msra.mxu0 %v5491
  %5515 = vmatmul.bf16.gmra.mxu0 %v5438
  %v5516 = vpop.f32.mrf.mxu0
  %v5517 = vadd.f32 %v5457, %v5516
  %v5518 = vpop.f32.mrf.mxu0
  %5519 = vdwg.mxu0
  %s5520 = scalar_lea.vmem %s16, 32
  %5521 = vst [vmem:[%s5520] sm:$0xff] %v5517
  %v5522 = vsel %vm56, %v5517, -1e+30
  %5523 = vmax.xlane.f32.xlu0 %v5522
  %v5524 = vpop.xlane.xlu0 %5523
  %vm5525 = vcmp.eq.f32.partialorder %v5522, %v5524
  %v5526 = vsel %vm5525, %v55, 128.0
  %5527 = vmin.xlane.f32.xlu0 %v5526
  %v5528 = vpop.xlane.xlu0 %5527
  %vm5529 = vcmp.eq.f32.partialorder %v55, %v5528
  %v5530 = vsel %vm5529, 1, 0
  %v5531 = vcvt.s32.f32 %v5530
  %v5532 = vpack.c.bf16 %v5531, %v5531
  %v5533 = vld [vmem:[%s4] sm:$0xf]
  %v5534 = vld [vmem:[%s4 + $0x4] sm:$0xf]
  %v5535 = vld [vmem:[%s4 + $0x8] sm:$0xf]
  %v5536 = vld [vmem:[%s4 + $0xc] sm:$0xf]
  %v5537 = vld [vmem:[%s4 + $0x10] sm:$0xf]
  %v5538 = vld [vmem:[%s4 + $0x14] sm:$0xf]
  %v5539 = vld [vmem:[%s4 + $0x18] sm:$0xf]
  %v5540 = vld [vmem:[%s4 + $0x1c] sm:$0xf]
  %v5541 = vld [vmem:[%s4 + $0x20] sm:$0xf]
  %v5542 = vld [vmem:[%s4 + $0x24] sm:$0xf]
  %v5543 = vld [vmem:[%s4 + $0x28] sm:$0xf]
  %v5544 = vld [vmem:[%s4 + $0x2c] sm:$0xf]
  %v5545 = vld [vmem:[%s4 + $0x30] sm:$0xf]
  %v5546 = vld [vmem:[%s4 + $0x34] sm:$0xf]
  %v5547 = vld [vmem:[%s4 + $0x38] sm:$0xf]
  %v5548 = vld [vmem:[%s4 + $0x3c] sm:$0xf]
  %v5565 = vunpack.c.l.b16 %v5533
  %v5566 = vunpack.c.l.b16 %v5534
  %v5567 = vunpack.c.l.b16 %v5535
  %v5568 = vunpack.c.l.b16 %v5536
  %v5569 = vunpack.c.l.b16 %v5537
  %v5570 = vunpack.c.l.b16 %v5538
  %v5571 = vunpack.c.l.b16 %v5539
  %v5572 = vunpack.c.l.b16 %v5540
  %v5573 = vunpack.c.l.b16 %v5541
  %v5574 = vunpack.c.l.b16 %v5542
  %v5575 = vunpack.c.l.b16 %v5543
  %v5576 = vunpack.c.l.b16 %v5544
  %v5577 = vunpack.c.l.b16 %v5545
  %v5578 = vunpack.c.l.b16 %v5546
  %v5579 = vunpack.c.l.b16 %v5547
  %v5580 = vunpack.c.l.b16 %v5548
  %v5581 = vpack.c.b16 %v5566, %v5565
  %v5582 = vpack.c.b16 %v5568, %v5567
  %v5583 = vpack.c.b16 %v5570, %v5569
  %v5584 = vpack.c.b16 %v5572, %v5571
  %v5585 = vpack.c.b16 %v5574, %v5573
  %v5586 = vpack.c.b16 %v5576, %v5575
  %v5587 = vpack.c.b16 %v5578, %v5577
  %v5588 = vpack.c.b16 %v5580, %v5579
  %5597 = vmatpush.bf16.msra.mxu0 %v5588
  %5598 = vmatpush.bf16.msra.mxu0 %v5587
  %5599 = vmatpush.bf16.msra.mxu0 %v5586
  %5600 = vmatpush.bf16.msra.mxu0 %v5585
  %5601 = vmatpush.bf16.msra.mxu0 %v5584
  %5602 = vmatpush.bf16.msra.mxu0 %v5583
  %5603 = vmatpush.bf16.msra.mxu0 %v5582
  %5604 = vmatpush.bf16.msra.mxu0 %v5581
  %5605 = vmatmul.bf16.gmra.mxu0 %v5532
  %v5606 = vpop.f32.mrf.mxu0
  %v5607 = vadd.f32 0.0, %v5606
  %v5608 = vpop.f32.mrf.mxu0
  %5609 = vdwg.mxu0
  %s5610 = scalar_lea.vmem %s3, 32
  %v5611 = vld [vmem:[%s5610] sm:$0xff]
  %v5612 = vmul.f32 %v5607, %v5611
  %s5613 = scalar_lea.vmem %s2, 32
  %v5614 = vld [vmem:[%s5613] sm:$0xff]
  %v5615 = vadd.f32 %v5612, %v5614
  %v5616 = vpack.c.bf16 %v5615, %v5615
  %v5617 = vld [vmem:[%s6] sm:$0xff]
  %v5618 = vld [vmem:[%s6 + $0x8] sm:$0xf]
  %v5619 = vld [vmem:[%s6 + $0xc] sm:$0xff]
  %v5620 = vld [vmem:[%s6 + $0x14] sm:$0xf]
  %v5621 = vld [vmem:[%s6 + $0x18] sm:$0xff]
  %v5622 = vld [vmem:[%s6 + $0x20] sm:$0xf]
  %v5623 = vld [vmem:[%s6 + $0x24] sm:$0xff]
  %v5624 = vld [vmem:[%s6 + $0x2c] sm:$0xf]
  %v5625 = vld [vmem:[%s6 + $0x30] sm:$0xff]
  %v5626 = vld [vmem:[%s6 + $0x38] sm:$0xf]
  %v5627 = vld [vmem:[%s6 + $0x3c] sm:$0xff]
  %v5628 = vld [vmem:[%s6 + $0x44] sm:$0xf]
  %v5629 = vld [vmem:[%s6 + $0x48] sm:$0xff]
  %v5630 = vld [vmem:[%s6 + $0x50] sm:$0xf]
  %v5631 = vld [vmem:[%s6 + $0x54] sm:$0xff]
  %v5632 = vld [vmem:[%s6 + $0x5c] sm:$0xf]
  %v5633 = vld [vmem:[%s6 + $0x60] sm:$0xff]
  %v5634 = vld [vmem:[%s6 + $0x68] sm:$0xf]
  %v5635 = vld [vmem:[%s6 + $0x6c] sm:$0xff]
  %v5636 = vld [vmem:[%s6 + $0x74] sm:$0xf]
  %v5637 = vld [vmem:[%s6 + $0x78] sm:$0xff]
  %v5638 = vld [vmem:[%s6 + $0x80] sm:$0xf]
  %v5639 = vld [vmem:[%s6 + $0x84] sm:$0xff]
  %v5640 = vld [vmem:[%s6 + $0x8c] sm:$0xf]
  %v5641 = vld [vmem:[%s6 + $0x90] sm:$0xff]
  %v5642 = vld [vmem:[%s6 + $0x98] sm:$0xf]
  %v5643 = vld [vmem:[%s6 + $0x9c] sm:$0xff]
  %v5644 = vld [vmem:[%s6 + $0xa4] sm:$0xf]
  %v5645 = vld [vmem:[%s6 + $0xa8] sm:$0xff]
  %v5646 = vld [vmem:[%s6 + $0xb0] sm:$0xf]
  %v5647 = vld [vmem:[%s6 + $0xb4] sm:$0xff]
  %v5648 = vld [vmem:[%s6 + $0xbc] sm:$0xf]
  %v5649 = vld [vmem:[%s8] sm:$0x7]
  %v5651 = vperm.slane %v5649, 0
  %v5652 = vperm.slane %v5649, 1
  %v5653 = vperm.slane %v5649, 2
  %v5689 = vunpack.c.l.b16 %v5617
  %v5690 = vunpack.c.h.b16 %v5617
  %v5691 = vunpack.c.l.b16 %v5618
  %v5692 = vunpack.c.l.b16 %v5619
  %v5693 = vunpack.c.h.b16 %v5619
  %v5694 = vunpack.c.l.b16 %v5620
  %v5695 = vunpack.c.l.b16 %v5621
  %v5696 = vunpack.c.h.b16 %v5621
  %v5697 = vunpack.c.l.b16 %v5622
  %v5698 = vunpack.c.l.b16 %v5623
  %v5699 = vunpack.c.h.b16 %v5623
  %v5700 = vunpack.c.l.b16 %v5624
  %v5701 = vunpack.c.l.b16 %v5625
  %v5702 = vunpack.c.h.b16 %v5625
  %v5703 = vunpack.c.l.b16 %v5626
  %v5704 = vunpack.c.l.b16 %v5627
  %v5705 = vunpack.c.h.b16 %v5627
  %v5706 = vunpack.c.l.b16 %v5628
  %v5707 = vunpack.c.l.b16 %v5629
  %v5708 = vunpack.c.h.b16 %v5629
  %v5709 = vunpack.c.l.b16 %v5630
  %v5710 = vunpack.c.l.b16 %v5631
  %v5711 = vunpack.c.h.b16 %v5631
  %v5712 = vunpack.c.l.b16 %v5632
  %v5713 = vunpack.c.l.b16 %v5633
  %v5714 = vunpack.c.h.b16 %v5633
  %v5715 = vunpack.c.l.b16 %v5634
  %v5716 = vunpack.c.l.b16 %v5635
  %v5717 = vunpack.c.h.b16 %v5635
  %v5718 = vunpack.c.l.b16 %v5636
  %v5719 = vunpack.c.l.b16 %v5637
  %v5720 = vunpack.c.h.b16 %v5637
  %v5721 = vunpack.c.l.b16 %v5638
  %v5722 = vunpack.c.l.b16 %v5639
  %v5723 = vunpack.c.h.b16 %v5639
  %v5724 = vunpack.c.l.b16 %v5640
  %v5725 = vunpack.c.l.b16 %v5641
  %v5726 = vunpack.c.h.b16 %v5641
  %v5727 = vunpack.c.l.b16 %v5642
  %v5728 = vunpack.c.l.b16 %v5643
  %v5729 = vunpack.c.h.b16 %v5643
  %v5730 = vunpack.c.l.b16 %v5644
  %v5731 = vunpack.c.l.b16 %v5645
  %v5732 = vunpack.c.h.b16 %v5645
  %v5733 = vunpack.c.l.b16 %v5646
  %v5734 = vunpack.c.l.b16 %v5647
  %v5735 = vunpack.c.h.b16 %v5647
  %v5736 = vunpack.c.l.b16 %v5648
  %v5737 = vpack.c.b16 %v5692, %v5689
  %v5738 = vpack.c.b16 %v5693, %v5690
  %v5739 = vpack.c.b16 %v5694, %v5691
  %v5740 = vpack.c.b16 %v5698, %v5695
  %v5741 = vpack.c.b16 %v5699, %v5696
  %v5742 = vpack.c.b16 %v5700, %v5697
  %v5743 = vpack.c.b16 %v5704, %v5701
  %v5744 = vpack.c.b16 %v5705, %v5702
  %v5745 = vpack.c.b16 %v5706, %v5703
  %v5746 = vpack.c.b16 %v5710, %v5707
  %v5747 = vpack.c.b16 %v5711, %v5708
  %v5748 = vpack.c.b16 %v5712, %v5709
  %v5749 = vpack.c.b16 %v5716, %v5713
  %v5750 = vpack.c.b16 %v5717, %v5714
  %v5751 = vpack.c.b16 %v5718, %v5715
  %v5752 = vpack.c.b16 %v5722, %v5719
  %v5753 = vpack.c.b16 %v5723, %v5720
  %v5754 = vpack.c.b16 %v5724, %v5721
  %v5755 = vpack.c.b16 %v5728, %v5725
  %v5756 = vpack.c.b16 %v5729, %v5726
  %v5757 = vpack.c.b16 %v5730, %v5727
  %v5758 = vpack.c.b16 %v5734, %v5731
  %v5759 = vpack.c.b16 %v5735, %v5732
  %v5760 = vpack.c.b16 %v5736, %v5733
  %5785 = vmatpush.bf16.msra.mxu0 %v5758
  %5786 = vmatpush.bf16.msra.mxu0 %v5755
  %5787 = vmatpush.bf16.msra.mxu0 %v5752
  %5788 = vmatpush.bf16.msra.mxu0 %v5749
  %5789 = vmatpush.bf16.msra.mxu0 %v5746
  %5790 = vmatpush.bf16.msra.mxu0 %v5743
  %5791 = vmatpush.bf16.msra.mxu0 %v5740
  %5792 = vmatpush.bf16.msra.mxu0 %v5737
  %5793 = vmatmul.bf16.gmra.mxu0 %v5616
  %v5794 = vpop.f32.mrf.mxu0
  %v5795 = vadd.f32 %v5651, %v5794
  %v5796 = vpop.f32.mrf.mxu0
  %5797 = vdwg.mxu0
  %5798 = vmatpush.bf16.msra.mxu0 %v5759
  %5799 = vmatpush.bf16.msra.mxu0 %v5756
  %5800 = vmatpush.bf16.msra.mxu0 %v5753
  %5801 = vmatpush.bf16.msra.mxu0 %v5750
  %5802 = vmatpush.bf16.msra.mxu0 %v5747
  %5803 = vmatpush.bf16.msra.mxu0 %v5744
  %5804 = vmatpush.bf16.msra.mxu0 %v5741
  %5805 = vmatpush.bf16.msra.mxu0 %v5738
  %5806 = vmatmul.bf16.gmra.mxu0 %v5616
  %v5807 = vpop.f32.mrf.mxu0
  %v5808 = vadd.f32 %v5652, %v5807
  %v5809 = vpop.f32.mrf.mxu0
  %5810 = vdwg.mxu0
  %5811 = vmatpush.bf16.msra.mxu0 %v5760
  %5812 = vmatpush.bf16.msra.mxu0 %v5757
  %5813 = vmatpush.bf16.msra.mxu0 %v5754
  %5814 = vmatpush.bf16.msra.mxu0 %v5751
  %5815 = vmatpush.bf16.msra.mxu0 %v5748
  %5816 = vmatpush.bf16.msra.mxu0 %v5745
  %5817 = vmatpush.bf16.msra.mxu0 %v5742
  %5818 = vmatpush.bf16.msra.mxu0 %v5739
  %5819 = vmatmul.bf16.gmra.mxu0 %v5616
  %v5820 = vpop.f32.mrf.mxu0
  %v5821 = vadd.f32 %v5653, %v5820
  %v5822 = vpop.f32.mrf.mxu0
  %5823 = vdwg.mxu0
  %v5824 = vld [vmem:[%s7] sm:$0xff]
  %v5825 = vld [vmem:[%s7 + $0x8] sm:$0xf]
  %v5826 = vld [vmem:[%s7 + $0xc] sm:$0xff]
  %v5827 = vld [vmem:[%s7 + $0x14] sm:$0xf]
  %v5828 = vld [vmem:[%s7 + $0x18] sm:$0xff]
  %v5829 = vld [vmem:[%s7 + $0x20] sm:$0xf]
  %v5830 = vld [vmem:[%s7 + $0x24] sm:$0xff]
  %v5831 = vld [vmem:[%s7 + $0x2c] sm:$0xf]
  %v5832 = vld [vmem:[%s7 + $0x30] sm:$0xff]
  %v5833 = vld [vmem:[%s7 + $0x38] sm:$0xf]
  %v5834 = vld [vmem:[%s7 + $0x3c] sm:$0xff]
  %v5835 = vld [vmem:[%s7 + $0x44] sm:$0xf]
  %v5836 = vld [vmem:[%s7 + $0x48] sm:$0xff]
  %v5837 = vld [vmem:[%s7 + $0x50] sm:$0xf]
  %v5838 = vld [vmem:[%s7 + $0x54] sm:$0xff]
  %v5839 = vld [vmem:[%s7 + $0x5c] sm:$0xf]
  %v5840 = vld [vmem:[%s7 + $0x60] sm:$0xff]
  %v5841 = vld [vmem:[%s7 + $0x68] sm:$0xf]
  %v5842 = vld [vmem:[%s7 + $0x6c] sm:$0xff]
  %v5843 = vld [vmem:[%s7 + $0x74] sm:$0xf]
  %v5844 = vld [vmem:[%s7 + $0x78] sm:$0xff]
  %v5845 = vld [vmem:[%s7 + $0x80] sm:$0xf]
  %v5846 = vld [vmem:[%s7 + $0x84] sm:$0xff]
  %v5847 = vld [vmem:[%s7 + $0x8c] sm:$0xf]
  %v5848 = vld [vmem:[%s7 + $0x90] sm:$0xff]
  %v5849 = vld [vmem:[%s7 + $0x98] sm:$0xf]
  %v5850 = vld [vmem:[%s7 + $0x9c] sm:$0xff]
  %v5851 = vld [vmem:[%s7 + $0xa4] sm:$0xf]
  %v5852 = vld [vmem:[%s7 + $0xa8] sm:$0xff]
  %v5853 = vld [vmem:[%s7 + $0xb0] sm:$0xf]
  %v5854 = vld [vmem:[%s7 + $0xb4] sm:$0xff]
  %v5855 = vld [vmem:[%s7 + $0xbc] sm:$0xf]
  %v5888 = vunpack.c.l.b16 %v5824
  %v5889 = vunpack.c.h.b16 %v5824
  %v5890 = vunpack.c.l.b16 %v5825
  %v5891 = vunpack.c.l.b16 %v5826
  %v5892 = vunpack.c.h.b16 %v5826
  %v5893 = vunpack.c.l.b16 %v5827
  %v5894 = vunpack.c.l.b16 %v5828
  %v5895 = vunpack.c.h.b16 %v5828
  %v5896 = vunpack.c.l.b16 %v5829
  %v5897 = vunpack.c.l.b16 %v5830
  %v5898 = vunpack.c.h.b16 %v5830
  %v5899 = vunpack.c.l.b16 %v5831
  %v5900 = vunpack.c.l.b16 %v5832
  %v5901 = vunpack.c.h.b16 %v5832
  %v5902 = vunpack.c.l.b16 %v5833
  %v5903 = vunpack.c.l.b16 %v5834
  %v5904 = vunpack.c.h.b16 %v5834
  %v5905 = vunpack.c.l.b16 %v5835
  %v5906 = vunpack.c.l.b16 %v5836
  %v5907 = vunpack.c.h.b16 %v5836
  %v5908 = vunpack.c.l.b16 %v5837
  %v5909 = vunpack.c.l.b16 %v5838
  %v5910 = vunpack.c.h.b16 %v5838
  %v5911 = vunpack.c.l.b16 %v5839
  %v5912 = vunpack.c.l.b16 %v5840
  %v5913 = vunpack.c.h.b16 %v5840
  %v5914 = vunpack.c.l.b16 %v5841
  %v5915 = vunpack.c.l.b16 %v5842
  %v5916 = vunpack.c.h.b16 %v5842
  %v5917 = vunpack.c.l.b16 %v5843
  %v5918 = vunpack.c.l.b16 %v5844
  %v5919 = vunpack.c.h.b16 %v5844
  %v5920 = vunpack.c.l.b16 %v5845
  %v5921 = vunpack.c.l.b16 %v5846
  %v5922 = vunpack.c.h.b16 %v5846
  %v5923 = vunpack.c.l.b16 %v5847
  %v5924 = vunpack.c.l.b16 %v5848
  %v5925 = vunpack.c.h.b16 %v5848
  %v5926 = vunpack.c.l.b16 %v5849
  %v5927 = vunpack.c.l.b16 %v5850
  %v5928 = vunpack.c.h.b16 %v5850
  %v5929 = vunpack.c.l.b16 %v5851
  %v5930 = vunpack.c.l.b16 %v5852
  %v5931 = vunpack.c.h.b16 %v5852
  %v5932 = vunpack.c.l.b16 %v5853
  %v5933 = vunpack.c.l.b16 %v5854
  %v5934 = vunpack.c.h.b16 %v5854
  %v5935 = vunpack.c.l.b16 %v5855
  %v5936 = vpack.c.b16 %v5891, %v5888
  %v5937 = vpack.c.b16 %v5892, %v5889
  %v5938 = vpack.c.b16 %v5893, %v5890
  %v5939 = vpack.c.b16 %v5897, %v5894
  %v5940 = vpack.c.b16 %v5898, %v5895
  %v5941 = vpack.c.b16 %v5899, %v5896
  %v5942 = vpack.c.b16 %v5903, %v5900
  %v5943 = vpack.c.b16 %v5904, %v5901
  %v5944 = vpack.c.b16 %v5905, %v5902
  %v5945 = vpack.c.b16 %v5909, %v5906
  %v5946 = vpack.c.b16 %v5910, %v5907
  %v5947 = vpack.c.b16 %v5911, %v5908
  %v5948 = vpack.c.b16 %v5915, %v5912
  %v5949 = vpack.c.b16 %v5916, %v5913
  %v5950 = vpack.c.b16 %v5917, %v5914
  %v5951 = vpack.c.b16 %v5921, %v5918
  %v5952 = vpack.c.b16 %v5922, %v5919
  %v5953 = vpack.c.b16 %v5923, %v5920
  %v5954 = vpack.c.b16 %v5927, %v5924
  %v5955 = vpack.c.b16 %v5928, %v5925
  %v5956 = vpack.c.b16 %v5929, %v5926
  %v5957 = vpack.c.b16 %v5933, %v5930
  %v5958 = vpack.c.b16 %v5934, %v5931
  %v5959 = vpack.c.b16 %v5935, %v5932
  %5984 = vmatpush.bf16.msra.mxu0 %v5957
  %5985 = vmatpush.bf16.msra.mxu0 %v5954
  %5986 = vmatpush.bf16.msra.mxu0 %v5951
  %5987 = vmatpush.bf16.msra.mxu0 %v5948
  %5988 = vmatpush.bf16.msra.mxu0 %v5945
  %5989 = vmatpush.bf16.msra.mxu0 %v5942
  %5990 = vmatpush.bf16.msra.mxu0 %v5939
  %5991 = vmatpush.bf16.msra.mxu0 %v5936
  %5992 = vmatmul.bf16.gmra.mxu0 %v4979
  %v5993 = vpop.f32.mrf.mxu0
  %v5994 = vadd.f32 0.0, %v5993
  %v5995 = vpop.f32.mrf.mxu0
  %5996 = vdwg.mxu0
  %5997 = vmatpush.bf16.msra.mxu0 %v5958
  %5998 = vmatpush.bf16.msra.mxu0 %v5955
  %5999 = vmatpush.bf16.msra.mxu0 %v5952
  %6000 = vmatpush.bf16.msra.mxu0 %v5949
  %6001 = vmatpush.bf16.msra.mxu0 %v5946
  %6002 = vmatpush.bf16.msra.mxu0 %v5943
  %6003 = vmatpush.bf16.msra.mxu0 %v5940
  %6004 = vmatpush.bf16.msra.mxu0 %v5937
  %6005 = vmatmul.bf16.gmra.mxu0 %v4979
  %v6006 = vpop.f32.mrf.mxu0
  %v6007 = vadd.f32 0.0, %v6006
  %v6008 = vpop.f32.mrf.mxu0
  %6009 = vdwg.mxu0
  %6010 = vmatpush.bf16.msra.mxu0 %v5959
  %6011 = vmatpush.bf16.msra.mxu0 %v5956
  %6012 = vmatpush.bf16.msra.mxu0 %v5953
  %6013 = vmatpush.bf16.msra.mxu0 %v5950
  %6014 = vmatpush.bf16.msra.mxu0 %v5947
  %6015 = vmatpush.bf16.msra.mxu0 %v5944
  %6016 = vmatpush.bf16.msra.mxu0 %v5941
  %6017 = vmatpush.bf16.msra.mxu0 %v5938
  %6018 = vmatmul.bf16.gmra.mxu0 %v4979
  %v6019 = vpop.f32.mrf.mxu0
  %v6020 = vadd.f32 0.0, %v6019
  %v6021 = vpop.f32.mrf.mxu0
  %6022 = vdwg.mxu0
  %v6023 = vadd.f32 %v5795, %v5994
  %v6024 = vadd.f32 %v5808, %v6007
  %v6025 = vxor.u32 %v6023, 2147483648
  %v6026 = vxor.u32 %v6024, 2147483648
  %v6027 = vmul.f32 %v6025, 1.442695
  %v6028 = vpow.pop %v6027
  %v6029 = vmul.f32 %v6026, 1.442695
  %v6030 = vpow.pop %v6029
  %v6031 = vadd.f32 %v6028, 1.0
  %v6032 = vadd.f32 %v6030, 1.0
  %v6033 = vrcp.pop %v6031
  %v6034 = vmul.f32 %v6031, %v6033
  %v6035 = vsub.f32 1.0, %v6034
  %v6036 = vmul.f32 %v6033, %v6035
  %v6037 = vadd.f32 %v6033, %v6036
  %vm6038 = vweird.f32 %v6031
  %vm6039 = vweird.f32 %v6033
  %vm6040 = vmor %vm6038, %vm6039
  %v6041 = vsel %vm6040, %v6033, %v6037
  %v6042 = vand.u32 2147483647, %v6031
  %vm6043 = vcmp.eq.f32.partialorder %v6042, 8.507059e+37
  %v6044 = vand.u32 %v6031, 2147483648
  %v6045 = vor.u32 1.1754944e-38, %v6044
  %v6046 = vsel %vm6043, %v6045, %v6041
  %v6047 = vmul.f32 1.0, %v6046
  %v6048 = vrcp.pop %v6032
  %v6049 = vmul.f32 %v6032, %v6048
  %v6050 = vsub.f32 1.0, %v6049
  %v6051 = vmul.f32 %v6048, %v6050
  %v6052 = vadd.f32 %v6048, %v6051
  %vm6053 = vweird.f32 %v6032
  %vm6054 = vweird.f32 %v6048
  %vm6055 = vmor %vm6053, %vm6054
  %v6056 = vsel %vm6055, %v6048, %v6052
  %v6057 = vand.u32 2147483647, %v6032
  %vm6058 = vcmp.eq.f32.partialorder %v6057, 8.507059e+37
  %v6059 = vand.u32 %v6032, 2147483648
  %v6060 = vor.u32 1.1754944e-38, %v6059
  %v6061 = vsel %vm6058, %v6060, %v6056
  %v6062 = vmul.f32 1.0, %v6061
  %v6063 = vld [vmem:[%s9] sm:$0x1]
  %v6065 = vperm.slane %v6063, 0
  %v6067 = vadd.f32 %v6020, %v6065
  %v6068 = vmul.f32 %v6047, %v6067
  %v6069 = vadd.f32 %v5821, %v6068
  %v6070 = vtanh.pop %v6069
  %v6071 = vsub.f32 1.0, %v6062
  %v6072 = vmul.f32 %v6071, %v6070
  %v6073 = vmul.f32 %v6062, %v4978
  %v6074 = vadd.f32 %v6072, %v6073
  %v6075 = vpack.c.bf16 %v6074, %v6074
  %v6076 = vld [vmem:[%s10] sm:$0xff]
  %v6077 = vld [vmem:[%s10 + $0x8] sm:$0xf]
  %v6078 = vld [vmem:[%s10 + $0xc] sm:$0xff]
  %v6079 = vld [vmem:[%s10 + $0x14] sm:$0xf]
  %v6080 = vld [vmem:[%s10 + $0x18] sm:$0xff]
  %v6081 = vld [vmem:[%s10 + $0x20] sm:$0xf]
  %v6082 = vld [vmem:[%s10 + $0x24] sm:$0xff]
  %v6083 = vld [vmem:[%s10 + $0x2c] sm:$0xf]
  %v6084 = vld [vmem:[%s10 + $0x30] sm:$0xff]
  %v6085 = vld [vmem:[%s10 + $0x38] sm:$0xf]
  %v6086 = vld [vmem:[%s10 + $0x3c] sm:$0xff]
  %v6087 = vld [vmem:[%s10 + $0x44] sm:$0xf]
  %v6088 = vld [vmem:[%s10 + $0x48] sm:$0xff]
  %v6089 = vld [vmem:[%s10 + $0x50] sm:$0xf]
  %v6090 = vld [vmem:[%s10 + $0x54] sm:$0xff]
  %v6091 = vld [vmem:[%s10 + $0x5c] sm:$0xf]
  %v6092 = vld [vmem:[%s10 + $0x60] sm:$0xff]
  %v6093 = vld [vmem:[%s10 + $0x68] sm:$0xf]
  %v6094 = vld [vmem:[%s10 + $0x6c] sm:$0xff]
  %v6095 = vld [vmem:[%s10 + $0x74] sm:$0xf]
  %v6096 = vld [vmem:[%s10 + $0x78] sm:$0xff]
  %v6097 = vld [vmem:[%s10 + $0x80] sm:$0xf]
  %v6098 = vld [vmem:[%s10 + $0x84] sm:$0xff]
  %v6099 = vld [vmem:[%s10 + $0x8c] sm:$0xf]
  %v6100 = vld [vmem:[%s10 + $0x90] sm:$0xff]
  %v6101 = vld [vmem:[%s10 + $0x98] sm:$0xf]
  %v6102 = vld [vmem:[%s10 + $0x9c] sm:$0xff]
  %v6103 = vld [vmem:[%s10 + $0xa4] sm:$0xf]
  %v6104 = vld [vmem:[%s10 + $0xa8] sm:$0xff]
  %v6105 = vld [vmem:[%s10 + $0xb0] sm:$0xf]
  %v6106 = vld [vmem:[%s10 + $0xb4] sm:$0xff]
  %v6107 = vld [vmem:[%s10 + $0xbc] sm:$0xf]
  %v6108 = vld [vmem:[%s12] sm:$0x7]
  %v6110 = vperm.slane %v6108, 0
  %v6111 = vperm.slane %v6108, 1
  %v6112 = vperm.slane %v6108, 2
  %v6148 = vunpack.c.l.b16 %v6076
  %v6149 = vunpack.c.h.b16 %v6076
  %v6150 = vunpack.c.l.b16 %v6077
  %v6151 = vunpack.c.l.b16 %v6078
  %v6152 = vunpack.c.h.b16 %v6078
  %v6153 = vunpack.c.l.b16 %v6079
  %v6154 = vunpack.c.l.b16 %v6080
  %v6155 = vunpack.c.h.b16 %v6080
  %v6156 = vunpack.c.l.b16 %v6081
  %v6157 = vunpack.c.l.b16 %v6082
  %v6158 = vunpack.c.h.b16 %v6082
  %v6159 = vunpack.c.l.b16 %v6083
  %v6160 = vunpack.c.l.b16 %v6084
  %v6161 = vunpack.c.h.b16 %v6084
  %v6162 = vunpack.c.l.b16 %v6085
  %v6163 = vunpack.c.l.b16 %v6086
  %v6164 = vunpack.c.h.b16 %v6086
  %v6165 = vunpack.c.l.b16 %v6087
  %v6166 = vunpack.c.l.b16 %v6088
  %v6167 = vunpack.c.h.b16 %v6088
  %v6168 = vunpack.c.l.b16 %v6089
  %v6169 = vunpack.c.l.b16 %v6090
  %v6170 = vunpack.c.h.b16 %v6090
  %v6171 = vunpack.c.l.b16 %v6091
  %v6172 = vunpack.c.l.b16 %v6092
  %v6173 = vunpack.c.h.b16 %v6092
  %v6174 = vunpack.c.l.b16 %v6093
  %v6175 = vunpack.c.l.b16 %v6094
  %v6176 = vunpack.c.h.b16 %v6094
  %v6177 = vunpack.c.l.b16 %v6095
  %v6178 = vunpack.c.l.b16 %v6096
  %v6179 = vunpack.c.h.b16 %v6096
  %v6180 = vunpack.c.l.b16 %v6097
  %v6181 = vunpack.c.l.b16 %v6098
  %v6182 = vunpack.c.h.b16 %v6098
  %v6183 = vunpack.c.l.b16 %v6099
  %v6184 = vunpack.c.l.b16 %v6100
  %v6185 = vunpack.c.h.b16 %v6100
  %v6186 = vunpack.c.l.b16 %v6101
  %v6187 = vunpack.c.l.b16 %v6102
  %v6188 = vunpack.c.h.b16 %v6102
  %v6189 = vunpack.c.l.b16 %v6103
  %v6190 = vunpack.c.l.b16 %v6104
  %v6191 = vunpack.c.h.b16 %v6104
  %v6192 = vunpack.c.l.b16 %v6105
  %v6193 = vunpack.c.l.b16 %v6106
  %v6194 = vunpack.c.h.b16 %v6106
  %v6195 = vunpack.c.l.b16 %v6107
  %v6196 = vpack.c.b16 %v6151, %v6148
  %v6197 = vpack.c.b16 %v6152, %v6149
  %v6198 = vpack.c.b16 %v6153, %v6150
  %v6199 = vpack.c.b16 %v6157, %v6154
  %v6200 = vpack.c.b16 %v6158, %v6155
  %v6201 = vpack.c.b16 %v6159, %v6156
  %v6202 = vpack.c.b16 %v6163, %v6160
  %v6203 = vpack.c.b16 %v6164, %v6161
  %v6204 = vpack.c.b16 %v6165, %v6162
  %v6205 = vpack.c.b16 %v6169, %v6166
  %v6206 = vpack.c.b16 %v6170, %v6167
  %v6207 = vpack.c.b16 %v6171, %v6168
  %v6208 = vpack.c.b16 %v6175, %v6172
  %v6209 = vpack.c.b16 %v6176, %v6173
  %v6210 = vpack.c.b16 %v6177, %v6174
  %v6211 = vpack.c.b16 %v6181, %v6178
  %v6212 = vpack.c.b16 %v6182, %v6179
  %v6213 = vpack.c.b16 %v6183, %v6180
  %v6214 = vpack.c.b16 %v6187, %v6184
  %v6215 = vpack.c.b16 %v6188, %v6185
  %v6216 = vpack.c.b16 %v6189, %v6186
  %v6217 = vpack.c.b16 %v6193, %v6190
  %v6218 = vpack.c.b16 %v6194, %v6191
  %v6219 = vpack.c.b16 %v6195, %v6192
  %6244 = vmatpush.bf16.msra.mxu0 %v6217
  %6245 = vmatpush.bf16.msra.mxu0 %v6214
  %6246 = vmatpush.bf16.msra.mxu0 %v6211
  %6247 = vmatpush.bf16.msra.mxu0 %v6208
  %6248 = vmatpush.bf16.msra.mxu0 %v6205
  %6249 = vmatpush.bf16.msra.mxu0 %v6202
  %6250 = vmatpush.bf16.msra.mxu0 %v6199
  %6251 = vmatpush.bf16.msra.mxu0 %v6196
  %6252 = vmatmul.bf16.gmra.mxu0 %v6075
  %v6253 = vpop.f32.mrf.mxu0
  %v6254 = vadd.f32 %v6110, %v6253
  %v6255 = vpop.f32.mrf.mxu0
  %6256 = vdwg.mxu0
  %6257 = vmatpush.bf16.msra.mxu0 %v6218
  %6258 = vmatpush.bf16.msra.mxu0 %v6215
  %6259 = vmatpush.bf16.msra.mxu0 %v6212
  %6260 = vmatpush.bf16.msra.mxu0 %v6209
  %6261 = vmatpush.bf16.msra.mxu0 %v6206
  %6262 = vmatpush.bf16.msra.mxu0 %v6203
  %6263 = vmatpush.bf16.msra.mxu0 %v6200
  %6264 = vmatpush.bf16.msra.mxu0 %v6197
  %6265 = vmatmul.bf16.gmra.mxu0 %v6075
  %v6266 = vpop.f32.mrf.mxu0
  %v6267 = vadd.f32 %v6111, %v6266
  %v6268 = vpop.f32.mrf.mxu0
  %6269 = vdwg.mxu0
  %6270 = vmatpush.bf16.msra.mxu0 %v6219
  %6271 = vmatpush.bf16.msra.mxu0 %v6216
  %6272 = vmatpush.bf16.msra.mxu0 %v6213
  %6273 = vmatpush.bf16.msra.mxu0 %v6210
  %6274 = vmatpush.bf16.msra.mxu0 %v6207
  %6275 = vmatpush.bf16.msra.mxu0 %v6204
  %6276 = vmatpush.bf16.msra.mxu0 %v6201
  %6277 = vmatpush.bf16.msra.mxu0 %v6198
  %6278 = vmatmul.bf16.gmra.mxu0 %v6075
  %v6279 = vpop.f32.mrf.mxu0
  %v6280 = vadd.f32 %v6112, %v6279
  %v6281 = vpop.f32.mrf.mxu0
  %6282 = vdwg.mxu0
  %v6283 = vld [vmem:[%s11] sm:$0xff]
  %v6284 = vld [vmem:[%s11 + $0x8] sm:$0xf]
  %v6285 = vld [vmem:[%s11 + $0xc] sm:$0xff]
  %v6286 = vld [vmem:[%s11 + $0x14] sm:$0xf]
  %v6287 = vld [vmem:[%s11 + $0x18] sm:$0xff]
  %v6288 = vld [vmem:[%s11 + $0x20] sm:$0xf]
  %v6289 = vld [vmem:[%s11 + $0x24] sm:$0xff]
  %v6290 = vld [vmem:[%s11 + $0x2c] sm:$0xf]
  %v6291 = vld [vmem:[%s11 + $0x30] sm:$0xff]
  %v6292 = vld [vmem:[%s11 + $0x38] sm:$0xf]
  %v6293 = vld [vmem:[%s11 + $0x3c] sm:$0xff]
  %v6294 = vld [vmem:[%s11 + $0x44] sm:$0xf]
  %v6295 = vld [vmem:[%s11 + $0x48] sm:$0xff]
  %v6296 = vld [vmem:[%s11 + $0x50] sm:$0xf]
  %v6297 = vld [vmem:[%s11 + $0x54] sm:$0xff]
  %v6298 = vld [vmem:[%s11 + $0x5c] sm:$0xf]
  %v6299 = vld [vmem:[%s11 + $0x60] sm:$0xff]
  %v6300 = vld [vmem:[%s11 + $0x68] sm:$0xf]
  %v6301 = vld [vmem:[%s11 + $0x6c] sm:$0xff]
  %v6302 = vld [vmem:[%s11 + $0x74] sm:$0xf]
  %v6303 = vld [vmem:[%s11 + $0x78] sm:$0xff]
  %v6304 = vld [vmem:[%s11 + $0x80] sm:$0xf]
  %v6305 = vld [vmem:[%s11 + $0x84] sm:$0xff]
  %v6306 = vld [vmem:[%s11 + $0x8c] sm:$0xf]
  %v6307 = vld [vmem:[%s11 + $0x90] sm:$0xff]
  %v6308 = vld [vmem:[%s11 + $0x98] sm:$0xf]
  %v6309 = vld [vmem:[%s11 + $0x9c] sm:$0xff]
  %v6310 = vld [vmem:[%s11 + $0xa4] sm:$0xf]
  %v6311 = vld [vmem:[%s11 + $0xa8] sm:$0xff]
  %v6312 = vld [vmem:[%s11 + $0xb0] sm:$0xf]
  %v6313 = vld [vmem:[%s11 + $0xb4] sm:$0xff]
  %v6314 = vld [vmem:[%s11 + $0xbc] sm:$0xf]
  %v6347 = vunpack.c.l.b16 %v6283
  %v6348 = vunpack.c.h.b16 %v6283
  %v6349 = vunpack.c.l.b16 %v6284
  %v6350 = vunpack.c.l.b16 %v6285
  %v6351 = vunpack.c.h.b16 %v6285
  %v6352 = vunpack.c.l.b16 %v6286
  %v6353 = vunpack.c.l.b16 %v6287
  %v6354 = vunpack.c.h.b16 %v6287
  %v6355 = vunpack.c.l.b16 %v6288
  %v6356 = vunpack.c.l.b16 %v6289
  %v6357 = vunpack.c.h.b16 %v6289
  %v6358 = vunpack.c.l.b16 %v6290
  %v6359 = vunpack.c.l.b16 %v6291
  %v6360 = vunpack.c.h.b16 %v6291
  %v6361 = vunpack.c.l.b16 %v6292
  %v6362 = vunpack.c.l.b16 %v6293
  %v6363 = vunpack.c.h.b16 %v6293
  %v6364 = vunpack.c.l.b16 %v6294
  %v6365 = vunpack.c.l.b16 %v6295
  %v6366 = vunpack.c.h.b16 %v6295
  %v6367 = vunpack.c.l.b16 %v6296
  %v6368 = vunpack.c.l.b16 %v6297
  %v6369 = vunpack.c.h.b16 %v6297
  %v6370 = vunpack.c.l.b16 %v6298
  %v6371 = vunpack.c.l.b16 %v6299
  %v6372 = vunpack.c.h.b16 %v6299
  %v6373 = vunpack.c.l.b16 %v6300
  %v6374 = vunpack.c.l.b16 %v6301
  %v6375 = vunpack.c.h.b16 %v6301
  %v6376 = vunpack.c.l.b16 %v6302
  %v6377 = vunpack.c.l.b16 %v6303
  %v6378 = vunpack.c.h.b16 %v6303
  %v6379 = vunpack.c.l.b16 %v6304
  %v6380 = vunpack.c.l.b16 %v6305
  %v6381 = vunpack.c.h.b16 %v6305
  %v6382 = vunpack.c.l.b16 %v6306
  %v6383 = vunpack.c.l.b16 %v6307
  %v6384 = vunpack.c.h.b16 %v6307
  %v6385 = vunpack.c.l.b16 %v6308
  %v6386 = vunpack.c.l.b16 %v6309
  %v6387 = vunpack.c.h.b16 %v6309
  %v6388 = vunpack.c.l.b16 %v6310
  %v6389 = vunpack.c.l.b16 %v6311
  %v6390 = vunpack.c.h.b16 %v6311
  %v6391 = vunpack.c.l.b16 %v6312
  %v6392 = vunpack.c.l.b16 %v6313
  %v6393 = vunpack.c.h.b16 %v6313
  %v6394 = vunpack.c.l.b16 %v6314
  %v6395 = vpack.c.b16 %v6350, %v6347
  %v6396 = vpack.c.b16 %v6351, %v6348
  %v6397 = vpack.c.b16 %v6352, %v6349
  %v6398 = vpack.c.b16 %v6356, %v6353
  %v6399 = vpack.c.b16 %v6357, %v6354
  %v6400 = vpack.c.b16 %v6358, %v6355
  %v6401 = vpack.c.b16 %v6362, %v6359
  %v6402 = vpack.c.b16 %v6363, %v6360
  %v6403 = vpack.c.b16 %v6364, %v6361
  %v6404 = vpack.c.b16 %v6368, %v6365
  %v6405 = vpack.c.b16 %v6369, %v6366
  %v6406 = vpack.c.b16 %v6370, %v6367
  %v6407 = vpack.c.b16 %v6374, %v6371
  %v6408 = vpack.c.b16 %v6375, %v6372
  %v6409 = vpack.c.b16 %v6376, %v6373
  %v6410 = vpack.c.b16 %v6380, %v6377
  %v6411 = vpack.c.b16 %v6381, %v6378
  %v6412 = vpack.c.b16 %v6382, %v6379
  %v6413 = vpack.c.b16 %v6386, %v6383
  %v6414 = vpack.c.b16 %v6387, %v6384
  %v6415 = vpack.c.b16 %v6388, %v6385
  %v6416 = vpack.c.b16 %v6392, %v6389
  %v6417 = vpack.c.b16 %v6393, %v6390
  %v6418 = vpack.c.b16 %v6394, %v6391
  %6443 = vmatpush.bf16.msra.mxu0 %v6416
  %6444 = vmatpush.bf16.msra.mxu0 %v6413
  %6445 = vmatpush.bf16.msra.mxu0 %v6410
  %6446 = vmatpush.bf16.msra.mxu0 %v6407
  %6447 = vmatpush.bf16.msra.mxu0 %v6404
  %6448 = vmatpush.bf16.msra.mxu0 %v6401
  %6449 = vmatpush.bf16.msra.mxu0 %v6398
  %6450 = vmatpush.bf16.msra.mxu0 %v6395
  %6451 = vmatmul.bf16.gmra.mxu0 %v5438
  %v6452 = vpop.f32.mrf.mxu0
  %v6453 = vadd.f32 0.0, %v6452
  %v6454 = vpop.f32.mrf.mxu0
  %6455 = vdwg.mxu0
  %6456 = vmatpush.bf16.msra.mxu0 %v6417
  %6457 = vmatpush.bf16.msra.mxu0 %v6414
  %6458 = vmatpush.bf16.msra.mxu0 %v6411
  %6459 = vmatpush.bf16.msra.mxu0 %v6408
  %6460 = vmatpush.bf16.msra.mxu0 %v6405
  %6461 = vmatpush.bf16.msra.mxu0 %v6402
  %6462 = vmatpush.bf16.msra.mxu0 %v6399
  %6463 = vmatpush.bf16.msra.mxu0 %v6396
  %6464 = vmatmul.bf16.gmra.mxu0 %v5438
  %v6465 = vpop.f32.mrf.mxu0
  %v6466 = vadd.f32 0.0, %v6465
  %v6467 = vpop.f32.mrf.mxu0
  %6468 = vdwg.mxu0
  %6469 = vmatpush.bf16.msra.mxu0 %v6418
  %6470 = vmatpush.bf16.msra.mxu0 %v6415
  %6471 = vmatpush.bf16.msra.mxu0 %v6412
  %6472 = vmatpush.bf16.msra.mxu0 %v6409
  %6473 = vmatpush.bf16.msra.mxu0 %v6406
  %6474 = vmatpush.bf16.msra.mxu0 %v6403
  %6475 = vmatpush.bf16.msra.mxu0 %v6400
  %6476 = vmatpush.bf16.msra.mxu0 %v6397
  %6477 = vmatmul.bf16.gmra.mxu0 %v5438
  %v6478 = vpop.f32.mrf.mxu0
  %v6479 = vadd.f32 0.0, %v6478
  %v6480 = vpop.f32.mrf.mxu0
  %6481 = vdwg.mxu0
  %v6482 = vadd.f32 %v6254, %v6453
  %v6483 = vadd.f32 %v6267, %v6466
  %v6484 = vxor.u32 %v6482, 2147483648
  %v6485 = vxor.u32 %v6483, 2147483648
  %v6486 = vmul.f32 %v6484, 1.442695
  %v6487 = vpow.pop %v6486
  %v6488 = vmul.f32 %v6485, 1.442695
  %v6489 = vpow.pop %v6488
  %v6490 = vadd.f32 %v6487, 1.0
  %v6491 = vadd.f32 %v6489, 1.0
  %v6492 = vrcp.pop %v6490
  %v6493 = vmul.f32 %v6490, %v6492
  %v6494 = vsub.f32 1.0, %v6493
  %v6495 = vmul.f32 %v6492, %v6494
  %v6496 = vadd.f32 %v6492, %v6495
  %vm6497 = vweird.f32 %v6490
  %vm6498 = vweird.f32 %v6492
  %vm6499 = vmor %vm6497, %vm6498
  %v6500 = vsel %vm6499, %v6492, %v6496
  %v6501 = vand.u32 2147483647, %v6490
  %vm6502 = vcmp.eq.f32.partialorder %v6501, 8.507059e+37
  %v6503 = vand.u32 %v6490, 2147483648
  %v6504 = vor.u32 1.1754944e-38, %v6503
  %v6505 = vsel %vm6502, %v6504, %v6500
  %v6506 = vmul.f32 1.0, %v6505
  %v6507 = vrcp.pop %v6491
  %v6508 = vmul.f32 %v6491, %v6507
  %v6509 = vsub.f32 1.0, %v6508
  %v6510 = vmul.f32 %v6507, %v6509
  %v6511 = vadd.f32 %v6507, %v6510
  %vm6512 = vweird.f32 %v6491
  %vm6513 = vweird.f32 %v6507
  %vm6514 = vmor %vm6512, %vm6513
  %v6515 = vsel %vm6514, %v6507, %v6511
  %v6516 = vand.u32 2147483647, %v6491
  %vm6517 = vcmp.eq.f32.partialorder %v6516, 8.507059e+37
  %v6518 = vand.u32 %v6491, 2147483648
  %v6519 = vor.u32 1.1754944e-38, %v6518
  %v6520 = vsel %vm6517, %v6519, %v6515
  %v6521 = vmul.f32 1.0, %v6520
  %v6522 = vld [vmem:[%s13] sm:$0x1]
  %v6524 = vperm.slane %v6522, 0
  %v6526 = vadd.f32 %v6479, %v6524
  %v6527 = vmul.f32 %v6506, %v6526
  %v6528 = vadd.f32 %v6280, %v6527
  %v6529 = vtanh.pop %v6528
  %v6530 = vsub.f32 1.0, %v6521
  %v6531 = vmul.f32 %v6530, %v6529
  %v6532 = vmul.f32 %v6521, %v5437
  %v6533 = vadd.f32 %v6531, %v6532
  %v6534 = vpack.c.bf16 %v6533, %v6533
  %v6535 = vld [vmem:[%s14] sm:$0xf]
  %v6536 = vld [vmem:[%s14 + $0x4] sm:$0xf]
  %v6537 = vld [vmem:[%s14 + $0x8] sm:$0xf]
  %v6538 = vld [vmem:[%s14 + $0xc] sm:$0xf]
  %v6539 = vld [vmem:[%s14 + $0x10] sm:$0xf]
  %v6540 = vld [vmem:[%s14 + $0x14] sm:$0xf]
  %v6541 = vld [vmem:[%s14 + $0x18] sm:$0xf]
  %v6542 = vld [vmem:[%s14 + $0x1c] sm:$0xf]
  %v6543 = vld [vmem:[%s14 + $0x20] sm:$0xf]
  %v6544 = vld [vmem:[%s14 + $0x24] sm:$0xf]
  %v6545 = vld [vmem:[%s14 + $0x28] sm:$0xf]
  %v6546 = vld [vmem:[%s14 + $0x2c] sm:$0xf]
  %v6547 = vld [vmem:[%s14 + $0x30] sm:$0xf]
  %v6548 = vld [vmem:[%s14 + $0x34] sm:$0xf]
  %v6549 = vld [vmem:[%s14 + $0x38] sm:$0xf]
  %v6550 = vld [vmem:[%s14 + $0x3c] sm:$0xf]
  %v6551 = vld [vmem:[%s15] sm:$0x1]
  %v6553 = vperm.slane %v6551, 0
  %v6571 = vunpack.c.l.b16 %v6535
  %v6572 = vunpack.c.l.b16 %v6536
  %v6573 = vunpack.c.l.b16 %v6537
  %v6574 = vunpack.c.l.b16 %v6538
  %v6575 = vunpack.c.l.b16 %v6539
  %v6576 = vunpack.c.l.b16 %v6540
  %v6577 = vunpack.c.l.b16 %v6541
  %v6578 = vunpack.c.l.b16 %v6542
  %v6579 = vunpack.c.l.b16 %v6543
  %v6580 = vunpack.c.l.b16 %v6544
  %v6581 = vunpack.c.l.b16 %v6545
  %v6582 = vunpack.c.l.b16 %v6546
  %v6583 = vunpack.c.l.b16 %v6547
  %v6584 = vunpack.c.l.b16 %v6548
  %v6585 = vunpack.c.l.b16 %v6549
  %v6586 = vunpack.c.l.b16 %v6550
  %v6587 = vpack.c.b16 %v6572, %v6571
  %v6588 = vpack.c.b16 %v6574, %v6573
  %v6589 = vpack.c.b16 %v6576, %v6575
  %v6590 = vpack.c.b16 %v6578, %v6577
  %v6591 = vpack.c.b16 %v6580, %v6579
  %v6592 = vpack.c.b16 %v6582, %v6581
  %v6593 = vpack.c.b16 %v6584, %v6583
  %v6594 = vpack.c.b16 %v6586, %v6585
  %6603 = vmatpush.bf16.msra.mxu0 %v6594
  %6604 = vmatpush.bf16.msra.mxu0 %v6593
  %6605 = vmatpush.bf16.msra.mxu0 %v6592
  %6606 = vmatpush.bf16.msra.mxu0 %v6591
  %6607 = vmatpush.bf16.msra.mxu0 %v6590
  %6608 = vmatpush.bf16.msra.mxu0 %v6589
  %6609 = vmatpush.bf16.msra.mxu0 %v6588
  %6610 = vmatpush.bf16.msra.mxu0 %v6587
  %6611 = vmatmul.bf16.gmra.mxu0 %v6534
  %v6612 = vpop.f32.mrf.mxu0
  %v6613 = vadd.f32 %v6553, %v6612
  %v6614 = vpop.f32.mrf.mxu0
  %6615 = vdwg.mxu0
  %s6616 = scalar_lea.vmem %s16, 40
  %6617 = vst [vmem:[%s6616] sm:$0xff] %v6613
  %v6618 = vsel %vm56, %v6613, -1e+30
  %6619 = vmax.xlane.f32.xlu0 %v6618
  %v6620 = vpop.xlane.xlu0 %6619
  %vm6621 = vcmp.eq.f32.partialorder %v6618, %v6620
  %v6622 = vsel %vm6621, %v55, 128.0
  %6623 = vmin.xlane.f32.xlu0 %v6622
  %v6624 = vpop.xlane.xlu0 %6623
  %vm6625 = vcmp.eq.f32.partialorder %v55, %v6624
  %v6626 = vsel %vm6625, 1, 0
  %v6627 = vcvt.s32.f32 %v6626
  %v6628 = vpack.c.bf16 %v6627, %v6627
  %v6629 = vld [vmem:[%s4] sm:$0xf]
  %v6630 = vld [vmem:[%s4 + $0x4] sm:$0xf]
  %v6631 = vld [vmem:[%s4 + $0x8] sm:$0xf]
  %v6632 = vld [vmem:[%s4 + $0xc] sm:$0xf]
  %v6633 = vld [vmem:[%s4 + $0x10] sm:$0xf]
  %v6634 = vld [vmem:[%s4 + $0x14] sm:$0xf]
  %v6635 = vld [vmem:[%s4 + $0x18] sm:$0xf]
  %v6636 = vld [vmem:[%s4 + $0x1c] sm:$0xf]
  %v6637 = vld [vmem:[%s4 + $0x20] sm:$0xf]
  %v6638 = vld [vmem:[%s4 + $0x24] sm:$0xf]
  %v6639 = vld [vmem:[%s4 + $0x28] sm:$0xf]
  %v6640 = vld [vmem:[%s4 + $0x2c] sm:$0xf]
  %v6641 = vld [vmem:[%s4 + $0x30] sm:$0xf]
  %v6642 = vld [vmem:[%s4 + $0x34] sm:$0xf]
  %v6643 = vld [vmem:[%s4 + $0x38] sm:$0xf]
  %v6644 = vld [vmem:[%s4 + $0x3c] sm:$0xf]
  %v6661 = vunpack.c.l.b16 %v6629
  %v6662 = vunpack.c.l.b16 %v6630
  %v6663 = vunpack.c.l.b16 %v6631
  %v6664 = vunpack.c.l.b16 %v6632
  %v6665 = vunpack.c.l.b16 %v6633
  %v6666 = vunpack.c.l.b16 %v6634
  %v6667 = vunpack.c.l.b16 %v6635
  %v6668 = vunpack.c.l.b16 %v6636
  %v6669 = vunpack.c.l.b16 %v6637
  %v6670 = vunpack.c.l.b16 %v6638
  %v6671 = vunpack.c.l.b16 %v6639
  %v6672 = vunpack.c.l.b16 %v6640
  %v6673 = vunpack.c.l.b16 %v6641
  %v6674 = vunpack.c.l.b16 %v6642
  %v6675 = vunpack.c.l.b16 %v6643
  %v6676 = vunpack.c.l.b16 %v6644
  %v6677 = vpack.c.b16 %v6662, %v6661
  %v6678 = vpack.c.b16 %v6664, %v6663
  %v6679 = vpack.c.b16 %v6666, %v6665
  %v6680 = vpack.c.b16 %v6668, %v6667
  %v6681 = vpack.c.b16 %v6670, %v6669
  %v6682 = vpack.c.b16 %v6672, %v6671
  %v6683 = vpack.c.b16 %v6674, %v6673
  %v6684 = vpack.c.b16 %v6676, %v6675
  %6693 = vmatpush.bf16.msra.mxu0 %v6684
  %6694 = vmatpush.bf16.msra.mxu0 %v6683
  %6695 = vmatpush.bf16.msra.mxu0 %v6682
  %6696 = vmatpush.bf16.msra.mxu0 %v6681
  %6697 = vmatpush.bf16.msra.mxu0 %v6680
  %6698 = vmatpush.bf16.msra.mxu0 %v6679
  %6699 = vmatpush.bf16.msra.mxu0 %v6678
  %6700 = vmatpush.bf16.msra.mxu0 %v6677
  %6701 = vmatmul.bf16.gmra.mxu0 %v6628
  %v6702 = vpop.f32.mrf.mxu0
  %v6703 = vadd.f32 0.0, %v6702
  %v6704 = vpop.f32.mrf.mxu0
  %6705 = vdwg.mxu0
  %s6706 = scalar_lea.vmem %s3, 40
  %v6707 = vld [vmem:[%s6706] sm:$0xff]
  %v6708 = vmul.f32 %v6703, %v6707
  %s6709 = scalar_lea.vmem %s2, 40
  %v6710 = vld [vmem:[%s6709] sm:$0xff]
  %v6711 = vadd.f32 %v6708, %v6710
  %v6712 = vpack.c.bf16 %v6711, %v6711
  %v6713 = vld [vmem:[%s6] sm:$0xff]
  %v6714 = vld [vmem:[%s6 + $0x8] sm:$0xf]
  %v6715 = vld [vmem:[%s6 + $0xc] sm:$0xff]
  %v6716 = vld [vmem:[%s6 + $0x14] sm:$0xf]
  %v6717 = vld [vmem:[%s6 + $0x18] sm:$0xff]
  %v6718 = vld [vmem:[%s6 + $0x20] sm:$0xf]
  %v6719 = vld [vmem:[%s6 + $0x24] sm:$0xff]
  %v6720 = vld [vmem:[%s6 + $0x2c] sm:$0xf]
  %v6721 = vld [vmem:[%s6 + $0x30] sm:$0xff]
  %v6722 = vld [vmem:[%s6 + $0x38] sm:$0xf]
  %v6723 = vld [vmem:[%s6 + $0x3c] sm:$0xff]
  %v6724 = vld [vmem:[%s6 + $0x44] sm:$0xf]
  %v6725 = vld [vmem:[%s6 + $0x48] sm:$0xff]
  %v6726 = vld [vmem:[%s6 + $0x50] sm:$0xf]
  %v6727 = vld [vmem:[%s6 + $0x54] sm:$0xff]
  %v6728 = vld [vmem:[%s6 + $0x5c] sm:$0xf]
  %v6729 = vld [vmem:[%s6 + $0x60] sm:$0xff]
  %v6730 = vld [vmem:[%s6 + $0x68] sm:$0xf]
  %v6731 = vld [vmem:[%s6 + $0x6c] sm:$0xff]
  %v6732 = vld [vmem:[%s6 + $0x74] sm:$0xf]
  %v6733 = vld [vmem:[%s6 + $0x78] sm:$0xff]
  %v6734 = vld [vmem:[%s6 + $0x80] sm:$0xf]
  %v6735 = vld [vmem:[%s6 + $0x84] sm:$0xff]
  %v6736 = vld [vmem:[%s6 + $0x8c] sm:$0xf]
  %v6737 = vld [vmem:[%s6 + $0x90] sm:$0xff]
  %v6738 = vld [vmem:[%s6 + $0x98] sm:$0xf]
  %v6739 = vld [vmem:[%s6 + $0x9c] sm:$0xff]
  %v6740 = vld [vmem:[%s6 + $0xa4] sm:$0xf]
  %v6741 = vld [vmem:[%s6 + $0xa8] sm:$0xff]
  %v6742 = vld [vmem:[%s6 + $0xb0] sm:$0xf]
  %v6743 = vld [vmem:[%s6 + $0xb4] sm:$0xff]
  %v6744 = vld [vmem:[%s6 + $0xbc] sm:$0xf]
  %v6745 = vld [vmem:[%s8] sm:$0x7]
  %v6747 = vperm.slane %v6745, 0
  %v6748 = vperm.slane %v6745, 1
  %v6749 = vperm.slane %v6745, 2
  %v6785 = vunpack.c.l.b16 %v6713
  %v6786 = vunpack.c.h.b16 %v6713
  %v6787 = vunpack.c.l.b16 %v6714
  %v6788 = vunpack.c.l.b16 %v6715
  %v6789 = vunpack.c.h.b16 %v6715
  %v6790 = vunpack.c.l.b16 %v6716
  %v6791 = vunpack.c.l.b16 %v6717
  %v6792 = vunpack.c.h.b16 %v6717
  %v6793 = vunpack.c.l.b16 %v6718
  %v6794 = vunpack.c.l.b16 %v6719
  %v6795 = vunpack.c.h.b16 %v6719
  %v6796 = vunpack.c.l.b16 %v6720
  %v6797 = vunpack.c.l.b16 %v6721
  %v6798 = vunpack.c.h.b16 %v6721
  %v6799 = vunpack.c.l.b16 %v6722
  %v6800 = vunpack.c.l.b16 %v6723
  %v6801 = vunpack.c.h.b16 %v6723
  %v6802 = vunpack.c.l.b16 %v6724
  %v6803 = vunpack.c.l.b16 %v6725
  %v6804 = vunpack.c.h.b16 %v6725
  %v6805 = vunpack.c.l.b16 %v6726
  %v6806 = vunpack.c.l.b16 %v6727
  %v6807 = vunpack.c.h.b16 %v6727
  %v6808 = vunpack.c.l.b16 %v6728
  %v6809 = vunpack.c.l.b16 %v6729
  %v6810 = vunpack.c.h.b16 %v6729
  %v6811 = vunpack.c.l.b16 %v6730
  %v6812 = vunpack.c.l.b16 %v6731
  %v6813 = vunpack.c.h.b16 %v6731
  %v6814 = vunpack.c.l.b16 %v6732
  %v6815 = vunpack.c.l.b16 %v6733
  %v6816 = vunpack.c.h.b16 %v6733
  %v6817 = vunpack.c.l.b16 %v6734
  %v6818 = vunpack.c.l.b16 %v6735
  %v6819 = vunpack.c.h.b16 %v6735
  %v6820 = vunpack.c.l.b16 %v6736
  %v6821 = vunpack.c.l.b16 %v6737
  %v6822 = vunpack.c.h.b16 %v6737
  %v6823 = vunpack.c.l.b16 %v6738
  %v6824 = vunpack.c.l.b16 %v6739
  %v6825 = vunpack.c.h.b16 %v6739
  %v6826 = vunpack.c.l.b16 %v6740
  %v6827 = vunpack.c.l.b16 %v6741
  %v6828 = vunpack.c.h.b16 %v6741
  %v6829 = vunpack.c.l.b16 %v6742
  %v6830 = vunpack.c.l.b16 %v6743
  %v6831 = vunpack.c.h.b16 %v6743
  %v6832 = vunpack.c.l.b16 %v6744
  %v6833 = vpack.c.b16 %v6788, %v6785
  %v6834 = vpack.c.b16 %v6789, %v6786
  %v6835 = vpack.c.b16 %v6790, %v6787
  %v6836 = vpack.c.b16 %v6794, %v6791
  %v6837 = vpack.c.b16 %v6795, %v6792
  %v6838 = vpack.c.b16 %v6796, %v6793
  %v6839 = vpack.c.b16 %v6800, %v6797
  %v6840 = vpack.c.b16 %v6801, %v6798
  %v6841 = vpack.c.b16 %v6802, %v6799
  %v6842 = vpack.c.b16 %v6806, %v6803
  %v6843 = vpack.c.b16 %v6807, %v6804
  %v6844 = vpack.c.b16 %v6808, %v6805
  %v6845 = vpack.c.b16 %v6812, %v6809
  %v6846 = vpack.c.b16 %v6813, %v6810
  %v6847 = vpack.c.b16 %v6814, %v6811
  %v6848 = vpack.c.b16 %v6818, %v6815
  %v6849 = vpack.c.b16 %v6819, %v6816
  %v6850 = vpack.c.b16 %v6820, %v6817
  %v6851 = vpack.c.b16 %v6824, %v6821
  %v6852 = vpack.c.b16 %v6825, %v6822
  %v6853 = vpack.c.b16 %v6826, %v6823
  %v6854 = vpack.c.b16 %v6830, %v6827
  %v6855 = vpack.c.b16 %v6831, %v6828
  %v6856 = vpack.c.b16 %v6832, %v6829
  %6881 = vmatpush.bf16.msra.mxu0 %v6854
  %6882 = vmatpush.bf16.msra.mxu0 %v6851
  %6883 = vmatpush.bf16.msra.mxu0 %v6848
  %6884 = vmatpush.bf16.msra.mxu0 %v6845
  %6885 = vmatpush.bf16.msra.mxu0 %v6842
  %6886 = vmatpush.bf16.msra.mxu0 %v6839
  %6887 = vmatpush.bf16.msra.mxu0 %v6836
  %6888 = vmatpush.bf16.msra.mxu0 %v6833
  %6889 = vmatmul.bf16.gmra.mxu0 %v6712
  %v6890 = vpop.f32.mrf.mxu0
  %v6891 = vadd.f32 %v6747, %v6890
  %v6892 = vpop.f32.mrf.mxu0
  %6893 = vdwg.mxu0
  %6894 = vmatpush.bf16.msra.mxu0 %v6855
  %6895 = vmatpush.bf16.msra.mxu0 %v6852
  %6896 = vmatpush.bf16.msra.mxu0 %v6849
  %6897 = vmatpush.bf16.msra.mxu0 %v6846
  %6898 = vmatpush.bf16.msra.mxu0 %v6843
  %6899 = vmatpush.bf16.msra.mxu0 %v6840
  %6900 = vmatpush.bf16.msra.mxu0 %v6837
  %6901 = vmatpush.bf16.msra.mxu0 %v6834
  %6902 = vmatmul.bf16.gmra.mxu0 %v6712
  %v6903 = vpop.f32.mrf.mxu0
  %v6904 = vadd.f32 %v6748, %v6903
  %v6905 = vpop.f32.mrf.mxu0
  %6906 = vdwg.mxu0
  %6907 = vmatpush.bf16.msra.mxu0 %v6856
  %6908 = vmatpush.bf16.msra.mxu0 %v6853
  %6909 = vmatpush.bf16.msra.mxu0 %v6850
  %6910 = vmatpush.bf16.msra.mxu0 %v6847
  %6911 = vmatpush.bf16.msra.mxu0 %v6844
  %6912 = vmatpush.bf16.msra.mxu0 %v6841
  %6913 = vmatpush.bf16.msra.mxu0 %v6838
  %6914 = vmatpush.bf16.msra.mxu0 %v6835
  %6915 = vmatmul.bf16.gmra.mxu0 %v6712
  %v6916 = vpop.f32.mrf.mxu0
  %v6917 = vadd.f32 %v6749, %v6916
  %v6918 = vpop.f32.mrf.mxu0
  %6919 = vdwg.mxu0
  %v6920 = vld [vmem:[%s7] sm:$0xff]
  %v6921 = vld [vmem:[%s7 + $0x8] sm:$0xf]
  %v6922 = vld [vmem:[%s7 + $0xc] sm:$0xff]
  %v6923 = vld [vmem:[%s7 + $0x14] sm:$0xf]
  %v6924 = vld [vmem:[%s7 + $0x18] sm:$0xff]
  %v6925 = vld [vmem:[%s7 + $0x20] sm:$0xf]
  %v6926 = vld [vmem:[%s7 + $0x24] sm:$0xff]
  %v6927 = vld [vmem:[%s7 + $0x2c] sm:$0xf]
  %v6928 = vld [vmem:[%s7 + $0x30] sm:$0xff]
  %v6929 = vld [vmem:[%s7 + $0x38] sm:$0xf]
  %v6930 = vld [vmem:[%s7 + $0x3c] sm:$0xff]
  %v6931 = vld [vmem:[%s7 + $0x44] sm:$0xf]
  %v6932 = vld [vmem:[%s7 + $0x48] sm:$0xff]
  %v6933 = vld [vmem:[%s7 + $0x50] sm:$0xf]
  %v6934 = vld [vmem:[%s7 + $0x54] sm:$0xff]
  %v6935 = vld [vmem:[%s7 + $0x5c] sm:$0xf]
  %v6936 = vld [vmem:[%s7 + $0x60] sm:$0xff]
  %v6937 = vld [vmem:[%s7 + $0x68] sm:$0xf]
  %v6938 = vld [vmem:[%s7 + $0x6c] sm:$0xff]
  %v6939 = vld [vmem:[%s7 + $0x74] sm:$0xf]
  %v6940 = vld [vmem:[%s7 + $0x78] sm:$0xff]
  %v6941 = vld [vmem:[%s7 + $0x80] sm:$0xf]
  %v6942 = vld [vmem:[%s7 + $0x84] sm:$0xff]
  %v6943 = vld [vmem:[%s7 + $0x8c] sm:$0xf]
  %v6944 = vld [vmem:[%s7 + $0x90] sm:$0xff]
  %v6945 = vld [vmem:[%s7 + $0x98] sm:$0xf]
  %v6946 = vld [vmem:[%s7 + $0x9c] sm:$0xff]
  %v6947 = vld [vmem:[%s7 + $0xa4] sm:$0xf]
  %v6948 = vld [vmem:[%s7 + $0xa8] sm:$0xff]
  %v6949 = vld [vmem:[%s7 + $0xb0] sm:$0xf]
  %v6950 = vld [vmem:[%s7 + $0xb4] sm:$0xff]
  %v6951 = vld [vmem:[%s7 + $0xbc] sm:$0xf]
  %v6984 = vunpack.c.l.b16 %v6920
  %v6985 = vunpack.c.h.b16 %v6920
  %v6986 = vunpack.c.l.b16 %v6921
  %v6987 = vunpack.c.l.b16 %v6922
  %v6988 = vunpack.c.h.b16 %v6922
  %v6989 = vunpack.c.l.b16 %v6923
  %v6990 = vunpack.c.l.b16 %v6924
  %v6991 = vunpack.c.h.b16 %v6924
  %v6992 = vunpack.c.l.b16 %v6925
  %v6993 = vunpack.c.l.b16 %v6926
  %v6994 = vunpack.c.h.b16 %v6926
  %v6995 = vunpack.c.l.b16 %v6927
  %v6996 = vunpack.c.l.b16 %v6928
  %v6997 = vunpack.c.h.b16 %v6928
  %v6998 = vunpack.c.l.b16 %v6929
  %v6999 = vunpack.c.l.b16 %v6930
  %v7000 = vunpack.c.h.b16 %v6930
  %v7001 = vunpack.c.l.b16 %v6931
  %v7002 = vunpack.c.l.b16 %v6932
  %v7003 = vunpack.c.h.b16 %v6932
  %v7004 = vunpack.c.l.b16 %v6933
  %v7005 = vunpack.c.l.b16 %v6934
  %v7006 = vunpack.c.h.b16 %v6934
  %v7007 = vunpack.c.l.b16 %v6935
  %v7008 = vunpack.c.l.b16 %v6936
  %v7009 = vunpack.c.h.b16 %v6936
  %v7010 = vunpack.c.l.b16 %v6937
  %v7011 = vunpack.c.l.b16 %v6938
  %v7012 = vunpack.c.h.b16 %v6938
  %v7013 = vunpack.c.l.b16 %v6939
  %v7014 = vunpack.c.l.b16 %v6940
  %v7015 = vunpack.c.h.b16 %v6940
  %v7016 = vunpack.c.l.b16 %v6941
  %v7017 = vunpack.c.l.b16 %v6942
  %v7018 = vunpack.c.h.b16 %v6942
  %v7019 = vunpack.c.l.b16 %v6943
  %v7020 = vunpack.c.l.b16 %v6944
  %v7021 = vunpack.c.h.b16 %v6944
  %v7022 = vunpack.c.l.b16 %v6945
  %v7023 = vunpack.c.l.b16 %v6946
  %v7024 = vunpack.c.h.b16 %v6946
  %v7025 = vunpack.c.l.b16 %v6947
  %v7026 = vunpack.c.l.b16 %v6948
  %v7027 = vunpack.c.h.b16 %v6948
  %v7028 = vunpack.c.l.b16 %v6949
  %v7029 = vunpack.c.l.b16 %v6950
  %v7030 = vunpack.c.h.b16 %v6950
  %v7031 = vunpack.c.l.b16 %v6951
  %v7032 = vpack.c.b16 %v6987, %v6984
  %v7033 = vpack.c.b16 %v6988, %v6985
  %v7034 = vpack.c.b16 %v6989, %v6986
  %v7035 = vpack.c.b16 %v6993, %v6990
  %v7036 = vpack.c.b16 %v6994, %v6991
  %v7037 = vpack.c.b16 %v6995, %v6992
  %v7038 = vpack.c.b16 %v6999, %v6996
  %v7039 = vpack.c.b16 %v7000, %v6997
  %v7040 = vpack.c.b16 %v7001, %v6998
  %v7041 = vpack.c.b16 %v7005, %v7002
  %v7042 = vpack.c.b16 %v7006, %v7003
  %v7043 = vpack.c.b16 %v7007, %v7004
  %v7044 = vpack.c.b16 %v7011, %v7008
  %v7045 = vpack.c.b16 %v7012, %v7009
  %v7046 = vpack.c.b16 %v7013, %v7010
  %v7047 = vpack.c.b16 %v7017, %v7014
  %v7048 = vpack.c.b16 %v7018, %v7015
  %v7049 = vpack.c.b16 %v7019, %v7016
  %v7050 = vpack.c.b16 %v7023, %v7020
  %v7051 = vpack.c.b16 %v7024, %v7021
  %v7052 = vpack.c.b16 %v7025, %v7022
  %v7053 = vpack.c.b16 %v7029, %v7026
  %v7054 = vpack.c.b16 %v7030, %v7027
  %v7055 = vpack.c.b16 %v7031, %v7028
  %7080 = vmatpush.bf16.msra.mxu0 %v7053
  %7081 = vmatpush.bf16.msra.mxu0 %v7050
  %7082 = vmatpush.bf16.msra.mxu0 %v7047
  %7083 = vmatpush.bf16.msra.mxu0 %v7044
  %7084 = vmatpush.bf16.msra.mxu0 %v7041
  %7085 = vmatpush.bf16.msra.mxu0 %v7038
  %7086 = vmatpush.bf16.msra.mxu0 %v7035
  %7087 = vmatpush.bf16.msra.mxu0 %v7032
  %7088 = vmatmul.bf16.gmra.mxu0 %v6075
  %v7089 = vpop.f32.mrf.mxu0
  %v7090 = vadd.f32 0.0, %v7089
  %v7091 = vpop.f32.mrf.mxu0
  %7092 = vdwg.mxu0
  %7093 = vmatpush.bf16.msra.mxu0 %v7054
  %7094 = vmatpush.bf16.msra.mxu0 %v7051
  %7095 = vmatpush.bf16.msra.mxu0 %v7048
  %7096 = vmatpush.bf16.msra.mxu0 %v7045
  %7097 = vmatpush.bf16.msra.mxu0 %v7042
  %7098 = vmatpush.bf16.msra.mxu0 %v7039
  %7099 = vmatpush.bf16.msra.mxu0 %v7036
  %7100 = vmatpush.bf16.msra.mxu0 %v7033
  %7101 = vmatmul.bf16.gmra.mxu0 %v6075
  %v7102 = vpop.f32.mrf.mxu0
  %v7103 = vadd.f32 0.0, %v7102
  %v7104 = vpop.f32.mrf.mxu0
  %7105 = vdwg.mxu0
  %7106 = vmatpush.bf16.msra.mxu0 %v7055
  %7107 = vmatpush.bf16.msra.mxu0 %v7052
  %7108 = vmatpush.bf16.msra.mxu0 %v7049
  %7109 = vmatpush.bf16.msra.mxu0 %v7046
  %7110 = vmatpush.bf16.msra.mxu0 %v7043
  %7111 = vmatpush.bf16.msra.mxu0 %v7040
  %7112 = vmatpush.bf16.msra.mxu0 %v7037
  %7113 = vmatpush.bf16.msra.mxu0 %v7034
  %7114 = vmatmul.bf16.gmra.mxu0 %v6075
  %v7115 = vpop.f32.mrf.mxu0
  %v7116 = vadd.f32 0.0, %v7115
  %v7117 = vpop.f32.mrf.mxu0
  %7118 = vdwg.mxu0
  %v7119 = vadd.f32 %v6891, %v7090
  %v7120 = vadd.f32 %v6904, %v7103
  %v7121 = vxor.u32 %v7119, 2147483648
  %v7122 = vxor.u32 %v7120, 2147483648
  %v7123 = vmul.f32 %v7121, 1.442695
  %v7124 = vpow.pop %v7123
  %v7125 = vmul.f32 %v7122, 1.442695
  %v7126 = vpow.pop %v7125
  %v7127 = vadd.f32 %v7124, 1.0
  %v7128 = vadd.f32 %v7126, 1.0
  %v7129 = vrcp.pop %v7127
  %v7130 = vmul.f32 %v7127, %v7129
  %v7131 = vsub.f32 1.0, %v7130
  %v7132 = vmul.f32 %v7129, %v7131
  %v7133 = vadd.f32 %v7129, %v7132
  %vm7134 = vweird.f32 %v7127
  %vm7135 = vweird.f32 %v7129
  %vm7136 = vmor %vm7134, %vm7135
  %v7137 = vsel %vm7136, %v7129, %v7133
  %v7138 = vand.u32 2147483647, %v7127
  %vm7139 = vcmp.eq.f32.partialorder %v7138, 8.507059e+37
  %v7140 = vand.u32 %v7127, 2147483648
  %v7141 = vor.u32 1.1754944e-38, %v7140
  %v7142 = vsel %vm7139, %v7141, %v7137
  %v7143 = vmul.f32 1.0, %v7142
  %v7144 = vrcp.pop %v7128
  %v7145 = vmul.f32 %v7128, %v7144
  %v7146 = vsub.f32 1.0, %v7145
  %v7147 = vmul.f32 %v7144, %v7146
  %v7148 = vadd.f32 %v7144, %v7147
  %vm7149 = vweird.f32 %v7128
  %vm7150 = vweird.f32 %v7144
  %vm7151 = vmor %vm7149, %vm7150
  %v7152 = vsel %vm7151, %v7144, %v7148
  %v7153 = vand.u32 2147483647, %v7128
  %vm7154 = vcmp.eq.f32.partialorder %v7153, 8.507059e+37
  %v7155 = vand.u32 %v7128, 2147483648
  %v7156 = vor.u32 1.1754944e-38, %v7155
  %v7157 = vsel %vm7154, %v7156, %v7152
  %v7158 = vmul.f32 1.0, %v7157
  %v7159 = vld [vmem:[%s9] sm:$0x1]
  %v7161 = vperm.slane %v7159, 0
  %v7163 = vadd.f32 %v7116, %v7161
  %v7164 = vmul.f32 %v7143, %v7163
  %v7165 = vadd.f32 %v6917, %v7164
  %v7166 = vtanh.pop %v7165
  %v7167 = vsub.f32 1.0, %v7158
  %v7168 = vmul.f32 %v7167, %v7166
  %v7169 = vmul.f32 %v7158, %v6074
  %v7170 = vadd.f32 %v7168, %v7169
  %v7171 = vpack.c.bf16 %v7170, %v7170
  %v7172 = vld [vmem:[%s10] sm:$0xff]
  %v7173 = vld [vmem:[%s10 + $0x8] sm:$0xf]
  %v7174 = vld [vmem:[%s10 + $0xc] sm:$0xff]
  %v7175 = vld [vmem:[%s10 + $0x14] sm:$0xf]
  %v7176 = vld [vmem:[%s10 + $0x18] sm:$0xff]
  %v7177 = vld [vmem:[%s10 + $0x20] sm:$0xf]
  %v7178 = vld [vmem:[%s10 + $0x24] sm:$0xff]
  %v7179 = vld [vmem:[%s10 + $0x2c] sm:$0xf]
  %v7180 = vld [vmem:[%s10 + $0x30] sm:$0xff]
  %v7181 = vld [vmem:[%s10 + $0x38] sm:$0xf]
  %v7182 = vld [vmem:[%s10 + $0x3c] sm:$0xff]
  %v7183 = vld [vmem:[%s10 + $0x44] sm:$0xf]
  %v7184 = vld [vmem:[%s10 + $0x48] sm:$0xff]
  %v7185 = vld [vmem:[%s10 + $0x50] sm:$0xf]
  %v7186 = vld [vmem:[%s10 + $0x54] sm:$0xff]
  %v7187 = vld [vmem:[%s10 + $0x5c] sm:$0xf]
  %v7188 = vld [vmem:[%s10 + $0x60] sm:$0xff]
  %v7189 = vld [vmem:[%s10 + $0x68] sm:$0xf]
  %v7190 = vld [vmem:[%s10 + $0x6c] sm:$0xff]
  %v7191 = vld [vmem:[%s10 + $0x74] sm:$0xf]
  %v7192 = vld [vmem:[%s10 + $0x78] sm:$0xff]
  %v7193 = vld [vmem:[%s10 + $0x80] sm:$0xf]
  %v7194 = vld [vmem:[%s10 + $0x84] sm:$0xff]
  %v7195 = vld [vmem:[%s10 + $0x8c] sm:$0xf]
  %v7196 = vld [vmem:[%s10 + $0x90] sm:$0xff]
  %v7197 = vld [vmem:[%s10 + $0x98] sm:$0xf]
  %v7198 = vld [vmem:[%s10 + $0x9c] sm:$0xff]
  %v7199 = vld [vmem:[%s10 + $0xa4] sm:$0xf]
  %v7200 = vld [vmem:[%s10 + $0xa8] sm:$0xff]
  %v7201 = vld [vmem:[%s10 + $0xb0] sm:$0xf]
  %v7202 = vld [vmem:[%s10 + $0xb4] sm:$0xff]
  %v7203 = vld [vmem:[%s10 + $0xbc] sm:$0xf]
  %v7204 = vld [vmem:[%s12] sm:$0x7]
  %v7206 = vperm.slane %v7204, 0
  %v7207 = vperm.slane %v7204, 1
  %v7208 = vperm.slane %v7204, 2
  %v7244 = vunpack.c.l.b16 %v7172
  %v7245 = vunpack.c.h.b16 %v7172
  %v7246 = vunpack.c.l.b16 %v7173
  %v7247 = vunpack.c.l.b16 %v7174
  %v7248 = vunpack.c.h.b16 %v7174
  %v7249 = vunpack.c.l.b16 %v7175
  %v7250 = vunpack.c.l.b16 %v7176
  %v7251 = vunpack.c.h.b16 %v7176
  %v7252 = vunpack.c.l.b16 %v7177
  %v7253 = vunpack.c.l.b16 %v7178
  %v7254 = vunpack.c.h.b16 %v7178
  %v7255 = vunpack.c.l.b16 %v7179
  %v7256 = vunpack.c.l.b16 %v7180
  %v7257 = vunpack.c.h.b16 %v7180
  %v7258 = vunpack.c.l.b16 %v7181
  %v7259 = vunpack.c.l.b16 %v7182
  %v7260 = vunpack.c.h.b16 %v7182
  %v7261 = vunpack.c.l.b16 %v7183
  %v7262 = vunpack.c.l.b16 %v7184
  %v7263 = vunpack.c.h.b16 %v7184
  %v7264 = vunpack.c.l.b16 %v7185
  %v7265 = vunpack.c.l.b16 %v7186
  %v7266 = vunpack.c.h.b16 %v7186
  %v7267 = vunpack.c.l.b16 %v7187
  %v7268 = vunpack.c.l.b16 %v7188
  %v7269 = vunpack.c.h.b16 %v7188
  %v7270 = vunpack.c.l.b16 %v7189
  %v7271 = vunpack.c.l.b16 %v7190
  %v7272 = vunpack.c.h.b16 %v7190
  %v7273 = vunpack.c.l.b16 %v7191
  %v7274 = vunpack.c.l.b16 %v7192
  %v7275 = vunpack.c.h.b16 %v7192
  %v7276 = vunpack.c.l.b16 %v7193
  %v7277 = vunpack.c.l.b16 %v7194
  %v7278 = vunpack.c.h.b16 %v7194
  %v7279 = vunpack.c.l.b16 %v7195
  %v7280 = vunpack.c.l.b16 %v7196
  %v7281 = vunpack.c.h.b16 %v7196
  %v7282 = vunpack.c.l.b16 %v7197
  %v7283 = vunpack.c.l.b16 %v7198
  %v7284 = vunpack.c.h.b16 %v7198
  %v7285 = vunpack.c.l.b16 %v7199
  %v7286 = vunpack.c.l.b16 %v7200
  %v7287 = vunpack.c.h.b16 %v7200
  %v7288 = vunpack.c.l.b16 %v7201
  %v7289 = vunpack.c.l.b16 %v7202
  %v7290 = vunpack.c.h.b16 %v7202
  %v7291 = vunpack.c.l.b16 %v7203
  %v7292 = vpack.c.b16 %v7247, %v7244
  %v7293 = vpack.c.b16 %v7248, %v7245
  %v7294 = vpack.c.b16 %v7249, %v7246
  %v7295 = vpack.c.b16 %v7253, %v7250
  %v7296 = vpack.c.b16 %v7254, %v7251
  %v7297 = vpack.c.b16 %v7255, %v7252
  %v7298 = vpack.c.b16 %v7259, %v7256
  %v7299 = vpack.c.b16 %v7260, %v7257
  %v7300 = vpack.c.b16 %v7261, %v7258
  %v7301 = vpack.c.b16 %v7265, %v7262
  %v7302 = vpack.c.b16 %v7266, %v7263
  %v7303 = vpack.c.b16 %v7267, %v7264
  %v7304 = vpack.c.b16 %v7271, %v7268
  %v7305 = vpack.c.b16 %v7272, %v7269
  %v7306 = vpack.c.b16 %v7273, %v7270
  %v7307 = vpack.c.b16 %v7277, %v7274
  %v7308 = vpack.c.b16 %v7278, %v7275
  %v7309 = vpack.c.b16 %v7279, %v7276
  %v7310 = vpack.c.b16 %v7283, %v7280
  %v7311 = vpack.c.b16 %v7284, %v7281
  %v7312 = vpack.c.b16 %v7285, %v7282
  %v7313 = vpack.c.b16 %v7289, %v7286
  %v7314 = vpack.c.b16 %v7290, %v7287
  %v7315 = vpack.c.b16 %v7291, %v7288
  %7340 = vmatpush.bf16.msra.mxu0 %v7313
  %7341 = vmatpush.bf16.msra.mxu0 %v7310
  %7342 = vmatpush.bf16.msra.mxu0 %v7307
  %7343 = vmatpush.bf16.msra.mxu0 %v7304
  %7344 = vmatpush.bf16.msra.mxu0 %v7301
  %7345 = vmatpush.bf16.msra.mxu0 %v7298
  %7346 = vmatpush.bf16.msra.mxu0 %v7295
  %7347 = vmatpush.bf16.msra.mxu0 %v7292
  %7348 = vmatmul.bf16.gmra.mxu0 %v7171
  %v7349 = vpop.f32.mrf.mxu0
  %v7350 = vadd.f32 %v7206, %v7349
  %v7351 = vpop.f32.mrf.mxu0
  %7352 = vdwg.mxu0
  %7353 = vmatpush.bf16.msra.mxu0 %v7314
  %7354 = vmatpush.bf16.msra.mxu0 %v7311
  %7355 = vmatpush.bf16.msra.mxu0 %v7308
  %7356 = vmatpush.bf16.msra.mxu0 %v7305
  %7357 = vmatpush.bf16.msra.mxu0 %v7302
  %7358 = vmatpush.bf16.msra.mxu0 %v7299
  %7359 = vmatpush.bf16.msra.mxu0 %v7296
  %7360 = vmatpush.bf16.msra.mxu0 %v7293
  %7361 = vmatmul.bf16.gmra.mxu0 %v7171
  %v7362 = vpop.f32.mrf.mxu0
  %v7363 = vadd.f32 %v7207, %v7362
  %v7364 = vpop.f32.mrf.mxu0
  %7365 = vdwg.mxu0
  %7366 = vmatpush.bf16.msra.mxu0 %v7315
  %7367 = vmatpush.bf16.msra.mxu0 %v7312
  %7368 = vmatpush.bf16.msra.mxu0 %v7309
  %7369 = vmatpush.bf16.msra.mxu0 %v7306
  %7370 = vmatpush.bf16.msra.mxu0 %v7303
  %7371 = vmatpush.bf16.msra.mxu0 %v7300
  %7372 = vmatpush.bf16.msra.mxu0 %v7297
  %7373 = vmatpush.bf16.msra.mxu0 %v7294
  %7374 = vmatmul.bf16.gmra.mxu0 %v7171
  %v7375 = vpop.f32.mrf.mxu0
  %v7376 = vadd.f32 %v7208, %v7375
  %v7377 = vpop.f32.mrf.mxu0
  %7378 = vdwg.mxu0
  %v7379 = vld [vmem:[%s11] sm:$0xff]
  %v7380 = vld [vmem:[%s11 + $0x8] sm:$0xf]
  %v7381 = vld [vmem:[%s11 + $0xc] sm:$0xff]
  %v7382 = vld [vmem:[%s11 + $0x14] sm:$0xf]
  %v7383 = vld [vmem:[%s11 + $0x18] sm:$0xff]
  %v7384 = vld [vmem:[%s11 + $0x20] sm:$0xf]
  %v7385 = vld [vmem:[%s11 + $0x24] sm:$0xff]
  %v7386 = vld [vmem:[%s11 + $0x2c] sm:$0xf]
  %v7387 = vld [vmem:[%s11 + $0x30] sm:$0xff]
  %v7388 = vld [vmem:[%s11 + $0x38] sm:$0xf]
  %v7389 = vld [vmem:[%s11 + $0x3c] sm:$0xff]
  %v7390 = vld [vmem:[%s11 + $0x44] sm:$0xf]
  %v7391 = vld [vmem:[%s11 + $0x48] sm:$0xff]
  %v7392 = vld [vmem:[%s11 + $0x50] sm:$0xf]
  %v7393 = vld [vmem:[%s11 + $0x54] sm:$0xff]
  %v7394 = vld [vmem:[%s11 + $0x5c] sm:$0xf]
  %v7395 = vld [vmem:[%s11 + $0x60] sm:$0xff]
  %v7396 = vld [vmem:[%s11 + $0x68] sm:$0xf]
  %v7397 = vld [vmem:[%s11 + $0x6c] sm:$0xff]
  %v7398 = vld [vmem:[%s11 + $0x74] sm:$0xf]
  %v7399 = vld [vmem:[%s11 + $0x78] sm:$0xff]
  %v7400 = vld [vmem:[%s11 + $0x80] sm:$0xf]
  %v7401 = vld [vmem:[%s11 + $0x84] sm:$0xff]
  %v7402 = vld [vmem:[%s11 + $0x8c] sm:$0xf]
  %v7403 = vld [vmem:[%s11 + $0x90] sm:$0xff]
  %v7404 = vld [vmem:[%s11 + $0x98] sm:$0xf]
  %v7405 = vld [vmem:[%s11 + $0x9c] sm:$0xff]
  %v7406 = vld [vmem:[%s11 + $0xa4] sm:$0xf]
  %v7407 = vld [vmem:[%s11 + $0xa8] sm:$0xff]
  %v7408 = vld [vmem:[%s11 + $0xb0] sm:$0xf]
  %v7409 = vld [vmem:[%s11 + $0xb4] sm:$0xff]
  %v7410 = vld [vmem:[%s11 + $0xbc] sm:$0xf]
  %v7443 = vunpack.c.l.b16 %v7379
  %v7444 = vunpack.c.h.b16 %v7379
  %v7445 = vunpack.c.l.b16 %v7380
  %v7446 = vunpack.c.l.b16 %v7381
  %v7447 = vunpack.c.h.b16 %v7381
  %v7448 = vunpack.c.l.b16 %v7382
  %v7449 = vunpack.c.l.b16 %v7383
  %v7450 = vunpack.c.h.b16 %v7383
  %v7451 = vunpack.c.l.b16 %v7384
  %v7452 = vunpack.c.l.b16 %v7385
  %v7453 = vunpack.c.h.b16 %v7385
  %v7454 = vunpack.c.l.b16 %v7386
  %v7455 = vunpack.c.l.b16 %v7387
  %v7456 = vunpack.c.h.b16 %v7387
  %v7457 = vunpack.c.l.b16 %v7388
  %v7458 = vunpack.c.l.b16 %v7389
  %v7459 = vunpack.c.h.b16 %v7389
  %v7460 = vunpack.c.l.b16 %v7390
  %v7461 = vunpack.c.l.b16 %v7391
  %v7462 = vunpack.c.h.b16 %v7391
  %v7463 = vunpack.c.l.b16 %v7392
  %v7464 = vunpack.c.l.b16 %v7393
  %v7465 = vunpack.c.h.b16 %v7393
  %v7466 = vunpack.c.l.b16 %v7394
  %v7467 = vunpack.c.l.b16 %v7395
  %v7468 = vunpack.c.h.b16 %v7395
  %v7469 = vunpack.c.l.b16 %v7396
  %v7470 = vunpack.c.l.b16 %v7397
  %v7471 = vunpack.c.h.b16 %v7397
  %v7472 = vunpack.c.l.b16 %v7398
  %v7473 = vunpack.c.l.b16 %v7399
  %v7474 = vunpack.c.h.b16 %v7399
  %v7475 = vunpack.c.l.b16 %v7400
  %v7476 = vunpack.c.l.b16 %v7401
  %v7477 = vunpack.c.h.b16 %v7401
  %v7478 = vunpack.c.l.b16 %v7402
  %v7479 = vunpack.c.l.b16 %v7403
  %v7480 = vunpack.c.h.b16 %v7403
  %v7481 = vunpack.c.l.b16 %v7404
  %v7482 = vunpack.c.l.b16 %v7405
  %v7483 = vunpack.c.h.b16 %v7405
  %v7484 = vunpack.c.l.b16 %v7406
  %v7485 = vunpack.c.l.b16 %v7407
  %v7486 = vunpack.c.h.b16 %v7407
  %v7487 = vunpack.c.l.b16 %v7408
  %v7488 = vunpack.c.l.b16 %v7409
  %v7489 = vunpack.c.h.b16 %v7409
  %v7490 = vunpack.c.l.b16 %v7410
  %v7491 = vpack.c.b16 %v7446, %v7443
  %v7492 = vpack.c.b16 %v7447, %v7444
  %v7493 = vpack.c.b16 %v7448, %v7445
  %v7494 = vpack.c.b16 %v7452, %v7449
  %v7495 = vpack.c.b16 %v7453, %v7450
  %v7496 = vpack.c.b16 %v7454, %v7451
  %v7497 = vpack.c.b16 %v7458, %v7455
  %v7498 = vpack.c.b16 %v7459, %v7456
  %v7499 = vpack.c.b16 %v7460, %v7457
  %v7500 = vpack.c.b16 %v7464, %v7461
  %v7501 = vpack.c.b16 %v7465, %v7462
  %v7502 = vpack.c.b16 %v7466, %v7463
  %v7503 = vpack.c.b16 %v7470, %v7467
  %v7504 = vpack.c.b16 %v7471, %v7468
  %v7505 = vpack.c.b16 %v7472, %v7469
  %v7506 = vpack.c.b16 %v7476, %v7473
  %v7507 = vpack.c.b16 %v7477, %v7474
  %v7508 = vpack.c.b16 %v7478, %v7475
  %v7509 = vpack.c.b16 %v7482, %v7479
  %v7510 = vpack.c.b16 %v7483, %v7480
  %v7511 = vpack.c.b16 %v7484, %v7481
  %v7512 = vpack.c.b16 %v7488, %v7485
  %v7513 = vpack.c.b16 %v7489, %v7486
  %v7514 = vpack.c.b16 %v7490, %v7487
  %7539 = vmatpush.bf16.msra.mxu0 %v7512
  %7540 = vmatpush.bf16.msra.mxu0 %v7509
  %7541 = vmatpush.bf16.msra.mxu0 %v7506
  %7542 = vmatpush.bf16.msra.mxu0 %v7503
  %7543 = vmatpush.bf16.msra.mxu0 %v7500
  %7544 = vmatpush.bf16.msra.mxu0 %v7497
  %7545 = vmatpush.bf16.msra.mxu0 %v7494
  %7546 = vmatpush.bf16.msra.mxu0 %v7491
  %7547 = vmatmul.bf16.gmra.mxu0 %v6534
  %v7548 = vpop.f32.mrf.mxu0
  %v7549 = vadd.f32 0.0, %v7548
  %v7550 = vpop.f32.mrf.mxu0
  %7551 = vdwg.mxu0
  %7552 = vmatpush.bf16.msra.mxu0 %v7513
  %7553 = vmatpush.bf16.msra.mxu0 %v7510
  %7554 = vmatpush.bf16.msra.mxu0 %v7507
  %7555 = vmatpush.bf16.msra.mxu0 %v7504
  %7556 = vmatpush.bf16.msra.mxu0 %v7501
  %7557 = vmatpush.bf16.msra.mxu0 %v7498
  %7558 = vmatpush.bf16.msra.mxu0 %v7495
  %7559 = vmatpush.bf16.msra.mxu0 %v7492
  %7560 = vmatmul.bf16.gmra.mxu0 %v6534
  %v7561 = vpop.f32.mrf.mxu0
  %v7562 = vadd.f32 0.0, %v7561
  %v7563 = vpop.f32.mrf.mxu0
  %7564 = vdwg.mxu0
  %7565 = vmatpush.bf16.msra.mxu0 %v7514
  %7566 = vmatpush.bf16.msra.mxu0 %v7511
  %7567 = vmatpush.bf16.msra.mxu0 %v7508
  %7568 = vmatpush.bf16.msra.mxu0 %v7505
  %7569 = vmatpush.bf16.msra.mxu0 %v7502
  %7570 = vmatpush.bf16.msra.mxu0 %v7499
  %7571 = vmatpush.bf16.msra.mxu0 %v7496
  %7572 = vmatpush.bf16.msra.mxu0 %v7493
  %7573 = vmatmul.bf16.gmra.mxu0 %v6534
  %v7574 = vpop.f32.mrf.mxu0
  %v7575 = vadd.f32 0.0, %v7574
  %v7576 = vpop.f32.mrf.mxu0
  %7577 = vdwg.mxu0
  %v7578 = vadd.f32 %v7350, %v7549
  %v7579 = vadd.f32 %v7363, %v7562
  %v7580 = vxor.u32 %v7578, 2147483648
  %v7581 = vxor.u32 %v7579, 2147483648
  %v7582 = vmul.f32 %v7580, 1.442695
  %v7583 = vpow.pop %v7582
  %v7584 = vmul.f32 %v7581, 1.442695
  %v7585 = vpow.pop %v7584
  %v7586 = vadd.f32 %v7583, 1.0
  %v7587 = vadd.f32 %v7585, 1.0
  %v7588 = vrcp.pop %v7586
  %v7589 = vmul.f32 %v7586, %v7588
  %v7590 = vsub.f32 1.0, %v7589
  %v7591 = vmul.f32 %v7588, %v7590
  %v7592 = vadd.f32 %v7588, %v7591
  %vm7593 = vweird.f32 %v7586
  %vm7594 = vweird.f32 %v7588
  %vm7595 = vmor %vm7593, %vm7594
  %v7596 = vsel %vm7595, %v7588, %v7592
  %v7597 = vand.u32 2147483647, %v7586
  %vm7598 = vcmp.eq.f32.partialorder %v7597, 8.507059e+37
  %v7599 = vand.u32 %v7586, 2147483648
  %v7600 = vor.u32 1.1754944e-38, %v7599
  %v7601 = vsel %vm7598, %v7600, %v7596
  %v7602 = vmul.f32 1.0, %v7601
  %v7603 = vrcp.pop %v7587
  %v7604 = vmul.f32 %v7587, %v7603
  %v7605 = vsub.f32 1.0, %v7604
  %v7606 = vmul.f32 %v7603, %v7605
  %v7607 = vadd.f32 %v7603, %v7606
  %vm7608 = vweird.f32 %v7587
  %vm7609 = vweird.f32 %v7603
  %vm7610 = vmor %vm7608, %vm7609
  %v7611 = vsel %vm7610, %v7603, %v7607
  %v7612 = vand.u32 2147483647, %v7587
  %vm7613 = vcmp.eq.f32.partialorder %v7612, 8.507059e+37
  %v7614 = vand.u32 %v7587, 2147483648
  %v7615 = vor.u32 1.1754944e-38, %v7614
  %v7616 = vsel %vm7613, %v7615, %v7611
  %v7617 = vmul.f32 1.0, %v7616
  %v7618 = vld [vmem:[%s13] sm:$0x1]
  %v7620 = vperm.slane %v7618, 0
  %v7622 = vadd.f32 %v7575, %v7620
  %v7623 = vmul.f32 %v7602, %v7622
  %v7624 = vadd.f32 %v7376, %v7623
  %v7625 = vtanh.pop %v7624
  %v7626 = vsub.f32 1.0, %v7617
  %v7627 = vmul.f32 %v7626, %v7625
  %v7628 = vmul.f32 %v7617, %v6533
  %v7629 = vadd.f32 %v7627, %v7628
  %v7630 = vpack.c.bf16 %v7629, %v7629
  %v7631 = vld [vmem:[%s14] sm:$0xf]
  %v7632 = vld [vmem:[%s14 + $0x4] sm:$0xf]
  %v7633 = vld [vmem:[%s14 + $0x8] sm:$0xf]
  %v7634 = vld [vmem:[%s14 + $0xc] sm:$0xf]
  %v7635 = vld [vmem:[%s14 + $0x10] sm:$0xf]
  %v7636 = vld [vmem:[%s14 + $0x14] sm:$0xf]
  %v7637 = vld [vmem:[%s14 + $0x18] sm:$0xf]
  %v7638 = vld [vmem:[%s14 + $0x1c] sm:$0xf]
  %v7639 = vld [vmem:[%s14 + $0x20] sm:$0xf]
  %v7640 = vld [vmem:[%s14 + $0x24] sm:$0xf]
  %v7641 = vld [vmem:[%s14 + $0x28] sm:$0xf]
  %v7642 = vld [vmem:[%s14 + $0x2c] sm:$0xf]
  %v7643 = vld [vmem:[%s14 + $0x30] sm:$0xf]
  %v7644 = vld [vmem:[%s14 + $0x34] sm:$0xf]
  %v7645 = vld [vmem:[%s14 + $0x38] sm:$0xf]
  %v7646 = vld [vmem:[%s14 + $0x3c] sm:$0xf]
  %v7647 = vld [vmem:[%s15] sm:$0x1]
  %v7649 = vperm.slane %v7647, 0
  %v7667 = vunpack.c.l.b16 %v7631
  %v7668 = vunpack.c.l.b16 %v7632
  %v7669 = vunpack.c.l.b16 %v7633
  %v7670 = vunpack.c.l.b16 %v7634
  %v7671 = vunpack.c.l.b16 %v7635
  %v7672 = vunpack.c.l.b16 %v7636
  %v7673 = vunpack.c.l.b16 %v7637
  %v7674 = vunpack.c.l.b16 %v7638
  %v7675 = vunpack.c.l.b16 %v7639
  %v7676 = vunpack.c.l.b16 %v7640
  %v7677 = vunpack.c.l.b16 %v7641
  %v7678 = vunpack.c.l.b16 %v7642
  %v7679 = vunpack.c.l.b16 %v7643
  %v7680 = vunpack.c.l.b16 %v7644
  %v7681 = vunpack.c.l.b16 %v7645
  %v7682 = vunpack.c.l.b16 %v7646
  %v7683 = vpack.c.b16 %v7668, %v7667
  %v7684 = vpack.c.b16 %v7670, %v7669
  %v7685 = vpack.c.b16 %v7672, %v7671
  %v7686 = vpack.c.b16 %v7674, %v7673
  %v7687 = vpack.c.b16 %v7676, %v7675
  %v7688 = vpack.c.b16 %v7678, %v7677
  %v7689 = vpack.c.b16 %v7680, %v7679
  %v7690 = vpack.c.b16 %v7682, %v7681
  %7699 = vmatpush.bf16.msra.mxu0 %v7690
  %7700 = vmatpush.bf16.msra.mxu0 %v7689
  %7701 = vmatpush.bf16.msra.mxu0 %v7688
  %7702 = vmatpush.bf16.msra.mxu0 %v7687
  %7703 = vmatpush.bf16.msra.mxu0 %v7686
  %7704 = vmatpush.bf16.msra.mxu0 %v7685
  %7705 = vmatpush.bf16.msra.mxu0 %v7684
  %7706 = vmatpush.bf16.msra.mxu0 %v7683
  %7707 = vmatmul.bf16.gmra.mxu0 %v7630
  %v7708 = vpop.f32.mrf.mxu0
  %v7709 = vadd.f32 %v7649, %v7708
  %v7710 = vpop.f32.mrf.mxu0
  %7711 = vdwg.mxu0
  %s7712 = scalar_lea.vmem %s16, 48
  %7713 = vst [vmem:[%s7712] sm:$0xff] %v7709
  %v7714 = vsel %vm56, %v7709, -1e+30
  %7715 = vmax.xlane.f32.xlu0 %v7714
  %v7716 = vpop.xlane.xlu0 %7715
  %vm7717 = vcmp.eq.f32.partialorder %v7714, %v7716
  %v7718 = vsel %vm7717, %v55, 128.0
  %7719 = vmin.xlane.f32.xlu0 %v7718
  %v7720 = vpop.xlane.xlu0 %7719
  %vm7721 = vcmp.eq.f32.partialorder %v55, %v7720
  %v7722 = vsel %vm7721, 1, 0
  %v7723 = vcvt.s32.f32 %v7722
  %v7724 = vpack.c.bf16 %v7723, %v7723
  %v7725 = vld [vmem:[%s4] sm:$0xf]
  %v7726 = vld [vmem:[%s4 + $0x4] sm:$0xf]
  %v7727 = vld [vmem:[%s4 + $0x8] sm:$0xf]
  %v7728 = vld [vmem:[%s4 + $0xc] sm:$0xf]
  %v7729 = vld [vmem:[%s4 + $0x10] sm:$0xf]
  %v7730 = vld [vmem:[%s4 + $0x14] sm:$0xf]
  %v7731 = vld [vmem:[%s4 + $0x18] sm:$0xf]
  %v7732 = vld [vmem:[%s4 + $0x1c] sm:$0xf]
  %v7733 = vld [vmem:[%s4 + $0x20] sm:$0xf]
  %v7734 = vld [vmem:[%s4 + $0x24] sm:$0xf]
  %v7735 = vld [vmem:[%s4 + $0x28] sm:$0xf]
  %v7736 = vld [vmem:[%s4 + $0x2c] sm:$0xf]
  %v7737 = vld [vmem:[%s4 + $0x30] sm:$0xf]
  %v7738 = vld [vmem:[%s4 + $0x34] sm:$0xf]
  %v7739 = vld [vmem:[%s4 + $0x38] sm:$0xf]
  %v7740 = vld [vmem:[%s4 + $0x3c] sm:$0xf]
  %v7757 = vunpack.c.l.b16 %v7725
  %v7758 = vunpack.c.l.b16 %v7726
  %v7759 = vunpack.c.l.b16 %v7727
  %v7760 = vunpack.c.l.b16 %v7728
  %v7761 = vunpack.c.l.b16 %v7729
  %v7762 = vunpack.c.l.b16 %v7730
  %v7763 = vunpack.c.l.b16 %v7731
  %v7764 = vunpack.c.l.b16 %v7732
  %v7765 = vunpack.c.l.b16 %v7733
  %v7766 = vunpack.c.l.b16 %v7734
  %v7767 = vunpack.c.l.b16 %v7735
  %v7768 = vunpack.c.l.b16 %v7736
  %v7769 = vunpack.c.l.b16 %v7737
  %v7770 = vunpack.c.l.b16 %v7738
  %v7771 = vunpack.c.l.b16 %v7739
  %v7772 = vunpack.c.l.b16 %v7740
  %v7773 = vpack.c.b16 %v7758, %v7757
  %v7774 = vpack.c.b16 %v7760, %v7759
  %v7775 = vpack.c.b16 %v7762, %v7761
  %v7776 = vpack.c.b16 %v7764, %v7763
  %v7777 = vpack.c.b16 %v7766, %v7765
  %v7778 = vpack.c.b16 %v7768, %v7767
  %v7779 = vpack.c.b16 %v7770, %v7769
  %v7780 = vpack.c.b16 %v7772, %v7771
  %7789 = vmatpush.bf16.msra.mxu0 %v7780
  %7790 = vmatpush.bf16.msra.mxu0 %v7779
  %7791 = vmatpush.bf16.msra.mxu0 %v7778
  %7792 = vmatpush.bf16.msra.mxu0 %v7777
  %7793 = vmatpush.bf16.msra.mxu0 %v7776
  %7794 = vmatpush.bf16.msra.mxu0 %v7775
  %7795 = vmatpush.bf16.msra.mxu0 %v7774
  %7796 = vmatpush.bf16.msra.mxu0 %v7773
  %7797 = vmatmul.bf16.gmra.mxu0 %v7724
  %v7798 = vpop.f32.mrf.mxu0
  %v7799 = vadd.f32 0.0, %v7798
  %v7800 = vpop.f32.mrf.mxu0
  %7801 = vdwg.mxu0
  %s7802 = scalar_lea.vmem %s3, 48
  %v7803 = vld [vmem:[%s7802] sm:$0xff]
  %v7804 = vmul.f32 %v7799, %v7803
  %s7805 = scalar_lea.vmem %s2, 48
  %v7806 = vld [vmem:[%s7805] sm:$0xff]
  %v7807 = vadd.f32 %v7804, %v7806
  %v7808 = vpack.c.bf16 %v7807, %v7807
  %v7809 = vld [vmem:[%s6] sm:$0xff]
  %v7810 = vld [vmem:[%s6 + $0x8] sm:$0xf]
  %v7811 = vld [vmem:[%s6 + $0xc] sm:$0xff]
  %v7812 = vld [vmem:[%s6 + $0x14] sm:$0xf]
  %v7813 = vld [vmem:[%s6 + $0x18] sm:$0xff]
  %v7814 = vld [vmem:[%s6 + $0x20] sm:$0xf]
  %v7815 = vld [vmem:[%s6 + $0x24] sm:$0xff]
  %v7816 = vld [vmem:[%s6 + $0x2c] sm:$0xf]
  %v7817 = vld [vmem:[%s6 + $0x30] sm:$0xff]
  %v7818 = vld [vmem:[%s6 + $0x38] sm:$0xf]
  %v7819 = vld [vmem:[%s6 + $0x3c] sm:$0xff]
  %v7820 = vld [vmem:[%s6 + $0x44] sm:$0xf]
  %v7821 = vld [vmem:[%s6 + $0x48] sm:$0xff]
  %v7822 = vld [vmem:[%s6 + $0x50] sm:$0xf]
  %v7823 = vld [vmem:[%s6 + $0x54] sm:$0xff]
  %v7824 = vld [vmem:[%s6 + $0x5c] sm:$0xf]
  %v7825 = vld [vmem:[%s6 + $0x60] sm:$0xff]
  %v7826 = vld [vmem:[%s6 + $0x68] sm:$0xf]
  %v7827 = vld [vmem:[%s6 + $0x6c] sm:$0xff]
  %v7828 = vld [vmem:[%s6 + $0x74] sm:$0xf]
  %v7829 = vld [vmem:[%s6 + $0x78] sm:$0xff]
  %v7830 = vld [vmem:[%s6 + $0x80] sm:$0xf]
  %v7831 = vld [vmem:[%s6 + $0x84] sm:$0xff]
  %v7832 = vld [vmem:[%s6 + $0x8c] sm:$0xf]
  %v7833 = vld [vmem:[%s6 + $0x90] sm:$0xff]
  %v7834 = vld [vmem:[%s6 + $0x98] sm:$0xf]
  %v7835 = vld [vmem:[%s6 + $0x9c] sm:$0xff]
  %v7836 = vld [vmem:[%s6 + $0xa4] sm:$0xf]
  %v7837 = vld [vmem:[%s6 + $0xa8] sm:$0xff]
  %v7838 = vld [vmem:[%s6 + $0xb0] sm:$0xf]
  %v7839 = vld [vmem:[%s6 + $0xb4] sm:$0xff]
  %v7840 = vld [vmem:[%s6 + $0xbc] sm:$0xf]
  %v7841 = vld [vmem:[%s8] sm:$0x7]
  %v7843 = vperm.slane %v7841, 0
  %v7844 = vperm.slane %v7841, 1
  %v7845 = vperm.slane %v7841, 2
  %v7881 = vunpack.c.l.b16 %v7809
  %v7882 = vunpack.c.h.b16 %v7809
  %v7883 = vunpack.c.l.b16 %v7810
  %v7884 = vunpack.c.l.b16 %v7811
  %v7885 = vunpack.c.h.b16 %v7811
  %v7886 = vunpack.c.l.b16 %v7812
  %v7887 = vunpack.c.l.b16 %v7813
  %v7888 = vunpack.c.h.b16 %v7813
  %v7889 = vunpack.c.l.b16 %v7814
  %v7890 = vunpack.c.l.b16 %v7815
  %v7891 = vunpack.c.h.b16 %v7815
  %v7892 = vunpack.c.l.b16 %v7816
  %v7893 = vunpack.c.l.b16 %v7817
  %v7894 = vunpack.c.h.b16 %v7817
  %v7895 = vunpack.c.l.b16 %v7818
  %v7896 = vunpack.c.l.b16 %v7819
  %v7897 = vunpack.c.h.b16 %v7819
  %v7898 = vunpack.c.l.b16 %v7820
  %v7899 = vunpack.c.l.b16 %v7821
  %v7900 = vunpack.c.h.b16 %v7821
  %v7901 = vunpack.c.l.b16 %v7822
  %v7902 = vunpack.c.l.b16 %v7823
  %v7903 = vunpack.c.h.b16 %v7823
  %v7904 = vunpack.c.l.b16 %v7824
  %v7905 = vunpack.c.l.b16 %v7825
  %v7906 = vunpack.c.h.b16 %v7825
  %v7907 = vunpack.c.l.b16 %v7826
  %v7908 = vunpack.c.l.b16 %v7827
  %v7909 = vunpack.c.h.b16 %v7827
  %v7910 = vunpack.c.l.b16 %v7828
  %v7911 = vunpack.c.l.b16 %v7829
  %v7912 = vunpack.c.h.b16 %v7829
  %v7913 = vunpack.c.l.b16 %v7830
  %v7914 = vunpack.c.l.b16 %v7831
  %v7915 = vunpack.c.h.b16 %v7831
  %v7916 = vunpack.c.l.b16 %v7832
  %v7917 = vunpack.c.l.b16 %v7833
  %v7918 = vunpack.c.h.b16 %v7833
  %v7919 = vunpack.c.l.b16 %v7834
  %v7920 = vunpack.c.l.b16 %v7835
  %v7921 = vunpack.c.h.b16 %v7835
  %v7922 = vunpack.c.l.b16 %v7836
  %v7923 = vunpack.c.l.b16 %v7837
  %v7924 = vunpack.c.h.b16 %v7837
  %v7925 = vunpack.c.l.b16 %v7838
  %v7926 = vunpack.c.l.b16 %v7839
  %v7927 = vunpack.c.h.b16 %v7839
  %v7928 = vunpack.c.l.b16 %v7840
  %v7929 = vpack.c.b16 %v7884, %v7881
  %v7930 = vpack.c.b16 %v7885, %v7882
  %v7931 = vpack.c.b16 %v7886, %v7883
  %v7932 = vpack.c.b16 %v7890, %v7887
  %v7933 = vpack.c.b16 %v7891, %v7888
  %v7934 = vpack.c.b16 %v7892, %v7889
  %v7935 = vpack.c.b16 %v7896, %v7893
  %v7936 = vpack.c.b16 %v7897, %v7894
  %v7937 = vpack.c.b16 %v7898, %v7895
  %v7938 = vpack.c.b16 %v7902, %v7899
  %v7939 = vpack.c.b16 %v7903, %v7900
  %v7940 = vpack.c.b16 %v7904, %v7901
  %v7941 = vpack.c.b16 %v7908, %v7905
  %v7942 = vpack.c.b16 %v7909, %v7906
  %v7943 = vpack.c.b16 %v7910, %v7907
  %v7944 = vpack.c.b16 %v7914, %v7911
  %v7945 = vpack.c.b16 %v7915, %v7912
  %v7946 = vpack.c.b16 %v7916, %v7913
  %v7947 = vpack.c.b16 %v7920, %v7917
  %v7948 = vpack.c.b16 %v7921, %v7918
  %v7949 = vpack.c.b16 %v7922, %v7919
  %v7950 = vpack.c.b16 %v7926, %v7923
  %v7951 = vpack.c.b16 %v7927, %v7924
  %v7952 = vpack.c.b16 %v7928, %v7925
  %7977 = vmatpush.bf16.msra.mxu0 %v7950
  %7978 = vmatpush.bf16.msra.mxu0 %v7947
  %7979 = vmatpush.bf16.msra.mxu0 %v7944
  %7980 = vmatpush.bf16.msra.mxu0 %v7941
  %7981 = vmatpush.bf16.msra.mxu0 %v7938
  %7982 = vmatpush.bf16.msra.mxu0 %v7935
  %7983 = vmatpush.bf16.msra.mxu0 %v7932
  %7984 = vmatpush.bf16.msra.mxu0 %v7929
  %7985 = vmatmul.bf16.gmra.mxu0 %v7808
  %v7986 = vpop.f32.mrf.mxu0
  %v7987 = vadd.f32 %v7843, %v7986
  %v7988 = vpop.f32.mrf.mxu0
  %7989 = vdwg.mxu0
  %7990 = vmatpush.bf16.msra.mxu0 %v7951
  %7991 = vmatpush.bf16.msra.mxu0 %v7948
  %7992 = vmatpush.bf16.msra.mxu0 %v7945
  %7993 = vmatpush.bf16.msra.mxu0 %v7942
  %7994 = vmatpush.bf16.msra.mxu0 %v7939
  %7995 = vmatpush.bf16.msra.mxu0 %v7936
  %7996 = vmatpush.bf16.msra.mxu0 %v7933
  %7997 = vmatpush.bf16.msra.mxu0 %v7930
  %7998 = vmatmul.bf16.gmra.mxu0 %v7808
  %v7999 = vpop.f32.mrf.mxu0
  %v8000 = vadd.f32 %v7844, %v7999
  %v8001 = vpop.f32.mrf.mxu0
  %8002 = vdwg.mxu0
  %8003 = vmatpush.bf16.msra.mxu0 %v7952
  %8004 = vmatpush.bf16.msra.mxu0 %v7949
  %8005 = vmatpush.bf16.msra.mxu0 %v7946
  %8006 = vmatpush.bf16.msra.mxu0 %v7943
  %8007 = vmatpush.bf16.msra.mxu0 %v7940
  %8008 = vmatpush.bf16.msra.mxu0 %v7937
  %8009 = vmatpush.bf16.msra.mxu0 %v7934
  %8010 = vmatpush.bf16.msra.mxu0 %v7931
  %8011 = vmatmul.bf16.gmra.mxu0 %v7808
  %v8012 = vpop.f32.mrf.mxu0
  %v8013 = vadd.f32 %v7845, %v8012
  %v8014 = vpop.f32.mrf.mxu0
  %8015 = vdwg.mxu0
  %v8016 = vld [vmem:[%s7] sm:$0xff]
  %v8017 = vld [vmem:[%s7 + $0x8] sm:$0xf]
  %v8018 = vld [vmem:[%s7 + $0xc] sm:$0xff]
  %v8019 = vld [vmem:[%s7 + $0x14] sm:$0xf]
  %v8020 = vld [vmem:[%s7 + $0x18] sm:$0xff]
  %v8021 = vld [vmem:[%s7 + $0x20] sm:$0xf]
  %v8022 = vld [vmem:[%s7 + $0x24] sm:$0xff]
  %v8023 = vld [vmem:[%s7 + $0x2c] sm:$0xf]
  %v8024 = vld [vmem:[%s7 + $0x30] sm:$0xff]
  %v8025 = vld [vmem:[%s7 + $0x38] sm:$0xf]
  %v8026 = vld [vmem:[%s7 + $0x3c] sm:$0xff]
  %v8027 = vld [vmem:[%s7 + $0x44] sm:$0xf]
  %v8028 = vld [vmem:[%s7 + $0x48] sm:$0xff]
  %v8029 = vld [vmem:[%s7 + $0x50] sm:$0xf]
  %v8030 = vld [vmem:[%s7 + $0x54] sm:$0xff]
  %v8031 = vld [vmem:[%s7 + $0x5c] sm:$0xf]
  %v8032 = vld [vmem:[%s7 + $0x60] sm:$0xff]
  %v8033 = vld [vmem:[%s7 + $0x68] sm:$0xf]
  %v8034 = vld [vmem:[%s7 + $0x6c] sm:$0xff]
  %v8035 = vld [vmem:[%s7 + $0x74] sm:$0xf]
  %v8036 = vld [vmem:[%s7 + $0x78] sm:$0xff]
  %v8037 = vld [vmem:[%s7 + $0x80] sm:$0xf]
  %v8038 = vld [vmem:[%s7 + $0x84] sm:$0xff]
  %v8039 = vld [vmem:[%s7 + $0x8c] sm:$0xf]
  %v8040 = vld [vmem:[%s7 + $0x90] sm:$0xff]
  %v8041 = vld [vmem:[%s7 + $0x98] sm:$0xf]
  %v8042 = vld [vmem:[%s7 + $0x9c] sm:$0xff]
  %v8043 = vld [vmem:[%s7 + $0xa4] sm:$0xf]
  %v8044 = vld [vmem:[%s7 + $0xa8] sm:$0xff]
  %v8045 = vld [vmem:[%s7 + $0xb0] sm:$0xf]
  %v8046 = vld [vmem:[%s7 + $0xb4] sm:$0xff]
  %v8047 = vld [vmem:[%s7 + $0xbc] sm:$0xf]
  %v8080 = vunpack.c.l.b16 %v8016
  %v8081 = vunpack.c.h.b16 %v8016
  %v8082 = vunpack.c.l.b16 %v8017
  %v8083 = vunpack.c.l.b16 %v8018
  %v8084 = vunpack.c.h.b16 %v8018
  %v8085 = vunpack.c.l.b16 %v8019
  %v8086 = vunpack.c.l.b16 %v8020
  %v8087 = vunpack.c.h.b16 %v8020
  %v8088 = vunpack.c.l.b16 %v8021
  %v8089 = vunpack.c.l.b16 %v8022
  %v8090 = vunpack.c.h.b16 %v8022
  %v8091 = vunpack.c.l.b16 %v8023
  %v8092 = vunpack.c.l.b16 %v8024
  %v8093 = vunpack.c.h.b16 %v8024
  %v8094 = vunpack.c.l.b16 %v8025
  %v8095 = vunpack.c.l.b16 %v8026
  %v8096 = vunpack.c.h.b16 %v8026
  %v8097 = vunpack.c.l.b16 %v8027
  %v8098 = vunpack.c.l.b16 %v8028
  %v8099 = vunpack.c.h.b16 %v8028
  %v8100 = vunpack.c.l.b16 %v8029
  %v8101 = vunpack.c.l.b16 %v8030
  %v8102 = vunpack.c.h.b16 %v8030
  %v8103 = vunpack.c.l.b16 %v8031
  %v8104 = vunpack.c.l.b16 %v8032
  %v8105 = vunpack.c.h.b16 %v8032
  %v8106 = vunpack.c.l.b16 %v8033
  %v8107 = vunpack.c.l.b16 %v8034
  %v8108 = vunpack.c.h.b16 %v8034
  %v8109 = vunpack.c.l.b16 %v8035
  %v8110 = vunpack.c.l.b16 %v8036
  %v8111 = vunpack.c.h.b16 %v8036
  %v8112 = vunpack.c.l.b16 %v8037
  %v8113 = vunpack.c.l.b16 %v8038
  %v8114 = vunpack.c.h.b16 %v8038
  %v8115 = vunpack.c.l.b16 %v8039
  %v8116 = vunpack.c.l.b16 %v8040
  %v8117 = vunpack.c.h.b16 %v8040
  %v8118 = vunpack.c.l.b16 %v8041
  %v8119 = vunpack.c.l.b16 %v8042
  %v8120 = vunpack.c.h.b16 %v8042
  %v8121 = vunpack.c.l.b16 %v8043
  %v8122 = vunpack.c.l.b16 %v8044
  %v8123 = vunpack.c.h.b16 %v8044
  %v8124 = vunpack.c.l.b16 %v8045
  %v8125 = vunpack.c.l.b16 %v8046
  %v8126 = vunpack.c.h.b16 %v8046
  %v8127 = vunpack.c.l.b16 %v8047
  %v8128 = vpack.c.b16 %v8083, %v8080
  %v8129 = vpack.c.b16 %v8084, %v8081
  %v8130 = vpack.c.b16 %v8085, %v8082
  %v8131 = vpack.c.b16 %v8089, %v8086
  %v8132 = vpack.c.b16 %v8090, %v8087
  %v8133 = vpack.c.b16 %v8091, %v8088
  %v8134 = vpack.c.b16 %v8095, %v8092
  %v8135 = vpack.c.b16 %v8096, %v8093
  %v8136 = vpack.c.b16 %v8097, %v8094
  %v8137 = vpack.c.b16 %v8101, %v8098
  %v8138 = vpack.c.b16 %v8102, %v8099
  %v8139 = vpack.c.b16 %v8103, %v8100
  %v8140 = vpack.c.b16 %v8107, %v8104
  %v8141 = vpack.c.b16 %v8108, %v8105
  %v8142 = vpack.c.b16 %v8109, %v8106
  %v8143 = vpack.c.b16 %v8113, %v8110
  %v8144 = vpack.c.b16 %v8114, %v8111
  %v8145 = vpack.c.b16 %v8115, %v8112
  %v8146 = vpack.c.b16 %v8119, %v8116
  %v8147 = vpack.c.b16 %v8120, %v8117
  %v8148 = vpack.c.b16 %v8121, %v8118
  %v8149 = vpack.c.b16 %v8125, %v8122
  %v8150 = vpack.c.b16 %v8126, %v8123
  %v8151 = vpack.c.b16 %v8127, %v8124
  %8176 = vmatpush.bf16.msra.mxu0 %v8149
  %8177 = vmatpush.bf16.msra.mxu0 %v8146
  %8178 = vmatpush.bf16.msra.mxu0 %v8143
  %8179 = vmatpush.bf16.msra.mxu0 %v8140
  %8180 = vmatpush.bf16.msra.mxu0 %v8137
  %8181 = vmatpush.bf16.msra.mxu0 %v8134
  %8182 = vmatpush.bf16.msra.mxu0 %v8131
  %8183 = vmatpush.bf16.msra.mxu0 %v8128
  %8184 = vmatmul.bf16.gmra.mxu0 %v7171
  %v8185 = vpop.f32.mrf.mxu0
  %v8186 = vadd.f32 0.0, %v8185
  %v8187 = vpop.f32.mrf.mxu0
  %8188 = vdwg.mxu0
  %8189 = vmatpush.bf16.msra.mxu0 %v8150
  %8190 = vmatpush.bf16.msra.mxu0 %v8147
  %8191 = vmatpush.bf16.msra.mxu0 %v8144
  %8192 = vmatpush.bf16.msra.mxu0 %v8141
  %8193 = vmatpush.bf16.msra.mxu0 %v8138
  %8194 = vmatpush.bf16.msra.mxu0 %v8135
  %8195 = vmatpush.bf16.msra.mxu0 %v8132
  %8196 = vmatpush.bf16.msra.mxu0 %v8129
  %8197 = vmatmul.bf16.gmra.mxu0 %v7171
  %v8198 = vpop.f32.mrf.mxu0
  %v8199 = vadd.f32 0.0, %v8198
  %v8200 = vpop.f32.mrf.mxu0
  %8201 = vdwg.mxu0
  %8202 = vmatpush.bf16.msra.mxu0 %v8151
  %8203 = vmatpush.bf16.msra.mxu0 %v8148
  %8204 = vmatpush.bf16.msra.mxu0 %v8145
  %8205 = vmatpush.bf16.msra.mxu0 %v8142
  %8206 = vmatpush.bf16.msra.mxu0 %v8139
  %8207 = vmatpush.bf16.msra.mxu0 %v8136
  %8208 = vmatpush.bf16.msra.mxu0 %v8133
  %8209 = vmatpush.bf16.msra.mxu0 %v8130
  %8210 = vmatmul.bf16.gmra.mxu0 %v7171
  %v8211 = vpop.f32.mrf.mxu0
  %v8212 = vadd.f32 0.0, %v8211
  %v8213 = vpop.f32.mrf.mxu0
  %8214 = vdwg.mxu0
  %v8215 = vadd.f32 %v7987, %v8186
  %v8216 = vadd.f32 %v8000, %v8199
  %v8217 = vxor.u32 %v8215, 2147483648
  %v8218 = vxor.u32 %v8216, 2147483648
  %v8219 = vmul.f32 %v8217, 1.442695
  %v8220 = vpow.pop %v8219
  %v8221 = vmul.f32 %v8218, 1.442695
  %v8222 = vpow.pop %v8221
  %v8223 = vadd.f32 %v8220, 1.0
  %v8224 = vadd.f32 %v8222, 1.0
  %v8225 = vrcp.pop %v8223
  %v8226 = vmul.f32 %v8223, %v8225
  %v8227 = vsub.f32 1.0, %v8226
  %v8228 = vmul.f32 %v8225, %v8227
  %v8229 = vadd.f32 %v8225, %v8228
  %vm8230 = vweird.f32 %v8223
  %vm8231 = vweird.f32 %v8225
  %vm8232 = vmor %vm8230, %vm8231
  %v8233 = vsel %vm8232, %v8225, %v8229
  %v8234 = vand.u32 2147483647, %v8223
  %vm8235 = vcmp.eq.f32.partialorder %v8234, 8.507059e+37
  %v8236 = vand.u32 %v8223, 2147483648
  %v8237 = vor.u32 1.1754944e-38, %v8236
  %v8238 = vsel %vm8235, %v8237, %v8233
  %v8239 = vmul.f32 1.0, %v8238
  %v8240 = vrcp.pop %v8224
  %v8241 = vmul.f32 %v8224, %v8240
  %v8242 = vsub.f32 1.0, %v8241
  %v8243 = vmul.f32 %v8240, %v8242
  %v8244 = vadd.f32 %v8240, %v8243
  %vm8245 = vweird.f32 %v8224
  %vm8246 = vweird.f32 %v8240
  %vm8247 = vmor %vm8245, %vm8246
  %v8248 = vsel %vm8247, %v8240, %v8244
  %v8249 = vand.u32 2147483647, %v8224
  %vm8250 = vcmp.eq.f32.partialorder %v8249, 8.507059e+37
  %v8251 = vand.u32 %v8224, 2147483648
  %v8252 = vor.u32 1.1754944e-38, %v8251
  %v8253 = vsel %vm8250, %v8252, %v8248
  %v8254 = vmul.f32 1.0, %v8253
  %v8255 = vld [vmem:[%s9] sm:$0x1]
  %v8257 = vperm.slane %v8255, 0
  %v8259 = vadd.f32 %v8212, %v8257
  %v8260 = vmul.f32 %v8239, %v8259
  %v8261 = vadd.f32 %v8013, %v8260
  %v8262 = vtanh.pop %v8261
  %v8263 = vsub.f32 1.0, %v8254
  %v8264 = vmul.f32 %v8263, %v8262
  %v8265 = vmul.f32 %v8254, %v7170
  %v8266 = vadd.f32 %v8264, %v8265
  %v8267 = vpack.c.bf16 %v8266, %v8266
  %v8268 = vld [vmem:[%s10] sm:$0xff]
  %v8269 = vld [vmem:[%s10 + $0x8] sm:$0xf]
  %v8270 = vld [vmem:[%s10 + $0xc] sm:$0xff]
  %v8271 = vld [vmem:[%s10 + $0x14] sm:$0xf]
  %v8272 = vld [vmem:[%s10 + $0x18] sm:$0xff]
  %v8273 = vld [vmem:[%s10 + $0x20] sm:$0xf]
  %v8274 = vld [vmem:[%s10 + $0x24] sm:$0xff]
  %v8275 = vld [vmem:[%s10 + $0x2c] sm:$0xf]
  %v8276 = vld [vmem:[%s10 + $0x30] sm:$0xff]
  %v8277 = vld [vmem:[%s10 + $0x38] sm:$0xf]
  %v8278 = vld [vmem:[%s10 + $0x3c] sm:$0xff]
  %v8279 = vld [vmem:[%s10 + $0x44] sm:$0xf]
  %v8280 = vld [vmem:[%s10 + $0x48] sm:$0xff]
  %v8281 = vld [vmem:[%s10 + $0x50] sm:$0xf]
  %v8282 = vld [vmem:[%s10 + $0x54] sm:$0xff]
  %v8283 = vld [vmem:[%s10 + $0x5c] sm:$0xf]
  %v8284 = vld [vmem:[%s10 + $0x60] sm:$0xff]
  %v8285 = vld [vmem:[%s10 + $0x68] sm:$0xf]
  %v8286 = vld [vmem:[%s10 + $0x6c] sm:$0xff]
  %v8287 = vld [vmem:[%s10 + $0x74] sm:$0xf]
  %v8288 = vld [vmem:[%s10 + $0x78] sm:$0xff]
  %v8289 = vld [vmem:[%s10 + $0x80] sm:$0xf]
  %v8290 = vld [vmem:[%s10 + $0x84] sm:$0xff]
  %v8291 = vld [vmem:[%s10 + $0x8c] sm:$0xf]
  %v8292 = vld [vmem:[%s10 + $0x90] sm:$0xff]
  %v8293 = vld [vmem:[%s10 + $0x98] sm:$0xf]
  %v8294 = vld [vmem:[%s10 + $0x9c] sm:$0xff]
  %v8295 = vld [vmem:[%s10 + $0xa4] sm:$0xf]
  %v8296 = vld [vmem:[%s10 + $0xa8] sm:$0xff]
  %v8297 = vld [vmem:[%s10 + $0xb0] sm:$0xf]
  %v8298 = vld [vmem:[%s10 + $0xb4] sm:$0xff]
  %v8299 = vld [vmem:[%s10 + $0xbc] sm:$0xf]
  %v8300 = vld [vmem:[%s12] sm:$0x7]
  %v8302 = vperm.slane %v8300, 0
  %v8303 = vperm.slane %v8300, 1
  %v8304 = vperm.slane %v8300, 2
  %v8340 = vunpack.c.l.b16 %v8268
  %v8341 = vunpack.c.h.b16 %v8268
  %v8342 = vunpack.c.l.b16 %v8269
  %v8343 = vunpack.c.l.b16 %v8270
  %v8344 = vunpack.c.h.b16 %v8270
  %v8345 = vunpack.c.l.b16 %v8271
  %v8346 = vunpack.c.l.b16 %v8272
  %v8347 = vunpack.c.h.b16 %v8272
  %v8348 = vunpack.c.l.b16 %v8273
  %v8349 = vunpack.c.l.b16 %v8274
  %v8350 = vunpack.c.h.b16 %v8274
  %v8351 = vunpack.c.l.b16 %v8275
  %v8352 = vunpack.c.l.b16 %v8276
  %v8353 = vunpack.c.h.b16 %v8276
  %v8354 = vunpack.c.l.b16 %v8277
  %v8355 = vunpack.c.l.b16 %v8278
  %v8356 = vunpack.c.h.b16 %v8278
  %v8357 = vunpack.c.l.b16 %v8279
  %v8358 = vunpack.c.l.b16 %v8280
  %v8359 = vunpack.c.h.b16 %v8280
  %v8360 = vunpack.c.l.b16 %v8281
  %v8361 = vunpack.c.l.b16 %v8282
  %v8362 = vunpack.c.h.b16 %v8282
  %v8363 = vunpack.c.l.b16 %v8283
  %v8364 = vunpack.c.l.b16 %v8284
  %v8365 = vunpack.c.h.b16 %v8284
  %v8366 = vunpack.c.l.b16 %v8285
  %v8367 = vunpack.c.l.b16 %v8286
  %v8368 = vunpack.c.h.b16 %v8286
  %v8369 = vunpack.c.l.b16 %v8287
  %v8370 = vunpack.c.l.b16 %v8288
  %v8371 = vunpack.c.h.b16 %v8288
  %v8372 = vunpack.c.l.b16 %v8289
  %v8373 = vunpack.c.l.b16 %v8290
  %v8374 = vunpack.c.h.b16 %v8290
  %v8375 = vunpack.c.l.b16 %v8291
  %v8376 = vunpack.c.l.b16 %v8292
  %v8377 = vunpack.c.h.b16 %v8292
  %v8378 = vunpack.c.l.b16 %v8293
  %v8379 = vunpack.c.l.b16 %v8294
  %v8380 = vunpack.c.h.b16 %v8294
  %v8381 = vunpack.c.l.b16 %v8295
  %v8382 = vunpack.c.l.b16 %v8296
  %v8383 = vunpack.c.h.b16 %v8296
  %v8384 = vunpack.c.l.b16 %v8297
  %v8385 = vunpack.c.l.b16 %v8298
  %v8386 = vunpack.c.h.b16 %v8298
  %v8387 = vunpack.c.l.b16 %v8299
  %v8388 = vpack.c.b16 %v8343, %v8340
  %v8389 = vpack.c.b16 %v8344, %v8341
  %v8390 = vpack.c.b16 %v8345, %v8342
  %v8391 = vpack.c.b16 %v8349, %v8346
  %v8392 = vpack.c.b16 %v8350, %v8347
  %v8393 = vpack.c.b16 %v8351, %v8348
  %v8394 = vpack.c.b16 %v8355, %v8352
  %v8395 = vpack.c.b16 %v8356, %v8353
  %v8396 = vpack.c.b16 %v8357, %v8354
  %v8397 = vpack.c.b16 %v8361, %v8358
  %v8398 = vpack.c.b16 %v8362, %v8359
  %v8399 = vpack.c.b16 %v8363, %v8360
  %v8400 = vpack.c.b16 %v8367, %v8364
  %v8401 = vpack.c.b16 %v8368, %v8365
  %v8402 = vpack.c.b16 %v8369, %v8366
  %v8403 = vpack.c.b16 %v8373, %v8370
  %v8404 = vpack.c.b16 %v8374, %v8371
  %v8405 = vpack.c.b16 %v8375, %v8372
  %v8406 = vpack.c.b16 %v8379, %v8376
  %v8407 = vpack.c.b16 %v8380, %v8377
  %v8408 = vpack.c.b16 %v8381, %v8378
  %v8409 = vpack.c.b16 %v8385, %v8382
  %v8410 = vpack.c.b16 %v8386, %v8383
  %v8411 = vpack.c.b16 %v8387, %v8384
  %8436 = vmatpush.bf16.msra.mxu0 %v8409
  %8437 = vmatpush.bf16.msra.mxu0 %v8406
  %8438 = vmatpush.bf16.msra.mxu0 %v8403
  %8439 = vmatpush.bf16.msra.mxu0 %v8400
  %8440 = vmatpush.bf16.msra.mxu0 %v8397
  %8441 = vmatpush.bf16.msra.mxu0 %v8394
  %8442 = vmatpush.bf16.msra.mxu0 %v8391
  %8443 = vmatpush.bf16.msra.mxu0 %v8388
  %8444 = vmatmul.bf16.gmra.mxu0 %v8267
  %v8445 = vpop.f32.mrf.mxu0
  %v8446 = vadd.f32 %v8302, %v8445
  %v8447 = vpop.f32.mrf.mxu0
  %8448 = vdwg.mxu0
  %8449 = vmatpush.bf16.msra.mxu0 %v8410
  %8450 = vmatpush.bf16.msra.mxu0 %v8407
  %8451 = vmatpush.bf16.msra.mxu0 %v8404
  %8452 = vmatpush.bf16.msra.mxu0 %v8401
  %8453 = vmatpush.bf16.msra.mxu0 %v8398
  %8454 = vmatpush.bf16.msra.mxu0 %v8395
  %8455 = vmatpush.bf16.msra.mxu0 %v8392
  %8456 = vmatpush.bf16.msra.mxu0 %v8389
  %8457 = vmatmul.bf16.gmra.mxu0 %v8267
  %v8458 = vpop.f32.mrf.mxu0
  %v8459 = vadd.f32 %v8303, %v8458
  %v8460 = vpop.f32.mrf.mxu0
  %8461 = vdwg.mxu0
  %8462 = vmatpush.bf16.msra.mxu0 %v8411
  %8463 = vmatpush.bf16.msra.mxu0 %v8408
  %8464 = vmatpush.bf16.msra.mxu0 %v8405
  %8465 = vmatpush.bf16.msra.mxu0 %v8402
  %8466 = vmatpush.bf16.msra.mxu0 %v8399
  %8467 = vmatpush.bf16.msra.mxu0 %v8396
  %8468 = vmatpush.bf16.msra.mxu0 %v8393
  %8469 = vmatpush.bf16.msra.mxu0 %v8390
  %8470 = vmatmul.bf16.gmra.mxu0 %v8267
  %v8471 = vpop.f32.mrf.mxu0
  %v8472 = vadd.f32 %v8304, %v8471
  %v8473 = vpop.f32.mrf.mxu0
  %8474 = vdwg.mxu0
  %v8475 = vld [vmem:[%s11] sm:$0xff]
  %v8476 = vld [vmem:[%s11 + $0x8] sm:$0xf]
  %v8477 = vld [vmem:[%s11 + $0xc] sm:$0xff]
  %v8478 = vld [vmem:[%s11 + $0x14] sm:$0xf]
  %v8479 = vld [vmem:[%s11 + $0x18] sm:$0xff]
  %v8480 = vld [vmem:[%s11 + $0x20] sm:$0xf]
  %v8481 = vld [vmem:[%s11 + $0x24] sm:$0xff]
  %v8482 = vld [vmem:[%s11 + $0x2c] sm:$0xf]
  %v8483 = vld [vmem:[%s11 + $0x30] sm:$0xff]
  %v8484 = vld [vmem:[%s11 + $0x38] sm:$0xf]
  %v8485 = vld [vmem:[%s11 + $0x3c] sm:$0xff]
  %v8486 = vld [vmem:[%s11 + $0x44] sm:$0xf]
  %v8487 = vld [vmem:[%s11 + $0x48] sm:$0xff]
  %v8488 = vld [vmem:[%s11 + $0x50] sm:$0xf]
  %v8489 = vld [vmem:[%s11 + $0x54] sm:$0xff]
  %v8490 = vld [vmem:[%s11 + $0x5c] sm:$0xf]
  %v8491 = vld [vmem:[%s11 + $0x60] sm:$0xff]
  %v8492 = vld [vmem:[%s11 + $0x68] sm:$0xf]
  %v8493 = vld [vmem:[%s11 + $0x6c] sm:$0xff]
  %v8494 = vld [vmem:[%s11 + $0x74] sm:$0xf]
  %v8495 = vld [vmem:[%s11 + $0x78] sm:$0xff]
  %v8496 = vld [vmem:[%s11 + $0x80] sm:$0xf]
  %v8497 = vld [vmem:[%s11 + $0x84] sm:$0xff]
  %v8498 = vld [vmem:[%s11 + $0x8c] sm:$0xf]
  %v8499 = vld [vmem:[%s11 + $0x90] sm:$0xff]
  %v8500 = vld [vmem:[%s11 + $0x98] sm:$0xf]
  %v8501 = vld [vmem:[%s11 + $0x9c] sm:$0xff]
  %v8502 = vld [vmem:[%s11 + $0xa4] sm:$0xf]
  %v8503 = vld [vmem:[%s11 + $0xa8] sm:$0xff]
  %v8504 = vld [vmem:[%s11 + $0xb0] sm:$0xf]
  %v8505 = vld [vmem:[%s11 + $0xb4] sm:$0xff]
  %v8506 = vld [vmem:[%s11 + $0xbc] sm:$0xf]
  %v8539 = vunpack.c.l.b16 %v8475
  %v8540 = vunpack.c.h.b16 %v8475
  %v8541 = vunpack.c.l.b16 %v8476
  %v8542 = vunpack.c.l.b16 %v8477
  %v8543 = vunpack.c.h.b16 %v8477
  %v8544 = vunpack.c.l.b16 %v8478
  %v8545 = vunpack.c.l.b16 %v8479
  %v8546 = vunpack.c.h.b16 %v8479
  %v8547 = vunpack.c.l.b16 %v8480
  %v8548 = vunpack.c.l.b16 %v8481
  %v8549 = vunpack.c.h.b16 %v8481
  %v8550 = vunpack.c.l.b16 %v8482
  %v8551 = vunpack.c.l.b16 %v8483
  %v8552 = vunpack.c.h.b16 %v8483
  %v8553 = vunpack.c.l.b16 %v8484
  %v8554 = vunpack.c.l.b16 %v8485
  %v8555 = vunpack.c.h.b16 %v8485
  %v8556 = vunpack.c.l.b16 %v8486
  %v8557 = vunpack.c.l.b16 %v8487
  %v8558 = vunpack.c.h.b16 %v8487
  %v8559 = vunpack.c.l.b16 %v8488
  %v8560 = vunpack.c.l.b16 %v8489
  %v8561 = vunpack.c.h.b16 %v8489
  %v8562 = vunpack.c.l.b16 %v8490
  %v8563 = vunpack.c.l.b16 %v8491
  %v8564 = vunpack.c.h.b16 %v8491
  %v8565 = vunpack.c.l.b16 %v8492
  %v8566 = vunpack.c.l.b16 %v8493
  %v8567 = vunpack.c.h.b16 %v8493
  %v8568 = vunpack.c.l.b16 %v8494
  %v8569 = vunpack.c.l.b16 %v8495
  %v8570 = vunpack.c.h.b16 %v8495
  %v8571 = vunpack.c.l.b16 %v8496
  %v8572 = vunpack.c.l.b16 %v8497
  %v8573 = vunpack.c.h.b16 %v8497
  %v8574 = vunpack.c.l.b16 %v8498
  %v8575 = vunpack.c.l.b16 %v8499
  %v8576 = vunpack.c.h.b16 %v8499
  %v8577 = vunpack.c.l.b16 %v8500
  %v8578 = vunpack.c.l.b16 %v8501
  %v8579 = vunpack.c.h.b16 %v8501
  %v8580 = vunpack.c.l.b16 %v8502
  %v8581 = vunpack.c.l.b16 %v8503
  %v8582 = vunpack.c.h.b16 %v8503
  %v8583 = vunpack.c.l.b16 %v8504
  %v8584 = vunpack.c.l.b16 %v8505
  %v8585 = vunpack.c.h.b16 %v8505
  %v8586 = vunpack.c.l.b16 %v8506
  %v8587 = vpack.c.b16 %v8542, %v8539
  %v8588 = vpack.c.b16 %v8543, %v8540
  %v8589 = vpack.c.b16 %v8544, %v8541
  %v8590 = vpack.c.b16 %v8548, %v8545
  %v8591 = vpack.c.b16 %v8549, %v8546
  %v8592 = vpack.c.b16 %v8550, %v8547
  %v8593 = vpack.c.b16 %v8554, %v8551
  %v8594 = vpack.c.b16 %v8555, %v8552
  %v8595 = vpack.c.b16 %v8556, %v8553
  %v8596 = vpack.c.b16 %v8560, %v8557
  %v8597 = vpack.c.b16 %v8561, %v8558
  %v8598 = vpack.c.b16 %v8562, %v8559
  %v8599 = vpack.c.b16 %v8566, %v8563
  %v8600 = vpack.c.b16 %v8567, %v8564
  %v8601 = vpack.c.b16 %v8568, %v8565
  %v8602 = vpack.c.b16 %v8572, %v8569
  %v8603 = vpack.c.b16 %v8573, %v8570
  %v8604 = vpack.c.b16 %v8574, %v8571
  %v8605 = vpack.c.b16 %v8578, %v8575
  %v8606 = vpack.c.b16 %v8579, %v8576
  %v8607 = vpack.c.b16 %v8580, %v8577
  %v8608 = vpack.c.b16 %v8584, %v8581
  %v8609 = vpack.c.b16 %v8585, %v8582
  %v8610 = vpack.c.b16 %v8586, %v8583
  %8635 = vmatpush.bf16.msra.mxu0 %v8608
  %8636 = vmatpush.bf16.msra.mxu0 %v8605
  %8637 = vmatpush.bf16.msra.mxu0 %v8602
  %8638 = vmatpush.bf16.msra.mxu0 %v8599
  %8639 = vmatpush.bf16.msra.mxu0 %v8596
  %8640 = vmatpush.bf16.msra.mxu0 %v8593
  %8641 = vmatpush.bf16.msra.mxu0 %v8590
  %8642 = vmatpush.bf16.msra.mxu0 %v8587
  %8643 = vmatmul.bf16.gmra.mxu0 %v7630
  %v8644 = vpop.f32.mrf.mxu0
  %v8645 = vadd.f32 0.0, %v8644
  %v8646 = vpop.f32.mrf.mxu0
  %8647 = vdwg.mxu0
  %8648 = vmatpush.bf16.msra.mxu0 %v8609
  %8649 = vmatpush.bf16.msra.mxu0 %v8606
  %8650 = vmatpush.bf16.msra.mxu0 %v8603
  %8651 = vmatpush.bf16.msra.mxu0 %v8600
  %8652 = vmatpush.bf16.msra.mxu0 %v8597
  %8653 = vmatpush.bf16.msra.mxu0 %v8594
  %8654 = vmatpush.bf16.msra.mxu0 %v8591
  %8655 = vmatpush.bf16.msra.mxu0 %v8588
  %8656 = vmatmul.bf16.gmra.mxu0 %v7630
  %v8657 = vpop.f32.mrf.mxu0
  %v8658 = vadd.f32 0.0, %v8657
  %v8659 = vpop.f32.mrf.mxu0
  %8660 = vdwg.mxu0
  %8661 = vmatpush.bf16.msra.mxu0 %v8610
  %8662 = vmatpush.bf16.msra.mxu0 %v8607
  %8663 = vmatpush.bf16.msra.mxu0 %v8604
  %8664 = vmatpush.bf16.msra.mxu0 %v8601
  %8665 = vmatpush.bf16.msra.mxu0 %v8598
  %8666 = vmatpush.bf16.msra.mxu0 %v8595
  %8667 = vmatpush.bf16.msra.mxu0 %v8592
  %8668 = vmatpush.bf16.msra.mxu0 %v8589
  %8669 = vmatmul.bf16.gmra.mxu0 %v7630
  %v8670 = vpop.f32.mrf.mxu0
  %v8671 = vadd.f32 0.0, %v8670
  %v8672 = vpop.f32.mrf.mxu0
  %8673 = vdwg.mxu0
  %v8674 = vadd.f32 %v8446, %v8645
  %v8675 = vadd.f32 %v8459, %v8658
  %v8676 = vxor.u32 %v8674, 2147483648
  %v8677 = vxor.u32 %v8675, 2147483648
  %v8678 = vmul.f32 %v8676, 1.442695
  %v8679 = vpow.pop %v8678
  %v8680 = vmul.f32 %v8677, 1.442695
  %v8681 = vpow.pop %v8680
  %v8682 = vadd.f32 %v8679, 1.0
  %v8683 = vadd.f32 %v8681, 1.0
  %v8684 = vrcp.pop %v8682
  %v8685 = vmul.f32 %v8682, %v8684
  %v8686 = vsub.f32 1.0, %v8685
  %v8687 = vmul.f32 %v8684, %v8686
  %v8688 = vadd.f32 %v8684, %v8687
  %vm8689 = vweird.f32 %v8682
  %vm8690 = vweird.f32 %v8684
  %vm8691 = vmor %vm8689, %vm8690
  %v8692 = vsel %vm8691, %v8684, %v8688
  %v8693 = vand.u32 2147483647, %v8682
  %vm8694 = vcmp.eq.f32.partialorder %v8693, 8.507059e+37
  %v8695 = vand.u32 %v8682, 2147483648
  %v8696 = vor.u32 1.1754944e-38, %v8695
  %v8697 = vsel %vm8694, %v8696, %v8692
  %v8698 = vmul.f32 1.0, %v8697
  %v8699 = vrcp.pop %v8683
  %v8700 = vmul.f32 %v8683, %v8699
  %v8701 = vsub.f32 1.0, %v8700
  %v8702 = vmul.f32 %v8699, %v8701
  %v8703 = vadd.f32 %v8699, %v8702
  %vm8704 = vweird.f32 %v8683
  %vm8705 = vweird.f32 %v8699
  %vm8706 = vmor %vm8704, %vm8705
  %v8707 = vsel %vm8706, %v8699, %v8703
  %v8708 = vand.u32 2147483647, %v8683
  %vm8709 = vcmp.eq.f32.partialorder %v8708, 8.507059e+37
  %v8710 = vand.u32 %v8683, 2147483648
  %v8711 = vor.u32 1.1754944e-38, %v8710
  %v8712 = vsel %vm8709, %v8711, %v8707
  %v8713 = vmul.f32 1.0, %v8712
  %v8714 = vld [vmem:[%s13] sm:$0x1]
  %v8716 = vperm.slane %v8714, 0
  %v8718 = vadd.f32 %v8671, %v8716
  %v8719 = vmul.f32 %v8698, %v8718
  %v8720 = vadd.f32 %v8472, %v8719
  %v8721 = vtanh.pop %v8720
  %v8722 = vsub.f32 1.0, %v8713
  %v8723 = vmul.f32 %v8722, %v8721
  %v8724 = vmul.f32 %v8713, %v7629
  %v8725 = vadd.f32 %v8723, %v8724
  %v8726 = vpack.c.bf16 %v8725, %v8725
  %v8727 = vld [vmem:[%s14] sm:$0xf]
  %v8728 = vld [vmem:[%s14 + $0x4] sm:$0xf]
  %v8729 = vld [vmem:[%s14 + $0x8] sm:$0xf]
  %v8730 = vld [vmem:[%s14 + $0xc] sm:$0xf]
  %v8731 = vld [vmem:[%s14 + $0x10] sm:$0xf]
  %v8732 = vld [vmem:[%s14 + $0x14] sm:$0xf]
  %v8733 = vld [vmem:[%s14 + $0x18] sm:$0xf]
  %v8734 = vld [vmem:[%s14 + $0x1c] sm:$0xf]
  %v8735 = vld [vmem:[%s14 + $0x20] sm:$0xf]
  %v8736 = vld [vmem:[%s14 + $0x24] sm:$0xf]
  %v8737 = vld [vmem:[%s14 + $0x28] sm:$0xf]
  %v8738 = vld [vmem:[%s14 + $0x2c] sm:$0xf]
  %v8739 = vld [vmem:[%s14 + $0x30] sm:$0xf]
  %v8740 = vld [vmem:[%s14 + $0x34] sm:$0xf]
  %v8741 = vld [vmem:[%s14 + $0x38] sm:$0xf]
  %v8742 = vld [vmem:[%s14 + $0x3c] sm:$0xf]
  %v8743 = vld [vmem:[%s15] sm:$0x1]
  %v8745 = vperm.slane %v8743, 0
  %v8763 = vunpack.c.l.b16 %v8727
  %v8764 = vunpack.c.l.b16 %v8728
  %v8765 = vunpack.c.l.b16 %v8729
  %v8766 = vunpack.c.l.b16 %v8730
  %v8767 = vunpack.c.l.b16 %v8731
  %v8768 = vunpack.c.l.b16 %v8732
  %v8769 = vunpack.c.l.b16 %v8733
  %v8770 = vunpack.c.l.b16 %v8734
  %v8771 = vunpack.c.l.b16 %v8735
  %v8772 = vunpack.c.l.b16 %v8736
  %v8773 = vunpack.c.l.b16 %v8737
  %v8774 = vunpack.c.l.b16 %v8738
  %v8775 = vunpack.c.l.b16 %v8739
  %v8776 = vunpack.c.l.b16 %v8740
  %v8777 = vunpack.c.l.b16 %v8741
  %v8778 = vunpack.c.l.b16 %v8742
  %v8779 = vpack.c.b16 %v8764, %v8763
  %v8780 = vpack.c.b16 %v8766, %v8765
  %v8781 = vpack.c.b16 %v8768, %v8767
  %v8782 = vpack.c.b16 %v8770, %v8769
  %v8783 = vpack.c.b16 %v8772, %v8771
  %v8784 = vpack.c.b16 %v8774, %v8773
  %v8785 = vpack.c.b16 %v8776, %v8775
  %v8786 = vpack.c.b16 %v8778, %v8777
  %8795 = vmatpush.bf16.msra.mxu0 %v8786
  %8796 = vmatpush.bf16.msra.mxu0 %v8785
  %8797 = vmatpush.bf16.msra.mxu0 %v8784
  %8798 = vmatpush.bf16.msra.mxu0 %v8783
  %8799 = vmatpush.bf16.msra.mxu0 %v8782
  %8800 = vmatpush.bf16.msra.mxu0 %v8781
  %8801 = vmatpush.bf16.msra.mxu0 %v8780
  %8802 = vmatpush.bf16.msra.mxu0 %v8779
  %8803 = vmatmul.bf16.gmra.mxu0 %v8726
  %v8804 = vpop.f32.mrf.mxu0
  %v8805 = vadd.f32 %v8745, %v8804
  %v8806 = vpop.f32.mrf.mxu0
  %8807 = vdwg.mxu0
  %s8808 = scalar_lea.vmem %s16, 56
  %8809 = vst [vmem:[%s8808] sm:$0xff] %v8805
  // Predicated region
  $region66: #{seq2seq_forward.1} parent=0 // pred_check
    _
  $region67: #{seq2seq_forward.1} parent=0 // pred_check_branch
    %8811 = sbr.rel (0) target = $region69
  $region68: #{seq2seq_forward.1} parent=0 // pred_region
    _
  $region69: #{seq2seq_forward.1} parent=0 // pred_fallthru
    _
  // Predicated region
  $region70: #{seq2seq_forward.1} parent=0 // pred_check
    _
  $region71: #{seq2seq_forward.1} parent=0 // pred_check_branch
    %8813 = sbr.rel (0) target = $region73
  $region72: #{seq2seq_forward.1} parent=0 // pred_region
    _
  $region73: #{seq2seq_forward.1} parent=0 // pred_fallthru
    _

</llo_original>
